<compile_context>
chip_gen: v7x
topology: tpu7x:2x2x1
jax: 0.10.0
libtpu: 0.0.40
codegen_flags: <defaults>
</compile_context>

<pallas_src>
import math
import functools

import jax
import jax.numpy as jnp
from jax.experimental import pallas as pl
from jax.experimental.pallas import tpu as pltpu

D = 200          # true embed_len (residual adds in EncodeLayer force 200)
HEAD_DIM = 200   # per-head projection width ("200 * head" in nn_arch)
DP = 256         # padded feature width (lane-dense, multiple of 128)
HDP = 256        # padded per-head width
LN_EPS = 1e-5
NEG_INF = -1e30

PARAM_ORDER = ("wq", "bq", "wk", "bk", "wv", "bv", "wf", "bf",
               "w1", "b1", "w2", "b2", "g0", "be0", "g1", "be1")


# --------------------------------------------------------------------------
# Kernel: one grid step = one (batch tile, layer) pair.
# --------------------------------------------------------------------------
def encode_stack_kernel(
    x_ref,                                              # (BT, S, DP) f32
    bias_ref,                                           # (BT, S) f32 additive key-pad bias
    wq_ref, bq_ref, wk_ref, bk_ref, wv_ref, bv_ref,     # stacked (L, ...) resident weights
    wf_ref, bf_ref, w1_ref, b1_ref, w2_ref, b2_ref,
    g0_ref, be0_ref, g1_ref, be1_ref,
    out_ref,                                            # (BT, S, DP) f32 (doubles as carry)
    *, head,
):
    l = pl.program_id(1)
    BT, S, DPAD = out_ref.shape
    M = BT * S
    HDp = wq_ref.shape[-1] // head
    HDF = head * HDp

    # Load the embedding tile into the layer-resident activation at layer 0.
    @pl.when(l == 0)
    def _():
        out_ref[...] = x_ref[...]

    x = out_ref[...].reshape(M, DPAD)                   # f32, pad lanes are zero
    xb = x.astype(jnp.bfloat16)

    def mm(a, w):
        return jnp.dot(a, w, preferred_element_type=jnp.float32)

    # Fused Q/K/V projections (lane-dense bf16 matmuls, M = BT*S rows).
    # 1/sqrt(200) is already folded into wq/bq.  Cast to bf16 once per tensor.
    q = (mm(xb, wq_ref[l]) + bq_ref[l]).reshape(BT, S, HDF)
    k = (mm(xb, wk_ref[l]) + bk_ref[l]).reshape(BT, S, HDF)
    v = (mm(xb, wv_ref[l]) + bv_ref[l]).reshape(BT, S, HDF)
    qb = q.astype(jnp.bfloat16)
    kb = k.astype(jnp.bfloat16)
    vb = v.astype(jnp.bfloat16)

    bias = bias_ref[...].reshape(BT, 1, S)              # 0 valid / -1e30 padded

    # Per-head attention; fuse projection accumulated per head (no concat).
    att = jnp.zeros((M, DPAD), jnp.float32)
    for h in range(head):                               # static unroll (head small)
        sl = slice(h * HDp, (h + 1) * HDp)
        qh = qb[:, :, sl]
        kh = kb[:, :, sl]
        vh = vb[:, :, sl]
        d = jnp.einsum('bqe,bke->bqk', qh, kh,
                       preferred_element_type=jnp.float32)          # (BT, S, S)
        d = d + bias                                    # finite fill: no inf-inf NaN
        d = d - jnp.max(d, axis=-1, keepdims=True)
        e = jnp.exp(d)
        p = e * pl.reciprocal(jnp.sum(e, axis=-1, keepdims=True), approx=True)
        ctx = jnp.einsum('bqk,bke->bqe', p.astype(jnp.bfloat16), vh,
                         preferred_element_type=jnp.float32)         # (BT, S, HDp)
        att = att + mm(ctx.reshape(M, HDp).astype(jnp.bfloat16),
                       wf_ref[l, pl.ds(h * HDp, HDp), :])
    att = att + bf_ref[l]                               # (M, DP), pad lanes zero

    # LayerNorm over the true 200 lanes only (pad lanes of inputs are zero and
    # stay zero in the output because gamma/beta are zero-padded).
    feat_mask = jax.lax.broadcasted_iota(jnp.int32, (1, DPAD), 1) < D

    def layernorm(hval, gamma, beta):
        mean = jnp.sum(hval, axis=-1, keepdims=True) * (1.0 / D)
        hc = jnp.where(feat_mask, hval - mean, 0.0)
        var = jnp.sum(hc * hc, axis=-1, keepdims=True) * (1.0 / D)
        return hc * jax.lax.rsqrt(var + LN_EPS) * gamma + beta

    h0 = layernorm(att + x, g0_ref[l], be0_ref[l])

    # Position-wise MLP: Linear -> ReLU -> Linear.
    ff = mm(h0.astype(jnp.bfloat16), w1_ref[l]) + b1_ref[l]
    ff = jnp.maximum(ff, 0.0)
    ff = mm(ff.astype(jnp.bfloat16), w2_ref[l]) + b2_ref[l]

    y = layernorm(ff + h0, g1_ref[l], be1_ref[l])
    out_ref[...] = y.reshape(BT, S, DPAD)               # carry to next layer


def _const_index_map(bt, l):
    return (0, 0, 0)


# --------------------------------------------------------------------------
# Wrapper: embedding glue + one pallas_call for the whole stack.
# --------------------------------------------------------------------------
def trm_encode(tokens, p, lengths, embed_mat, packed, head, *, b_tile=8):
    # Embedding gather + positional add: plain-JAX glue (not the hot path).
    x = embed_mat[tokens] + p                           # (B, S, D) f32
    B, S, _ = x.shape
    L = packed["wq"].shape[0]
    assert B % b_tile == 0, "batch must be divisible by the batch tile"
    xp = jnp.pad(x, ((0, 0), (0, 0), (0, DP - D)))      # lane-dense feature dim

    # Additive key-padding bias: O(B*S) bytes instead of (B, head, S, S).
    key_pad = jnp.arange(S, dtype=jnp.int32)[None, :] >= lengths[:, None]
    neg_bias = jnp.where(key_pad, jnp.float32(NEG_INF), jnp.float32(0.0))

    def xmap(bt, l):
        return (bt, 0, 0)

    def maskmap(bt, l):
        return (bt, 0)

    in_specs = [pl.BlockSpec((b_tile, S, DP), xmap),
                pl.BlockSpec((b_tile, S), maskmap)]
    args = [xp, neg_bias]
    for name in PARAM_ORDER:
        arr = packed[name]
        # Full stacked array + constant index map => weights DMA'd into VMEM
        # once and stay resident for the whole grid (indexed by layer in-kernel).
        in_specs.append(pl.BlockSpec(arr.shape, _const_index_map))
        args.append(arr)

    # Advisory cost estimate (weights counted once: they are resident).
    M = b_tile * S
    HDF = head * HDP
    steps = (B // b_tile) * L
    flops_step = (3 * 2 * M * DP * HDF                      # Q/K/V projections
                  + head * (2 * 2 * b_tile * S * S * HDP)   # scores + context
                  + 2 * M * HDF * DP                        # fuse
                  + 2 * (2 * M * DP * DP))                  # MLP
    weight_bytes = sum(int(v.size) * v.dtype.itemsize for v in packed.values())
    cost = pl.CostEstimate(
        flops=int(steps * flops_step),
        transcendentals=int(steps * (head * b_tile * S * S + 3 * M)),
        bytes_accessed=int(xp.size * 4 + B * S * DP * 4
                           + neg_bias.size * 4 + weight_bytes),
    )

    kernel = functools.partial(encode_stack_kernel, head=head)
    out = pl.pallas_call(
        kernel,
        out_shape=jax.ShapeDtypeStruct((B, S, DP), jnp.float32),
        grid_spec=pltpu.PrefetchScalarGridSpec(
            num_scalar_prefetch=0,
            grid=(B // b_tile, L),
            in_specs=in_specs,
            out_specs=pl.BlockSpec((b_tile, S, DP), xmap),
        ),
        compiler_params=pltpu.CompilerParams(
            dimension_semantics=("parallel", "arbitrary"),
            # ~1.3 MB bf16 weights/layer stay resident; 48 MiB leaves headroom
            # under v7x's 64 MiB physical VMEM and is far below v5e/v6e's 128.
            vmem_limit_bytes=48 * 1024 * 1024,
        ),
        cost_estimate=cost,
    )(*args)
    # TODO(synk): the [:, :, :D] slice is an extra HBM copy; callers that can
    # consume the 256-lane padded layout should take `out` directly.
    return out[:, :, :D]


# --------------------------------------------------------------------------
# Parameter construction (raw f32 params + packed/padded/bf16 kernel params).
# --------------------------------------------------------------------------
def init_layer_params_raw(key, head):
    ks = jax.random.split(key, 12)
    s = 0.05
    n = jax.random.normal
    return {
        "wq": n(ks[0], (head, D, HEAD_DIM), jnp.float32) * s,
        "bq": n(ks[1], (head, HEAD_DIM), jnp.float32) * s,
        "wk": n(ks[2], (head, D, HEAD_DIM), jnp.float32) * s,
        "bk": n(ks[3], (head, HEAD_DIM), jnp.float32) * s,
        "wv": n(ks[4], (head, D, HEAD_DIM), jnp.float32) * s,
        "bv": n(ks[5], (head, HEAD_DIM), jnp.float32) * s,
        "wf": n(ks[6], (head, HEAD_DIM, D), jnp.float32) * s,
        "bf": n(ks[7], (D,), jnp.float32) * s,
        "w1": n(ks[8], (D, D), jnp.float32) * s,
        "b1": n(ks[9], (D,), jnp.float32) * s,
        "w2": n(ks[10], (D, D), jnp.float32) * s,
        "b2": n(ks[11], (D,), jnp.float32) * s,
        "g0": jnp.ones((D,), jnp.float32),
        "be0": jnp.zeros((D,), jnp.float32),
        "g1": jnp.ones((D,), jnp.float32),
        "be1": jnp.zeros((D,), jnp.float32),
    }


def pack_params(layer_params, head):
    """Zero-pad 200->256, fuse heads into single matmul weights, fold the
    1/sqrt(200) score scale into wq/bq, cast weights to bf16, stack layers."""
    scale = 1.0 / math.sqrt(HEAD_DIM)

    def pad_proj(w, sc=1.0):   # (head, D, 200) -> (DP, head*HDP) bf16
        wp = jnp.zeros((head, DP, HDP), jnp.float32).at[:, :D, :HEAD_DIM].set(w * sc)
        return jnp.transpose(wp, (1, 0, 2)).reshape(DP, head * HDP).astype(jnp.bfloat16)

    def pad_bias_h(b, sc=1.0):  # (head, 200) -> (1, head*HDP) f32
        bp = jnp.zeros((head, HDP), jnp.float32).at[:, :HEAD_DIM].set(b * sc)
        return bp.reshape(1, head * HDP)

    def pad_fuse(w):            # (head, 200, D) -> (head*HDP, DP) bf16
        wp = jnp.zeros((head, HDP, DP), jnp.float32).at[:, :HEAD_DIM, :D].set(w)
        return wp.reshape(head * HDP, DP).astype(jnp.bfloat16)

    def pad_vec(v):             # (D,) -> (1, DP) f32
        return jnp.zeros((1, DP), jnp.float32).at[0, :D].set(v)

    def pad_mat(w):             # (D, D) -> (DP, DP) bf16
        return jnp.zeros((DP, DP), jnp.float32).at[:D, :D].set(w).astype(jnp.bfloat16)

    packed = {name: [] for name in PARAM_ORDER}
    for prm in layer_params:
        packed["wq"].append(pad_proj(prm["wq"], scale))
        packed["bq"].append(pad_bias_h(prm["bq"], scale))
        packed["wk"].append(pad_proj(prm["wk"]))
        packed["bk"].append(pad_bias_h(prm["bk"]))
        packed["wv"].append(pad_proj(prm["wv"]))
        packed["bv"].append(pad_bias_h(prm["bv"]))
        packed["wf"].append(pad_fuse(prm["wf"]))
        packed["bf"].append(pad_vec(prm["bf"]))
        packed["w1"].append(pad_mat(prm["w1"]))
        packed["b1"].append(pad_vec(prm["b1"]))
        packed["w2"].append(pad_mat(prm["w2"]))
        packed["b2"].append(pad_vec(prm["b2"]))
        packed["g0"].append(pad_vec(prm["g0"]))
        packed["be0"].append(pad_vec(prm["be0"]))
        packed["g1"].append(pad_vec(prm["g1"]))
        packed["be1"].append(pad_vec(prm["be1"]))
    return {k: jnp.stack(v, axis=0) for k, v in packed.items()}


# --------------------------------------------------------------------------
# Pure-JAX f32 reference (mirrors the PyTorch module) for a sanity check.
# --------------------------------------------------------------------------
def _ln_ref(h, g, b):
    mean = jnp.mean(h, axis=-1, keepdims=True)
    var = jnp.mean((h - mean) ** 2, axis=-1, keepdims=True)
    return (h - mean) * jax.lax.rsqrt(var + LN_EPS) * g + b


def trm_encode_ref(tokens, p, lengths, embed_mat, layer_params, head):
    x = embed_mat[tokens] + p
    B, S, _ = x.shape
    key_pad = jnp.arange(S)[None, :] >= lengths[:, None]          # (B, S)
    for prm in layer_params:
        q = jnp.einsum('bsd,hde->bhse', x, prm["wq"]) + prm["bq"][None, :, None, :]
        k = jnp.einsum('bsd,hde->bhse', x, prm["wk"]) + prm["bk"][None, :, None, :]
        v = jnp.einsum('bsd,hde->bhse', x, prm["wv"]) + prm["bv"][None, :, None, :]
        d = jnp.einsum('bhqe,bhke->bhqk', q, k) / math.sqrt(HEAD_DIM)
        d = jnp.where(key_pad[:, None, None, :], NEG_INF, d)
        a = jax.nn.softmax(d, axis=-1)
        c = jnp.einsum('bhqk,bhke->bhqe', a, v)
        att = jnp.einsum('bhse,hed->bsd', c, prm["wf"]) + prm["bf"]
        h0 = _ln_ref(att + x, prm["g0"], prm["be0"])
        ff = jnp.maximum(jnp.einsum('bsd,de->bse', h0, prm["w1"]) + prm["b1"], 0.0)
        ff = jnp.einsum('bse,ed->bsd', ff, prm["w2"]) + prm["b2"]
        x = _ln_ref(ff + h0, prm["g1"], prm["be1"])
    return x


if __name__ == "__main__":
    key = jax.random.PRNGKey(0)
    k0, k1, k2, k3 = jax.random.split(key, 4)

    vocab_num, head, stack = 50, 2, 2
    B, S = 32, 8
    B_TILE = 16     # matmul M = B_TILE*S = 128; 2 parallel steps -> both TCs on v7x

    embed_mat = jax.random.normal(k0, (vocab_num, D), jnp.float32) * 0.1
    tokens = jax.random.randint(k1, (B, S), 0, vocab_num)
    p = jax.random.normal(k2, (B, S, D), jnp.float32) * 0.1
    lengths = (jnp.arange(B, dtype=jnp.int32) % S) + 1   # key-padding via lengths

    raw_params = [init_layer_params_raw(k, head) for k in jax.random.split(k3, stack)]
    packed = pack_params(raw_params, head)

    out = trm_encode(tokens, p, lengths, embed_mat, packed, head, b_tile=B_TILE)
    jax.block_until_ready(out)

    assert out.shape == (B, S, D)
    assert bool(jnp.all(jnp.isfinite(out)))

    ref = trm_encode_ref(tokens, p, lengths, embed_mat, raw_params, head)
    max_err = float(jnp.max(jnp.abs(out - ref)))
    mean_err = float(jnp.mean(jnp.abs(out - ref)))
    assert max_err < 1e-1, f"kernel/reference mismatch: max abs err = {max_err}"
    assert mean_err < 3e-2, f"kernel/reference drift: mean abs err = {mean_err}"

    print("KERNEL_OK")
</pallas_src>

<mosaic_0001>
module attributes {stable_mosaic.version = 11 : i64} {
  func.func @encode_stack_kernel(%arg0: i32, %arg1: i32, %arg2: memref<16x8x256xf32, #tpu.memory_space<vmem>>, %arg3: memref<16x8xf32, #tpu.memory_space<vmem>>, %arg4: memref<2x256x512xbf16, #tpu.memory_space<vmem>>, %arg5: memref<2x1x512xf32, #tpu.memory_space<vmem>>, %arg6: memref<2x256x512xbf16, #tpu.memory_space<vmem>>, %arg7: memref<2x1x512xf32, #tpu.memory_space<vmem>>, %arg8: memref<2x256x512xbf16, #tpu.memory_space<vmem>>, %arg9: memref<2x1x512xf32, #tpu.memory_space<vmem>>, %arg10: memref<2x512x256xbf16, #tpu.memory_space<vmem>>, %arg11: memref<2x1x256xf32, #tpu.memory_space<vmem>>, %arg12: memref<2x256x256xbf16, #tpu.memory_space<vmem>>, %arg13: memref<2x1x256xf32, #tpu.memory_space<vmem>>, %arg14: memref<2x256x256xbf16, #tpu.memory_space<vmem>>, %arg15: memref<2x1x256xf32, #tpu.memory_space<vmem>>, %arg16: memref<2x1x256xf32, #tpu.memory_space<vmem>>, %arg17: memref<2x1x256xf32, #tpu.memory_space<vmem>>, %arg18: memref<2x1x256xf32, #tpu.memory_space<vmem>>, %arg19: memref<2x1x256xf32, #tpu.memory_space<vmem>>, %arg20: memref<16x8x256xf32, #tpu.memory_space<vmem>>) attributes {dimension_semantics = [#tpu.dimension_semantics<parallel>, #tpu.dimension_semantics<arbitrary>], iteration_bounds = array<i64: 2, 2>, scalar_prefetch = 0 : i64, scratch_operands = 0 : i64, tpu.core_type = #tpu.core_type<tc>, window_params = [{transform_indices = @transform_0, window_bounds = array<i64: 16, 8, 256>}, {transform_indices = @transform_1, window_bounds = array<i64: 16, 8>}, {pipeline_mode = #tpu.pipeline_mode<synchronous>, transform_indices = @transform_2, window_bounds = array<i64: 2, 256, 512>}, {pipeline_mode = #tpu.pipeline_mode<synchronous>, transform_indices = @transform_3, window_bounds = array<i64: 2, 1, 512>}, {pipeline_mode = #tpu.pipeline_mode<synchronous>, transform_indices = @transform_4, window_bounds = array<i64: 2, 256, 512>}, {pipeline_mode = #tpu.pipeline_mode<synchronous>, transform_indices = @transform_5, window_bounds = array<i64: 2, 1, 512>}, {pipeline_mode = #tpu.pipeline_mode<synchronous>, transform_indices = @transform_6, window_bounds = array<i64: 2, 256, 512>}, {pipeline_mode = #tpu.pipeline_mode<synchronous>, transform_indices = @transform_7, window_bounds = array<i64: 2, 1, 512>}, {pipeline_mode = #tpu.pipeline_mode<synchronous>, transform_indices = @transform_8, window_bounds = array<i64: 2, 512, 256>}, {pipeline_mode = #tpu.pipeline_mode<synchronous>, transform_indices = @transform_9, window_bounds = array<i64: 2, 1, 256>}, {pipeline_mode = #tpu.pipeline_mode<synchronous>, transform_indices = @transform_10, window_bounds = array<i64: 2, 256, 256>}, {pipeline_mode = #tpu.pipeline_mode<synchronous>, transform_indices = @transform_11, window_bounds = array<i64: 2, 1, 256>}, {pipeline_mode = #tpu.pipeline_mode<synchronous>, transform_indices = @transform_12, window_bounds = array<i64: 2, 256, 256>}, {pipeline_mode = #tpu.pipeline_mode<synchronous>, transform_indices = @transform_13, window_bounds = array<i64: 2, 1, 256>}, {pipeline_mode = #tpu.pipeline_mode<synchronous>, transform_indices = @transform_14, window_bounds = array<i64: 2, 1, 256>}, {pipeline_mode = #tpu.pipeline_mode<synchronous>, transform_indices = @transform_15, window_bounds = array<i64: 2, 1, 256>}, {pipeline_mode = #tpu.pipeline_mode<synchronous>, transform_indices = @transform_16, window_bounds = array<i64: 2, 1, 256>}, {pipeline_mode = #tpu.pipeline_mode<synchronous>, transform_indices = @transform_17, window_bounds = array<i64: 2, 1, 256>}, {transform_indices = @transform_18, window_bounds = array<i64: 16, 8, 256>}]} {
    %c0_i32 = arith.constant 0 : i32
    %0 = arith.cmpi eq, %arg1, %c0_i32 : i32
    %1 = arith.extui %0 : i1 to i32
    %c0_i32_0 = arith.constant 0 : i32
    %2 = arith.cmpi ne, %1, %c0_i32_0 : i32
    scf.if %2 {
      %c0_69 = arith.constant 0 : index
      %c0_70 = arith.constant 0 : index
      %c0_71 = arith.constant 0 : index
      %186 = vector.load %arg2[%c0_69, %c0_70, %c0_71] : memref<16x8x256xf32, #tpu.memory_space<vmem>>, vector<16x8x256xf32>
      %c0_72 = arith.constant 0 : index
      %c0_73 = arith.constant 0 : index
      %c0_74 = arith.constant 0 : index
      %187 = vector.load %arg20[%c0_72, %c0_73, %c0_74] : memref<16x8x256xf32, #tpu.memory_space<vmem>>, vector<16x8x256xf32>
      tpu.vector_store %arg20[%c0_72, %c0_73, %c0_74], %186 {strides = array<i32>} : memref<16x8x256xf32, #tpu.memory_space<vmem>>, vector<16x8x256xf32>,
    } else {
    }
    %c0 = arith.constant 0 : index
    %c0_1 = arith.constant 0 : index
    %c0_2 = arith.constant 0 : index
    %3 = vector.load %arg20[%c0, %c0_1, %c0_2] : memref<16x8x256xf32, #tpu.memory_space<vmem>>, vector<16x8x256xf32>
    %4 = vector.shape_cast %3 : vector<16x8x256xf32> to vector<128x256xf32>
    %5 = arith.truncf %4 : vector<128x256xf32> to vector<128x256xbf16>
    %6 = arith.index_cast %arg1 : i32 to index
    %c0_3 = arith.constant 0 : index
    %c0_4 = arith.constant 0 : index
    %7 = vector.load %arg4[%6, %c0_3, %c0_4] : memref<2x256x512xbf16, #tpu.memory_space<vmem>>, vector<1x256x512xbf16>
    %8 = vector.shape_cast %7 : vector<1x256x512xbf16> to vector<256x512xbf16>
    %cst = arith.constant dense<0.000000e+00> : vector<128x512xf32>
    %9 = tpu.matmul %5, %8, %cst {dimension_numbers = #tpu.dot_dimension_numbers<[1], [0], [0], [1], [0, 0, 1, 1], [], []>} : vector<128x256xbf16>, vector<256x512xbf16>, vector<128x512xf32> -> vector<128x512xf32>
    %10 = arith.index_cast %arg1 : i32 to index
    %c0_5 = arith.constant 0 : index
    %c0_6 = arith.constant 0 : index
    %11 = vector.load %arg5[%10, %c0_5, %c0_6] : memref<2x1x512xf32, #tpu.memory_space<vmem>>, vector<1x1x512xf32>
    %12 = vector.shape_cast %11 : vector<1x1x512xf32> to vector<1x512xf32>
    %13 = vector.broadcast %12 : vector<1x512xf32> to vector<128x512xf32>
    %14 = arith.addf %9, %13 : vector<128x512xf32>
    %15 = vector.shape_cast %14 : vector<128x512xf32> to vector<16x8x512xf32>
    %16 = arith.index_cast %arg1 : i32 to index
    %c0_7 = arith.constant 0 : index
    %c0_8 = arith.constant 0 : index
    %17 = vector.load %arg6[%16, %c0_7, %c0_8] : memref<2x256x512xbf16, #tpu.memory_space<vmem>>, vector<1x256x512xbf16>
    %18 = vector.shape_cast %17 : vector<1x256x512xbf16> to vector<256x512xbf16>
    %cst_9 = arith.constant dense<0.000000e+00> : vector<128x512xf32>
    %19 = tpu.matmul %5, %18, %cst_9 {dimension_numbers = #tpu.dot_dimension_numbers<[1], [0], [0], [1], [0, 0, 1, 1], [], []>} : vector<128x256xbf16>, vector<256x512xbf16>, vector<128x512xf32> -> vector<128x512xf32>
    %20 = arith.index_cast %arg1 : i32 to index
    %c0_10 = arith.constant 0 : index
    %c0_11 = arith.constant 0 : index
    %21 = vector.load %arg7[%20, %c0_10, %c0_11] : memref<2x1x512xf32, #tpu.memory_space<vmem>>, vector<1x1x512xf32>
    %22 = vector.shape_cast %21 : vector<1x1x512xf32> to vector<1x512xf32>
    %23 = vector.broadcast %22 : vector<1x512xf32> to vector<128x512xf32>
    %24 = arith.addf %19, %23 : vector<128x512xf32>
    %25 = vector.shape_cast %24 : vector<128x512xf32> to vector<16x8x512xf32>
    %26 = arith.index_cast %arg1 : i32 to index
    %c0_12 = arith.constant 0 : index
    %c0_13 = arith.constant 0 : index
    %27 = vector.load %arg8[%26, %c0_12, %c0_13] : memref<2x256x512xbf16, #tpu.memory_space<vmem>>, vector<1x256x512xbf16>
    %28 = vector.shape_cast %27 : vector<1x256x512xbf16> to vector<256x512xbf16>
    %cst_14 = arith.constant dense<0.000000e+00> : vector<128x512xf32>
    %29 = tpu.matmul %5, %28, %cst_14 {dimension_numbers = #tpu.dot_dimension_numbers<[1], [0], [0], [1], [0, 0, 1, 1], [], []>} : vector<128x256xbf16>, vector<256x512xbf16>, vector<128x512xf32> -> vector<128x512xf32>
    %30 = arith.index_cast %arg1 : i32 to index
    %c0_15 = arith.constant 0 : index
    %c0_16 = arith.constant 0 : index
    %31 = vector.load %arg9[%30, %c0_15, %c0_16] : memref<2x1x512xf32, #tpu.memory_space<vmem>>, vector<1x1x512xf32>
    %32 = vector.shape_cast %31 : vector<1x1x512xf32> to vector<1x512xf32>
    %33 = vector.broadcast %32 : vector<1x512xf32> to vector<128x512xf32>
    %34 = arith.addf %29, %33 : vector<128x512xf32>
    %35 = vector.shape_cast %34 : vector<128x512xf32> to vector<16x8x512xf32>
    %36 = arith.truncf %15 : vector<16x8x512xf32> to vector<16x8x512xbf16>
    %37 = arith.truncf %25 : vector<16x8x512xf32> to vector<16x8x512xbf16>
    %38 = arith.truncf %35 : vector<16x8x512xf32> to vector<16x8x512xbf16>
    %c0_17 = arith.constant 0 : index
    %c0_18 = arith.constant 0 : index
    %39 = vector.load %arg3[%c0_17, %c0_18] : memref<16x8xf32, #tpu.memory_space<vmem>>, vector<16x8xf32>
    %40 = vector.shape_cast %39 : vector<16x8xf32> to vector<16x1x8xf32>
    %cst_19 = arith.constant 0.000000e+00 : f32
    %41 = vector.broadcast %cst_19 : f32 to vector<128x256xf32>
    %42 = vector.extract_strided_slice %36 {offsets = [0, 0, 0], sizes = [16, 8, 256], strides = [1, 1, 1]} : vector<16x8x512xbf16> to vector<16x8x256xbf16>
    %43 = vector.extract_strided_slice %37 {offsets = [0, 0, 0], sizes = [16, 8, 256], strides = [1, 1, 1]} : vector<16x8x512xbf16> to vector<16x8x256xbf16>
    %44 = vector.extract_strided_slice %38 {offsets = [0, 0, 0], sizes = [16, 8, 256], strides = [1, 1, 1]} : vector<16x8x512xbf16> to vector<16x8x256xbf16>
    "tpu.trace_start"() <{level = 10 : i32, message = "bqe,bke->bqk"}> : () -> ()
    %cst_20 = arith.constant dense<0.000000e+00> : vector<16x8x8xf32>
    %45 = tpu.matmul %42, %43, %cst_20 {dimension_numbers = #tpu.dot_dimension_numbers<[2], [2], [1], [1], [0, 0, 0, 1, 1, 1], [0], [0]>} : vector<16x8x256xbf16>, vector<16x8x256xbf16>, vector<16x8x8xf32> -> vector<16x8x8xf32>
    "tpu.trace_stop"() : () -> ()
    %46 = vector.broadcast %40 : vector<16x1x8xf32> to vector<16x8x8xf32>
    %47 = arith.addf %45, %46 : vector<16x8x8xf32>
    %cst_21 = arith.constant dense<0xFF800000> : vector<16x8xf32>
    %48 = vector.multi_reduction <maximumf>, %47, %cst_21 [2] : vector<16x8x8xf32> to vector<16x8xf32>
    %49 = vector.shape_cast %48 : vector<16x8xf32> to vector<16x8x1xf32>
    %50 = vector.broadcast %49 : vector<16x8x1xf32> to vector<16x8x8xf32>
    %51 = arith.subf %47, %50 : vector<16x8x8xf32>
    %52 = math.exp %51 : vector<16x8x8xf32>
    %cst_22 = arith.constant dense<0.000000e+00> : vector<16x8xf32>
    %53 = vector.multi_reduction <add>, %52, %cst_22 [2] : vector<16x8x8xf32> to vector<16x8xf32>
    %54 = vector.shape_cast %53 : vector<16x8xf32> to vector<16x8x1xf32>
    %55 = tpu.reciprocal %54 {approx = true} : vector<16x8x1xf32> -> vector<16x8x1xf32>
    %56 = vector.broadcast %55 : vector<16x8x1xf32> to vector<16x8x8xf32>
    %57 = arith.mulf %52, %56 : vector<16x8x8xf32>
    %58 = arith.truncf %57 : vector<16x8x8xf32> to vector<16x8x8xbf16>
    "tpu.trace_start"() <{level = 10 : i32, message = "bqk,bke->bqe"}> : () -> ()
    %cst_23 = arith.constant dense<0.000000e+00> : vector<16x8x256xf32>
    %59 = tpu.matmul %58, %44, %cst_23 {dimension_numbers = #tpu.dot_dimension_numbers<[2], [1], [1], [2], [0, 0, 0, 1, 1, 2], [0], [0]>} : vector<16x8x8xbf16>, vector<16x8x256xbf16>, vector<16x8x256xf32> -> vector<16x8x256xf32>
    "tpu.trace_stop"() : () -> ()
    %60 = vector.shape_cast %59 : vector<16x8x256xf32> to vector<128x256xf32>
    %61 = arith.truncf %60 : vector<128x256xf32> to vector<128x256xbf16>
    %62 = arith.index_cast %arg1 : i32 to index
    %c0_24 = arith.constant 0 : index
    %c0_25 = arith.constant 0 : index
    %63 = vector.load %arg10[%62, %c0_24, %c0_25] : memref<2x512x256xbf16, #tpu.memory_space<vmem>>, vector<1x256x256xbf16>
    %64 = vector.shape_cast %63 : vector<1x256x256xbf16> to vector<256x256xbf16>
    %cst_26 = arith.constant dense<0.000000e+00> : vector<128x256xf32>
    %65 = tpu.matmul %61, %64, %cst_26 {dimension_numbers = #tpu.dot_dimension_numbers<[1], [0], [0], [1], [0, 0, 1, 1], [], []>} : vector<128x256xbf16>, vector<256x256xbf16>, vector<128x256xf32> -> vector<128x256xf32>
    %66 = arith.addf %41, %65 : vector<128x256xf32>
    %67 = vector.extract_strided_slice %36 {offsets = [0, 0, 256], sizes = [16, 8, 256], strides = [1, 1, 1]} : vector<16x8x512xbf16> to vector<16x8x256xbf16>
    %68 = vector.extract_strided_slice %37 {offsets = [0, 0, 256], sizes = [16, 8, 256], strides = [1, 1, 1]} : vector<16x8x512xbf16> to vector<16x8x256xbf16>
    %69 = vector.extract_strided_slice %38 {offsets = [0, 0, 256], sizes = [16, 8, 256], strides = [1, 1, 1]} : vector<16x8x512xbf16> to vector<16x8x256xbf16>
    "tpu.trace_start"() <{level = 10 : i32, message = "bqe,bke->bqk"}> : () -> ()
    %cst_27 = arith.constant dense<0.000000e+00> : vector<16x8x8xf32>
    %70 = tpu.matmul %67, %68, %cst_27 {dimension_numbers = #tpu.dot_dimension_numbers<[2], [2], [1], [1], [0, 0, 0, 1, 1, 1], [0], [0]>} : vector<16x8x256xbf16>, vector<16x8x256xbf16>, vector<16x8x8xf32> -> vector<16x8x8xf32>
    "tpu.trace_stop"() : () -> ()
    %71 = vector.broadcast %40 : vector<16x1x8xf32> to vector<16x8x8xf32>
    %72 = arith.addf %70, %71 : vector<16x8x8xf32>
    %cst_28 = arith.constant dense<0xFF800000> : vector<16x8xf32>
    %73 = vector.multi_reduction <maximumf>, %72, %cst_28 [2] : vector<16x8x8xf32> to vector<16x8xf32>
    %74 = vector.shape_cast %73 : vector<16x8xf32> to vector<16x8x1xf32>
    %75 = vector.broadcast %74 : vector<16x8x1xf32> to vector<16x8x8xf32>
    %76 = arith.subf %72, %75 : vector<16x8x8xf32>
    %77 = math.exp %76 : vector<16x8x8xf32>
    %cst_29 = arith.constant dense<0.000000e+00> : vector<16x8xf32>
    %78 = vector.multi_reduction <add>, %77, %cst_29 [2] : vector<16x8x8xf32> to vector<16x8xf32>
    %79 = vector.shape_cast %78 : vector<16x8xf32> to vector<16x8x1xf32>
    %80 = tpu.reciprocal %79 {approx = true} : vector<16x8x1xf32> -> vector<16x8x1xf32>
    %81 = vector.broadcast %80 : vector<16x8x1xf32> to vector<16x8x8xf32>
    %82 = arith.mulf %77, %81 : vector<16x8x8xf32>
    %83 = arith.truncf %82 : vector<16x8x8xf32> to vector<16x8x8xbf16>
    "tpu.trace_start"() <{level = 10 : i32, message = "bqk,bke->bqe"}> : () -> ()
    %cst_30 = arith.constant dense<0.000000e+00> : vector<16x8x256xf32>
    %84 = tpu.matmul %83, %69, %cst_30 {dimension_numbers = #tpu.dot_dimension_numbers<[2], [1], [1], [2], [0, 0, 0, 1, 1, 2], [0], [0]>} : vector<16x8x8xbf16>, vector<16x8x256xbf16>, vector<16x8x256xf32> -> vector<16x8x256xf32>
    "tpu.trace_stop"() : () -> ()
    %85 = vector.shape_cast %84 : vector<16x8x256xf32> to vector<128x256xf32>
    %86 = arith.truncf %85 : vector<128x256xf32> to vector<128x256xbf16>
    %87 = arith.index_cast %arg1 : i32 to index
    %c256 = arith.constant 256 : index
    %c0_31 = arith.constant 0 : index
    %88 = vector.load %arg10[%87, %c256, %c0_31] : memref<2x512x256xbf16, #tpu.memory_space<vmem>>, vector<1x256x256xbf16>
    %89 = vector.shape_cast %88 : vector<1x256x256xbf16> to vector<256x256xbf16>
    %cst_32 = arith.constant dense<0.000000e+00> : vector<128x256xf32>
    %90 = tpu.matmul %86, %89, %cst_32 {dimension_numbers = #tpu.dot_dimension_numbers<[1], [0], [0], [1], [0, 0, 1, 1], [], []>} : vector<128x256xbf16>, vector<256x256xbf16>, vector<128x256xf32> -> vector<128x256xf32>
    %91 = arith.addf %66, %90 : vector<128x256xf32>
    %92 = arith.index_cast %arg1 : i32 to index
    %c0_33 = arith.constant 0 : index
    %c0_34 = arith.constant 0 : index
    %93 = vector.load %arg11[%92, %c0_33, %c0_34] : memref<2x1x256xf32, #tpu.memory_space<vmem>>, vector<1x1x256xf32>
    %94 = vector.shape_cast %93 : vector<1x1x256xf32> to vector<1x256xf32>
    %95 = vector.broadcast %94 : vector<1x256xf32> to vector<128x256xf32>
    %96 = arith.addf %91, %95 : vector<128x256xf32>
    %97 = tpu.iota {dimensions = array<i32: 1>} : vector<1x256xi32>
    %c200_i32 = arith.constant 200 : i32
    %98 = vector.broadcast %c200_i32 : i32 to vector<1x256xi32>
    %99 = arith.cmpi slt, %97, %98 : vector<1x256xi32>
    %100 = arith.addf %96, %4 : vector<128x256xf32>
    %101 = arith.index_cast %arg1 : i32 to index
    %c0_35 = arith.constant 0 : index
    %c0_36 = arith.constant 0 : index
    %102 = vector.load %arg16[%101, %c0_35, %c0_36] : memref<2x1x256xf32, #tpu.memory_space<vmem>>, vector<1x1x256xf32>
    %103 = vector.shape_cast %102 : vector<1x1x256xf32> to vector<1x256xf32>
    %104 = arith.index_cast %arg1 : i32 to index
    %c0_37 = arith.constant 0 : index
    %c0_38 = arith.constant 0 : index
    %105 = vector.load %arg17[%104, %c0_37, %c0_38] : memref<2x1x256xf32, #tpu.memory_space<vmem>>, vector<1x1x256xf32>
    %106 = vector.shape_cast %105 : vector<1x1x256xf32> to vector<1x256xf32>
    %cst_39 = arith.constant dense<0.000000e+00> : vector<128xf32>
    %107 = vector.multi_reduction <add>, %100, %cst_39 [1] : vector<128x256xf32> to vector<128xf32>
    %108 = vector.shape_cast %107 : vector<128xf32> to vector<128x1xf32>
    %cst_40 = arith.constant 5.000000e-03 : f32
    %109 = vector.broadcast %cst_40 : f32 to vector<128x1xf32>
    %110 = arith.mulf %108, %109 : vector<128x1xf32>
    %111 = vector.broadcast %110 : vector<128x1xf32> to vector<128x256xf32>
    %112 = arith.subf %100, %111 : vector<128x256xf32>
    %cst_41 = arith.constant 0.000000e+00 : f32
    %113 = vector.shape_cast %99 : vector<1x256xi1> to vector<1x256xi1>
    %114 = vector.broadcast %113 : vector<1x256xi1> to vector<128x256xi1>
    %115 = vector.broadcast %cst_41 : f32 to vector<128x256xf32>
    %116 = arith.select %114, %112, %115 : vector<128x256xi1>, vector<128x256xf32>
    %117 = arith.mulf %116, %116 : vector<128x256xf32>
    %cst_42 = arith.constant dense<0.000000e+00> : vector<128xf32>
    %118 = vector.multi_reduction <add>, %117, %cst_42 [1] : vector<128x256xf32> to vector<128xf32>
    %119 = vector.shape_cast %118 : vector<128xf32> to vector<128x1xf32>
    %cst_43 = arith.constant 5.000000e-03 : f32
    %120 = vector.broadcast %cst_43 : f32 to vector<128x1xf32>
    %121 = arith.mulf %119, %120 : vector<128x1xf32>
    %cst_44 = arith.constant 9.99999974E-6 : f32
    %122 = vector.broadcast %cst_44 : f32 to vector<128x1xf32>
    %123 = arith.addf %121, %122 : vector<128x1xf32>
    %124 = math.rsqrt %123 : vector<128x1xf32>
    %125 = vector.broadcast %124 : vector<128x1xf32> to vector<128x256xf32>
    %126 = arith.mulf %116, %125 : vector<128x256xf32>
    %127 = vector.broadcast %103 : vector<1x256xf32> to vector<128x256xf32>
    %128 = arith.mulf %126, %127 : vector<128x256xf32>
    %129 = vector.broadcast %106 : vector<1x256xf32> to vector<128x256xf32>
    %130 = arith.addf %128, %129 : vector<128x256xf32>
    %131 = arith.truncf %130 : vector<128x256xf32> to vector<128x256xbf16>
    %132 = arith.index_cast %arg1 : i32 to index
    %c0_45 = arith.constant 0 : index
    %c0_46 = arith.constant 0 : index
    %133 = vector.load %arg12[%132, %c0_45, %c0_46] : memref<2x256x256xbf16, #tpu.memory_space<vmem>>, vector<1x256x256xbf16>
    %134 = vector.shape_cast %133 : vector<1x256x256xbf16> to vector<256x256xbf16>
    %cst_47 = arith.constant dense<0.000000e+00> : vector<128x256xf32>
    %135 = tpu.matmul %131, %134, %cst_47 {dimension_numbers = #tpu.dot_dimension_numbers<[1], [0], [0], [1], [0, 0, 1, 1], [], []>} : vector<128x256xbf16>, vector<256x256xbf16>, vector<128x256xf32> -> vector<128x256xf32>
    %136 = arith.index_cast %arg1 : i32 to index
    %c0_48 = arith.constant 0 : index
    %c0_49 = arith.constant 0 : index
    %137 = vector.load %arg13[%136, %c0_48, %c0_49] : memref<2x1x256xf32, #tpu.memory_space<vmem>>, vector<1x1x256xf32>
    %138 = vector.shape_cast %137 : vector<1x1x256xf32> to vector<1x256xf32>
    %139 = vector.broadcast %138 : vector<1x256xf32> to vector<128x256xf32>
    %140 = arith.addf %135, %139 : vector<128x256xf32>
    %cst_50 = arith.constant 0.000000e+00 : f32
    %141 = vector.broadcast %cst_50 : f32 to vector<128x256xf32>
    %142 = arith.maximumf %140, %141 : vector<128x256xf32>
    %143 = arith.truncf %142 : vector<128x256xf32> to vector<128x256xbf16>
    %144 = arith.index_cast %arg1 : i32 to index
    %c0_51 = arith.constant 0 : index
    %c0_52 = arith.constant 0 : index
    %145 = vector.load %arg14[%144, %c0_51, %c0_52] : memref<2x256x256xbf16, #tpu.memory_space<vmem>>, vector<1x256x256xbf16>
    %146 = vector.shape_cast %145 : vector<1x256x256xbf16> to vector<256x256xbf16>
    %cst_53 = arith.constant dense<0.000000e+00> : vector<128x256xf32>
    %147 = tpu.matmul %143, %146, %cst_53 {dimension_numbers = #tpu.dot_dimension_numbers<[1], [0], [0], [1], [0, 0, 1, 1], [], []>} : vector<128x256xbf16>, vector<256x256xbf16>, vector<128x256xf32> -> vector<128x256xf32>
    %148 = arith.index_cast %arg1 : i32 to index
    %c0_54 = arith.constant 0 : index
    %c0_55 = arith.constant 0 : index
    %149 = vector.load %arg15[%148, %c0_54, %c0_55] : memref<2x1x256xf32, #tpu.memory_space<vmem>>, vector<1x1x256xf32>
    %150 = vector.shape_cast %149 : vector<1x1x256xf32> to vector<1x256xf32>
    %151 = vector.broadcast %150 : vector<1x256xf32> to vector<128x256xf32>
    %152 = arith.addf %147, %151 : vector<128x256xf32>
    %153 = arith.addf %152, %130 : vector<128x256xf32>
    %154 = arith.index_cast %arg1 : i32 to index
    %c0_56 = arith.constant 0 : index
    %c0_57 = arith.constant 0 : index
    %155 = vector.load %arg18[%154, %c0_56, %c0_57] : memref<2x1x256xf32, #tpu.memory_space<vmem>>, vector<1x1x256xf32>
    %156 = vector.shape_cast %155 : vector<1x1x256xf32> to vector<1x256xf32>
    %157 = arith.index_cast %arg1 : i32 to index
    %c0_58 = arith.constant 0 : index
    %c0_59 = arith.constant 0 : index
    %158 = vector.load %arg19[%157, %c0_58, %c0_59] : memref<2x1x256xf32, #tpu.memory_space<vmem>>, vector<1x1x256xf32>
    %159 = vector.shape_cast %158 : vector<1x1x256xf32> to vector<1x256xf32>
    %cst_60 = arith.constant dense<0.000000e+00> : vector<128xf32>
    %160 = vector.multi_reduction <add>, %153, %cst_60 [1] : vector<128x256xf32> to vector<128xf32>
    %161 = vector.shape_cast %160 : vector<128xf32> to vector<128x1xf32>
    %cst_61 = arith.constant 5.000000e-03 : f32
    %162 = vector.broadcast %cst_61 : f32 to vector<128x1xf32>
    %163 = arith.mulf %161, %162 : vector<128x1xf32>
    %164 = vector.broadcast %163 : vector<128x1xf32> to vector<128x256xf32>
    %165 = arith.subf %153, %164 : vector<128x256xf32>
    %cst_62 = arith.constant 0.000000e+00 : f32
    %166 = vector.shape_cast %99 : vector<1x256xi1> to vector<1x256xi1>
    %167 = vector.broadcast %166 : vector<1x256xi1> to vector<128x256xi1>
    %168 = vector.broadcast %cst_62 : f32 to vector<128x256xf32>
    %169 = arith.select %167, %165, %168 : vector<128x256xi1>, vector<128x256xf32>
    %170 = arith.mulf %169, %169 : vector<128x256xf32>
    %cst_63 = arith.constant dense<0.000000e+00> : vector<128xf32>
    %171 = vector.multi_reduction <add>, %170, %cst_63 [1] : vector<128x256xf32> to vector<128xf32>
    %172 = vector.shape_cast %171 : vector<128xf32> to vector<128x1xf32>
    %cst_64 = arith.constant 5.000000e-03 : f32
    %173 = vector.broadcast %cst_64 : f32 to vector<128x1xf32>
    %174 = arith.mulf %172, %173 : vector<128x1xf32>
    %cst_65 = arith.constant 9.99999974E-6 : f32
    %175 = vector.broadcast %cst_65 : f32 to vector<128x1xf32>
    %176 = arith.addf %174, %175 : vector<128x1xf32>
    %177 = math.rsqrt %176 : vector<128x1xf32>
    %178 = vector.broadcast %177 : vector<128x1xf32> to vector<128x256xf32>
    %179 = arith.mulf %169, %178 : vector<128x256xf32>
    %180 = vector.broadcast %156 : vector<1x256xf32> to vector<128x256xf32>
    %181 = arith.mulf %179, %180 : vector<128x256xf32>
    %182 = vector.broadcast %159 : vector<1x256xf32> to vector<128x256xf32>
    %183 = arith.addf %181, %182 : vector<128x256xf32>
    %184 = vector.shape_cast %183 : vector<128x256xf32> to vector<16x8x256xf32>
    %c0_66 = arith.constant 0 : index
    %c0_67 = arith.constant 0 : index
    %c0_68 = arith.constant 0 : index
    %185 = vector.load %arg20[%c0_66, %c0_67, %c0_68] : memref<16x8x256xf32, #tpu.memory_space<vmem>>, vector<16x8x256xf32>
    tpu.vector_store %arg20[%c0_66, %c0_67, %c0_68], %184 {strides = array<i32>} : memref<16x8x256xf32, #tpu.memory_space<vmem>>, vector<16x8x256xf32>,
    return
  }
  func.func @transform_0(%arg0: i32, %arg1: i32) -> (i32, i32, i32) {
    %c0_i32 = arith.constant 0 : i32
    %c0_i32_0 = arith.constant 0 : i32
    %c0_i32_1 = arith.constant 0 : i32
    return %arg0, %c0_i32, %c0_i32_0 : i32, i32, i32
  }
  func.func @transform_1(%arg0: i32, %arg1: i32) -> (i32, i32) {
    %c0_i32 = arith.constant 0 : i32
    %c0_i32_0 = arith.constant 0 : i32
    return %arg0, %c0_i32 : i32, i32
  }
  func.func @transform_2(%arg0: i32, %arg1: i32) -> (i32, i32, i32) {
    %c0_i32 = arith.constant 0 : i32
    %c0_i32_0 = arith.constant 0 : i32
    %c0_i32_1 = arith.constant 0 : i32
    %c0_i32_2 = arith.constant 0 : i32
    return %c0_i32, %c0_i32_0, %c0_i32_1 : i32, i32, i32
  }
  func.func @transform_3(%arg0: i32, %arg1: i32) -> (i32, i32, i32) {
    %c0_i32 = arith.constant 0 : i32
    %c0_i32_0 = arith.constant 0 : i32
    %c0_i32_1 = arith.constant 0 : i32
    %c0_i32_2 = arith.constant 0 : i32
    return %c0_i32, %c0_i32_0, %c0_i32_1 : i32, i32, i32
  }
  func.func @transform_4(%arg0: i32, %arg1: i32) -> (i32, i32, i32) {
    %c0_i32 = arith.constant 0 : i32
    %c0_i32_0 = arith.constant 0 : i32
    %c0_i32_1 = arith.constant 0 : i32
    %c0_i32_2 = arith.constant 0 : i32
    return %c0_i32, %c0_i32_0, %c0_i32_1 : i32, i32, i32
  }
  func.func @transform_5(%arg0: i32, %arg1: i32) -> (i32, i32, i32) {
    %c0_i32 = arith.constant 0 : i32
    %c0_i32_0 = arith.constant 0 : i32
    %c0_i32_1 = arith.constant 0 : i32
    %c0_i32_2 = arith.constant 0 : i32
    return %c0_i32, %c0_i32_0, %c0_i32_1 : i32, i32, i32
  }
  func.func @transform_6(%arg0: i32, %arg1: i32) -> (i32, i32, i32) {
    %c0_i32 = arith.constant 0 : i32
    %c0_i32_0 = arith.constant 0 : i32
    %c0_i32_1 = arith.constant 0 : i32
    %c0_i32_2 = arith.constant 0 : i32
    return %c0_i32, %c0_i32_0, %c0_i32_1 : i32, i32, i32
  }
  func.func @transform_7(%arg0: i32, %arg1: i32) -> (i32, i32, i32) {
    %c0_i32 = arith.constant 0 : i32
    %c0_i32_0 = arith.constant 0 : i32
    %c0_i32_1 = arith.constant 0 : i32
    %c0_i32_2 = arith.constant 0 : i32
    return %c0_i32, %c0_i32_0, %c0_i32_1 : i32, i32, i32
  }
  func.func @transform_8(%arg0: i32, %arg1: i32) -> (i32, i32, i32) {
    %c0_i32 = arith.constant 0 : i32
    %c0_i32_0 = arith.constant 0 : i32
    %c0_i32_1 = arith.constant 0 : i32
    %c0_i32_2 = arith.constant 0 : i32
    return %c0_i32, %c0_i32_0, %c0_i32_1 : i32, i32, i32
  }
  func.func @transform_9(%arg0: i32, %arg1: i32) -> (i32, i32, i32) {
    %c0_i32 = arith.constant 0 : i32
    %c0_i32_0 = arith.constant 0 : i32
    %c0_i32_1 = arith.constant 0 : i32
    %c0_i32_2 = arith.constant 0 : i32
    return %c0_i32, %c0_i32_0, %c0_i32_1 : i32, i32, i32
  }
  func.func @transform_10(%arg0: i32, %arg1: i32) -> (i32, i32, i32) {
    %c0_i32 = arith.constant 0 : i32
    %c0_i32_0 = arith.constant 0 : i32
    %c0_i32_1 = arith.constant 0 : i32
    %c0_i32_2 = arith.constant 0 : i32
    return %c0_i32, %c0_i32_0, %c0_i32_1 : i32, i32, i32
  }
  func.func @transform_11(%arg0: i32, %arg1: i32) -> (i32, i32, i32) {
    %c0_i32 = arith.constant 0 : i32
    %c0_i32_0 = arith.constant 0 : i32
    %c0_i32_1 = arith.constant 0 : i32
    %c0_i32_2 = arith.constant 0 : i32
    return %c0_i32, %c0_i32_0, %c0_i32_1 : i32, i32, i32
  }
  func.func @transform_12(%arg0: i32, %arg1: i32) -> (i32, i32, i32) {
    %c0_i32 = arith.constant 0 : i32
    %c0_i32_0 = arith.constant 0 : i32
    %c0_i32_1 = arith.constant 0 : i32
    %c0_i32_2 = arith.constant 0 : i32
    return %c0_i32, %c0_i32_0, %c0_i32_1 : i32, i32, i32
  }
  func.func @transform_13(%arg0: i32, %arg1: i32) -> (i32, i32, i32) {
    %c0_i32 = arith.constant 0 : i32
    %c0_i32_0 = arith.constant 0 : i32
    %c0_i32_1 = arith.constant 0 : i32
    %c0_i32_2 = arith.constant 0 : i32
    return %c0_i32, %c0_i32_0, %c0_i32_1 : i32, i32, i32
  }
  func.func @transform_14(%arg0: i32, %arg1: i32) -> (i32, i32, i32) {
    %c0_i32 = arith.constant 0 : i32
    %c0_i32_0 = arith.constant 0 : i32
    %c0_i32_1 = arith.constant 0 : i32
    %c0_i32_2 = arith.constant 0 : i32
    return %c0_i32, %c0_i32_0, %c0_i32_1 : i32, i32, i32
  }
  func.func @transform_15(%arg0: i32, %arg1: i32) -> (i32, i32, i32) {
    %c0_i32 = arith.constant 0 : i32
    %c0_i32_0 = arith.constant 0 : i32
    %c0_i32_1 = arith.constant 0 : i32
    %c0_i32_2 = arith.constant 0 : i32
    return %c0_i32, %c0_i32_0, %c0_i32_1 : i32, i32, i32
  }
  func.func @transform_16(%arg0: i32, %arg1: i32) -> (i32, i32, i32) {
    %c0_i32 = arith.constant 0 : i32
    %c0_i32_0 = arith.constant 0 : i32
    %c0_i32_1 = arith.constant 0 : i32
    %c0_i32_2 = arith.constant 0 : i32
    return %c0_i32, %c0_i32_0, %c0_i32_1 : i32, i32, i32
  }
  func.func @transform_17(%arg0: i32, %arg1: i32) -> (i32, i32, i32) {
    %c0_i32 = arith.constant 0 : i32
    %c0_i32_0 = arith.constant 0 : i32
    %c0_i32_1 = arith.constant 0 : i32
    %c0_i32_2 = arith.constant 0 : i32
    return %c0_i32, %c0_i32_0, %c0_i32_1 : i32, i32, i32
  }
  func.func @transform_18(%arg0: i32, %arg1: i32) -> (i32, i32, i32) {
    %c0_i32 = arith.constant 0 : i32
    %c0_i32_0 = arith.constant 0 : i32
    %c0_i32_1 = arith.constant 0 : i32
    return %arg0, %c0_i32, %c0_i32_0 : i32, i32, i32
  }
}

</mosaic_0001>

<llo_original>
// kernel: tpu_custom_call.1
$region0: #{tpu_custom_call.1}
  #allocation0 [shape = 'u32[]', space=smem, size = 0x4, offset = 0x4, fixed_abs, tag = 'smem constant byte address 0x4 - core index']
  #allocation1 [shape = 'u32[144,128]{1,0:T(1,128)}', space=vmem, size = 0x12000, scoped, tag = 'internal scratch']
  %s0 = inlined_call_operand.hbm [shape: f32[32,8,256], index: 0, kind: input, shape index: {}]
  %s1 = inlined_call_operand.vmem [shape: f32[32,8], index: 1, kind: input, shape index: {}]
  %s2 = inlined_call_operand.hbm [shape: bf16[2,256,512], index: 2, kind: input, shape index: {}]
  %s3 = inlined_call_operand.vmem [shape: f32[2,1,512], index: 3, kind: input, shape index: {}]
  %s4 = inlined_call_operand.hbm [shape: bf16[2,256,512], index: 4, kind: input, shape index: {}]
  %s5 = inlined_call_operand.vmem [shape: f32[2,1,512], index: 5, kind: input, shape index: {}]
  %s6 = inlined_call_operand.hbm [shape: bf16[2,256,512], index: 6, kind: input, shape index: {}]
  %s7 = inlined_call_operand.vmem [shape: f32[2,1,512], index: 7, kind: input, shape index: {}]
  %s8 = inlined_call_operand.hbm [shape: bf16[2,512,256], index: 8, kind: input, shape index: {}]
  %s9 = inlined_call_operand.vmem [shape: f32[2,1,256], index: 9, kind: input, shape index: {}]
  %s10 = inlined_call_operand.hbm [shape: bf16[2,256,256], index: 10, kind: input, shape index: {}]
  %s11 = inlined_call_operand.vmem [shape: f32[2,1,256], index: 11, kind: input, shape index: {}]
  %s12 = inlined_call_operand.hbm [shape: bf16[2,256,256], index: 12, kind: input, shape index: {}]
  %s13 = inlined_call_operand.vmem [shape: f32[2,1,256], index: 13, kind: input, shape index: {}]
  %s14 = inlined_call_operand.vmem [shape: f32[2,1,256], index: 14, kind: input, shape index: {}]
  %s15 = inlined_call_operand.vmem [shape: f32[2,1,256], index: 15, kind: input, shape index: {}]
  %s16 = inlined_call_operand.vmem [shape: f32[2,1,256], index: 16, kind: input, shape index: {}]
  %s17 = inlined_call_operand.vmem [shape: f32[2,1,256], index: 17, kind: input, shape index: {}]
  %s18 = inlined_call_operand.hbm [shape: f32[32,8,256], index: 18, kind: output, shape index: {}]
  %s19 = sld [smem:[#allocation0]]
  $region137: #{tpu_custom_call.1} parent=0
    _
  %s21 = ssub.s32 1, %s19
  %s22 = scalar_select 0, %s21, %s19
  $region1: #{tpu_custom_call.1} parent=0
    #allocation2 [shape = 'u8[262144]{0}', space=vmem, size = 0x40000, scoped, tag = 'input window, operand 0']
    #allocation3 [shape = 's32[2]{0}', space=sflag, size = 0x8, scoped, tag = 'scoped memory for tpu_custom_call.1']
    #allocation4 [shape = 's32[2]{0}', space=sflag, size = 0x8, scoped, tag = 'scoped memory for tpu_custom_call.1']
    #allocation5 [shape = 'u8[524288]{0}', space=vmem, size = 0x80000, scoped, tag = 'input window, operand 2, single buffered']
    #allocation6 [shape = 's32[1]{0}', space=sflag, size = 0x4, scoped, tag = 'scoped memory for tpu_custom_call.1']
    #allocation7 [shape = 'u8[524288]{0}', space=vmem, size = 0x80000, scoped, tag = 'input window, operand 4, single buffered']
    #allocation8 [shape = 'u8[524288]{0}', space=vmem, size = 0x80000, scoped, tag = 'input window, operand 6, single buffered']
    #allocation9 [shape = 's32[1]{0}', space=sflag, size = 0x4, scoped, tag = 'scoped memory for tpu_custom_call.1']
    #allocation10 [shape = 'u8[524288]{0}', space=vmem, size = 0x80000, scoped, tag = 'input window, operand 8, single buffered']
    #allocation11 [shape = 'u8[262144]{0}', space=vmem, size = 0x40000, scoped, tag = 'input window, operand 10, single buffered']
    #allocation12 [shape = 's32[1]{0}', space=sflag, size = 0x4, scoped, tag = 'scoped memory for tpu_custom_call.1']
    #allocation13 [shape = 'u8[262144]{0}', space=vmem, size = 0x40000, scoped, tag = 'input window, operand 12, single buffered']
    #allocation14 [shape = 'u8[262144]{0}', space=vmem, size = 0x40000, scoped, tag = 'output window, operand 0']
    %23 = vsyncpa [#allocation3], 0
    %s24 = scalar_lea.sflag [#allocation3], 1
    %25 = vsyncpa %s24, 0
    %26 = vsyncpa [#allocation6], 0
    %27 = vsyncpa [#allocation9], 0
    %28 = vsyncpa [#allocation12], 0
    %29 = vsyncpa [#allocation4], 0
    %s30 = scalar_lea.sflag [#allocation4], 1
    %31 = vsyncpa %s30, 0
    loop: start=0, step=1, limit=6
    $region2: #{tpu_custom_call.1} parent=1 // loop_pre_header
      _
    $region3: #{tpu_custom_call.1} parent=1 // loop_header
      %s33 = sphi 0, %s37
      %p34 = scmp.ge.s32.totalorder %s33, 6
      %s40 = sphi 0, %s52
      %s41 = sphi 0, %s48
      %s42 = sphi 0, %s40
      %s43 = sphi 0, %s41
      %s44 = sphi 0, %s42
      %s45 = sphi 0, %s43
      %s55 = sphi 0, %s57
      %s58 = sphi 0, %s55
      %s59 = sphi 0, %s58
      %s75 = sphi 0, %s59
      %s81 = sphi 0, %s83
      %s84 = sphi 0, %s81
      %s85 = sphi 0, %s84
      %s101 = sphi 0, %s85
      %s105 = sphi 0, %s105
      %s107 = sphi 0, %s105
      %s108 = sphi 0, %s107
      %s122 = sphi 0, %s108
      %s126 = sphi 0, %s126
      %s128 = sphi 0, %s126
      %s129 = sphi 0, %s128
      %s143 = sphi 0, %s129
      %s147 = sphi 0, %s147
      %s149 = sphi 0, %s147
      %s150 = sphi 0, %s149
      %s164 = sphi 0, %s150
      %s168 = sphi 0, %s168
      %s170 = sphi 0, %s168
      %s171 = sphi 0, %s170
      %s185 = sphi 0, %s171
      %s189 = sphi 0, %s189
      %s191 = sphi 0, %s189
      %s192 = sphi 0, %s191
      %s206 = sphi 0, %s192
      %s210 = sphi 0, %s210
      %s212 = sphi 0, %s210
      %s213 = sphi 0, %s212
      %s227 = sphi 0, %s213
      %s231 = sphi 0, %s231
      %s233 = sphi 0, %s231
      %s234 = sphi 0, %s233
      %s248 = sphi 0, %s234
      %s252 = sphi 0, %s252
      %s254 = sphi 0, %s252
      %s255 = sphi 0, %s254
      %s269 = sphi 0, %s255
      %s273 = sphi 0, %s273
      %s275 = sphi 0, %s273
      %s276 = sphi 0, %s275
      %s290 = sphi 0, %s276
      %s294 = sphi 0, %s294
      %s296 = sphi 0, %s294
      %s297 = sphi 0, %s296
      %s311 = sphi 0, %s297
      %s315 = sphi 0, %s315
      %s317 = sphi 0, %s315
      %s318 = sphi 0, %s317
      %s332 = sphi 0, %s318
      %s336 = sphi 0, %s336
      %s338 = sphi 0, %s336
      %s339 = sphi 0, %s338
      %s353 = sphi 0, %s339
      %s357 = sphi 0, %s357
      %s359 = sphi 0, %s357
      %s360 = sphi 0, %s359
      %s374 = sphi 0, %s360
      %s378 = sphi 0, %s378
      %s380 = sphi 0, %s378
      %s381 = sphi 0, %s380
      %s395 = sphi 0, %s381
      %s399 = sphi 0, %s399
      %s401 = sphi 0, %s399
      %s402 = sphi 0, %s401
      %s416 = sphi 0, %s402
      %s420 = sphi 0, %s420
      %s422 = sphi 0, %s420
      %s423 = sphi 0, %s422
      %s437 = sphi 0, %s423
      %s443 = sphi 0, %s445
      %s446 = sphi 0, %s443
      %s447 = sphi 0, %s446
      %s463 = sphi 0, %s447
    $region4: #{tpu_custom_call.1} parent=1 // loop_header_branch
      %36 = sbr.rel (%p34) target = $region8
    $region5: #{tpu_custom_call.1} parent=1 // loop_body
      %s38 = ssub.s32 %s33, 1
      %s39 = ssub.s32 %s33, 2
      %s46 = sadd.s32 1, %s41
      %p47 = scmp.ge.s32.totalorder %s46, 2
      %s48 = scalar_select %p47, 0, %s46
      %s49 = sadd.s32 1, %s40
      %s50 = scalar_select %p47, %s49, %s40
      %p51 = scmp.ge.s32.totalorder %s50, 2
      %s52 = scalar_select %p51, 0, %s50
      %s53 = ssub.s32 %s40, %s52
      %p54 = scmp.eq.s32.totalorder %s53, 0
      %s56 = sadd.s32 %s55, 1
      %s57 = scalar_select %p54, %s55, %s56
      %p60 = pneg %p54
      %p61 = scmp.eq.s32.totalorder %s33, 3
      %p62 = por %p60, %p61
      %p63 = scmp.ne.s32.totalorder %s55, %s58
      %p64 = scmp.eq.s32.totalorder %s33, 0
      %p65 = por %p63, %p64
      %p66 = scmp.ne.s32.totalorder %s55, %s58
      %p67 = scmp.eq.s32.totalorder %s38, 3
      %p68 = por %p66, %p67
      %p69 = scmp.ne.s32.totalorder %s58, %s59
      %p70 = scmp.eq.s32.totalorder %s38, 0
      %p71 = por %p69, %p70
      %p72 = scmp.ne.s32.totalorder %s58, %s59
      %p73 = scmp.eq.s32.totalorder %s39, 3
      %p74 = por %p72, %p73
      %p76 = scmp.ne.s32.totalorder %s59, %s75
      %p77 = scmp.eq.s32.totalorder %s39, 0
      %p78 = por %p76, %p77
      %s79 = ssub.s32 %s40, %s52
      %p80 = scmp.eq.s32.totalorder %s79, 0
      %s82 = sadd.s32 %s81, 1
      %s83 = scalar_select %p80, %s81, %s82
      %p86 = pneg %p80
      %p87 = scmp.eq.s32.totalorder %s33, 3
      %p88 = por %p86, %p87
      %p89 = scmp.ne.s32.totalorder %s81, %s84
      %p90 = scmp.eq.s32.totalorder %s33, 0
      %p91 = por %p89, %p90
      %p92 = scmp.ne.s32.totalorder %s81, %s84
      %p93 = scmp.eq.s32.totalorder %s38, 3
      %p94 = por %p92, %p93
      %p95 = scmp.ne.s32.totalorder %s84, %s85
      %p96 = scmp.eq.s32.totalorder %s38, 0
      %p97 = por %p95, %p96
      %p98 = scmp.ne.s32.totalorder %s84, %s85
      %p99 = scmp.eq.s32.totalorder %s39, 3
      %p100 = por %p98, %p99
      %p102 = scmp.ne.s32.totalorder %s85, %s101
      %p103 = scmp.eq.s32.totalorder %s39, 0
      %p104 = por %p102, %p103
      %s106 = sadd.s32 %s105, 1
      %p109 = scmp.eq.s32.totalorder %s33, 3
      %p110 = scmp.ne.s32.totalorder %s105, %s107
      %p111 = scmp.eq.s32.totalorder %s33, 0
      %p112 = por %p110, %p111
      %p113 = scmp.ne.s32.totalorder %s105, %s107
      %p114 = scmp.eq.s32.totalorder %s38, 3
      %p115 = por %p113, %p114
      %p116 = scmp.ne.s32.totalorder %s107, %s108
      %p117 = scmp.eq.s32.totalorder %s38, 0
      %p118 = por %p116, %p117
      %p119 = scmp.ne.s32.totalorder %s107, %s108
      %p120 = scmp.eq.s32.totalorder %s39, 3
      %p121 = por %p119, %p120
      %p123 = scmp.ne.s32.totalorder %s108, %s122
      %p124 = scmp.eq.s32.totalorder %s39, 0
      %p125 = por %p123, %p124
      %s127 = sadd.s32 %s126, 1
      %p130 = scmp.eq.s32.totalorder %s33, 3
      %p131 = scmp.ne.s32.totalorder %s126, %s128
      %p132 = scmp.eq.s32.totalorder %s33, 0
      %p133 = por %p131, %p132
      %p134 = scmp.ne.s32.totalorder %s126, %s128
      %p135 = scmp.eq.s32.totalorder %s38, 3
      %p136 = por %p134, %p135
      %p137 = scmp.ne.s32.totalorder %s128, %s129
      %p138 = scmp.eq.s32.totalorder %s38, 0
      %p139 = por %p137, %p138
      %p140 = scmp.ne.s32.totalorder %s128, %s129
      %p141 = scmp.eq.s32.totalorder %s39, 3
      %p142 = por %p140, %p141
      %p144 = scmp.ne.s32.totalorder %s129, %s143
      %p145 = scmp.eq.s32.totalorder %s39, 0
      %p146 = por %p144, %p145
      %s148 = sadd.s32 %s147, 1
      %p151 = scmp.eq.s32.totalorder %s33, 3
      %p152 = scmp.ne.s32.totalorder %s147, %s149
      %p153 = scmp.eq.s32.totalorder %s33, 0
      %p154 = por %p152, %p153
      %p155 = scmp.ne.s32.totalorder %s147, %s149
      %p156 = scmp.eq.s32.totalorder %s38, 3
      %p157 = por %p155, %p156
      %p158 = scmp.ne.s32.totalorder %s149, %s150
      %p159 = scmp.eq.s32.totalorder %s38, 0
      %p160 = por %p158, %p159
      %p161 = scmp.ne.s32.totalorder %s149, %s150
      %p162 = scmp.eq.s32.totalorder %s39, 3
      %p163 = por %p161, %p162
      %p165 = scmp.ne.s32.totalorder %s150, %s164
      %p166 = scmp.eq.s32.totalorder %s39, 0
      %p167 = por %p165, %p166
      %s169 = sadd.s32 %s168, 1
      %p172 = scmp.eq.s32.totalorder %s33, 3
      %p173 = scmp.ne.s32.totalorder %s168, %s170
      %p174 = scmp.eq.s32.totalorder %s33, 0
      %p175 = por %p173, %p174
      %p176 = scmp.ne.s32.totalorder %s168, %s170
      %p177 = scmp.eq.s32.totalorder %s38, 3
      %p178 = por %p176, %p177
      %p179 = scmp.ne.s32.totalorder %s170, %s171
      %p180 = scmp.eq.s32.totalorder %s38, 0
      %p181 = por %p179, %p180
      %p182 = scmp.ne.s32.totalorder %s170, %s171
      %p183 = scmp.eq.s32.totalorder %s39, 3
      %p184 = por %p182, %p183
      %p186 = scmp.ne.s32.totalorder %s171, %s185
      %p187 = scmp.eq.s32.totalorder %s39, 0
      %p188 = por %p186, %p187
      %s190 = sadd.s32 %s189, 1
      %p193 = scmp.eq.s32.totalorder %s33, 3
      %p194 = scmp.ne.s32.totalorder %s189, %s191
      %p195 = scmp.eq.s32.totalorder %s33, 0
      %p196 = por %p194, %p195
      %p197 = scmp.ne.s32.totalorder %s189, %s191
      %p198 = scmp.eq.s32.totalorder %s38, 3
      %p199 = por %p197, %p198
      %p200 = scmp.ne.s32.totalorder %s191, %s192
      %p201 = scmp.eq.s32.totalorder %s38, 0
      %p202 = por %p200, %p201
      %p203 = scmp.ne.s32.totalorder %s191, %s192
      %p204 = scmp.eq.s32.totalorder %s39, 3
      %p205 = por %p203, %p204
      %p207 = scmp.ne.s32.totalorder %s192, %s206
      %p208 = scmp.eq.s32.totalorder %s39, 0
      %p209 = por %p207, %p208
      %s211 = sadd.s32 %s210, 1
      %p214 = scmp.eq.s32.totalorder %s33, 3
      %p215 = scmp.ne.s32.totalorder %s210, %s212
      %p216 = scmp.eq.s32.totalorder %s33, 0
      %p217 = por %p215, %p216
      %p218 = scmp.ne.s32.totalorder %s210, %s212
      %p219 = scmp.eq.s32.totalorder %s38, 3
      %p220 = por %p218, %p219
      %p221 = scmp.ne.s32.totalorder %s212, %s213
      %p222 = scmp.eq.s32.totalorder %s38, 0
      %p223 = por %p221, %p222
      %p224 = scmp.ne.s32.totalorder %s212, %s213
      %p225 = scmp.eq.s32.totalorder %s39, 3
      %p226 = por %p224, %p225
      %p228 = scmp.ne.s32.totalorder %s213, %s227
      %p229 = scmp.eq.s32.totalorder %s39, 0
      %p230 = por %p228, %p229
      %s232 = sadd.s32 %s231, 1
      %p235 = scmp.eq.s32.totalorder %s33, 3
      %p236 = scmp.ne.s32.totalorder %s231, %s233
      %p237 = scmp.eq.s32.totalorder %s33, 0
      %p238 = por %p236, %p237
      %p239 = scmp.ne.s32.totalorder %s231, %s233
      %p240 = scmp.eq.s32.totalorder %s38, 3
      %p241 = por %p239, %p240
      %p242 = scmp.ne.s32.totalorder %s233, %s234
      %p243 = scmp.eq.s32.totalorder %s38, 0
      %p244 = por %p242, %p243
      %p245 = scmp.ne.s32.totalorder %s233, %s234
      %p246 = scmp.eq.s32.totalorder %s39, 3
      %p247 = por %p245, %p246
      %p249 = scmp.ne.s32.totalorder %s234, %s248
      %p250 = scmp.eq.s32.totalorder %s39, 0
      %p251 = por %p249, %p250
      %s253 = sadd.s32 %s252, 1
      %p256 = scmp.eq.s32.totalorder %s33, 3
      %p257 = scmp.ne.s32.totalorder %s252, %s254
      %p258 = scmp.eq.s32.totalorder %s33, 0
      %p259 = por %p257, %p258
      %p260 = scmp.ne.s32.totalorder %s252, %s254
      %p261 = scmp.eq.s32.totalorder %s38, 3
      %p262 = por %p260, %p261
      %p263 = scmp.ne.s32.totalorder %s254, %s255
      %p264 = scmp.eq.s32.totalorder %s38, 0
      %p265 = por %p263, %p264
      %p266 = scmp.ne.s32.totalorder %s254, %s255
      %p267 = scmp.eq.s32.totalorder %s39, 3
      %p268 = por %p266, %p267
      %p270 = scmp.ne.s32.totalorder %s255, %s269
      %p271 = scmp.eq.s32.totalorder %s39, 0
      %p272 = por %p270, %p271
      %s274 = sadd.s32 %s273, 1
      %p277 = scmp.eq.s32.totalorder %s33, 3
      %p278 = scmp.ne.s32.totalorder %s273, %s275
      %p279 = scmp.eq.s32.totalorder %s33, 0
      %p280 = por %p278, %p279
      %p281 = scmp.ne.s32.totalorder %s273, %s275
      %p282 = scmp.eq.s32.totalorder %s38, 3
      %p283 = por %p281, %p282
      %p284 = scmp.ne.s32.totalorder %s275, %s276
      %p285 = scmp.eq.s32.totalorder %s38, 0
      %p286 = por %p284, %p285
      %p287 = scmp.ne.s32.totalorder %s275, %s276
      %p288 = scmp.eq.s32.totalorder %s39, 3
      %p289 = por %p287, %p288
      %p291 = scmp.ne.s32.totalorder %s276, %s290
      %p292 = scmp.eq.s32.totalorder %s39, 0
      %p293 = por %p291, %p292
      %s295 = sadd.s32 %s294, 1
      %p298 = scmp.eq.s32.totalorder %s33, 3
      %p299 = scmp.ne.s32.totalorder %s294, %s296
      %p300 = scmp.eq.s32.totalorder %s33, 0
      %p301 = por %p299, %p300
      %p302 = scmp.ne.s32.totalorder %s294, %s296
      %p303 = scmp.eq.s32.totalorder %s38, 3
      %p304 = por %p302, %p303
      %p305 = scmp.ne.s32.totalorder %s296, %s297
      %p306 = scmp.eq.s32.totalorder %s38, 0
      %p307 = por %p305, %p306
      %p308 = scmp.ne.s32.totalorder %s296, %s297
      %p309 = scmp.eq.s32.totalorder %s39, 3
      %p310 = por %p308, %p309
      %p312 = scmp.ne.s32.totalorder %s297, %s311
      %p313 = scmp.eq.s32.totalorder %s39, 0
      %p314 = por %p312, %p313
      %s316 = sadd.s32 %s315, 1
      %p319 = scmp.eq.s32.totalorder %s33, 3
      %p320 = scmp.ne.s32.totalorder %s315, %s317
      %p321 = scmp.eq.s32.totalorder %s33, 0
      %p322 = por %p320, %p321
      %p323 = scmp.ne.s32.totalorder %s315, %s317
      %p324 = scmp.eq.s32.totalorder %s38, 3
      %p325 = por %p323, %p324
      %p326 = scmp.ne.s32.totalorder %s317, %s318
      %p327 = scmp.eq.s32.totalorder %s38, 0
      %p328 = por %p326, %p327
      %p329 = scmp.ne.s32.totalorder %s317, %s318
      %p330 = scmp.eq.s32.totalorder %s39, 3
      %p331 = por %p329, %p330
      %p333 = scmp.ne.s32.totalorder %s318, %s332
      %p334 = scmp.eq.s32.totalorder %s39, 0
      %p335 = por %p333, %p334
      %s337 = sadd.s32 %s336, 1
      %p340 = scmp.eq.s32.totalorder %s33, 3
      %p341 = scmp.ne.s32.totalorder %s336, %s338
      %p342 = scmp.eq.s32.totalorder %s33, 0
      %p343 = por %p341, %p342
      %p344 = scmp.ne.s32.totalorder %s336, %s338
      %p345 = scmp.eq.s32.totalorder %s38, 3
      %p346 = por %p344, %p345
      %p347 = scmp.ne.s32.totalorder %s338, %s339
      %p348 = scmp.eq.s32.totalorder %s38, 0
      %p349 = por %p347, %p348
      %p350 = scmp.ne.s32.totalorder %s338, %s339
      %p351 = scmp.eq.s32.totalorder %s39, 3
      %p352 = por %p350, %p351
      %p354 = scmp.ne.s32.totalorder %s339, %s353
      %p355 = scmp.eq.s32.totalorder %s39, 0
      %p356 = por %p354, %p355
      %s358 = sadd.s32 %s357, 1
      %p361 = scmp.eq.s32.totalorder %s33, 3
      %p362 = scmp.ne.s32.totalorder %s357, %s359
      %p363 = scmp.eq.s32.totalorder %s33, 0
      %p364 = por %p362, %p363
      %p365 = scmp.ne.s32.totalorder %s357, %s359
      %p366 = scmp.eq.s32.totalorder %s38, 3
      %p367 = por %p365, %p366
      %p368 = scmp.ne.s32.totalorder %s359, %s360
      %p369 = scmp.eq.s32.totalorder %s38, 0
      %p370 = por %p368, %p369
      %p371 = scmp.ne.s32.totalorder %s359, %s360
      %p372 = scmp.eq.s32.totalorder %s39, 3
      %p373 = por %p371, %p372
      %p375 = scmp.ne.s32.totalorder %s360, %s374
      %p376 = scmp.eq.s32.totalorder %s39, 0
      %p377 = por %p375, %p376
      %s379 = sadd.s32 %s378, 1
      %p382 = scmp.eq.s32.totalorder %s33, 3
      %p383 = scmp.ne.s32.totalorder %s378, %s380
      %p384 = scmp.eq.s32.totalorder %s33, 0
      %p385 = por %p383, %p384
      %p386 = scmp.ne.s32.totalorder %s378, %s380
      %p387 = scmp.eq.s32.totalorder %s38, 3
      %p388 = por %p386, %p387
      %p389 = scmp.ne.s32.totalorder %s380, %s381
      %p390 = scmp.eq.s32.totalorder %s38, 0
      %p391 = por %p389, %p390
      %p392 = scmp.ne.s32.totalorder %s380, %s381
      %p393 = scmp.eq.s32.totalorder %s39, 3
      %p394 = por %p392, %p393
      %p396 = scmp.ne.s32.totalorder %s381, %s395
      %p397 = scmp.eq.s32.totalorder %s39, 0
      %p398 = por %p396, %p397
      %s400 = sadd.s32 %s399, 1
      %p403 = scmp.eq.s32.totalorder %s33, 3
      %p404 = scmp.ne.s32.totalorder %s399, %s401
      %p405 = scmp.eq.s32.totalorder %s33, 0
      %p406 = por %p404, %p405
      %p407 = scmp.ne.s32.totalorder %s399, %s401
      %p408 = scmp.eq.s32.totalorder %s38, 3
      %p409 = por %p407, %p408
      %p410 = scmp.ne.s32.totalorder %s401, %s402
      %p411 = scmp.eq.s32.totalorder %s38, 0
      %p412 = por %p410, %p411
      %p413 = scmp.ne.s32.totalorder %s401, %s402
      %p414 = scmp.eq.s32.totalorder %s39, 3
      %p415 = por %p413, %p414
      %p417 = scmp.ne.s32.totalorder %s402, %s416
      %p418 = scmp.eq.s32.totalorder %s39, 0
      %p419 = por %p417, %p418
      %s421 = sadd.s32 %s420, 1
      %p424 = scmp.eq.s32.totalorder %s33, 3
      %p425 = scmp.ne.s32.totalorder %s420, %s422
      %p426 = scmp.eq.s32.totalorder %s33, 0
      %p427 = por %p425, %p426
      %p428 = scmp.ne.s32.totalorder %s420, %s422
      %p429 = scmp.eq.s32.totalorder %s38, 3
      %p430 = por %p428, %p429
      %p431 = scmp.ne.s32.totalorder %s422, %s423
      %p432 = scmp.eq.s32.totalorder %s38, 0
      %p433 = por %p431, %p432
      %p434 = scmp.ne.s32.totalorder %s422, %s423
      %p435 = scmp.eq.s32.totalorder %s39, 3
      %p436 = por %p434, %p435
      %p438 = scmp.ne.s32.totalorder %s423, %s437
      %p439 = scmp.eq.s32.totalorder %s39, 0
      %p440 = por %p438, %p439
      %s441 = ssub.s32 %s40, %s52
      %p442 = scmp.eq.s32.totalorder %s441, 0
      %s444 = sadd.s32 %s443, 1
      %s445 = scalar_select %p442, %s443, %s444
      %p448 = pneg %p442
      %p449 = scmp.eq.s32.totalorder %s33, 3
      %p450 = por %p448, %p449
      %p451 = scmp.ne.s32.totalorder %s443, %s446
      %p452 = scmp.eq.s32.totalorder %s33, 0
      %p453 = por %p451, %p452
      %p454 = scmp.ne.s32.totalorder %s443, %s446
      %p455 = scmp.eq.s32.totalorder %s38, 3
      %p456 = por %p454, %p455
      %p457 = scmp.ne.s32.totalorder %s446, %s447
      %p458 = scmp.eq.s32.totalorder %s38, 0
      %p459 = por %p457, %p458
      %p460 = scmp.ne.s32.totalorder %s446, %s447
      %p461 = scmp.eq.s32.totalorder %s39, 3
      %p462 = por %p460, %p461
      %p464 = scmp.ne.s32.totalorder %s447, %s463
      %p465 = scmp.eq.s32.totalorder %s39, 0
      %p466 = por %p464, %p465
      %p467 = scmp.le.s32.totalorder 1, %s33
      %p468 = scmp.lt.s32.totalorder %s33, 5
      %p469 = pnand %p467, %p468
      %p470 = pneg %p469
      // Predicated region
      $region9: #{tpu_custom_call.1} parent=5 // pred_check
        _
      $region10: #{tpu_custom_call.1} parent=5 // pred_check_branch
        %472 = sbr.rel (%p469) target = $region12
      $region11: #{tpu_custom_call.1} parent=5 // pred_region
        %s473 = ssub.s32 %s33, 1
        // Predicated region
        $region13: #{tpu_custom_call.1} parent=11 // pred_check
          %p474 = pneg %p118
        $region14: #{tpu_custom_call.1} parent=11 // pred_check_branch
          %476 = sbr.rel (%p474) target = $region16
        $region15: #{tpu_custom_call.1} parent=11 // pred_region
          %s478 = ssub.s32 16384, 16384
          %479 = vsyncadd [#allocation6], %s478
          %s480 = sshll.u32 [#allocation5], 4
          %s481 = int_to_ptr.vmem [resolvable:$true] %s480
          %486 = dma.hbm_to_vmem [thread:$0]  %s2, 16384, %s481, [#allocation6], 256, 256, 16
        $region16: #{tpu_custom_call.1} parent=11 // pred_fallthru
          _
        // Predicated region
        $region17: #{tpu_custom_call.1} parent=11 // pred_check
          %p487 = pneg %p139
        $region18: #{tpu_custom_call.1} parent=11 // pred_check_branch
          %489 = sbr.rel (%p487) target = $region20
        $region19: #{tpu_custom_call.1} parent=11 // pred_region
          _
        $region20: #{tpu_custom_call.1} parent=11 // pred_fallthru
          _
        // Predicated region
        $region21: #{tpu_custom_call.1} parent=11 // pred_check
          %p490 = pneg %p160
        $region22: #{tpu_custom_call.1} parent=11 // pred_check_branch
          %492 = sbr.rel (%p490) target = $region24
        $region23: #{tpu_custom_call.1} parent=11 // pred_region
          %s494 = ssub.s32 16384, 16384
          %495 = vsyncadd [#allocation6], %s494
          %s496 = sshll.u32 [#allocation7], 4
          %s497 = int_to_ptr.vmem [resolvable:$true] %s496
          %502 = dma.hbm_to_vmem [thread:$0]  %s4, 16384, %s497, [#allocation6], 256, 256, 16
        $region24: #{tpu_custom_call.1} parent=11 // pred_fallthru
          _
        // Predicated region
        $region25: #{tpu_custom_call.1} parent=11 // pred_check
          %p503 = pneg %p181
        $region26: #{tpu_custom_call.1} parent=11 // pred_check_branch
          %505 = sbr.rel (%p503) target = $region28
        $region27: #{tpu_custom_call.1} parent=11 // pred_region
          _
        $region28: #{tpu_custom_call.1} parent=11 // pred_fallthru
          _
        // Predicated region
        $region29: #{tpu_custom_call.1} parent=11 // pred_check
          %p506 = pneg %p202
        $region30: #{tpu_custom_call.1} parent=11 // pred_check_branch
          %508 = sbr.rel (%p506) target = $region32
        $region31: #{tpu_custom_call.1} parent=11 // pred_region
          %s510 = ssub.s32 16384, 16384
          %511 = vsyncadd [#allocation9], %s510
          %s512 = sshll.u32 [#allocation8], 4
          %s513 = int_to_ptr.vmem [resolvable:$true] %s512
          %518 = dma.hbm_to_vmem [thread:$0]  %s6, 16384, %s513, [#allocation9], 256, 256, 16
        $region32: #{tpu_custom_call.1} parent=11 // pred_fallthru
          _
        // Predicated region
        $region33: #{tpu_custom_call.1} parent=11 // pred_check
          %p519 = pneg %p223
        $region34: #{tpu_custom_call.1} parent=11 // pred_check_branch
          %521 = sbr.rel (%p519) target = $region36
        $region35: #{tpu_custom_call.1} parent=11 // pred_region
          _
        $region36: #{tpu_custom_call.1} parent=11 // pred_fallthru
          _
        // Predicated region
        $region37: #{tpu_custom_call.1} parent=11 // pred_check
          %p522 = pneg %p244
        $region38: #{tpu_custom_call.1} parent=11 // pred_check_branch
          %524 = sbr.rel (%p522) target = $region40
        $region39: #{tpu_custom_call.1} parent=11 // pred_region
          %s526 = ssub.s32 16384, 16384
          %527 = vsyncadd [#allocation9], %s526
          %s528 = sshll.u32 [#allocation10], 4
          %s529 = int_to_ptr.vmem [resolvable:$true] %s528
          %534 = dma.hbm_to_vmem [thread:$0]  %s8, 16384, %s529, [#allocation9], 128, 128, 8
        $region40: #{tpu_custom_call.1} parent=11 // pred_fallthru
          _
        // Predicated region
        $region41: #{tpu_custom_call.1} parent=11 // pred_check
          %p535 = pneg %p265
        $region42: #{tpu_custom_call.1} parent=11 // pred_check_branch
          %537 = sbr.rel (%p535) target = $region44
        $region43: #{tpu_custom_call.1} parent=11 // pred_region
          _
        $region44: #{tpu_custom_call.1} parent=11 // pred_fallthru
          _
        // Predicated region
        $region45: #{tpu_custom_call.1} parent=11 // pred_check
          %p538 = pneg %p286
        $region46: #{tpu_custom_call.1} parent=11 // pred_check_branch
          %540 = sbr.rel (%p538) target = $region48
        $region47: #{tpu_custom_call.1} parent=11 // pred_region
          %s542 = ssub.s32 8192, 8192
          %543 = vsyncadd [#allocation12], %s542
          %s544 = sshll.u32 [#allocation11], 4
          %s545 = int_to_ptr.vmem [resolvable:$true] %s544
          %550 = dma.hbm_to_vmem [thread:$0]  %s10, 8192, %s545, [#allocation12], 128, 128, 8
        $region48: #{tpu_custom_call.1} parent=11 // pred_fallthru
          _
        // Predicated region
        $region49: #{tpu_custom_call.1} parent=11 // pred_check
          %p551 = pneg %p307
        $region50: #{tpu_custom_call.1} parent=11 // pred_check_branch
          %553 = sbr.rel (%p551) target = $region52
        $region51: #{tpu_custom_call.1} parent=11 // pred_region
          _
        $region52: #{tpu_custom_call.1} parent=11 // pred_fallthru
          _
        // Predicated region
        $region53: #{tpu_custom_call.1} parent=11 // pred_check
          %p554 = pneg %p328
        $region54: #{tpu_custom_call.1} parent=11 // pred_check_branch
          %556 = sbr.rel (%p554) target = $region56
        $region55: #{tpu_custom_call.1} parent=11 // pred_region
          %s558 = ssub.s32 8192, 8192
          %559 = vsyncadd [#allocation12], %s558
          %s560 = sshll.u32 [#allocation13], 4
          %s561 = int_to_ptr.vmem [resolvable:$true] %s560
          %566 = dma.hbm_to_vmem [thread:$0]  %s12, 8192, %s561, [#allocation12], 128, 128, 8
        $region56: #{tpu_custom_call.1} parent=11 // pred_fallthru
          _
        // Predicated region
        $region57: #{tpu_custom_call.1} parent=11 // pred_check
          %p567 = pneg %p349
        $region58: #{tpu_custom_call.1} parent=11 // pred_check_branch
          %569 = sbr.rel (%p567) target = $region60
        $region59: #{tpu_custom_call.1} parent=11 // pred_region
          _
        $region60: #{tpu_custom_call.1} parent=11 // pred_fallthru
          _
        // Predicated region
        $region61: #{tpu_custom_call.1} parent=11 // pred_check
          %p570 = pneg %p370
        $region62: #{tpu_custom_call.1} parent=11 // pred_check_branch
          %572 = sbr.rel (%p570) target = $region64
        $region63: #{tpu_custom_call.1} parent=11 // pred_region
          _
        $region64: #{tpu_custom_call.1} parent=11 // pred_fallthru
          _
        // Predicated region
        $region65: #{tpu_custom_call.1} parent=11 // pred_check
          %p573 = pneg %p391
        $region66: #{tpu_custom_call.1} parent=11 // pred_check_branch
          %575 = sbr.rel (%p573) target = $region68
        $region67: #{tpu_custom_call.1} parent=11 // pred_region
          _
        $region68: #{tpu_custom_call.1} parent=11 // pred_fallthru
          _
        // Predicated region
        $region69: #{tpu_custom_call.1} parent=11 // pred_check
          %p576 = pneg %p412
        $region70: #{tpu_custom_call.1} parent=11 // pred_check_branch
          %578 = sbr.rel (%p576) target = $region72
        $region71: #{tpu_custom_call.1} parent=11 // pred_region
          _
        $region72: #{tpu_custom_call.1} parent=11 // pred_fallthru
          _
        // Predicated region
        $region73: #{tpu_custom_call.1} parent=11 // pred_check
          %p579 = pneg %p433
        $region74: #{tpu_custom_call.1} parent=11 // pred_check_branch
          %581 = sbr.rel (%p579) target = $region76
        $region75: #{tpu_custom_call.1} parent=11 // pred_region
          _
        $region76: #{tpu_custom_call.1} parent=11 // pred_fallthru
          _
      $region12: #{tpu_custom_call.1} parent=5 // pred_fallthru
        _
      %p582 = scmp.lt.s32.totalorder %s33, 4
      // Predicated region
      $region77: #{tpu_custom_call.1} parent=5 // pred_check
        %p583 = pneg %p582
      $region78: #{tpu_custom_call.1} parent=5 // pred_check_branch
        %585 = sbr.rel (%p583) target = $region80
      $region79: #{tpu_custom_call.1} parent=5 // pred_region
        // Predicated region
        $region81: #{tpu_custom_call.1} parent=79 // pred_check
          %p586 = pneg %p65
        $region82: #{tpu_custom_call.1} parent=79 // pred_check_branch
          %588 = sbr.rel (%p586) target = $region84
        $region83: #{tpu_custom_call.1} parent=79 // pred_region
          %s589 = sand.u32 %s55, 1
          %s590 = scalar_lea.sflag [#allocation3], %s589
          %s591 = sand.u32 %s55, 1
          %s592 = smul.addr %s591, 256
          %s593 = scalar_lea.vmem [#allocation2], %s592
          %s594 = smul.u32 16, %s40
          %s596 = ssub.s32 4096, 4096
          %597 = vsyncadd %s590, %s596
          %s598 = smul.addr %s594, 2
          %s599 = smul.addr %s598, 128
          %s600 = scalar_lea.hbm %s0, %s599
          %s601 = sshll.u32 %s593, 4
          %s602 = int_to_ptr.vmem [resolvable:$true] %s601
          %607 = dma.hbm_to_vmem [thread:$0]  %s600, 4096, %s602, %s590, 256, 256, 16
        $region84: #{tpu_custom_call.1} parent=79 // pred_fallthru
          _
        // Predicated region
        $region85: #{tpu_custom_call.1} parent=79 // pred_check
          %p608 = pneg %p91
        $region86: #{tpu_custom_call.1} parent=79 // pred_check_branch
          %610 = sbr.rel (%p608) target = $region88
        $region87: #{tpu_custom_call.1} parent=79 // pred_region
          %s611 = smul.u32 2, %s40
          %p612 = scmp.lt.s32.totalorder %s611, 3
          %s613 = scalar_select %p612, %s611, 3
          %s614 = smul.addr %s613, 8
          %s615 = scalar_lea.vmem %s1, %s614
          %s616 = smul.u32 2, %s40
        $region88: #{tpu_custom_call.1} parent=79 // pred_fallthru
          _
      $region80: #{tpu_custom_call.1} parent=5 // pred_fallthru
        _
      %p617 = scmp.le.s32.totalorder 1, %s33
      %p618 = scmp.lt.s32.totalorder %s33, 5
      %p619 = pnand %p617, %p618
      %p620 = pneg %p619
      // Predicated region
      $region89: #{tpu_custom_call.1} parent=5 // pred_check
        _
      $region90: #{tpu_custom_call.1} parent=5 // pred_check_branch
        %622 = sbr.rel (%p619) target = $region92
      $region91: #{tpu_custom_call.1} parent=5 // pred_region
        %s623 = ssub.s32 %s33, 1
        %s624 = sand.u32 %s58, 1
        %s625 = scalar_lea.sflag [#allocation3], %s624
        %s626 = sand.u32 %s58, 1
        %s627 = smul.addr %s626, 256
        %s628 = scalar_lea.vmem [#allocation2], %s627
        // Predicated region
        $region93: #{tpu_custom_call.1} parent=91 // pred_check
          %p629 = pneg %p71
        $region94: #{tpu_custom_call.1} parent=91 // pred_check_branch
          %631 = sbr.rel (%p629) target = $region96
        $region95: #{tpu_custom_call.1} parent=91 // pred_region
          %632 = dma.done %s625, 4096
        $region96: #{tpu_custom_call.1} parent=91 // pred_fallthru
          _
        // Predicated region
        $region97: #{tpu_custom_call.1} parent=91 // pred_check
          %p633 = pneg %p118
        $region98: #{tpu_custom_call.1} parent=91 // pred_check_branch
          %635 = sbr.rel (%p633) target = $region100
        $region99: #{tpu_custom_call.1} parent=91 // pred_region
          %636 = dma.done [#allocation6], 16384
        $region100: #{tpu_custom_call.1} parent=91 // pred_fallthru
          _
        // Predicated region
        $region101: #{tpu_custom_call.1} parent=91 // pred_check
          %p637 = pneg %p160
        $region102: #{tpu_custom_call.1} parent=91 // pred_check_branch
          %639 = sbr.rel (%p637) target = $region104
        $region103: #{tpu_custom_call.1} parent=91 // pred_region
          %640 = dma.done [#allocation6], 16384
        $region104: #{tpu_custom_call.1} parent=91 // pred_fallthru
          _
        // Predicated region
        $region105: #{tpu_custom_call.1} parent=91 // pred_check
          %p641 = pneg %p202
        $region106: #{tpu_custom_call.1} parent=91 // pred_check_branch
          %643 = sbr.rel (%p641) target = $region108
        $region107: #{tpu_custom_call.1} parent=91 // pred_region
          %644 = dma.done [#allocation9], 16384
        $region108: #{tpu_custom_call.1} parent=91 // pred_fallthru
          _
        // Predicated region
        $region109: #{tpu_custom_call.1} parent=91 // pred_check
          %p645 = pneg %p244
        $region110: #{tpu_custom_call.1} parent=91 // pred_check_branch
          %647 = sbr.rel (%p645) target = $region112
        $region111: #{tpu_custom_call.1} parent=91 // pred_region
          %648 = dma.done [#allocation9], 16384
        $region112: #{tpu_custom_call.1} parent=91 // pred_fallthru
          _
        // Predicated region
        $region113: #{tpu_custom_call.1} parent=91 // pred_check
          %p649 = pneg %p286
        $region114: #{tpu_custom_call.1} parent=91 // pred_check_branch
          %651 = sbr.rel (%p649) target = $region116
        $region115: #{tpu_custom_call.1} parent=91 // pred_region
          %652 = dma.done [#allocation12], 8192
        $region116: #{tpu_custom_call.1} parent=91 // pred_fallthru
          _
        // Predicated region
        $region117: #{tpu_custom_call.1} parent=91 // pred_check
          %p653 = pneg %p328
        $region118: #{tpu_custom_call.1} parent=91 // pred_check_branch
          %655 = sbr.rel (%p653) target = $region120
        $region119: #{tpu_custom_call.1} parent=91 // pred_region
          %656 = dma.done [#allocation12], 8192
        $region120: #{tpu_custom_call.1} parent=91 // pred_fallthru
          _
        %s657 = sand.u32 %s58, 1
        %s658 = scalar_lea.sflag [#allocation3], %s657
        %s659 = sand.u32 %s58, 1
        %s660 = smul.addr %s659, 256
        %s661 = scalar_lea.vmem [#allocation2], %s660
        %p662 = pneg %p71
        %p663 = pneg %p68
        %s664 = smul.u32 2, %s42
        %p665 = scmp.lt.s32.totalorder %s664, 3
        %s666 = scalar_select %p665, %s664, 3
        %s667 = smul.addr %s666, 8
        %s668 = scalar_lea.vmem %s1, %s667
        %p669 = pneg %p97
        %p670 = pneg %p94
        %p671 = pneg %p118
        %p672 = pneg %p115
        %p673 = pneg %p139
        %p674 = pneg %p136
        %p675 = pneg %p160
        %p676 = pneg %p157
        %p677 = pneg %p181
        %p678 = pneg %p178
        %p679 = pneg %p202
        %p680 = pneg %p199
        %p681 = pneg %p223
        %p682 = pneg %p220
        %p683 = pneg %p244
        %p684 = pneg %p241
        %p685 = pneg %p265
        %p686 = pneg %p262
        %p687 = pneg %p286
        %p688 = pneg %p283
        %p689 = pneg %p307
        %p690 = pneg %p304
        %p691 = pneg %p328
        %p692 = pneg %p325
        %p693 = pneg %p349
        %p694 = pneg %p346
        %p695 = pneg %p370
        %p696 = pneg %p367
        %p697 = pneg %p391
        %p698 = pneg %p388
        %p699 = pneg %p412
        %p700 = pneg %p409
        %p701 = pneg %p433
        %p702 = pneg %p430
        %p703 = pneg %p459
        %p704 = pneg %p456
        %s705 = sand.u32 %s446, 1
        %s706 = scalar_lea.sflag [#allocation4], %s705
        %s707 = sand.u32 %s446, 1
        %s708 = smul.addr %s707, 256
        %s709 = scalar_lea.vmem [#allocation14], %s708
        %s710 = smul.u32 16, %s42
        %s711 = smul.u32 2, %s42
        %p712 = scmp.lt.s32.totalorder %s711, 3
        %s713 = scalar_select %p712, %s711, 3
        %s714 = smul.addr %s713, 8
        %s715 = scalar_lea.vmem %s1, %s714
        %s716 = smul.u32 2, %s42
        %s717 = smul.u32 16, %s42
        %p719 = scmp.eq.s32.totalorder %s43, 0
        // Predicated region
        $region121: #{tpu_custom_call.1} parent=91 // pred_check
          %p720 = pneg %p719
        $region122: #{tpu_custom_call.1} parent=91 // pred_check_branch
          %722 = sbr.rel (%p720) target = $region124
        $region123: #{tpu_custom_call.1} parent=91 // pred_region
          %v723 = vld [vmem:[%s628] sm:$0xff]
          %v724 = vld [vmem:[%s628 + $0x8] sm:$0xff]
          %v725 = vld [vmem:[%s628 + $0x10] sm:$0xff]
          %v726 = vld [vmem:[%s628 + $0x18] sm:$0xff]
          %v727 = vld [vmem:[%s628 + $0x20] sm:$0xff]
          %v728 = vld [vmem:[%s628 + $0x28] sm:$0xff]
          %v729 = vld [vmem:[%s628 + $0x30] sm:$0xff]
          %v730 = vld [vmem:[%s628 + $0x38] sm:$0xff]
          %v731 = vld [vmem:[%s628 + $0x40] sm:$0xff]
          %v732 = vld [vmem:[%s628 + $0x48] sm:$0xff]
          %v733 = vld [vmem:[%s628 + $0x50] sm:$0xff]
          %v734 = vld [vmem:[%s628 + $0x58] sm:$0xff]
          %v735 = vld [vmem:[%s628 + $0x60] sm:$0xff]
          %v736 = vld [vmem:[%s628 + $0x68] sm:$0xff]
          %v737 = vld [vmem:[%s628 + $0x70] sm:$0xff]
          %v738 = vld [vmem:[%s628 + $0x78] sm:$0xff]
          %v739 = vld [vmem:[%s628 + $0x80] sm:$0xff]
          %v740 = vld [vmem:[%s628 + $0x88] sm:$0xff]
          %v741 = vld [vmem:[%s628 + $0x90] sm:$0xff]
          %v742 = vld [vmem:[%s628 + $0x98] sm:$0xff]
          %v743 = vld [vmem:[%s628 + $0xa0] sm:$0xff]
          %v744 = vld [vmem:[%s628 + $0xa8] sm:$0xff]
          %v745 = vld [vmem:[%s628 + $0xb0] sm:$0xff]
          %v746 = vld [vmem:[%s628 + $0xb8] sm:$0xff]
          %v747 = vld [vmem:[%s628 + $0xc0] sm:$0xff]
          %v748 = vld [vmem:[%s628 + $0xc8] sm:$0xff]
          %v749 = vld [vmem:[%s628 + $0xd0] sm:$0xff]
          %v750 = vld [vmem:[%s628 + $0xd8] sm:$0xff]
          %v751 = vld [vmem:[%s628 + $0xe0] sm:$0xff]
          %v752 = vld [vmem:[%s628 + $0xe8] sm:$0xff]
          %v753 = vld [vmem:[%s628 + $0xf0] sm:$0xff]
          %v754 = vld [vmem:[%s628 + $0xf8] sm:$0xff]
          %755 = vst [vmem:[%s709] sm:$0xff] %v723
          %756 = vst [vmem:[%s709 + $0x8] sm:$0xff] %v724
          %757 = vst [vmem:[%s709 + $0x10] sm:$0xff] %v725
          %758 = vst [vmem:[%s709 + $0x18] sm:$0xff] %v726
          %759 = vst [vmem:[%s709 + $0x20] sm:$0xff] %v727
          %760 = vst [vmem:[%s709 + $0x28] sm:$0xff] %v728
          %761 = vst [vmem:[%s709 + $0x30] sm:$0xff] %v729
          %762 = vst [vmem:[%s709 + $0x38] sm:$0xff] %v730
          %763 = vst [vmem:[%s709 + $0x40] sm:$0xff] %v731
          %764 = vst [vmem:[%s709 + $0x48] sm:$0xff] %v732
          %765 = vst [vmem:[%s709 + $0x50] sm:$0xff] %v733
          %766 = vst [vmem:[%s709 + $0x58] sm:$0xff] %v734
          %767 = vst [vmem:[%s709 + $0x60] sm:$0xff] %v735
          %768 = vst [vmem:[%s709 + $0x68] sm:$0xff] %v736
          %769 = vst [vmem:[%s709 + $0x70] sm:$0xff] %v737
          %770 = vst [vmem:[%s709 + $0x78] sm:$0xff] %v738
          %771 = vst [vmem:[%s709 + $0x80] sm:$0xff] %v739
          %772 = vst [vmem:[%s709 + $0x88] sm:$0xff] %v740
          %773 = vst [vmem:[%s709 + $0x90] sm:$0xff] %v741
          %774 = vst [vmem:[%s709 + $0x98] sm:$0xff] %v742
          %775 = vst [vmem:[%s709 + $0xa0] sm:$0xff] %v743
          %776 = vst [vmem:[%s709 + $0xa8] sm:$0xff] %v744
          %777 = vst [vmem:[%s709 + $0xb0] sm:$0xff] %v745
          %778 = vst [vmem:[%s709 + $0xb8] sm:$0xff] %v746
          %779 = vst [vmem:[%s709 + $0xc0] sm:$0xff] %v747
          %780 = vst [vmem:[%s709 + $0xc8] sm:$0xff] %v748
          %781 = vst [vmem:[%s709 + $0xd0] sm:$0xff] %v749
          %782 = vst [vmem:[%s709 + $0xd8] sm:$0xff] %v750
          %783 = vst [vmem:[%s709 + $0xe0] sm:$0xff] %v751
          %784 = vst [vmem:[%s709 + $0xe8] sm:$0xff] %v752
          %785 = vst [vmem:[%s709 + $0xf0] sm:$0xff] %v753
          %786 = vst [vmem:[%s709 + $0xf8] sm:$0xff] %v754
        $region124: #{tpu_custom_call.1} parent=91 // pred_fallthru
          _
        %v787 = vld [vmem:[%s709] sm:$0xff]
        %v788 = vld [vmem:[%s709 + $0x8] sm:$0xff]
        %v789 = vld [vmem:[%s709 + $0x10] sm:$0xff]
        %v790 = vld [vmem:[%s709 + $0x18] sm:$0xff]
        %v791 = vld [vmem:[%s709 + $0x20] sm:$0xff]
        %v792 = vld [vmem:[%s709 + $0x28] sm:$0xff]
        %v793 = vld [vmem:[%s709 + $0x30] sm:$0xff]
        %v794 = vld [vmem:[%s709 + $0x38] sm:$0xff]
        %v795 = vld [vmem:[%s709 + $0x40] sm:$0xff]
        %v796 = vld [vmem:[%s709 + $0x48] sm:$0xff]
        %v797 = vld [vmem:[%s709 + $0x50] sm:$0xff]
        %v798 = vld [vmem:[%s709 + $0x58] sm:$0xff]
        %v799 = vld [vmem:[%s709 + $0x60] sm:$0xff]
        %v800 = vld [vmem:[%s709 + $0x68] sm:$0xff]
        %v801 = vld [vmem:[%s709 + $0x70] sm:$0xff]
        %v802 = vld [vmem:[%s709 + $0x78] sm:$0xff]
        %v803 = vld [vmem:[%s709 + $0x80] sm:$0xff]
        %v804 = vld [vmem:[%s709 + $0x88] sm:$0xff]
        %v805 = vld [vmem:[%s709 + $0x90] sm:$0xff]
        %v806 = vld [vmem:[%s709 + $0x98] sm:$0xff]
        %v807 = vld [vmem:[%s709 + $0xa0] sm:$0xff]
        %v808 = vld [vmem:[%s709 + $0xa8] sm:$0xff]
        %v809 = vld [vmem:[%s709 + $0xb0] sm:$0xff]
        %v810 = vld [vmem:[%s709 + $0xb8] sm:$0xff]
        %v811 = vld [vmem:[%s709 + $0xc0] sm:$0xff]
        %v812 = vld [vmem:[%s709 + $0xc8] sm:$0xff]
        %v813 = vld [vmem:[%s709 + $0xd0] sm:$0xff]
        %v814 = vld [vmem:[%s709 + $0xd8] sm:$0xff]
        %v815 = vld [vmem:[%s709 + $0xe0] sm:$0xff]
        %v816 = vld [vmem:[%s709 + $0xe8] sm:$0xff]
        %v817 = vld [vmem:[%s709 + $0xf0] sm:$0xff]
        %v818 = vld [vmem:[%s709 + $0xf8] sm:$0xff]
        %v819 = vpack.c.bf16 %v789, %v787
        %v820 = vpack.c.bf16 %v790, %v788
        %v821 = vpack.c.bf16 %v793, %v791
        %v822 = vpack.c.bf16 %v794, %v792
        %v823 = vpack.c.bf16 %v797, %v795
        %v824 = vpack.c.bf16 %v798, %v796
        %v825 = vpack.c.bf16 %v801, %v799
        %v826 = vpack.c.bf16 %v802, %v800
        %v827 = vpack.c.bf16 %v805, %v803
        %v828 = vpack.c.bf16 %v806, %v804
        %v829 = vpack.c.bf16 %v809, %v807
        %v830 = vpack.c.bf16 %v810, %v808
        %v831 = vpack.c.bf16 %v813, %v811
        %v832 = vpack.c.bf16 %v814, %v812
        %v833 = vpack.c.bf16 %v817, %v815
        %v834 = vpack.c.bf16 %v818, %v816
        %s835 = smul.u32 %s43, 128
        %s836 = smul.addr %s835, 4
        %s837 = scalar_lea.vmem [#allocation5], %s836
        %v838 = vld [vmem:[%s837] sm:$0xff]
        %v839 = vld [vmem:[%s837 + $0x8] sm:$0xff]
        %v840 = vld [vmem:[%s837 + $0x10] sm:$0xff]
        %v841 = vld [vmem:[%s837 + $0x18] sm:$0xff]
        %v842 = vld [vmem:[%s837 + $0x20] sm:$0xff]
        %v843 = vld [vmem:[%s837 + $0x28] sm:$0xff]
        %v844 = vld [vmem:[%s837 + $0x30] sm:$0xff]
        %v845 = vld [vmem:[%s837 + $0x38] sm:$0xff]
        %v846 = vld [vmem:[%s837 + $0x40] sm:$0xff]
        %v847 = vld [vmem:[%s837 + $0x48] sm:$0xff]
        %v848 = vld [vmem:[%s837 + $0x50] sm:$0xff]
        %v849 = vld [vmem:[%s837 + $0x58] sm:$0xff]
        %v850 = vld [vmem:[%s837 + $0x60] sm:$0xff]
        %v851 = vld [vmem:[%s837 + $0x68] sm:$0xff]
        %v852 = vld [vmem:[%s837 + $0x70] sm:$0xff]
        %v853 = vld [vmem:[%s837 + $0x78] sm:$0xff]
        %v854 = vld [vmem:[%s837 + $0x80] sm:$0xff]
        %v855 = vld [vmem:[%s837 + $0x88] sm:$0xff]
        %v856 = vld [vmem:[%s837 + $0x90] sm:$0xff]
        %v857 = vld [vmem:[%s837 + $0x98] sm:$0xff]
        %v858 = vld [vmem:[%s837 + $0xa0] sm:$0xff]
        %v859 = vld [vmem:[%s837 + $0xa8] sm:$0xff]
        %v860 = vld [vmem:[%s837 + $0xb0] sm:$0xff]
        %v861 = vld [vmem:[%s837 + $0xb8] sm:$0xff]
        %v862 = vld [vmem:[%s837 + $0xc0] sm:$0xff]
        %v863 = vld [vmem:[%s837 + $0xc8] sm:$0xff]
        %v864 = vld [vmem:[%s837 + $0xd0] sm:$0xff]
        %v865 = vld [vmem:[%s837 + $0xd8] sm:$0xff]
        %v866 = vld [vmem:[%s837 + $0xe0] sm:$0xff]
        %v867 = vld [vmem:[%s837 + $0xe8] sm:$0xff]
        %v868 = vld [vmem:[%s837 + $0xf0] sm:$0xff]
        %v869 = vld [vmem:[%s837 + $0xf8] sm:$0xff]
        %v870 = vld [vmem:[%s837 + $0x100] sm:$0xff]
        %v871 = vld [vmem:[%s837 + $0x108] sm:$0xff]
        %v872 = vld [vmem:[%s837 + $0x110] sm:$0xff]
        %v873 = vld [vmem:[%s837 + $0x118] sm:$0xff]
        %v874 = vld [vmem:[%s837 + $0x120] sm:$0xff]
        %v875 = vld [vmem:[%s837 + $0x128] sm:$0xff]
        %v876 = vld [vmem:[%s837 + $0x130] sm:$0xff]
        %v877 = vld [vmem:[%s837 + $0x138] sm:$0xff]
        %v878 = vld [vmem:[%s837 + $0x140] sm:$0xff]
        %v879 = vld [vmem:[%s837 + $0x148] sm:$0xff]
        %v880 = vld [vmem:[%s837 + $0x150] sm:$0xff]
        %v881 = vld [vmem:[%s837 + $0x158] sm:$0xff]
        %v882 = vld [vmem:[%s837 + $0x160] sm:$0xff]
        %v883 = vld [vmem:[%s837 + $0x168] sm:$0xff]
        %v884 = vld [vmem:[%s837 + $0x170] sm:$0xff]
        %v885 = vld [vmem:[%s837 + $0x178] sm:$0xff]
        %v886 = vld [vmem:[%s837 + $0x180] sm:$0xff]
        %v887 = vld [vmem:[%s837 + $0x188] sm:$0xff]
        %v888 = vld [vmem:[%s837 + $0x190] sm:$0xff]
        %v889 = vld [vmem:[%s837 + $0x198] sm:$0xff]
        %v890 = vld [vmem:[%s837 + $0x1a0] sm:$0xff]
        %v891 = vld [vmem:[%s837 + $0x1a8] sm:$0xff]
        %v892 = vld [vmem:[%s837 + $0x1b0] sm:$0xff]
        %v893 = vld [vmem:[%s837 + $0x1b8] sm:$0xff]
        %v894 = vld [vmem:[%s837 + $0x1c0] sm:$0xff]
        %v895 = vld [vmem:[%s837 + $0x1c8] sm:$0xff]
        %v896 = vld [vmem:[%s837 + $0x1d0] sm:$0xff]
        %v897 = vld [vmem:[%s837 + $0x1d8] sm:$0xff]
        %v898 = vld [vmem:[%s837 + $0x1e0] sm:$0xff]
        %v899 = vld [vmem:[%s837 + $0x1e8] sm:$0xff]
        %v900 = vld [vmem:[%s837 + $0x1f0] sm:$0xff]
        %v901 = vld [vmem:[%s837 + $0x1f8] sm:$0xff]
        %s902 = smul.u32 %s43, 4
        %s903 = scalar_lea.vmem %s3, %s902
        %v904 = vld [vmem:[%s903] sm:$0xf]
        %v906 = vlaneseq
        %v907 = vshrl.u32 %v906, 7
        %v908 = vsub.s32 0, %v907
        %v909 = vrot.slane %v904, %v908
        %v910 = vlaneseq
        %v911 = vshrl.u32 %v910, 7
        %v912 = vsub.s32 1, %v911
        %v913 = vrot.slane %v904, %v912
        %v914 = vlaneseq
        %v915 = vshrl.u32 %v914, 7
        %v916 = vsub.s32 2, %v915
        %v917 = vrot.slane %v904, %v916
        %v918 = vlaneseq
        %v919 = vshrl.u32 %v918, 7
        %v920 = vsub.s32 3, %v919
        %v921 = vrot.slane %v904, %v920
        %v990 = vunpack.c.l.b16 %v838
        %v991 = vunpack.c.h.b16 %v838
        %v992 = vunpack.c.l.b16 %v839
        %v993 = vunpack.c.h.b16 %v839
        %v994 = vunpack.c.l.b16 %v840
        %v995 = vunpack.c.h.b16 %v840
        %v996 = vunpack.c.l.b16 %v841
        %v997 = vunpack.c.h.b16 %v841
        %v998 = vunpack.c.l.b16 %v842
        %v999 = vunpack.c.h.b16 %v842
        %v1000 = vunpack.c.l.b16 %v843
        %v1001 = vunpack.c.h.b16 %v843
        %v1002 = vunpack.c.l.b16 %v844
        %v1003 = vunpack.c.h.b16 %v844
        %v1004 = vunpack.c.l.b16 %v845
        %v1005 = vunpack.c.h.b16 %v845
        %v1006 = vunpack.c.l.b16 %v846
        %v1007 = vunpack.c.h.b16 %v846
        %v1008 = vunpack.c.l.b16 %v847
        %v1009 = vunpack.c.h.b16 %v847
        %v1010 = vunpack.c.l.b16 %v848
        %v1011 = vunpack.c.h.b16 %v848
        %v1012 = vunpack.c.l.b16 %v849
        %v1013 = vunpack.c.h.b16 %v849
        %v1014 = vunpack.c.l.b16 %v850
        %v1015 = vunpack.c.h.b16 %v850
        %v1016 = vunpack.c.l.b16 %v851
        %v1017 = vunpack.c.h.b16 %v851
        %v1018 = vunpack.c.l.b16 %v852
        %v1019 = vunpack.c.h.b16 %v852
        %v1020 = vunpack.c.l.b16 %v853
        %v1021 = vunpack.c.h.b16 %v853
        %v1022 = vunpack.c.l.b16 %v854
        %v1023 = vunpack.c.h.b16 %v854
        %v1024 = vunpack.c.l.b16 %v855
        %v1025 = vunpack.c.h.b16 %v855
        %v1026 = vunpack.c.l.b16 %v856
        %v1027 = vunpack.c.h.b16 %v856
        %v1028 = vunpack.c.l.b16 %v857
        %v1029 = vunpack.c.h.b16 %v857
        %v1030 = vunpack.c.l.b16 %v858
        %v1031 = vunpack.c.h.b16 %v858
        %v1032 = vunpack.c.l.b16 %v859
        %v1033 = vunpack.c.h.b16 %v859
        %v1034 = vunpack.c.l.b16 %v860
        %v1035 = vunpack.c.h.b16 %v860
        %v1036 = vunpack.c.l.b16 %v861
        %v1037 = vunpack.c.h.b16 %v861
        %v1038 = vunpack.c.l.b16 %v862
        %v1039 = vunpack.c.h.b16 %v862
        %v1040 = vunpack.c.l.b16 %v863
        %v1041 = vunpack.c.h.b16 %v863
        %v1042 = vunpack.c.l.b16 %v864
        %v1043 = vunpack.c.h.b16 %v864
        %v1044 = vunpack.c.l.b16 %v865
        %v1045 = vunpack.c.h.b16 %v865
        %v1046 = vunpack.c.l.b16 %v866
        %v1047 = vunpack.c.h.b16 %v866
        %v1048 = vunpack.c.l.b16 %v867
        %v1049 = vunpack.c.h.b16 %v867
        %v1050 = vunpack.c.l.b16 %v868
        %v1051 = vunpack.c.h.b16 %v868
        %v1052 = vunpack.c.l.b16 %v869
        %v1053 = vunpack.c.h.b16 %v869
        %v1054 = vunpack.c.l.b16 %v870
        %v1055 = vunpack.c.h.b16 %v870
        %v1056 = vunpack.c.l.b16 %v871
        %v1057 = vunpack.c.h.b16 %v871
        %v1058 = vunpack.c.l.b16 %v872
        %v1059 = vunpack.c.h.b16 %v872
        %v1060 = vunpack.c.l.b16 %v873
        %v1061 = vunpack.c.h.b16 %v873
        %v1062 = vunpack.c.l.b16 %v874
        %v1063 = vunpack.c.h.b16 %v874
        %v1064 = vunpack.c.l.b16 %v875
        %v1065 = vunpack.c.h.b16 %v875
        %v1066 = vunpack.c.l.b16 %v876
        %v1067 = vunpack.c.h.b16 %v876
        %v1068 = vunpack.c.l.b16 %v877
        %v1069 = vunpack.c.h.b16 %v877
        %v1070 = vunpack.c.l.b16 %v878
        %v1071 = vunpack.c.h.b16 %v878
        %v1072 = vunpack.c.l.b16 %v879
        %v1073 = vunpack.c.h.b16 %v879
        %v1074 = vunpack.c.l.b16 %v880
        %v1075 = vunpack.c.h.b16 %v880
        %v1076 = vunpack.c.l.b16 %v881
        %v1077 = vunpack.c.h.b16 %v881
        %v1078 = vunpack.c.l.b16 %v882
        %v1079 = vunpack.c.h.b16 %v882
        %v1080 = vunpack.c.l.b16 %v883
        %v1081 = vunpack.c.h.b16 %v883
        %v1082 = vunpack.c.l.b16 %v884
        %v1083 = vunpack.c.h.b16 %v884
        %v1084 = vunpack.c.l.b16 %v885
        %v1085 = vunpack.c.h.b16 %v885
        %v1086 = vunpack.c.l.b16 %v886
        %v1087 = vunpack.c.h.b16 %v886
        %v1088 = vunpack.c.l.b16 %v887
        %v1089 = vunpack.c.h.b16 %v887
        %v1090 = vunpack.c.l.b16 %v888
        %v1091 = vunpack.c.h.b16 %v888
        %v1092 = vunpack.c.l.b16 %v889
        %v1093 = vunpack.c.h.b16 %v889
        %v1094 = vunpack.c.l.b16 %v890
        %v1095 = vunpack.c.h.b16 %v890
        %v1096 = vunpack.c.l.b16 %v891
        %v1097 = vunpack.c.h.b16 %v891
        %v1098 = vunpack.c.l.b16 %v892
        %v1099 = vunpack.c.h.b16 %v892
        %v1100 = vunpack.c.l.b16 %v893
        %v1101 = vunpack.c.h.b16 %v893
        %v1102 = vunpack.c.l.b16 %v894
        %v1103 = vunpack.c.h.b16 %v894
        %v1104 = vunpack.c.l.b16 %v895
        %v1105 = vunpack.c.h.b16 %v895
        %v1106 = vunpack.c.l.b16 %v896
        %v1107 = vunpack.c.h.b16 %v896
        %v1108 = vunpack.c.l.b16 %v897
        %v1109 = vunpack.c.h.b16 %v897
        %v1110 = vunpack.c.l.b16 %v898
        %v1111 = vunpack.c.h.b16 %v898
        %v1112 = vunpack.c.l.b16 %v899
        %v1113 = vunpack.c.h.b16 %v899
        %v1114 = vunpack.c.l.b16 %v900
        %v1115 = vunpack.c.h.b16 %v900
        %v1116 = vunpack.c.l.b16 %v901
        %v1117 = vunpack.c.h.b16 %v901
        %v1118 = vpack.c.b16 %v994, %v990
        %v1119 = vpack.c.b16 %v995, %v991
        %v1120 = vpack.c.b16 %v996, %v992
        %v1121 = vpack.c.b16 %v997, %v993
        %v1122 = vpack.c.b16 %v1002, %v998
        %v1123 = vpack.c.b16 %v1003, %v999
        %v1124 = vpack.c.b16 %v1004, %v1000
        %v1125 = vpack.c.b16 %v1005, %v1001
        %v1126 = vpack.c.b16 %v1010, %v1006
        %v1127 = vpack.c.b16 %v1011, %v1007
        %v1128 = vpack.c.b16 %v1012, %v1008
        %v1129 = vpack.c.b16 %v1013, %v1009
        %v1130 = vpack.c.b16 %v1018, %v1014
        %v1131 = vpack.c.b16 %v1019, %v1015
        %v1132 = vpack.c.b16 %v1020, %v1016
        %v1133 = vpack.c.b16 %v1021, %v1017
        %v1134 = vpack.c.b16 %v1026, %v1022
        %v1135 = vpack.c.b16 %v1027, %v1023
        %v1136 = vpack.c.b16 %v1028, %v1024
        %v1137 = vpack.c.b16 %v1029, %v1025
        %v1138 = vpack.c.b16 %v1034, %v1030
        %v1139 = vpack.c.b16 %v1035, %v1031
        %v1140 = vpack.c.b16 %v1036, %v1032
        %v1141 = vpack.c.b16 %v1037, %v1033
        %v1142 = vpack.c.b16 %v1042, %v1038
        %v1143 = vpack.c.b16 %v1043, %v1039
        %v1144 = vpack.c.b16 %v1044, %v1040
        %v1145 = vpack.c.b16 %v1045, %v1041
        %v1146 = vpack.c.b16 %v1050, %v1046
        %v1147 = vpack.c.b16 %v1051, %v1047
        %v1148 = vpack.c.b16 %v1052, %v1048
        %v1149 = vpack.c.b16 %v1053, %v1049
        %v1150 = vpack.c.b16 %v1058, %v1054
        %v1151 = vpack.c.b16 %v1059, %v1055
        %v1152 = vpack.c.b16 %v1060, %v1056
        %v1153 = vpack.c.b16 %v1061, %v1057
        %v1154 = vpack.c.b16 %v1066, %v1062
        %v1155 = vpack.c.b16 %v1067, %v1063
        %v1156 = vpack.c.b16 %v1068, %v1064
        %v1157 = vpack.c.b16 %v1069, %v1065
        %v1158 = vpack.c.b16 %v1074, %v1070
        %v1159 = vpack.c.b16 %v1075, %v1071
        %v1160 = vpack.c.b16 %v1076, %v1072
        %v1161 = vpack.c.b16 %v1077, %v1073
        %v1162 = vpack.c.b16 %v1082, %v1078
        %v1163 = vpack.c.b16 %v1083, %v1079
        %v1164 = vpack.c.b16 %v1084, %v1080
        %v1165 = vpack.c.b16 %v1085, %v1081
        %v1166 = vpack.c.b16 %v1090, %v1086
        %v1167 = vpack.c.b16 %v1091, %v1087
        %v1168 = vpack.c.b16 %v1092, %v1088
        %v1169 = vpack.c.b16 %v1093, %v1089
        %v1170 = vpack.c.b16 %v1098, %v1094
        %v1171 = vpack.c.b16 %v1099, %v1095
        %v1172 = vpack.c.b16 %v1100, %v1096
        %v1173 = vpack.c.b16 %v1101, %v1097
        %v1174 = vpack.c.b16 %v1106, %v1102
        %v1175 = vpack.c.b16 %v1107, %v1103
        %v1176 = vpack.c.b16 %v1108, %v1104
        %v1177 = vpack.c.b16 %v1109, %v1105
        %v1178 = vpack.c.b16 %v1114, %v1110
        %v1179 = vpack.c.b16 %v1115, %v1111
        %v1180 = vpack.c.b16 %v1116, %v1112
        %v1181 = vpack.c.b16 %v1117, %v1113
        %1246 = vmatprep.subr.bf16.mxu0 %v1119
        %1247 = vmatpush1.bf16.msra.mxu0 %v1118
        %1248 = vmatprep.subr.bf16.mxu0 %v1123
        %1249 = vmatpush1.bf16.msra.mxu0 %v1122
        %1250 = vmatprep.subr.bf16.mxu0 %v1127
        %1251 = vmatpush1.bf16.msra.mxu0 %v1126
        %1252 = vmatprep.subr.bf16.mxu0 %v1131
        %1253 = vmatpush1.bf16.msra.mxu0 %v1130
        %1254 = vmatprep.subr.bf16.mxu0 %v1135
        %1255 = vmatpush1.bf16.msra.mxu0 %v1134
        %1256 = vmatprep.subr.bf16.mxu0 %v1139
        %1257 = vmatpush1.bf16.msra.mxu0 %v1138
        %1258 = vmatprep.subr.bf16.mxu0 %v1143
        %1259 = vmatpush1.bf16.msra.mxu0 %v1142
        %1260 = vmatprep.subr.bf16.mxu0 %v1147
        %1261 = vmatpush1.bf16.msra.mxu0 %v1146
        %1262 = vmatprep.subr.bf16.mxu0 %v1151
        %1263 = vmatpush1.bf16.msra.mxu0 %v1150
        %1264 = vmatprep.subr.bf16.mxu0 %v1155
        %1265 = vmatpush1.bf16.msra.mxu0 %v1154
        %1266 = vmatprep.subr.bf16.mxu0 %v1159
        %1267 = vmatpush1.bf16.msra.mxu0 %v1158
        %1268 = vmatprep.subr.bf16.mxu0 %v1163
        %1269 = vmatpush1.bf16.msra.mxu0 %v1162
        %1270 = vmatprep.subr.bf16.mxu0 %v1167
        %1271 = vmatpush1.bf16.msra.mxu0 %v1166
        %1272 = vmatprep.subr.bf16.mxu0 %v1171
        %1273 = vmatpush1.bf16.msra.mxu0 %v1170
        %1274 = vmatprep.subr.bf16.mxu0 %v1175
        %1275 = vmatpush1.bf16.msra.mxu0 %v1174
        %1276 = vmatprep.subr.bf16.mxu0 %v1179
        %1277 = vmatpush1.bf16.msra.mxu0 %v1178
        %1278 = vmatprep.mubr.bf16.mxu0 %v820
        %1279 = vmatmul.mubr.bf16.gmra.mrb[0].mxu0 %v819
        %v1280 = vpop.f32.mrb[0].mxu0
        %v1281 = vadd.f32 %v909, %v1280
        %v1282 = vpop.f32.mrb[0].mxu0
        %v1283 = vadd.f32 %v913, %v1282
        %v1284 = vpop.f32.mrb[0].mxu0
        %v1285 = vadd.f32 %v909, %v1284
        %v1286 = vpop.f32.mrb[0].mxu0
        %v1287 = vadd.f32 %v913, %v1286
        %1288 = vmatprep.mubr.bf16.mxu0 %v822
        %1289 = vmatmul.mubr.bf16.gmra.mrb[0].mxu0 %v821
        %v1290 = vpop.f32.mrb[0].mxu0
        %v1291 = vadd.f32 %v909, %v1290
        %v1292 = vpop.f32.mrb[0].mxu0
        %v1293 = vadd.f32 %v913, %v1292
        %v1294 = vpop.f32.mrb[0].mxu0
        %v1295 = vadd.f32 %v909, %v1294
        %v1296 = vpop.f32.mrb[0].mxu0
        %v1297 = vadd.f32 %v913, %v1296
        %1298 = vmatprep.mubr.bf16.mxu0 %v824
        %1299 = vmatmul.mubr.bf16.gmra.mrb[0].mxu0 %v823
        %v1300 = vpop.f32.mrb[0].mxu0
        %v1301 = vadd.f32 %v909, %v1300
        %v1302 = vpop.f32.mrb[0].mxu0
        %v1303 = vadd.f32 %v913, %v1302
        %v1304 = vpop.f32.mrb[0].mxu0
        %v1305 = vadd.f32 %v909, %v1304
        %v1306 = vpop.f32.mrb[0].mxu0
        %v1307 = vadd.f32 %v913, %v1306
        %1308 = vmatprep.mubr.bf16.mxu0 %v826
        %1309 = vmatmul.mubr.bf16.gmra.mrb[0].mxu0 %v825
        %v1310 = vpop.f32.mrb[0].mxu0
        %v1311 = vadd.f32 %v909, %v1310
        %v1312 = vpop.f32.mrb[0].mxu0
        %v1313 = vadd.f32 %v913, %v1312
        %v1314 = vpop.f32.mrb[0].mxu0
        %v1315 = vadd.f32 %v909, %v1314
        %v1316 = vpop.f32.mrb[0].mxu0
        %v1317 = vadd.f32 %v913, %v1316
        %1318 = vmatprep.mubr.bf16.mxu0 %v828
        %1319 = vmatmul.mubr.bf16.gmra.mrb[0].mxu0 %v827
        %v1320 = vpop.f32.mrb[0].mxu0
        %v1321 = vadd.f32 %v909, %v1320
        %v1322 = vpop.f32.mrb[0].mxu0
        %v1323 = vadd.f32 %v913, %v1322
        %v1324 = vpop.f32.mrb[0].mxu0
        %v1325 = vadd.f32 %v909, %v1324
        %v1326 = vpop.f32.mrb[0].mxu0
        %v1327 = vadd.f32 %v913, %v1326
        %1328 = vmatprep.mubr.bf16.mxu0 %v830
        %1329 = vmatmul.mubr.bf16.gmra.mrb[0].mxu0 %v829
        %v1330 = vpop.f32.mrb[0].mxu0
        %v1331 = vadd.f32 %v909, %v1330
        %v1332 = vpop.f32.mrb[0].mxu0
        %v1333 = vadd.f32 %v913, %v1332
        %v1334 = vpop.f32.mrb[0].mxu0
        %v1335 = vadd.f32 %v909, %v1334
        %v1336 = vpop.f32.mrb[0].mxu0
        %v1337 = vadd.f32 %v913, %v1336
        %1338 = vmatprep.mubr.bf16.mxu0 %v832
        %1339 = vmatmul.mubr.bf16.gmra.mrb[0].mxu0 %v831
        %v1340 = vpop.f32.mrb[0].mxu0
        %v1341 = vadd.f32 %v909, %v1340
        %v1342 = vpop.f32.mrb[0].mxu0
        %v1343 = vadd.f32 %v913, %v1342
        %v1344 = vpop.f32.mrb[0].mxu0
        %v1345 = vadd.f32 %v909, %v1344
        %v1346 = vpop.f32.mrb[0].mxu0
        %v1347 = vadd.f32 %v913, %v1346
        %1348 = vmatprep.mubr.bf16.mxu0 %v834
        %1349 = vmatmul.mubr.bf16.gmra.mrb[0].mxu0 %v833
        %v1350 = vpop.f32.mrb[0].mxu0
        %v1351 = vadd.f32 %v909, %v1350
        %v1352 = vpop.f32.mrb[0].mxu0
        %v1353 = vadd.f32 %v913, %v1352
        %v1354 = vpop.f32.mrb[0].mxu0
        %v1355 = vadd.f32 %v909, %v1354
        %v1356 = vpop.f32.mrb[0].mxu0
        %v1357 = vadd.f32 %v913, %v1356
        %1358 = vdwg.mxu0
        %1359 = vmatprep.subr.bf16.mxu0 %v1121
        %1360 = vmatpush1.bf16.msra.mxu0 %v1120
        %1361 = vmatprep.subr.bf16.mxu0 %v1125
        %1362 = vmatpush1.bf16.msra.mxu0 %v1124
        %1363 = vmatprep.subr.bf16.mxu0 %v1129
        %1364 = vmatpush1.bf16.msra.mxu0 %v1128
        %1365 = vmatprep.subr.bf16.mxu0 %v1133
        %1366 = vmatpush1.bf16.msra.mxu0 %v1132
        %1367 = vmatprep.subr.bf16.mxu0 %v1137
        %1368 = vmatpush1.bf16.msra.mxu0 %v1136
        %1369 = vmatprep.subr.bf16.mxu0 %v1141
        %1370 = vmatpush1.bf16.msra.mxu0 %v1140
        %1371 = vmatprep.subr.bf16.mxu0 %v1145
        %1372 = vmatpush1.bf16.msra.mxu0 %v1144
        %1373 = vmatprep.subr.bf16.mxu0 %v1149
        %1374 = vmatpush1.bf16.msra.mxu0 %v1148
        %1375 = vmatprep.subr.bf16.mxu0 %v1153
        %1376 = vmatpush1.bf16.msra.mxu0 %v1152
        %1377 = vmatprep.subr.bf16.mxu0 %v1157
        %1378 = vmatpush1.bf16.msra.mxu0 %v1156
        %1379 = vmatprep.subr.bf16.mxu0 %v1161
        %1380 = vmatpush1.bf16.msra.mxu0 %v1160
        %1381 = vmatprep.subr.bf16.mxu0 %v1165
        %1382 = vmatpush1.bf16.msra.mxu0 %v1164
        %1383 = vmatprep.subr.bf16.mxu0 %v1169
        %1384 = vmatpush1.bf16.msra.mxu0 %v1168
        %1385 = vmatprep.subr.bf16.mxu0 %v1173
        %1386 = vmatpush1.bf16.msra.mxu0 %v1172
        %1387 = vmatprep.subr.bf16.mxu0 %v1177
        %1388 = vmatpush1.bf16.msra.mxu0 %v1176
        %1389 = vmatprep.subr.bf16.mxu0 %v1181
        %1390 = vmatpush1.bf16.msra.mxu0 %v1180
        %1391 = vmatprep.mubr.bf16.mxu0 %v820
        %1392 = vmatmul.mubr.bf16.gmra.mrb[0].mxu0 %v819
        %v1393 = vpop.f32.mrb[0].mxu0
        %v1394 = vadd.f32 %v917, %v1393
        %v1395 = vpop.f32.mrb[0].mxu0
        %v1396 = vadd.f32 %v921, %v1395
        %v1397 = vpop.f32.mrb[0].mxu0
        %v1398 = vadd.f32 %v917, %v1397
        %v1399 = vpop.f32.mrb[0].mxu0
        %v1400 = vadd.f32 %v921, %v1399
        %1401 = vmatprep.mubr.bf16.mxu0 %v822
        %1402 = vmatmul.mubr.bf16.gmra.mrb[0].mxu0 %v821
        %v1403 = vpop.f32.mrb[0].mxu0
        %v1404 = vadd.f32 %v917, %v1403
        %v1405 = vpop.f32.mrb[0].mxu0
        %v1406 = vadd.f32 %v921, %v1405
        %v1407 = vpop.f32.mrb[0].mxu0
        %v1408 = vadd.f32 %v917, %v1407
        %v1409 = vpop.f32.mrb[0].mxu0
        %v1410 = vadd.f32 %v921, %v1409
        %1411 = vmatprep.mubr.bf16.mxu0 %v824
        %1412 = vmatmul.mubr.bf16.gmra.mrb[0].mxu0 %v823
        %v1413 = vpop.f32.mrb[0].mxu0
        %v1414 = vadd.f32 %v917, %v1413
        %v1415 = vpop.f32.mrb[0].mxu0
        %v1416 = vadd.f32 %v921, %v1415
        %v1417 = vpop.f32.mrb[0].mxu0
        %v1418 = vadd.f32 %v917, %v1417
        %v1419 = vpop.f32.mrb[0].mxu0
        %v1420 = vadd.f32 %v921, %v1419
        %1421 = vmatprep.mubr.bf16.mxu0 %v826
        %1422 = vmatmul.mubr.bf16.gmra.mrb[0].mxu0 %v825
        %v1423 = vpop.f32.mrb[0].mxu0
        %v1424 = vadd.f32 %v917, %v1423
        %v1425 = vpop.f32.mrb[0].mxu0
        %v1426 = vadd.f32 %v921, %v1425
        %v1427 = vpop.f32.mrb[0].mxu0
        %v1428 = vadd.f32 %v917, %v1427
        %v1429 = vpop.f32.mrb[0].mxu0
        %v1430 = vadd.f32 %v921, %v1429
        %1431 = vmatprep.mubr.bf16.mxu0 %v828
        %1432 = vmatmul.mubr.bf16.gmra.mrb[0].mxu0 %v827
        %v1433 = vpop.f32.mrb[0].mxu0
        %v1434 = vadd.f32 %v917, %v1433
        %v1435 = vpop.f32.mrb[0].mxu0
        %v1436 = vadd.f32 %v921, %v1435
        %v1437 = vpop.f32.mrb[0].mxu0
        %v1438 = vadd.f32 %v917, %v1437
        %v1439 = vpop.f32.mrb[0].mxu0
        %v1440 = vadd.f32 %v921, %v1439
        %1441 = vmatprep.mubr.bf16.mxu0 %v830
        %1442 = vmatmul.mubr.bf16.gmra.mrb[0].mxu0 %v829
        %v1443 = vpop.f32.mrb[0].mxu0
        %v1444 = vadd.f32 %v917, %v1443
        %v1445 = vpop.f32.mrb[0].mxu0
        %v1446 = vadd.f32 %v921, %v1445
        %v1447 = vpop.f32.mrb[0].mxu0
        %v1448 = vadd.f32 %v917, %v1447
        %v1449 = vpop.f32.mrb[0].mxu0
        %v1450 = vadd.f32 %v921, %v1449
        %1451 = vmatprep.mubr.bf16.mxu0 %v832
        %1452 = vmatmul.mubr.bf16.gmra.mrb[0].mxu0 %v831
        %v1453 = vpop.f32.mrb[0].mxu0
        %v1454 = vadd.f32 %v917, %v1453
        %v1455 = vpop.f32.mrb[0].mxu0
        %v1456 = vadd.f32 %v921, %v1455
        %v1457 = vpop.f32.mrb[0].mxu0
        %v1458 = vadd.f32 %v917, %v1457
        %v1459 = vpop.f32.mrb[0].mxu0
        %v1460 = vadd.f32 %v921, %v1459
        %1461 = vmatprep.mubr.bf16.mxu0 %v834
        %1462 = vmatmul.mubr.bf16.gmra.mrb[0].mxu0 %v833
        %v1463 = vpop.f32.mrb[0].mxu0
        %v1464 = vadd.f32 %v917, %v1463
        %v1465 = vpop.f32.mrb[0].mxu0
        %v1466 = vadd.f32 %v921, %v1465
        %v1467 = vpop.f32.mrb[0].mxu0
        %v1468 = vadd.f32 %v917, %v1467
        %v1469 = vpop.f32.mrb[0].mxu0
        %v1470 = vadd.f32 %v921, %v1469
        %1471 = vdwg.mxu0
        %s1472 = smul.addr %s835, 4
        %s1473 = scalar_lea.vmem [#allocation7], %s1472
        %v1474 = vld [vmem:[%s1473] sm:$0xff]
        %v1475 = vld [vmem:[%s1473 + $0x8] sm:$0xff]
        %v1476 = vld [vmem:[%s1473 + $0x10] sm:$0xff]
        %v1477 = vld [vmem:[%s1473 + $0x18] sm:$0xff]
        %v1478 = vld [vmem:[%s1473 + $0x20] sm:$0xff]
        %v1479 = vld [vmem:[%s1473 + $0x28] sm:$0xff]
        %v1480 = vld [vmem:[%s1473 + $0x30] sm:$0xff]
        %v1481 = vld [vmem:[%s1473 + $0x38] sm:$0xff]
        %v1482 = vld [vmem:[%s1473 + $0x40] sm:$0xff]
        %v1483 = vld [vmem:[%s1473 + $0x48] sm:$0xff]
        %v1484 = vld [vmem:[%s1473 + $0x50] sm:$0xff]
        %v1485 = vld [vmem:[%s1473 + $0x58] sm:$0xff]
        %v1486 = vld [vmem:[%s1473 + $0x60] sm:$0xff]
        %v1487 = vld [vmem:[%s1473 + $0x68] sm:$0xff]
        %v1488 = vld [vmem:[%s1473 + $0x70] sm:$0xff]
        %v1489 = vld [vmem:[%s1473 + $0x78] sm:$0xff]
        %v1490 = vld [vmem:[%s1473 + $0x80] sm:$0xff]
        %v1491 = vld [vmem:[%s1473 + $0x88] sm:$0xff]
        %v1492 = vld [vmem:[%s1473 + $0x90] sm:$0xff]
        %v1493 = vld [vmem:[%s1473 + $0x98] sm:$0xff]
        %v1494 = vld [vmem:[%s1473 + $0xa0] sm:$0xff]
        %v1495 = vld [vmem:[%s1473 + $0xa8] sm:$0xff]
        %v1496 = vld [vmem:[%s1473 + $0xb0] sm:$0xff]
        %v1497 = vld [vmem:[%s1473 + $0xb8] sm:$0xff]
        %v1498 = vld [vmem:[%s1473 + $0xc0] sm:$0xff]
        %v1499 = vld [vmem:[%s1473 + $0xc8] sm:$0xff]
        %v1500 = vld [vmem:[%s1473 + $0xd0] sm:$0xff]
        %v1501 = vld [vmem:[%s1473 + $0xd8] sm:$0xff]
        %v1502 = vld [vmem:[%s1473 + $0xe0] sm:$0xff]
        %v1503 = vld [vmem:[%s1473 + $0xe8] sm:$0xff]
        %v1504 = vld [vmem:[%s1473 + $0xf0] sm:$0xff]
        %v1505 = vld [vmem:[%s1473 + $0xf8] sm:$0xff]
        %v1506 = vld [vmem:[%s1473 + $0x100] sm:$0xff]
        %v1507 = vld [vmem:[%s1473 + $0x108] sm:$0xff]
        %v1508 = vld [vmem:[%s1473 + $0x110] sm:$0xff]
        %v1509 = vld [vmem:[%s1473 + $0x118] sm:$0xff]
        %v1510 = vld [vmem:[%s1473 + $0x120] sm:$0xff]
        %v1511 = vld [vmem:[%s1473 + $0x128] sm:$0xff]
        %v1512 = vld [vmem:[%s1473 + $0x130] sm:$0xff]
        %v1513 = vld [vmem:[%s1473 + $0x138] sm:$0xff]
        %v1514 = vld [vmem:[%s1473 + $0x140] sm:$0xff]
        %v1515 = vld [vmem:[%s1473 + $0x148] sm:$0xff]
        %v1516 = vld [vmem:[%s1473 + $0x150] sm:$0xff]
        %v1517 = vld [vmem:[%s1473 + $0x158] sm:$0xff]
        %v1518 = vld [vmem:[%s1473 + $0x160] sm:$0xff]
        %v1519 = vld [vmem:[%s1473 + $0x168] sm:$0xff]
        %v1520 = vld [vmem:[%s1473 + $0x170] sm:$0xff]
        %v1521 = vld [vmem:[%s1473 + $0x178] sm:$0xff]
        %v1522 = vld [vmem:[%s1473 + $0x180] sm:$0xff]
        %v1523 = vld [vmem:[%s1473 + $0x188] sm:$0xff]
        %v1524 = vld [vmem:[%s1473 + $0x190] sm:$0xff]
        %v1525 = vld [vmem:[%s1473 + $0x198] sm:$0xff]
        %v1526 = vld [vmem:[%s1473 + $0x1a0] sm:$0xff]
        %v1527 = vld [vmem:[%s1473 + $0x1a8] sm:$0xff]
        %v1528 = vld [vmem:[%s1473 + $0x1b0] sm:$0xff]
        %v1529 = vld [vmem:[%s1473 + $0x1b8] sm:$0xff]
        %v1530 = vld [vmem:[%s1473 + $0x1c0] sm:$0xff]
        %v1531 = vld [vmem:[%s1473 + $0x1c8] sm:$0xff]
        %v1532 = vld [vmem:[%s1473 + $0x1d0] sm:$0xff]
        %v1533 = vld [vmem:[%s1473 + $0x1d8] sm:$0xff]
        %v1534 = vld [vmem:[%s1473 + $0x1e0] sm:$0xff]
        %v1535 = vld [vmem:[%s1473 + $0x1e8] sm:$0xff]
        %v1536 = vld [vmem:[%s1473 + $0x1f0] sm:$0xff]
        %v1537 = vld [vmem:[%s1473 + $0x1f8] sm:$0xff]
        %s1538 = scalar_lea.vmem %s5, %s902
        %v1539 = vld [vmem:[%s1538] sm:$0xf]
        %v1541 = vlaneseq
        %v1542 = vshrl.u32 %v1541, 7
        %v1543 = vsub.s32 0, %v1542
        %v1544 = vrot.slane %v1539, %v1543
        %v1545 = vlaneseq
        %v1546 = vshrl.u32 %v1545, 7
        %v1547 = vsub.s32 1, %v1546
        %v1548 = vrot.slane %v1539, %v1547
        %v1549 = vlaneseq
        %v1550 = vshrl.u32 %v1549, 7
        %v1551 = vsub.s32 2, %v1550
        %v1552 = vrot.slane %v1539, %v1551
        %v1553 = vlaneseq
        %v1554 = vshrl.u32 %v1553, 7
        %v1555 = vsub.s32 3, %v1554
        %v1556 = vrot.slane %v1539, %v1555
        %v1625 = vunpack.c.l.b16 %v1474
        %v1626 = vunpack.c.h.b16 %v1474
        %v1627 = vunpack.c.l.b16 %v1475
        %v1628 = vunpack.c.h.b16 %v1475
        %v1629 = vunpack.c.l.b16 %v1476
        %v1630 = vunpack.c.h.b16 %v1476
        %v1631 = vunpack.c.l.b16 %v1477
        %v1632 = vunpack.c.h.b16 %v1477
        %v1633 = vunpack.c.l.b16 %v1478
        %v1634 = vunpack.c.h.b16 %v1478
        %v1635 = vunpack.c.l.b16 %v1479
        %v1636 = vunpack.c.h.b16 %v1479
        %v1637 = vunpack.c.l.b16 %v1480
        %v1638 = vunpack.c.h.b16 %v1480
        %v1639 = vunpack.c.l.b16 %v1481
        %v1640 = vunpack.c.h.b16 %v1481
        %v1641 = vunpack.c.l.b16 %v1482
        %v1642 = vunpack.c.h.b16 %v1482
        %v1643 = vunpack.c.l.b16 %v1483
        %v1644 = vunpack.c.h.b16 %v1483
        %v1645 = vunpack.c.l.b16 %v1484
        %v1646 = vunpack.c.h.b16 %v1484
        %v1647 = vunpack.c.l.b16 %v1485
        %v1648 = vunpack.c.h.b16 %v1485
        %v1649 = vunpack.c.l.b16 %v1486
        %v1650 = vunpack.c.h.b16 %v1486
        %v1651 = vunpack.c.l.b16 %v1487
        %v1652 = vunpack.c.h.b16 %v1487
        %v1653 = vunpack.c.l.b16 %v1488
        %v1654 = vunpack.c.h.b16 %v1488
        %v1655 = vunpack.c.l.b16 %v1489
        %v1656 = vunpack.c.h.b16 %v1489
        %v1657 = vunpack.c.l.b16 %v1490
        %v1658 = vunpack.c.h.b16 %v1490
        %v1659 = vunpack.c.l.b16 %v1491
        %v1660 = vunpack.c.h.b16 %v1491
        %v1661 = vunpack.c.l.b16 %v1492
        %v1662 = vunpack.c.h.b16 %v1492
        %v1663 = vunpack.c.l.b16 %v1493
        %v1664 = vunpack.c.h.b16 %v1493
        %v1665 = vunpack.c.l.b16 %v1494
        %v1666 = vunpack.c.h.b16 %v1494
        %v1667 = vunpack.c.l.b16 %v1495
        %v1668 = vunpack.c.h.b16 %v1495
        %v1669 = vunpack.c.l.b16 %v1496
        %v1670 = vunpack.c.h.b16 %v1496
        %v1671 = vunpack.c.l.b16 %v1497
        %v1672 = vunpack.c.h.b16 %v1497
        %v1673 = vunpack.c.l.b16 %v1498
        %v1674 = vunpack.c.h.b16 %v1498
        %v1675 = vunpack.c.l.b16 %v1499
        %v1676 = vunpack.c.h.b16 %v1499
        %v1677 = vunpack.c.l.b16 %v1500
        %v1678 = vunpack.c.h.b16 %v1500
        %v1679 = vunpack.c.l.b16 %v1501
        %v1680 = vunpack.c.h.b16 %v1501
        %v1681 = vunpack.c.l.b16 %v1502
        %v1682 = vunpack.c.h.b16 %v1502
        %v1683 = vunpack.c.l.b16 %v1503
        %v1684 = vunpack.c.h.b16 %v1503
        %v1685 = vunpack.c.l.b16 %v1504
        %v1686 = vunpack.c.h.b16 %v1504
        %v1687 = vunpack.c.l.b16 %v1505
        %v1688 = vunpack.c.h.b16 %v1505
        %v1689 = vunpack.c.l.b16 %v1506
        %v1690 = vunpack.c.h.b16 %v1506
        %v1691 = vunpack.c.l.b16 %v1507
        %v1692 = vunpack.c.h.b16 %v1507
        %v1693 = vunpack.c.l.b16 %v1508
        %v1694 = vunpack.c.h.b16 %v1508
        %v1695 = vunpack.c.l.b16 %v1509
        %v1696 = vunpack.c.h.b16 %v1509
        %v1697 = vunpack.c.l.b16 %v1510
        %v1698 = vunpack.c.h.b16 %v1510
        %v1699 = vunpack.c.l.b16 %v1511
        %v1700 = vunpack.c.h.b16 %v1511
        %v1701 = vunpack.c.l.b16 %v1512
        %v1702 = vunpack.c.h.b16 %v1512
        %v1703 = vunpack.c.l.b16 %v1513
        %v1704 = vunpack.c.h.b16 %v1513
        %v1705 = vunpack.c.l.b16 %v1514
        %v1706 = vunpack.c.h.b16 %v1514
        %v1707 = vunpack.c.l.b16 %v1515
        %v1708 = vunpack.c.h.b16 %v1515
        %v1709 = vunpack.c.l.b16 %v1516
        %v1710 = vunpack.c.h.b16 %v1516
        %v1711 = vunpack.c.l.b16 %v1517
        %v1712 = vunpack.c.h.b16 %v1517
        %v1713 = vunpack.c.l.b16 %v1518
        %v1714 = vunpack.c.h.b16 %v1518
        %v1715 = vunpack.c.l.b16 %v1519
        %v1716 = vunpack.c.h.b16 %v1519
        %v1717 = vunpack.c.l.b16 %v1520
        %v1718 = vunpack.c.h.b16 %v1520
        %v1719 = vunpack.c.l.b16 %v1521
        %v1720 = vunpack.c.h.b16 %v1521
        %v1721 = vunpack.c.l.b16 %v1522
        %v1722 = vunpack.c.h.b16 %v1522
        %v1723 = vunpack.c.l.b16 %v1523
        %v1724 = vunpack.c.h.b16 %v1523
        %v1725 = vunpack.c.l.b16 %v1524
        %v1726 = vunpack.c.h.b16 %v1524
        %v1727 = vunpack.c.l.b16 %v1525
        %v1728 = vunpack.c.h.b16 %v1525
        %v1729 = vunpack.c.l.b16 %v1526
        %v1730 = vunpack.c.h.b16 %v1526
        %v1731 = vunpack.c.l.b16 %v1527
        %v1732 = vunpack.c.h.b16 %v1527
        %v1733 = vunpack.c.l.b16 %v1528
        %v1734 = vunpack.c.h.b16 %v1528
        %v1735 = vunpack.c.l.b16 %v1529
        %v1736 = vunpack.c.h.b16 %v1529
        %v1737 = vunpack.c.l.b16 %v1530
        %v1738 = vunpack.c.h.b16 %v1530
        %v1739 = vunpack.c.l.b16 %v1531
        %v1740 = vunpack.c.h.b16 %v1531
        %v1741 = vunpack.c.l.b16 %v1532
        %v1742 = vunpack.c.h.b16 %v1532
        %v1743 = vunpack.c.l.b16 %v1533
        %v1744 = vunpack.c.h.b16 %v1533
        %v1745 = vunpack.c.l.b16 %v1534
        %v1746 = vunpack.c.h.b16 %v1534
        %v1747 = vunpack.c.l.b16 %v1535
        %v1748 = vunpack.c.h.b16 %v1535
        %v1749 = vunpack.c.l.b16 %v1536
        %v1750 = vunpack.c.h.b16 %v1536
        %v1751 = vunpack.c.l.b16 %v1537
        %v1752 = vunpack.c.h.b16 %v1537
        %v1753 = vpack.c.b16 %v1629, %v1625
        %v1754 = vpack.c.b16 %v1630, %v1626
        %v1755 = vpack.c.b16 %v1631, %v1627
        %v1756 = vpack.c.b16 %v1632, %v1628
        %v1757 = vpack.c.b16 %v1637, %v1633
        %v1758 = vpack.c.b16 %v1638, %v1634
        %v1759 = vpack.c.b16 %v1639, %v1635
        %v1760 = vpack.c.b16 %v1640, %v1636
        %v1761 = vpack.c.b16 %v1645, %v1641
        %v1762 = vpack.c.b16 %v1646, %v1642
        %v1763 = vpack.c.b16 %v1647, %v1643
        %v1764 = vpack.c.b16 %v1648, %v1644
        %v1765 = vpack.c.b16 %v1653, %v1649
        %v1766 = vpack.c.b16 %v1654, %v1650
        %v1767 = vpack.c.b16 %v1655, %v1651
        %v1768 = vpack.c.b16 %v1656, %v1652
        %v1769 = vpack.c.b16 %v1661, %v1657
        %v1770 = vpack.c.b16 %v1662, %v1658
        %v1771 = vpack.c.b16 %v1663, %v1659
        %v1772 = vpack.c.b16 %v1664, %v1660
        %v1773 = vpack.c.b16 %v1669, %v1665
        %v1774 = vpack.c.b16 %v1670, %v1666
        %v1775 = vpack.c.b16 %v1671, %v1667
        %v1776 = vpack.c.b16 %v1672, %v1668
        %v1777 = vpack.c.b16 %v1677, %v1673
        %v1778 = vpack.c.b16 %v1678, %v1674
        %v1779 = vpack.c.b16 %v1679, %v1675
        %v1780 = vpack.c.b16 %v1680, %v1676
        %v1781 = vpack.c.b16 %v1685, %v1681
        %v1782 = vpack.c.b16 %v1686, %v1682
        %v1783 = vpack.c.b16 %v1687, %v1683
        %v1784 = vpack.c.b16 %v1688, %v1684
        %v1785 = vpack.c.b16 %v1693, %v1689
        %v1786 = vpack.c.b16 %v1694, %v1690
        %v1787 = vpack.c.b16 %v1695, %v1691
        %v1788 = vpack.c.b16 %v1696, %v1692
        %v1789 = vpack.c.b16 %v1701, %v1697
        %v1790 = vpack.c.b16 %v1702, %v1698
        %v1791 = vpack.c.b16 %v1703, %v1699
        %v1792 = vpack.c.b16 %v1704, %v1700
        %v1793 = vpack.c.b16 %v1709, %v1705
        %v1794 = vpack.c.b16 %v1710, %v1706
        %v1795 = vpack.c.b16 %v1711, %v1707
        %v1796 = vpack.c.b16 %v1712, %v1708
        %v1797 = vpack.c.b16 %v1717, %v1713
        %v1798 = vpack.c.b16 %v1718, %v1714
        %v1799 = vpack.c.b16 %v1719, %v1715
        %v1800 = vpack.c.b16 %v1720, %v1716
        %v1801 = vpack.c.b16 %v1725, %v1721
        %v1802 = vpack.c.b16 %v1726, %v1722
        %v1803 = vpack.c.b16 %v1727, %v1723
        %v1804 = vpack.c.b16 %v1728, %v1724
        %v1805 = vpack.c.b16 %v1733, %v1729
        %v1806 = vpack.c.b16 %v1734, %v1730
        %v1807 = vpack.c.b16 %v1735, %v1731
        %v1808 = vpack.c.b16 %v1736, %v1732
        %v1809 = vpack.c.b16 %v1741, %v1737
        %v1810 = vpack.c.b16 %v1742, %v1738
        %v1811 = vpack.c.b16 %v1743, %v1739
        %v1812 = vpack.c.b16 %v1744, %v1740
        %v1813 = vpack.c.b16 %v1749, %v1745
        %v1814 = vpack.c.b16 %v1750, %v1746
        %v1815 = vpack.c.b16 %v1751, %v1747
        %v1816 = vpack.c.b16 %v1752, %v1748
        %1881 = vmatprep.subr.bf16.mxu0 %v1754
        %1882 = vmatpush1.bf16.msra.mxu0 %v1753
        %1883 = vmatprep.subr.bf16.mxu0 %v1758
        %1884 = vmatpush1.bf16.msra.mxu0 %v1757
        %1885 = vmatprep.subr.bf16.mxu0 %v1762
        %1886 = vmatpush1.bf16.msra.mxu0 %v1761
        %1887 = vmatprep.subr.bf16.mxu0 %v1766
        %1888 = vmatpush1.bf16.msra.mxu0 %v1765
        %1889 = vmatprep.subr.bf16.mxu0 %v1770
        %1890 = vmatpush1.bf16.msra.mxu0 %v1769
        %1891 = vmatprep.subr.bf16.mxu0 %v1774
        %1892 = vmatpush1.bf16.msra.mxu0 %v1773
        %1893 = vmatprep.subr.bf16.mxu0 %v1778
        %1894 = vmatpush1.bf16.msra.mxu0 %v1777
        %1895 = vmatprep.subr.bf16.mxu0 %v1782
        %1896 = vmatpush1.bf16.msra.mxu0 %v1781
        %1897 = vmatprep.subr.bf16.mxu0 %v1786
        %1898 = vmatpush1.bf16.msra.mxu0 %v1785
        %1899 = vmatprep.subr.bf16.mxu0 %v1790
        %1900 = vmatpush1.bf16.msra.mxu0 %v1789
        %1901 = vmatprep.subr.bf16.mxu0 %v1794
        %1902 = vmatpush1.bf16.msra.mxu0 %v1793
        %1903 = vmatprep.subr.bf16.mxu0 %v1798
        %1904 = vmatpush1.bf16.msra.mxu0 %v1797
        %1905 = vmatprep.subr.bf16.mxu0 %v1802
        %1906 = vmatpush1.bf16.msra.mxu0 %v1801
        %1907 = vmatprep.subr.bf16.mxu0 %v1806
        %1908 = vmatpush1.bf16.msra.mxu0 %v1805
        %1909 = vmatprep.subr.bf16.mxu0 %v1810
        %1910 = vmatpush1.bf16.msra.mxu0 %v1809
        %1911 = vmatprep.subr.bf16.mxu0 %v1814
        %1912 = vmatpush1.bf16.msra.mxu0 %v1813
        %1913 = vmatprep.mubr.bf16.mxu0 %v820
        %1914 = vmatmul.mubr.bf16.gmra.mrb[0].mxu0 %v819
        %v1915 = vpop.f32.mrb[0].mxu0
        %v1916 = vadd.f32 %v1544, %v1915
        %v1917 = vpop.f32.mrb[0].mxu0
        %v1918 = vadd.f32 %v1548, %v1917
        %v1919 = vpop.f32.mrb[0].mxu0
        %v1920 = vadd.f32 %v1544, %v1919
        %v1921 = vpop.f32.mrb[0].mxu0
        %v1922 = vadd.f32 %v1548, %v1921
        %1923 = vmatprep.mubr.bf16.mxu0 %v822
        %1924 = vmatmul.mubr.bf16.gmra.mrb[0].mxu0 %v821
        %v1925 = vpop.f32.mrb[0].mxu0
        %v1926 = vadd.f32 %v1544, %v1925
        %v1927 = vpop.f32.mrb[0].mxu0
        %v1928 = vadd.f32 %v1548, %v1927
        %v1929 = vpop.f32.mrb[0].mxu0
        %v1930 = vadd.f32 %v1544, %v1929
        %v1931 = vpop.f32.mrb[0].mxu0
        %v1932 = vadd.f32 %v1548, %v1931
        %1933 = vmatprep.mubr.bf16.mxu0 %v824
        %1934 = vmatmul.mubr.bf16.gmra.mrb[0].mxu0 %v823
        %v1935 = vpop.f32.mrb[0].mxu0
        %v1936 = vadd.f32 %v1544, %v1935
        %v1937 = vpop.f32.mrb[0].mxu0
        %v1938 = vadd.f32 %v1548, %v1937
        %v1939 = vpop.f32.mrb[0].mxu0
        %v1940 = vadd.f32 %v1544, %v1939
        %v1941 = vpop.f32.mrb[0].mxu0
        %v1942 = vadd.f32 %v1548, %v1941
        %1943 = vmatprep.mubr.bf16.mxu0 %v826
        %1944 = vmatmul.mubr.bf16.gmra.mrb[0].mxu0 %v825
        %v1945 = vpop.f32.mrb[0].mxu0
        %v1946 = vadd.f32 %v1544, %v1945
        %v1947 = vpop.f32.mrb[0].mxu0
        %v1948 = vadd.f32 %v1548, %v1947
        %v1949 = vpop.f32.mrb[0].mxu0
        %v1950 = vadd.f32 %v1544, %v1949
        %v1951 = vpop.f32.mrb[0].mxu0
        %v1952 = vadd.f32 %v1548, %v1951
        %1953 = vmatprep.mubr.bf16.mxu0 %v828
        %1954 = vmatmul.mubr.bf16.gmra.mrb[0].mxu0 %v827
        %v1955 = vpop.f32.mrb[0].mxu0
        %v1956 = vadd.f32 %v1544, %v1955
        %v1957 = vpop.f32.mrb[0].mxu0
        %v1958 = vadd.f32 %v1548, %v1957
        %v1959 = vpop.f32.mrb[0].mxu0
        %v1960 = vadd.f32 %v1544, %v1959
        %v1961 = vpop.f32.mrb[0].mxu0
        %v1962 = vadd.f32 %v1548, %v1961
        %1963 = vmatprep.mubr.bf16.mxu0 %v830
        %1964 = vmatmul.mubr.bf16.gmra.mrb[0].mxu0 %v829
        %v1965 = vpop.f32.mrb[0].mxu0
        %v1966 = vadd.f32 %v1544, %v1965
        %v1967 = vpop.f32.mrb[0].mxu0
        %v1968 = vadd.f32 %v1548, %v1967
        %v1969 = vpop.f32.mrb[0].mxu0
        %v1970 = vadd.f32 %v1544, %v1969
        %v1971 = vpop.f32.mrb[0].mxu0
        %v1972 = vadd.f32 %v1548, %v1971
        %1973 = vmatprep.mubr.bf16.mxu0 %v832
        %1974 = vmatmul.mubr.bf16.gmra.mrb[0].mxu0 %v831
        %v1975 = vpop.f32.mrb[0].mxu0
        %v1976 = vadd.f32 %v1544, %v1975
        %v1977 = vpop.f32.mrb[0].mxu0
        %v1978 = vadd.f32 %v1548, %v1977
        %v1979 = vpop.f32.mrb[0].mxu0
        %v1980 = vadd.f32 %v1544, %v1979
        %v1981 = vpop.f32.mrb[0].mxu0
        %v1982 = vadd.f32 %v1548, %v1981
        %1983 = vmatprep.mubr.bf16.mxu0 %v834
        %1984 = vmatmul.mubr.bf16.gmra.mrb[0].mxu0 %v833
        %v1985 = vpop.f32.mrb[0].mxu0
        %v1986 = vadd.f32 %v1544, %v1985
        %v1987 = vpop.f32.mrb[0].mxu0
        %v1988 = vadd.f32 %v1548, %v1987
        %v1989 = vpop.f32.mrb[0].mxu0
        %v1990 = vadd.f32 %v1544, %v1989
        %v1991 = vpop.f32.mrb[0].mxu0
        %v1992 = vadd.f32 %v1548, %v1991
        %1993 = vdwg.mxu0
        %1994 = vmatprep.subr.bf16.mxu0 %v1756
        %1995 = vmatpush1.bf16.msra.mxu0 %v1755
        %1996 = vmatprep.subr.bf16.mxu0 %v1760
        %1997 = vmatpush1.bf16.msra.mxu0 %v1759
        %1998 = vmatprep.subr.bf16.mxu0 %v1764
        %1999 = vmatpush1.bf16.msra.mxu0 %v1763
        %2000 = vmatprep.subr.bf16.mxu0 %v1768
        %2001 = vmatpush1.bf16.msra.mxu0 %v1767
        %2002 = vmatprep.subr.bf16.mxu0 %v1772
        %2003 = vmatpush1.bf16.msra.mxu0 %v1771
        %2004 = vmatprep.subr.bf16.mxu0 %v1776
        %2005 = vmatpush1.bf16.msra.mxu0 %v1775
        %2006 = vmatprep.subr.bf16.mxu0 %v1780
        %2007 = vmatpush1.bf16.msra.mxu0 %v1779
        %2008 = vmatprep.subr.bf16.mxu0 %v1784
        %2009 = vmatpush1.bf16.msra.mxu0 %v1783
        %2010 = vmatprep.subr.bf16.mxu0 %v1788
        %2011 = vmatpush1.bf16.msra.mxu0 %v1787
        %2012 = vmatprep.subr.bf16.mxu0 %v1792
        %2013 = vmatpush1.bf16.msra.mxu0 %v1791
        %2014 = vmatprep.subr.bf16.mxu0 %v1796
        %2015 = vmatpush1.bf16.msra.mxu0 %v1795
        %2016 = vmatprep.subr.bf16.mxu0 %v1800
        %2017 = vmatpush1.bf16.msra.mxu0 %v1799
        %2018 = vmatprep.subr.bf16.mxu0 %v1804
        %2019 = vmatpush1.bf16.msra.mxu0 %v1803
        %2020 = vmatprep.subr.bf16.mxu0 %v1808
        %2021 = vmatpush1.bf16.msra.mxu0 %v1807
        %2022 = vmatprep.subr.bf16.mxu0 %v1812
        %2023 = vmatpush1.bf16.msra.mxu0 %v1811
        %2024 = vmatprep.subr.bf16.mxu0 %v1816
        %2025 = vmatpush1.bf16.msra.mxu0 %v1815
        %2026 = vmatprep.mubr.bf16.mxu0 %v820
        %2027 = vmatmul.mubr.bf16.gmra.mrb[0].mxu0 %v819
        %v2028 = vpop.f32.mrb[0].mxu0
        %v2029 = vadd.f32 %v1552, %v2028
        %v2030 = vpop.f32.mrb[0].mxu0
        %v2031 = vadd.f32 %v1556, %v2030
        %v2032 = vpop.f32.mrb[0].mxu0
        %v2033 = vadd.f32 %v1552, %v2032
        %v2034 = vpop.f32.mrb[0].mxu0
        %v2035 = vadd.f32 %v1556, %v2034
        %2036 = vmatprep.mubr.bf16.mxu0 %v822
        %2037 = vmatmul.mubr.bf16.gmra.mrb[0].mxu0 %v821
        %v2038 = vpop.f32.mrb[0].mxu0
        %v2039 = vadd.f32 %v1552, %v2038
        %v2040 = vpop.f32.mrb[0].mxu0
        %v2041 = vadd.f32 %v1556, %v2040
        %v2042 = vpop.f32.mrb[0].mxu0
        %v2043 = vadd.f32 %v1552, %v2042
        %v2044 = vpop.f32.mrb[0].mxu0
        %v2045 = vadd.f32 %v1556, %v2044
        %2046 = vmatprep.mubr.bf16.mxu0 %v824
        %2047 = vmatmul.mubr.bf16.gmra.mrb[0].mxu0 %v823
        %v2048 = vpop.f32.mrb[0].mxu0
        %v2049 = vadd.f32 %v1552, %v2048
        %v2050 = vpop.f32.mrb[0].mxu0
        %v2051 = vadd.f32 %v1556, %v2050
        %v2052 = vpop.f32.mrb[0].mxu0
        %v2053 = vadd.f32 %v1552, %v2052
        %v2054 = vpop.f32.mrb[0].mxu0
        %v2055 = vadd.f32 %v1556, %v2054
        %2056 = vmatprep.mubr.bf16.mxu0 %v826
        %2057 = vmatmul.mubr.bf16.gmra.mrb[0].mxu0 %v825
        %v2058 = vpop.f32.mrb[0].mxu0
        %v2059 = vadd.f32 %v1552, %v2058
        %v2060 = vpop.f32.mrb[0].mxu0
        %v2061 = vadd.f32 %v1556, %v2060
        %v2062 = vpop.f32.mrb[0].mxu0
        %v2063 = vadd.f32 %v1552, %v2062
        %v2064 = vpop.f32.mrb[0].mxu0
        %v2065 = vadd.f32 %v1556, %v2064
        %2066 = vmatprep.mubr.bf16.mxu0 %v828
        %2067 = vmatmul.mubr.bf16.gmra.mrb[0].mxu0 %v827
        %v2068 = vpop.f32.mrb[0].mxu0
        %v2069 = vadd.f32 %v1552, %v2068
        %v2070 = vpop.f32.mrb[0].mxu0
        %v2071 = vadd.f32 %v1556, %v2070
        %v2072 = vpop.f32.mrb[0].mxu0
        %v2073 = vadd.f32 %v1552, %v2072
        %v2074 = vpop.f32.mrb[0].mxu0
        %v2075 = vadd.f32 %v1556, %v2074
        %2076 = vmatprep.mubr.bf16.mxu0 %v830
        %2077 = vmatmul.mubr.bf16.gmra.mrb[0].mxu0 %v829
        %v2078 = vpop.f32.mrb[0].mxu0
        %v2079 = vadd.f32 %v1552, %v2078
        %v2080 = vpop.f32.mrb[0].mxu0
        %v2081 = vadd.f32 %v1556, %v2080
        %v2082 = vpop.f32.mrb[0].mxu0
        %v2083 = vadd.f32 %v1552, %v2082
        %v2084 = vpop.f32.mrb[0].mxu0
        %v2085 = vadd.f32 %v1556, %v2084
        %2086 = vmatprep.mubr.bf16.mxu0 %v832
        %2087 = vmatmul.mubr.bf16.gmra.mrb[0].mxu0 %v831
        %v2088 = vpop.f32.mrb[0].mxu0
        %v2089 = vadd.f32 %v1552, %v2088
        %v2090 = vpop.f32.mrb[0].mxu0
        %v2091 = vadd.f32 %v1556, %v2090
        %v2092 = vpop.f32.mrb[0].mxu0
        %v2093 = vadd.f32 %v1552, %v2092
        %v2094 = vpop.f32.mrb[0].mxu0
        %v2095 = vadd.f32 %v1556, %v2094
        %2096 = vmatprep.mubr.bf16.mxu0 %v834
        %2097 = vmatmul.mubr.bf16.gmra.mrb[0].mxu0 %v833
        %v2098 = vpop.f32.mrb[0].mxu0
        %v2099 = vadd.f32 %v1552, %v2098
        %v2100 = vpop.f32.mrb[0].mxu0
        %v2101 = vadd.f32 %v1556, %v2100
        %v2102 = vpop.f32.mrb[0].mxu0
        %v2103 = vadd.f32 %v1552, %v2102
        %v2104 = vpop.f32.mrb[0].mxu0
        %v2105 = vadd.f32 %v1556, %v2104
        %2106 = vdwg.mxu0
        %s2107 = smul.addr %s835, 4
        %s2108 = scalar_lea.vmem [#allocation8], %s2107
        %v2109 = vld [vmem:[%s2108] sm:$0xff]
        %v2110 = vld [vmem:[%s2108 + $0x8] sm:$0xff]
        %v2111 = vld [vmem:[%s2108 + $0x10] sm:$0xff]
        %v2112 = vld [vmem:[%s2108 + $0x18] sm:$0xff]
        %v2113 = vld [vmem:[%s2108 + $0x20] sm:$0xff]
        %v2114 = vld [vmem:[%s2108 + $0x28] sm:$0xff]
        %v2115 = vld [vmem:[%s2108 + $0x30] sm:$0xff]
        %v2116 = vld [vmem:[%s2108 + $0x38] sm:$0xff]
        %v2117 = vld [vmem:[%s2108 + $0x40] sm:$0xff]
        %v2118 = vld [vmem:[%s2108 + $0x48] sm:$0xff]
        %v2119 = vld [vmem:[%s2108 + $0x50] sm:$0xff]
        %v2120 = vld [vmem:[%s2108 + $0x58] sm:$0xff]
        %v2121 = vld [vmem:[%s2108 + $0x60] sm:$0xff]
        %v2122 = vld [vmem:[%s2108 + $0x68] sm:$0xff]
        %v2123 = vld [vmem:[%s2108 + $0x70] sm:$0xff]
        %v2124 = vld [vmem:[%s2108 + $0x78] sm:$0xff]
        %v2125 = vld [vmem:[%s2108 + $0x80] sm:$0xff]
        %v2126 = vld [vmem:[%s2108 + $0x88] sm:$0xff]
        %v2127 = vld [vmem:[%s2108 + $0x90] sm:$0xff]
        %v2128 = vld [vmem:[%s2108 + $0x98] sm:$0xff]
        %v2129 = vld [vmem:[%s2108 + $0xa0] sm:$0xff]
        %v2130 = vld [vmem:[%s2108 + $0xa8] sm:$0xff]
        %v2131 = vld [vmem:[%s2108 + $0xb0] sm:$0xff]
        %v2132 = vld [vmem:[%s2108 + $0xb8] sm:$0xff]
        %v2133 = vld [vmem:[%s2108 + $0xc0] sm:$0xff]
        %v2134 = vld [vmem:[%s2108 + $0xc8] sm:$0xff]
        %v2135 = vld [vmem:[%s2108 + $0xd0] sm:$0xff]
        %v2136 = vld [vmem:[%s2108 + $0xd8] sm:$0xff]
        %v2137 = vld [vmem:[%s2108 + $0xe0] sm:$0xff]
        %v2138 = vld [vmem:[%s2108 + $0xe8] sm:$0xff]
        %v2139 = vld [vmem:[%s2108 + $0xf0] sm:$0xff]
        %v2140 = vld [vmem:[%s2108 + $0xf8] sm:$0xff]
        %v2141 = vld [vmem:[%s2108 + $0x100] sm:$0xff]
        %v2142 = vld [vmem:[%s2108 + $0x108] sm:$0xff]
        %v2143 = vld [vmem:[%s2108 + $0x110] sm:$0xff]
        %v2144 = vld [vmem:[%s2108 + $0x118] sm:$0xff]
        %v2145 = vld [vmem:[%s2108 + $0x120] sm:$0xff]
        %v2146 = vld [vmem:[%s2108 + $0x128] sm:$0xff]
        %v2147 = vld [vmem:[%s2108 + $0x130] sm:$0xff]
        %v2148 = vld [vmem:[%s2108 + $0x138] sm:$0xff]
        %v2149 = vld [vmem:[%s2108 + $0x140] sm:$0xff]
        %v2150 = vld [vmem:[%s2108 + $0x148] sm:$0xff]
        %v2151 = vld [vmem:[%s2108 + $0x150] sm:$0xff]
        %v2152 = vld [vmem:[%s2108 + $0x158] sm:$0xff]
        %v2153 = vld [vmem:[%s2108 + $0x160] sm:$0xff]
        %v2154 = vld [vmem:[%s2108 + $0x168] sm:$0xff]
        %v2155 = vld [vmem:[%s2108 + $0x170] sm:$0xff]
        %v2156 = vld [vmem:[%s2108 + $0x178] sm:$0xff]
        %v2157 = vld [vmem:[%s2108 + $0x180] sm:$0xff]
        %v2158 = vld [vmem:[%s2108 + $0x188] sm:$0xff]
        %v2159 = vld [vmem:[%s2108 + $0x190] sm:$0xff]
        %v2160 = vld [vmem:[%s2108 + $0x198] sm:$0xff]
        %v2161 = vld [vmem:[%s2108 + $0x1a0] sm:$0xff]
        %v2162 = vld [vmem:[%s2108 + $0x1a8] sm:$0xff]
        %v2163 = vld [vmem:[%s2108 + $0x1b0] sm:$0xff]
        %v2164 = vld [vmem:[%s2108 + $0x1b8] sm:$0xff]
        %v2165 = vld [vmem:[%s2108 + $0x1c0] sm:$0xff]
        %v2166 = vld [vmem:[%s2108 + $0x1c8] sm:$0xff]
        %v2167 = vld [vmem:[%s2108 + $0x1d0] sm:$0xff]
        %v2168 = vld [vmem:[%s2108 + $0x1d8] sm:$0xff]
        %v2169 = vld [vmem:[%s2108 + $0x1e0] sm:$0xff]
        %v2170 = vld [vmem:[%s2108 + $0x1e8] sm:$0xff]
        %v2171 = vld [vmem:[%s2108 + $0x1f0] sm:$0xff]
        %v2172 = vld [vmem:[%s2108 + $0x1f8] sm:$0xff]
        %s2173 = scalar_lea.vmem %s7, %s902
        %v2174 = vld [vmem:[%s2173] sm:$0xf]
        %v2176 = vlaneseq
        %v2177 = vshrl.u32 %v2176, 7
        %v2178 = vsub.s32 0, %v2177
        %v2179 = vrot.slane %v2174, %v2178
        %v2180 = vlaneseq
        %v2181 = vshrl.u32 %v2180, 7
        %v2182 = vsub.s32 1, %v2181
        %v2183 = vrot.slane %v2174, %v2182
        %v2184 = vlaneseq
        %v2185 = vshrl.u32 %v2184, 7
        %v2186 = vsub.s32 2, %v2185
        %v2187 = vrot.slane %v2174, %v2186
        %v2188 = vlaneseq
        %v2189 = vshrl.u32 %v2188, 7
        %v2190 = vsub.s32 3, %v2189
        %v2191 = vrot.slane %v2174, %v2190
        %v2260 = vunpack.c.l.b16 %v2109
        %v2261 = vunpack.c.h.b16 %v2109
        %v2262 = vunpack.c.l.b16 %v2110
        %v2263 = vunpack.c.h.b16 %v2110
        %v2264 = vunpack.c.l.b16 %v2111
        %v2265 = vunpack.c.h.b16 %v2111
        %v2266 = vunpack.c.l.b16 %v2112
        %v2267 = vunpack.c.h.b16 %v2112
        %v2268 = vunpack.c.l.b16 %v2113
        %v2269 = vunpack.c.h.b16 %v2113
        %v2270 = vunpack.c.l.b16 %v2114
        %v2271 = vunpack.c.h.b16 %v2114
        %v2272 = vunpack.c.l.b16 %v2115
        %v2273 = vunpack.c.h.b16 %v2115
        %v2274 = vunpack.c.l.b16 %v2116
        %v2275 = vunpack.c.h.b16 %v2116
        %v2276 = vunpack.c.l.b16 %v2117
        %v2277 = vunpack.c.h.b16 %v2117
        %v2278 = vunpack.c.l.b16 %v2118
        %v2279 = vunpack.c.h.b16 %v2118
        %v2280 = vunpack.c.l.b16 %v2119
        %v2281 = vunpack.c.h.b16 %v2119
        %v2282 = vunpack.c.l.b16 %v2120
        %v2283 = vunpack.c.h.b16 %v2120
        %v2284 = vunpack.c.l.b16 %v2121
        %v2285 = vunpack.c.h.b16 %v2121
        %v2286 = vunpack.c.l.b16 %v2122
        %v2287 = vunpack.c.h.b16 %v2122
        %v2288 = vunpack.c.l.b16 %v2123
        %v2289 = vunpack.c.h.b16 %v2123
        %v2290 = vunpack.c.l.b16 %v2124
        %v2291 = vunpack.c.h.b16 %v2124
        %v2292 = vunpack.c.l.b16 %v2125
        %v2293 = vunpack.c.h.b16 %v2125
        %v2294 = vunpack.c.l.b16 %v2126
        %v2295 = vunpack.c.h.b16 %v2126
        %v2296 = vunpack.c.l.b16 %v2127
        %v2297 = vunpack.c.h.b16 %v2127
        %v2298 = vunpack.c.l.b16 %v2128
        %v2299 = vunpack.c.h.b16 %v2128
        %v2300 = vunpack.c.l.b16 %v2129
        %v2301 = vunpack.c.h.b16 %v2129
        %v2302 = vunpack.c.l.b16 %v2130
        %v2303 = vunpack.c.h.b16 %v2130
        %v2304 = vunpack.c.l.b16 %v2131
        %v2305 = vunpack.c.h.b16 %v2131
        %v2306 = vunpack.c.l.b16 %v2132
        %v2307 = vunpack.c.h.b16 %v2132
        %v2308 = vunpack.c.l.b16 %v2133
        %v2309 = vunpack.c.h.b16 %v2133
        %v2310 = vunpack.c.l.b16 %v2134
        %v2311 = vunpack.c.h.b16 %v2134
        %v2312 = vunpack.c.l.b16 %v2135
        %v2313 = vunpack.c.h.b16 %v2135
        %v2314 = vunpack.c.l.b16 %v2136
        %v2315 = vunpack.c.h.b16 %v2136
        %v2316 = vunpack.c.l.b16 %v2137
        %v2317 = vunpack.c.h.b16 %v2137
        %v2318 = vunpack.c.l.b16 %v2138
        %v2319 = vunpack.c.h.b16 %v2138
        %v2320 = vunpack.c.l.b16 %v2139
        %v2321 = vunpack.c.h.b16 %v2139
        %v2322 = vunpack.c.l.b16 %v2140
        %v2323 = vunpack.c.h.b16 %v2140
        %v2324 = vunpack.c.l.b16 %v2141
        %v2325 = vunpack.c.h.b16 %v2141
        %v2326 = vunpack.c.l.b16 %v2142
        %v2327 = vunpack.c.h.b16 %v2142
        %v2328 = vunpack.c.l.b16 %v2143
        %v2329 = vunpack.c.h.b16 %v2143
        %v2330 = vunpack.c.l.b16 %v2144
        %v2331 = vunpack.c.h.b16 %v2144
        %v2332 = vunpack.c.l.b16 %v2145
        %v2333 = vunpack.c.h.b16 %v2145
        %v2334 = vunpack.c.l.b16 %v2146
        %v2335 = vunpack.c.h.b16 %v2146
        %v2336 = vunpack.c.l.b16 %v2147
        %v2337 = vunpack.c.h.b16 %v2147
        %v2338 = vunpack.c.l.b16 %v2148
        %v2339 = vunpack.c.h.b16 %v2148
        %v2340 = vunpack.c.l.b16 %v2149
        %v2341 = vunpack.c.h.b16 %v2149
        %v2342 = vunpack.c.l.b16 %v2150
        %v2343 = vunpack.c.h.b16 %v2150
        %v2344 = vunpack.c.l.b16 %v2151
        %v2345 = vunpack.c.h.b16 %v2151
        %v2346 = vunpack.c.l.b16 %v2152
        %v2347 = vunpack.c.h.b16 %v2152
        %v2348 = vunpack.c.l.b16 %v2153
        %v2349 = vunpack.c.h.b16 %v2153
        %v2350 = vunpack.c.l.b16 %v2154
        %v2351 = vunpack.c.h.b16 %v2154
        %v2352 = vunpack.c.l.b16 %v2155
        %v2353 = vunpack.c.h.b16 %v2155
        %v2354 = vunpack.c.l.b16 %v2156
        %v2355 = vunpack.c.h.b16 %v2156
        %v2356 = vunpack.c.l.b16 %v2157
        %v2357 = vunpack.c.h.b16 %v2157
        %v2358 = vunpack.c.l.b16 %v2158
        %v2359 = vunpack.c.h.b16 %v2158
        %v2360 = vunpack.c.l.b16 %v2159
        %v2361 = vunpack.c.h.b16 %v2159
        %v2362 = vunpack.c.l.b16 %v2160
        %v2363 = vunpack.c.h.b16 %v2160
        %v2364 = vunpack.c.l.b16 %v2161
        %v2365 = vunpack.c.h.b16 %v2161
        %v2366 = vunpack.c.l.b16 %v2162
        %v2367 = vunpack.c.h.b16 %v2162
        %v2368 = vunpack.c.l.b16 %v2163
        %v2369 = vunpack.c.h.b16 %v2163
        %v2370 = vunpack.c.l.b16 %v2164
        %v2371 = vunpack.c.h.b16 %v2164
        %v2372 = vunpack.c.l.b16 %v2165
        %v2373 = vunpack.c.h.b16 %v2165
        %v2374 = vunpack.c.l.b16 %v2166
        %v2375 = vunpack.c.h.b16 %v2166
        %v2376 = vunpack.c.l.b16 %v2167
        %v2377 = vunpack.c.h.b16 %v2167
        %v2378 = vunpack.c.l.b16 %v2168
        %v2379 = vunpack.c.h.b16 %v2168
        %v2380 = vunpack.c.l.b16 %v2169
        %v2381 = vunpack.c.h.b16 %v2169
        %v2382 = vunpack.c.l.b16 %v2170
        %v2383 = vunpack.c.h.b16 %v2170
        %v2384 = vunpack.c.l.b16 %v2171
        %v2385 = vunpack.c.h.b16 %v2171
        %v2386 = vunpack.c.l.b16 %v2172
        %v2387 = vunpack.c.h.b16 %v2172
        %v2388 = vpack.c.b16 %v2264, %v2260
        %v2389 = vpack.c.b16 %v2265, %v2261
        %v2390 = vpack.c.b16 %v2266, %v2262
        %v2391 = vpack.c.b16 %v2267, %v2263
        %v2392 = vpack.c.b16 %v2272, %v2268
        %v2393 = vpack.c.b16 %v2273, %v2269
        %v2394 = vpack.c.b16 %v2274, %v2270
        %v2395 = vpack.c.b16 %v2275, %v2271
        %v2396 = vpack.c.b16 %v2280, %v2276
        %v2397 = vpack.c.b16 %v2281, %v2277
        %v2398 = vpack.c.b16 %v2282, %v2278
        %v2399 = vpack.c.b16 %v2283, %v2279
        %v2400 = vpack.c.b16 %v2288, %v2284
        %v2401 = vpack.c.b16 %v2289, %v2285
        %v2402 = vpack.c.b16 %v2290, %v2286
        %v2403 = vpack.c.b16 %v2291, %v2287
        %v2404 = vpack.c.b16 %v2296, %v2292
        %v2405 = vpack.c.b16 %v2297, %v2293
        %v2406 = vpack.c.b16 %v2298, %v2294
        %v2407 = vpack.c.b16 %v2299, %v2295
        %v2408 = vpack.c.b16 %v2304, %v2300
        %v2409 = vpack.c.b16 %v2305, %v2301
        %v2410 = vpack.c.b16 %v2306, %v2302
        %v2411 = vpack.c.b16 %v2307, %v2303
        %v2412 = vpack.c.b16 %v2312, %v2308
        %v2413 = vpack.c.b16 %v2313, %v2309
        %v2414 = vpack.c.b16 %v2314, %v2310
        %v2415 = vpack.c.b16 %v2315, %v2311
        %v2416 = vpack.c.b16 %v2320, %v2316
        %v2417 = vpack.c.b16 %v2321, %v2317
        %v2418 = vpack.c.b16 %v2322, %v2318
        %v2419 = vpack.c.b16 %v2323, %v2319
        %v2420 = vpack.c.b16 %v2328, %v2324
        %v2421 = vpack.c.b16 %v2329, %v2325
        %v2422 = vpack.c.b16 %v2330, %v2326
        %v2423 = vpack.c.b16 %v2331, %v2327
        %v2424 = vpack.c.b16 %v2336, %v2332
        %v2425 = vpack.c.b16 %v2337, %v2333
        %v2426 = vpack.c.b16 %v2338, %v2334
        %v2427 = vpack.c.b16 %v2339, %v2335
        %v2428 = vpack.c.b16 %v2344, %v2340
        %v2429 = vpack.c.b16 %v2345, %v2341
        %v2430 = vpack.c.b16 %v2346, %v2342
        %v2431 = vpack.c.b16 %v2347, %v2343
        %v2432 = vpack.c.b16 %v2352, %v2348
        %v2433 = vpack.c.b16 %v2353, %v2349
        %v2434 = vpack.c.b16 %v2354, %v2350
        %v2435 = vpack.c.b16 %v2355, %v2351
        %v2436 = vpack.c.b16 %v2360, %v2356
        %v2437 = vpack.c.b16 %v2361, %v2357
        %v2438 = vpack.c.b16 %v2362, %v2358
        %v2439 = vpack.c.b16 %v2363, %v2359
        %v2440 = vpack.c.b16 %v2368, %v2364
        %v2441 = vpack.c.b16 %v2369, %v2365
        %v2442 = vpack.c.b16 %v2370, %v2366
        %v2443 = vpack.c.b16 %v2371, %v2367
        %v2444 = vpack.c.b16 %v2376, %v2372
        %v2445 = vpack.c.b16 %v2377, %v2373
        %v2446 = vpack.c.b16 %v2378, %v2374
        %v2447 = vpack.c.b16 %v2379, %v2375
        %v2448 = vpack.c.b16 %v2384, %v2380
        %v2449 = vpack.c.b16 %v2385, %v2381
        %v2450 = vpack.c.b16 %v2386, %v2382
        %v2451 = vpack.c.b16 %v2387, %v2383
        %2516 = vmatprep.subr.bf16.mxu0 %v2389
        %2517 = vmatpush1.bf16.msra.mxu0 %v2388
        %2518 = vmatprep.subr.bf16.mxu0 %v2393
        %2519 = vmatpush1.bf16.msra.mxu0 %v2392
        %2520 = vmatprep.subr.bf16.mxu0 %v2397
        %2521 = vmatpush1.bf16.msra.mxu0 %v2396
        %2522 = vmatprep.subr.bf16.mxu0 %v2401
        %2523 = vmatpush1.bf16.msra.mxu0 %v2400
        %2524 = vmatprep.subr.bf16.mxu0 %v2405
        %2525 = vmatpush1.bf16.msra.mxu0 %v2404
        %2526 = vmatprep.subr.bf16.mxu0 %v2409
        %2527 = vmatpush1.bf16.msra.mxu0 %v2408
        %2528 = vmatprep.subr.bf16.mxu0 %v2413
        %2529 = vmatpush1.bf16.msra.mxu0 %v2412
        %2530 = vmatprep.subr.bf16.mxu0 %v2417
        %2531 = vmatpush1.bf16.msra.mxu0 %v2416
        %2532 = vmatprep.subr.bf16.mxu0 %v2421
        %2533 = vmatpush1.bf16.msra.mxu0 %v2420
        %2534 = vmatprep.subr.bf16.mxu0 %v2425
        %2535 = vmatpush1.bf16.msra.mxu0 %v2424
        %2536 = vmatprep.subr.bf16.mxu0 %v2429
        %2537 = vmatpush1.bf16.msra.mxu0 %v2428
        %2538 = vmatprep.subr.bf16.mxu0 %v2433
        %2539 = vmatpush1.bf16.msra.mxu0 %v2432
        %2540 = vmatprep.subr.bf16.mxu0 %v2437
        %2541 = vmatpush1.bf16.msra.mxu0 %v2436
        %2542 = vmatprep.subr.bf16.mxu0 %v2441
        %2543 = vmatpush1.bf16.msra.mxu0 %v2440
        %2544 = vmatprep.subr.bf16.mxu0 %v2445
        %2545 = vmatpush1.bf16.msra.mxu0 %v2444
        %2546 = vmatprep.subr.bf16.mxu0 %v2449
        %2547 = vmatpush1.bf16.msra.mxu0 %v2448
        %2548 = vmatprep.mubr.bf16.mxu0 %v820
        %2549 = vmatmul.mubr.bf16.gmra.mrb[0].mxu0 %v819
        %v2550 = vpop.f32.mrb[0].mxu0
        %v2551 = vadd.f32 %v2179, %v2550
        %v2552 = vpop.f32.mrb[0].mxu0
        %v2553 = vadd.f32 %v2183, %v2552
        %v2554 = vpop.f32.mrb[0].mxu0
        %v2555 = vadd.f32 %v2179, %v2554
        %v2556 = vpop.f32.mrb[0].mxu0
        %v2557 = vadd.f32 %v2183, %v2556
        %2558 = vmatprep.mubr.bf16.mxu0 %v822
        %2559 = vmatmul.mubr.bf16.gmra.mrb[0].mxu0 %v821
        %v2560 = vpop.f32.mrb[0].mxu0
        %v2561 = vadd.f32 %v2179, %v2560
        %v2562 = vpop.f32.mrb[0].mxu0
        %v2563 = vadd.f32 %v2183, %v2562
        %v2564 = vpop.f32.mrb[0].mxu0
        %v2565 = vadd.f32 %v2179, %v2564
        %v2566 = vpop.f32.mrb[0].mxu0
        %v2567 = vadd.f32 %v2183, %v2566
        %2568 = vmatprep.mubr.bf16.mxu0 %v824
        %2569 = vmatmul.mubr.bf16.gmra.mrb[0].mxu0 %v823
        %v2570 = vpop.f32.mrb[0].mxu0
        %v2571 = vadd.f32 %v2179, %v2570
        %v2572 = vpop.f32.mrb[0].mxu0
        %v2573 = vadd.f32 %v2183, %v2572
        %v2574 = vpop.f32.mrb[0].mxu0
        %v2575 = vadd.f32 %v2179, %v2574
        %v2576 = vpop.f32.mrb[0].mxu0
        %v2577 = vadd.f32 %v2183, %v2576
        %2578 = vmatprep.mubr.bf16.mxu0 %v826
        %2579 = vmatmul.mubr.bf16.gmra.mrb[0].mxu0 %v825
        %v2580 = vpop.f32.mrb[0].mxu0
        %v2581 = vadd.f32 %v2179, %v2580
        %v2582 = vpop.f32.mrb[0].mxu0
        %v2583 = vadd.f32 %v2183, %v2582
        %v2584 = vpop.f32.mrb[0].mxu0
        %v2585 = vadd.f32 %v2179, %v2584
        %v2586 = vpop.f32.mrb[0].mxu0
        %v2587 = vadd.f32 %v2183, %v2586
        %2588 = vmatprep.mubr.bf16.mxu0 %v828
        %2589 = vmatmul.mubr.bf16.gmra.mrb[0].mxu0 %v827
        %v2590 = vpop.f32.mrb[0].mxu0
        %v2591 = vadd.f32 %v2179, %v2590
        %v2592 = vpop.f32.mrb[0].mxu0
        %v2593 = vadd.f32 %v2183, %v2592
        %v2594 = vpop.f32.mrb[0].mxu0
        %v2595 = vadd.f32 %v2179, %v2594
        %v2596 = vpop.f32.mrb[0].mxu0
        %v2597 = vadd.f32 %v2183, %v2596
        %2598 = vmatprep.mubr.bf16.mxu0 %v830
        %2599 = vmatmul.mubr.bf16.gmra.mrb[0].mxu0 %v829
        %v2600 = vpop.f32.mrb[0].mxu0
        %v2601 = vadd.f32 %v2179, %v2600
        %v2602 = vpop.f32.mrb[0].mxu0
        %v2603 = vadd.f32 %v2183, %v2602
        %v2604 = vpop.f32.mrb[0].mxu0
        %v2605 = vadd.f32 %v2179, %v2604
        %v2606 = vpop.f32.mrb[0].mxu0
        %v2607 = vadd.f32 %v2183, %v2606
        %2608 = vmatprep.mubr.bf16.mxu0 %v832
        %2609 = vmatmul.mubr.bf16.gmra.mrb[0].mxu0 %v831
        %v2610 = vpop.f32.mrb[0].mxu0
        %v2611 = vadd.f32 %v2179, %v2610
        %v2612 = vpop.f32.mrb[0].mxu0
        %v2613 = vadd.f32 %v2183, %v2612
        %v2614 = vpop.f32.mrb[0].mxu0
        %v2615 = vadd.f32 %v2179, %v2614
        %v2616 = vpop.f32.mrb[0].mxu0
        %v2617 = vadd.f32 %v2183, %v2616
        %2618 = vmatprep.mubr.bf16.mxu0 %v834
        %2619 = vmatmul.mubr.bf16.gmra.mrb[0].mxu0 %v833
        %v2620 = vpop.f32.mrb[0].mxu0
        %v2621 = vadd.f32 %v2179, %v2620
        %v2622 = vpop.f32.mrb[0].mxu0
        %v2623 = vadd.f32 %v2183, %v2622
        %v2624 = vpop.f32.mrb[0].mxu0
        %v2625 = vadd.f32 %v2179, %v2624
        %v2626 = vpop.f32.mrb[0].mxu0
        %v2627 = vadd.f32 %v2183, %v2626
        %2628 = vdwg.mxu0
        %2629 = vmatprep.subr.bf16.mxu0 %v2391
        %2630 = vmatpush1.bf16.msra.mxu0 %v2390
        %2631 = vmatprep.subr.bf16.mxu0 %v2395
        %2632 = vmatpush1.bf16.msra.mxu0 %v2394
        %2633 = vmatprep.subr.bf16.mxu0 %v2399
        %2634 = vmatpush1.bf16.msra.mxu0 %v2398
        %2635 = vmatprep.subr.bf16.mxu0 %v2403
        %2636 = vmatpush1.bf16.msra.mxu0 %v2402
        %2637 = vmatprep.subr.bf16.mxu0 %v2407
        %2638 = vmatpush1.bf16.msra.mxu0 %v2406
        %2639 = vmatprep.subr.bf16.mxu0 %v2411
        %2640 = vmatpush1.bf16.msra.mxu0 %v2410
        %2641 = vmatprep.subr.bf16.mxu0 %v2415
        %2642 = vmatpush1.bf16.msra.mxu0 %v2414
        %2643 = vmatprep.subr.bf16.mxu0 %v2419
        %2644 = vmatpush1.bf16.msra.mxu0 %v2418
        %2645 = vmatprep.subr.bf16.mxu0 %v2423
        %2646 = vmatpush1.bf16.msra.mxu0 %v2422
        %2647 = vmatprep.subr.bf16.mxu0 %v2427
        %2648 = vmatpush1.bf16.msra.mxu0 %v2426
        %2649 = vmatprep.subr.bf16.mxu0 %v2431
        %2650 = vmatpush1.bf16.msra.mxu0 %v2430
        %2651 = vmatprep.subr.bf16.mxu0 %v2435
        %2652 = vmatpush1.bf16.msra.mxu0 %v2434
        %2653 = vmatprep.subr.bf16.mxu0 %v2439
        %2654 = vmatpush1.bf16.msra.mxu0 %v2438
        %2655 = vmatprep.subr.bf16.mxu0 %v2443
        %2656 = vmatpush1.bf16.msra.mxu0 %v2442
        %2657 = vmatprep.subr.bf16.mxu0 %v2447
        %2658 = vmatpush1.bf16.msra.mxu0 %v2446
        %2659 = vmatprep.subr.bf16.mxu0 %v2451
        %2660 = vmatpush1.bf16.msra.mxu0 %v2450
        %2661 = vmatprep.mubr.bf16.mxu0 %v820
        %2662 = vmatmul.mubr.bf16.gmra.mrb[0].mxu0 %v819
        %v2663 = vpop.f32.mrb[0].mxu0
        %v2664 = vadd.f32 %v2187, %v2663
        %v2665 = vpop.f32.mrb[0].mxu0
        %v2666 = vadd.f32 %v2191, %v2665
        %v2667 = vpop.f32.mrb[0].mxu0
        %v2668 = vadd.f32 %v2187, %v2667
        %v2669 = vpop.f32.mrb[0].mxu0
        %v2670 = vadd.f32 %v2191, %v2669
        %2671 = vmatprep.mubr.bf16.mxu0 %v822
        %2672 = vmatmul.mubr.bf16.gmra.mrb[0].mxu0 %v821
        %v2673 = vpop.f32.mrb[0].mxu0
        %v2674 = vadd.f32 %v2187, %v2673
        %v2675 = vpop.f32.mrb[0].mxu0
        %v2676 = vadd.f32 %v2191, %v2675
        %v2677 = vpop.f32.mrb[0].mxu0
        %v2678 = vadd.f32 %v2187, %v2677
        %v2679 = vpop.f32.mrb[0].mxu0
        %v2680 = vadd.f32 %v2191, %v2679
        %2681 = vmatprep.mubr.bf16.mxu0 %v824
        %2682 = vmatmul.mubr.bf16.gmra.mrb[0].mxu0 %v823
        %v2683 = vpop.f32.mrb[0].mxu0
        %v2684 = vadd.f32 %v2187, %v2683
        %v2685 = vpop.f32.mrb[0].mxu0
        %v2686 = vadd.f32 %v2191, %v2685
        %v2687 = vpop.f32.mrb[0].mxu0
        %v2688 = vadd.f32 %v2187, %v2687
        %v2689 = vpop.f32.mrb[0].mxu0
        %v2690 = vadd.f32 %v2191, %v2689
        %2691 = vmatprep.mubr.bf16.mxu0 %v826
        %2692 = vmatmul.mubr.bf16.gmra.mrb[0].mxu0 %v825
        %v2693 = vpop.f32.mrb[0].mxu0
        %v2694 = vadd.f32 %v2187, %v2693
        %v2695 = vpop.f32.mrb[0].mxu0
        %v2696 = vadd.f32 %v2191, %v2695
        %v2697 = vpop.f32.mrb[0].mxu0
        %v2698 = vadd.f32 %v2187, %v2697
        %v2699 = vpop.f32.mrb[0].mxu0
        %v2700 = vadd.f32 %v2191, %v2699
        %2701 = vmatprep.mubr.bf16.mxu0 %v828
        %2702 = vmatmul.mubr.bf16.gmra.mrb[0].mxu0 %v827
        %v2703 = vpop.f32.mrb[0].mxu0
        %v2704 = vadd.f32 %v2187, %v2703
        %v2705 = vpop.f32.mrb[0].mxu0
        %v2706 = vadd.f32 %v2191, %v2705
        %v2707 = vpop.f32.mrb[0].mxu0
        %v2708 = vadd.f32 %v2187, %v2707
        %v2709 = vpop.f32.mrb[0].mxu0
        %v2710 = vadd.f32 %v2191, %v2709
        %2711 = vmatprep.mubr.bf16.mxu0 %v830
        %2712 = vmatmul.mubr.bf16.gmra.mrb[0].mxu0 %v829
        %v2713 = vpop.f32.mrb[0].mxu0
        %v2714 = vadd.f32 %v2187, %v2713
        %v2715 = vpop.f32.mrb[0].mxu0
        %v2716 = vadd.f32 %v2191, %v2715
        %v2717 = vpop.f32.mrb[0].mxu0
        %v2718 = vadd.f32 %v2187, %v2717
        %v2719 = vpop.f32.mrb[0].mxu0
        %v2720 = vadd.f32 %v2191, %v2719
        %2721 = vmatprep.mubr.bf16.mxu0 %v832
        %2722 = vmatmul.mubr.bf16.gmra.mrb[0].mxu0 %v831
        %v2723 = vpop.f32.mrb[0].mxu0
        %v2724 = vadd.f32 %v2187, %v2723
        %v2725 = vpop.f32.mrb[0].mxu0
        %v2726 = vadd.f32 %v2191, %v2725
        %v2727 = vpop.f32.mrb[0].mxu0
        %v2728 = vadd.f32 %v2187, %v2727
        %v2729 = vpop.f32.mrb[0].mxu0
        %v2730 = vadd.f32 %v2191, %v2729
        %2731 = vmatprep.mubr.bf16.mxu0 %v834
        %2732 = vmatmul.mubr.bf16.gmra.mrb[0].mxu0 %v833
        %v2733 = vpop.f32.mrb[0].mxu0
        %v2734 = vadd.f32 %v2187, %v2733
        %v2735 = vpop.f32.mrb[0].mxu0
        %v2736 = vadd.f32 %v2191, %v2735
        %v2737 = vpop.f32.mrb[0].mxu0
        %v2738 = vadd.f32 %v2187, %v2737
        %v2739 = vpop.f32.mrb[0].mxu0
        %v2740 = vadd.f32 %v2191, %v2739
        %2741 = vdwg.mxu0
        %v2742 = vpack.c.bf16 %v1281, %v1281
        %v2743 = vpack.c.bf16 %v1283, %v1283
        %v2744 = vpack.c.bf16 %v1394, %v1394
        %v2745 = vpack.c.bf16 %v1396, %v1396
        %v2746 = vpack.c.bf16 %v1285, %v1285
        %v2747 = vpack.c.bf16 %v1287, %v1287
        %v2748 = vpack.c.bf16 %v1398, %v1398
        %v2749 = vpack.c.bf16 %v1400, %v1400
        %v2750 = vpack.c.bf16 %v1291, %v1291
        %v2751 = vpack.c.bf16 %v1293, %v1293
        %v2752 = vpack.c.bf16 %v1404, %v1404
        %v2753 = vpack.c.bf16 %v1406, %v1406
        %v2754 = vpack.c.bf16 %v1295, %v1295
        %v2755 = vpack.c.bf16 %v1297, %v1297
        %v2756 = vpack.c.bf16 %v1408, %v1408
        %v2757 = vpack.c.bf16 %v1410, %v1410
        %v2758 = vpack.c.bf16 %v1301, %v1301
        %v2759 = vpack.c.bf16 %v1303, %v1303
        %v2760 = vpack.c.bf16 %v1414, %v1414
        %v2761 = vpack.c.bf16 %v1416, %v1416
        %v2762 = vpack.c.bf16 %v1305, %v1305
        %v2763 = vpack.c.bf16 %v1307, %v1307
        %v2764 = vpack.c.bf16 %v1418, %v1418
        %v2765 = vpack.c.bf16 %v1420, %v1420
        %v2766 = vpack.c.bf16 %v1311, %v1311
        %v2767 = vpack.c.bf16 %v1313, %v1313
        %v2768 = vpack.c.bf16 %v1424, %v1424
        %v2769 = vpack.c.bf16 %v1426, %v1426
        %v2770 = vpack.c.bf16 %v1315, %v1315
        %v2771 = vpack.c.bf16 %v1317, %v1317
        %v2772 = vpack.c.bf16 %v1428, %v1428
        %v2773 = vpack.c.bf16 %v1430, %v1430
        %v2774 = vpack.c.bf16 %v1321, %v1321
        %v2775 = vpack.c.bf16 %v1323, %v1323
        %v2776 = vpack.c.bf16 %v1434, %v1434
        %v2777 = vpack.c.bf16 %v1436, %v1436
        %v2778 = vpack.c.bf16 %v1325, %v1325
        %v2779 = vpack.c.bf16 %v1327, %v1327
        %v2780 = vpack.c.bf16 %v1438, %v1438
        %v2781 = vpack.c.bf16 %v1440, %v1440
        %v2782 = vpack.c.bf16 %v1331, %v1331
        %v2783 = vpack.c.bf16 %v1333, %v1333
        %v2784 = vpack.c.bf16 %v1444, %v1444
        %v2785 = vpack.c.bf16 %v1446, %v1446
        %v2786 = vpack.c.bf16 %v1335, %v1335
        %v2787 = vpack.c.bf16 %v1337, %v1337
        %v2788 = vpack.c.bf16 %v1448, %v1448
        %v2789 = vpack.c.bf16 %v1450, %v1450
        %v2790 = vpack.c.bf16 %v1341, %v1341
        %v2791 = vpack.c.bf16 %v1343, %v1343
        %v2792 = vpack.c.bf16 %v1454, %v1454
        %v2793 = vpack.c.bf16 %v1456, %v1456
        %v2794 = vpack.c.bf16 %v1345, %v1345
        %v2795 = vpack.c.bf16 %v1347, %v1347
        %v2796 = vpack.c.bf16 %v1458, %v1458
        %v2797 = vpack.c.bf16 %v1460, %v1460
        %v2798 = vpack.c.bf16 %v1351, %v1351
        %v2799 = vpack.c.bf16 %v1353, %v1353
        %v2800 = vpack.c.bf16 %v1464, %v1464
        %v2801 = vpack.c.bf16 %v1466, %v1466
        %v2802 = vpack.c.bf16 %v1355, %v1355
        %v2803 = vpack.c.bf16 %v1357, %v1357
        %v2804 = vpack.c.bf16 %v1468, %v1468
        %v2805 = vpack.c.bf16 %v1470, %v1470
        %v2806 = vpack.c.bf16 %v1916, %v1916
        %v2807 = vpack.c.bf16 %v1918, %v1918
        %v2808 = vpack.c.bf16 %v2029, %v2029
        %v2809 = vpack.c.bf16 %v2031, %v2031
        %v2810 = vpack.c.bf16 %v1920, %v1920
        %v2811 = vpack.c.bf16 %v1922, %v1922
        %v2812 = vpack.c.bf16 %v2033, %v2033
        %v2813 = vpack.c.bf16 %v2035, %v2035
        %v2814 = vpack.c.bf16 %v1926, %v1926
        %v2815 = vpack.c.bf16 %v1928, %v1928
        %v2816 = vpack.c.bf16 %v2039, %v2039
        %v2817 = vpack.c.bf16 %v2041, %v2041
        %v2818 = vpack.c.bf16 %v1930, %v1930
        %v2819 = vpack.c.bf16 %v1932, %v1932
        %v2820 = vpack.c.bf16 %v2043, %v2043
        %v2821 = vpack.c.bf16 %v2045, %v2045
        %v2822 = vpack.c.bf16 %v1936, %v1936
        %v2823 = vpack.c.bf16 %v1938, %v1938
        %v2824 = vpack.c.bf16 %v2049, %v2049
        %v2825 = vpack.c.bf16 %v2051, %v2051
        %v2826 = vpack.c.bf16 %v1940, %v1940
        %v2827 = vpack.c.bf16 %v1942, %v1942
        %v2828 = vpack.c.bf16 %v2053, %v2053
        %v2829 = vpack.c.bf16 %v2055, %v2055
        %v2830 = vpack.c.bf16 %v1946, %v1946
        %v2831 = vpack.c.bf16 %v1948, %v1948
        %v2832 = vpack.c.bf16 %v2059, %v2059
        %v2833 = vpack.c.bf16 %v2061, %v2061
        %v2834 = vpack.c.bf16 %v1950, %v1950
        %v2835 = vpack.c.bf16 %v1952, %v1952
        %v2836 = vpack.c.bf16 %v2063, %v2063
        %v2837 = vpack.c.bf16 %v2065, %v2065
        %v2838 = vpack.c.bf16 %v1956, %v1956
        %v2839 = vpack.c.bf16 %v1958, %v1958
        %v2840 = vpack.c.bf16 %v2069, %v2069
        %v2841 = vpack.c.bf16 %v2071, %v2071
        %v2842 = vpack.c.bf16 %v1960, %v1960
        %v2843 = vpack.c.bf16 %v1962, %v1962
        %v2844 = vpack.c.bf16 %v2073, %v2073
        %v2845 = vpack.c.bf16 %v2075, %v2075
        %v2846 = vpack.c.bf16 %v1966, %v1966
        %v2847 = vpack.c.bf16 %v1968, %v1968
        %v2848 = vpack.c.bf16 %v2079, %v2079
        %v2849 = vpack.c.bf16 %v2081, %v2081
        %v2850 = vpack.c.bf16 %v1970, %v1970
        %v2851 = vpack.c.bf16 %v1972, %v1972
        %v2852 = vpack.c.bf16 %v2083, %v2083
        %v2853 = vpack.c.bf16 %v2085, %v2085
        %v2854 = vpack.c.bf16 %v1976, %v1976
        %v2855 = vpack.c.bf16 %v1978, %v1978
        %v2856 = vpack.c.bf16 %v2089, %v2089
        %v2857 = vpack.c.bf16 %v2091, %v2091
        %v2858 = vpack.c.bf16 %v1980, %v1980
        %v2859 = vpack.c.bf16 %v1982, %v1982
        %v2860 = vpack.c.bf16 %v2093, %v2093
        %v2861 = vpack.c.bf16 %v2095, %v2095
        %v2862 = vpack.c.bf16 %v1986, %v1986
        %v2863 = vpack.c.bf16 %v1988, %v1988
        %v2864 = vpack.c.bf16 %v2099, %v2099
        %v2865 = vpack.c.bf16 %v2101, %v2101
        %v2866 = vpack.c.bf16 %v1990, %v1990
        %v2867 = vpack.c.bf16 %v1992, %v1992
        %v2868 = vpack.c.bf16 %v2103, %v2103
        %v2869 = vpack.c.bf16 %v2105, %v2105
        %v2870 = vpack.c.bf16 %v2551, %v2551
        %v2871 = vpack.c.bf16 %v2553, %v2553
        %v2872 = vpack.c.bf16 %v2664, %v2664
        %v2873 = vpack.c.bf16 %v2666, %v2666
        %v2874 = vpack.c.bf16 %v2555, %v2555
        %v2875 = vpack.c.bf16 %v2557, %v2557
        %v2876 = vpack.c.bf16 %v2668, %v2668
        %v2877 = vpack.c.bf16 %v2670, %v2670
        %v2878 = vpack.c.bf16 %v2561, %v2561
        %v2879 = vpack.c.bf16 %v2563, %v2563
        %v2880 = vpack.c.bf16 %v2674, %v2674
        %v2881 = vpack.c.bf16 %v2676, %v2676
        %v2882 = vpack.c.bf16 %v2565, %v2565
        %v2883 = vpack.c.bf16 %v2567, %v2567
        %v2884 = vpack.c.bf16 %v2678, %v2678
        %v2885 = vpack.c.bf16 %v2680, %v2680
        %v2886 = vpack.c.bf16 %v2571, %v2571
        %v2887 = vpack.c.bf16 %v2573, %v2573
        %v2888 = vpack.c.bf16 %v2684, %v2684
        %v2889 = vpack.c.bf16 %v2686, %v2686
        %v2890 = vpack.c.bf16 %v2575, %v2575
        %v2891 = vpack.c.bf16 %v2577, %v2577
        %v2892 = vpack.c.bf16 %v2688, %v2688
        %v2893 = vpack.c.bf16 %v2690, %v2690
        %v2894 = vpack.c.bf16 %v2581, %v2581
        %v2895 = vpack.c.bf16 %v2583, %v2583
        %v2896 = vpack.c.bf16 %v2694, %v2694
        %v2897 = vpack.c.bf16 %v2696, %v2696
        %v2898 = vpack.c.bf16 %v2585, %v2585
        %v2899 = vpack.c.bf16 %v2587, %v2587
        %v2900 = vpack.c.bf16 %v2698, %v2698
        %v2901 = vpack.c.bf16 %v2700, %v2700
        %v2902 = vpack.c.bf16 %v2591, %v2591
        %v2903 = vpack.c.bf16 %v2593, %v2593
        %v2904 = vpack.c.bf16 %v2704, %v2704
        %v2905 = vpack.c.bf16 %v2706, %v2706
        %v2906 = vpack.c.bf16 %v2595, %v2595
        %v2907 = vpack.c.bf16 %v2597, %v2597
        %v2908 = vpack.c.bf16 %v2708, %v2708
        %v2909 = vpack.c.bf16 %v2710, %v2710
        %v2910 = vpack.c.bf16 %v2601, %v2601
        %v2911 = vpack.c.bf16 %v2603, %v2603
        %v2912 = vpack.c.bf16 %v2714, %v2714
        %v2913 = vpack.c.bf16 %v2716, %v2716
        %v2914 = vpack.c.bf16 %v2605, %v2605
        %v2915 = vpack.c.bf16 %v2607, %v2607
        %v2916 = vpack.c.bf16 %v2718, %v2718
        %v2917 = vpack.c.bf16 %v2720, %v2720
        %v2918 = vpack.c.bf16 %v2611, %v2611
        %v2919 = vpack.c.bf16 %v2613, %v2613
        %v2920 = vpack.c.bf16 %v2724, %v2724
        %v2921 = vpack.c.bf16 %v2726, %v2726
        %v2922 = vpack.c.bf16 %v2615, %v2615
        %v2923 = vpack.c.bf16 %v2617, %v2617
        %v2924 = vpack.c.bf16 %v2728, %v2728
        %v2925 = vpack.c.bf16 %v2730, %v2730
        %v2926 = vpack.c.bf16 %v2621, %v2621
        %v2927 = vpack.c.bf16 %v2623, %v2623
        %v2928 = vpack.c.bf16 %v2734, %v2734
        %v2929 = vpack.c.bf16 %v2736, %v2736
        %v2930 = vpack.c.bf16 %v2625, %v2625
        %v2931 = vpack.c.bf16 %v2627, %v2627
        %v2932 = vpack.c.bf16 %v2738, %v2738
        %v2933 = vpack.c.bf16 %v2740, %v2740
        %v2934 = vld [vmem:[%s715] sm:$0xff]
        %v2935 = vld [vmem:[%s715 + $0x8] sm:$0xff]
        %v2938 = vcombine.high %v2934, %v2934
        %v2940 = vunpack.c.l.s4 1966171168
        %v2941 = vunpack.c.0.s8 %v2940
        %v2942 = vlaneseq
        %v2943 = vshrl.u32 %v2942, 7
        %v2944 = vsub.s32 %v2941, %v2943
        %v2945 = vrot.slane %v2934, %v2944
        %v2947 = vunpack.c.l.s4 1966171168
        %v2948 = vunpack.c.0.s8 %v2947
        %v2949 = vlaneseq
        %v2950 = vshrl.u32 %v2949, 7
        %v2951 = vsub.s32 %v2948, %v2950
        %v2952 = vrot.slane %v2938, %v2951
        %v2953 = vcombine.high %v2945, %v2945
        %v2954 = vcombine.high %v2952, %v2952
        %v2956 = vunpack.c.l.s4 1966171168
        %v2957 = vunpack.c.0.s8 %v2956
        %v2958 = vlaneseq
        %v2959 = vshrl.u32 %v2958, 7
        %v2960 = vsub.s32 %v2957, %v2959
        %v2961 = vrot.slane %v2945, %v2960
        %v2963 = vunpack.c.l.s4 1966171168
        %v2964 = vunpack.c.0.s8 %v2963
        %v2965 = vlaneseq
        %v2966 = vshrl.u32 %v2965, 7
        %v2967 = vsub.s32 %v2964, %v2966
        %v2968 = vrot.slane %v2952, %v2967
        %v2970 = vunpack.c.l.s4 1966171168
        %v2971 = vunpack.c.0.s8 %v2970
        %v2972 = vlaneseq
        %v2973 = vshrl.u32 %v2972, 7
        %v2974 = vsub.s32 %v2971, %v2973
        %v2975 = vrot.slane %v2953, %v2974
        %v2977 = vunpack.c.l.s4 1966171168
        %v2978 = vunpack.c.0.s8 %v2977
        %v2979 = vlaneseq
        %v2980 = vshrl.u32 %v2979, 7
        %v2981 = vsub.s32 %v2978, %v2980
        %v2982 = vrot.slane %v2954, %v2981
        %v2983 = vcombine.high %v2961, %v2961
        %v2984 = vcombine.high %v2968, %v2968
        %v2985 = vcombine.high %v2975, %v2975
        %v2986 = vcombine.high %v2982, %v2982
        %v2987 = vcombine.high %v2935, %v2935
        %v2989 = vunpack.c.l.s4 1966171168
        %v2990 = vunpack.c.0.s8 %v2989
        %v2991 = vlaneseq
        %v2992 = vshrl.u32 %v2991, 7
        %v2993 = vsub.s32 %v2990, %v2992
        %v2994 = vrot.slane %v2935, %v2993
        %v2996 = vunpack.c.l.s4 1966171168
        %v2997 = vunpack.c.0.s8 %v2996
        %v2998 = vlaneseq
        %v2999 = vshrl.u32 %v2998, 7
        %v3000 = vsub.s32 %v2997, %v2999
        %v3001 = vrot.slane %v2987, %v3000
        %v3002 = vcombine.high %v2994, %v2994
        %v3003 = vcombine.high %v3001, %v3001
        %v3005 = vunpack.c.l.s4 1966171168
        %v3006 = vunpack.c.0.s8 %v3005
        %v3007 = vlaneseq
        %v3008 = vshrl.u32 %v3007, 7
        %v3009 = vsub.s32 %v3006, %v3008
        %v3010 = vrot.slane %v2994, %v3009
        %v3012 = vunpack.c.l.s4 1966171168
        %v3013 = vunpack.c.0.s8 %v3012
        %v3014 = vlaneseq
        %v3015 = vshrl.u32 %v3014, 7
        %v3016 = vsub.s32 %v3013, %v3015
        %v3017 = vrot.slane %v3001, %v3016
        %v3019 = vunpack.c.l.s4 1966171168
        %v3020 = vunpack.c.0.s8 %v3019
        %v3021 = vlaneseq
        %v3022 = vshrl.u32 %v3021, 7
        %v3023 = vsub.s32 %v3020, %v3022
        %v3024 = vrot.slane %v3002, %v3023
        %v3026 = vunpack.c.l.s4 1966171168
        %v3027 = vunpack.c.0.s8 %v3026
        %v3028 = vlaneseq
        %v3029 = vshrl.u32 %v3028, 7
        %v3030 = vsub.s32 %v3027, %v3029
        %v3031 = vrot.slane %v3003, %v3030
        %v3032 = vcombine.high %v3010, %v3010
        %v3033 = vcombine.high %v3017, %v3017
        %v3034 = vcombine.high %v3024, %v3024
        %v3035 = vcombine.high %v3031, %v3031
        %v3036 = vlaneseq
        %v3037 = vshrl.u32 %v3036, 7
        %v3038 = vsub.s32 0, %v3037
        %v3039 = vrot.slane %v2961, %v3038
        %v3040 = vlaneseq
        %v3041 = vshrl.u32 %v3040, 7
        %v3042 = vsub.s32 0, %v3041
        %v3043 = vrot.slane %v2975, %v3042
        %v3044 = vlaneseq
        %v3045 = vshrl.u32 %v3044, 7
        %v3046 = vsub.s32 0, %v3045
        %v3047 = vrot.slane %v2983, %v3046
        %v3048 = vlaneseq
        %v3049 = vshrl.u32 %v3048, 7
        %v3050 = vsub.s32 0, %v3049
        %v3051 = vrot.slane %v2985, %v3050
        %v3052 = vlaneseq
        %v3053 = vshrl.u32 %v3052, 7
        %v3054 = vsub.s32 0, %v3053
        %v3055 = vrot.slane %v2968, %v3054
        %v3056 = vlaneseq
        %v3057 = vshrl.u32 %v3056, 7
        %v3058 = vsub.s32 0, %v3057
        %v3059 = vrot.slane %v2982, %v3058
        %v3060 = vlaneseq
        %v3061 = vshrl.u32 %v3060, 7
        %v3062 = vsub.s32 0, %v3061
        %v3063 = vrot.slane %v2984, %v3062
        %v3064 = vlaneseq
        %v3065 = vshrl.u32 %v3064, 7
        %v3066 = vsub.s32 0, %v3065
        %v3067 = vrot.slane %v2986, %v3066
        %v3068 = vlaneseq
        %v3069 = vshrl.u32 %v3068, 7
        %v3070 = vsub.s32 0, %v3069
        %v3071 = vrot.slane %v3010, %v3070
        %v3072 = vlaneseq
        %v3073 = vshrl.u32 %v3072, 7
        %v3074 = vsub.s32 0, %v3073
        %v3075 = vrot.slane %v3024, %v3074
        %v3076 = vlaneseq
        %v3077 = vshrl.u32 %v3076, 7
        %v3078 = vsub.s32 0, %v3077
        %v3079 = vrot.slane %v3032, %v3078
        %v3080 = vlaneseq
        %v3081 = vshrl.u32 %v3080, 7
        %v3082 = vsub.s32 0, %v3081
        %v3083 = vrot.slane %v3034, %v3082
        %v3084 = vlaneseq
        %v3085 = vshrl.u32 %v3084, 7
        %v3086 = vsub.s32 0, %v3085
        %v3087 = vrot.slane %v3017, %v3086
        %v3088 = vlaneseq
        %v3089 = vshrl.u32 %v3088, 7
        %v3090 = vsub.s32 0, %v3089
        %v3091 = vrot.slane %v3031, %v3090
        %v3092 = vlaneseq
        %v3093 = vshrl.u32 %v3092, 7
        %v3094 = vsub.s32 0, %v3093
        %v3095 = vrot.slane %v3033, %v3094
        %v3096 = vlaneseq
        %v3097 = vshrl.u32 %v3096, 7
        %v3098 = vsub.s32 0, %v3097
        %v3099 = vrot.slane %v3035, %v3098
        %3116 = vmatprep.subr.bf16.mxu0 %v2807
        %3117 = vmatpush1.bf16.xpose.msra.mxu0 %v2806
        %3118 = vmatprep.subr.bf16.mxu0 0
        %3119 = vmatpush1.bf16.xpose.msra.mxu0 0
        %3120 = vmatprep.subr.bf16.mxu0 0
        %3121 = vmatpush1.bf16.xpose.msra.mxu0 0
        %3122 = vmatprep.subr.bf16.mxu0 0
        %3123 = vmatpush1.bf16.xpose.msra.mxu0 0
        %3124 = vmatprep.subr.bf16.mxu0 0
        %3125 = vmatpush1.bf16.xpose.msra.mxu0 0
        %3126 = vmatprep.subr.bf16.mxu0 0
        %3127 = vmatpush1.bf16.xpose.msra.mxu0 0
        %3128 = vmatprep.subr.bf16.mxu0 0
        %3129 = vmatpush1.bf16.xpose.msra.mxu0 0
        %3130 = vmatprep.subr.bf16.mxu0 0
        %3131 = vmatpush1.bf16.xpose.msra.mxu0 0
        %3132 = vmatprep.subr.bf16.mxu0 0
        %3133 = vmatpush1.bf16.xpose.msra.mxu0 0
        %3134 = vmatprep.subr.bf16.mxu0 0
        %3135 = vmatpush1.bf16.xpose.msra.mxu0 0
        %3136 = vmatprep.subr.bf16.mxu0 0
        %3137 = vmatpush1.bf16.xpose.msra.mxu0 0
        %3138 = vmatprep.subr.bf16.mxu0 0
        %3139 = vmatpush1.bf16.xpose.msra.mxu0 0
        %3140 = vmatprep.subr.bf16.mxu0 0
        %3141 = vmatpush1.bf16.xpose.msra.mxu0 0
        %3142 = vmatprep.subr.bf16.mxu0 0
        %3143 = vmatpush1.bf16.xpose.msra.mxu0 0
        %3144 = vmatprep.subr.bf16.mxu0 0
        %3145 = vmatpush1.bf16.xpose.msra.mxu0 0
        %3146 = vmatprep.subr.bf16.mxu0 0
        %3147 = vmatpush1.bf16.xpose.msra.mxu0 0
        %3148 = vmatprep.mubr.bf16.mxu0 %v2743
        %3149 = vmatmul.mubr.bf16.gmra.mrb[0].mxu0 %v2742
        %v3150 = vpop.f32.mrb[0].mxu0
        %v3151 = vadd.f32 %v3039, %v3150
        %v3152 = vpop.f32.mrb[0].mxu0
        %v3153 = vpop.f32.mrb[0].mxu0
        %v3154 = vpop.f32.mrb[0].mxu0
        %3155 = vdwg.mxu0
        %3156 = vmatprep.subr.bf16.mxu0 %v2811
        %3157 = vmatpush1.bf16.xpose.msra.mxu0 %v2810
        %3158 = vmatprep.subr.bf16.mxu0 0
        %3159 = vmatpush1.bf16.xpose.msra.mxu0 0
        %3160 = vmatprep.subr.bf16.mxu0 0
        %3161 = vmatpush1.bf16.xpose.msra.mxu0 0
        %3162 = vmatprep.subr.bf16.mxu0 0
        %3163 = vmatpush1.bf16.xpose.msra.mxu0 0
        %3164 = vmatprep.subr.bf16.mxu0 0
        %3165 = vmatpush1.bf16.xpose.msra.mxu0 0
        %3166 = vmatprep.subr.bf16.mxu0 0
        %3167 = vmatpush1.bf16.xpose.msra.mxu0 0
        %3168 = vmatprep.subr.bf16.mxu0 0
        %3169 = vmatpush1.bf16.xpose.msra.mxu0 0
        %3170 = vmatprep.subr.bf16.mxu0 0
        %3171 = vmatpush1.bf16.xpose.msra.mxu0 0
        %3172 = vmatprep.subr.bf16.mxu0 0
        %3173 = vmatpush1.bf16.xpose.msra.mxu0 0
        %3174 = vmatprep.subr.bf16.mxu0 0
        %3175 = vmatpush1.bf16.xpose.msra.mxu0 0
        %3176 = vmatprep.subr.bf16.mxu0 0
        %3177 = vmatpush1.bf16.xpose.msra.mxu0 0
        %3178 = vmatprep.subr.bf16.mxu0 0
        %3179 = vmatpush1.bf16.xpose.msra.mxu0 0
        %3180 = vmatprep.subr.bf16.mxu0 0
        %3181 = vmatpush1.bf16.xpose.msra.mxu0 0
        %3182 = vmatprep.subr.bf16.mxu0 0
        %3183 = vmatpush1.bf16.xpose.msra.mxu0 0
        %3184 = vmatprep.subr.bf16.mxu0 0
        %3185 = vmatpush1.bf16.xpose.msra.mxu0 0
        %3186 = vmatprep.subr.bf16.mxu0 0
        %3187 = vmatpush1.bf16.xpose.msra.mxu0 0
        %3188 = vmatprep.mubr.bf16.mxu0 %v2747
        %3189 = vmatmul.mubr.bf16.gmra.mrb[0].mxu0 %v2746
        %v3190 = vpop.f32.mrb[0].mxu0
        %v3191 = vadd.f32 %v3043, %v3190
        %v3192 = vpop.f32.mrb[0].mxu0
        %v3193 = vpop.f32.mrb[0].mxu0
        %v3194 = vpop.f32.mrb[0].mxu0
        %3195 = vdwg.mxu0
        %3196 = vmatprep.subr.bf16.mxu0 %v2815
        %3197 = vmatpush1.bf16.xpose.msra.mxu0 %v2814
        %3198 = vmatprep.subr.bf16.mxu0 0
        %3199 = vmatpush1.bf16.xpose.msra.mxu0 0
        %3200 = vmatprep.subr.bf16.mxu0 0
        %3201 = vmatpush1.bf16.xpose.msra.mxu0 0
        %3202 = vmatprep.subr.bf16.mxu0 0
        %3203 = vmatpush1.bf16.xpose.msra.mxu0 0
        %3204 = vmatprep.subr.bf16.mxu0 0
        %3205 = vmatpush1.bf16.xpose.msra.mxu0 0
        %3206 = vmatprep.subr.bf16.mxu0 0
        %3207 = vmatpush1.bf16.xpose.msra.mxu0 0
        %3208 = vmatprep.subr.bf16.mxu0 0
        %3209 = vmatpush1.bf16.xpose.msra.mxu0 0
        %3210 = vmatprep.subr.bf16.mxu0 0
        %3211 = vmatpush1.bf16.xpose.msra.mxu0 0
        %3212 = vmatprep.subr.bf16.mxu0 0
        %3213 = vmatpush1.bf16.xpose.msra.mxu0 0
        %3214 = vmatprep.subr.bf16.mxu0 0
        %3215 = vmatpush1.bf16.xpose.msra.mxu0 0
        %3216 = vmatprep.subr.bf16.mxu0 0
        %3217 = vmatpush1.bf16.xpose.msra.mxu0 0
        %3218 = vmatprep.subr.bf16.mxu0 0
        %3219 = vmatpush1.bf16.xpose.msra.mxu0 0
        %3220 = vmatprep.subr.bf16.mxu0 0
        %3221 = vmatpush1.bf16.xpose.msra.mxu0 0
        %3222 = vmatprep.subr.bf16.mxu0 0
        %3223 = vmatpush1.bf16.xpose.msra.mxu0 0
        %3224 = vmatprep.subr.bf16.mxu0 0
        %3225 = vmatpush1.bf16.xpose.msra.mxu0 0
        %3226 = vmatprep.subr.bf16.mxu0 0
        %3227 = vmatpush1.bf16.xpose.msra.mxu0 0
        %3228 = vmatprep.mubr.bf16.mxu0 %v2751
        %3229 = vmatmul.mubr.bf16.gmra.mrb[0].mxu0 %v2750
        %v3230 = vpop.f32.mrb[0].mxu0
        %v3231 = vadd.f32 %v3047, %v3230
        %v3232 = vpop.f32.mrb[0].mxu0
        %v3233 = vpop.f32.mrb[0].mxu0
        %v3234 = vpop.f32.mrb[0].mxu0
        %3235 = vdwg.mxu0
        %3236 = vmatprep.subr.bf16.mxu0 %v2819
        %3237 = vmatpush1.bf16.xpose.msra.mxu0 %v2818
        %3238 = vmatprep.subr.bf16.mxu0 0
        %3239 = vmatpush1.bf16.xpose.msra.mxu0 0
        %3240 = vmatprep.subr.bf16.mxu0 0
        %3241 = vmatpush1.bf16.xpose.msra.mxu0 0
        %3242 = vmatprep.subr.bf16.mxu0 0
        %3243 = vmatpush1.bf16.xpose.msra.mxu0 0
        %3244 = vmatprep.subr.bf16.mxu0 0
        %3245 = vmatpush1.bf16.xpose.msra.mxu0 0
        %3246 = vmatprep.subr.bf16.mxu0 0
        %3247 = vmatpush1.bf16.xpose.msra.mxu0 0
        %3248 = vmatprep.subr.bf16.mxu0 0
        %3249 = vmatpush1.bf16.xpose.msra.mxu0 0
        %3250 = vmatprep.subr.bf16.mxu0 0
        %3251 = vmatpush1.bf16.xpose.msra.mxu0 0
        %3252 = vmatprep.subr.bf16.mxu0 0
        %3253 = vmatpush1.bf16.xpose.msra.mxu0 0
        %3254 = vmatprep.subr.bf16.mxu0 0
        %3255 = vmatpush1.bf16.xpose.msra.mxu0 0
        %3256 = vmatprep.subr.bf16.mxu0 0
        %3257 = vmatpush1.bf16.xpose.msra.mxu0 0
        %3258 = vmatprep.subr.bf16.mxu0 0
        %3259 = vmatpush1.bf16.xpose.msra.mxu0 0
        %3260 = vmatprep.subr.bf16.mxu0 0
        %3261 = vmatpush1.bf16.xpose.msra.mxu0 0
        %3262 = vmatprep.subr.bf16.mxu0 0
        %3263 = vmatpush1.bf16.xpose.msra.mxu0 0
        %3264 = vmatprep.subr.bf16.mxu0 0
        %3265 = vmatpush1.bf16.xpose.msra.mxu0 0
        %3266 = vmatprep.subr.bf16.mxu0 0
        %3267 = vmatpush1.bf16.xpose.msra.mxu0 0
        %3268 = vmatprep.mubr.bf16.mxu0 %v2755
        %3269 = vmatmul.mubr.bf16.gmra.mrb[0].mxu0 %v2754
        %v3270 = vpop.f32.mrb[0].mxu0
        %v3271 = vadd.f32 %v3051, %v3270
        %v3272 = vpop.f32.mrb[0].mxu0
        %v3273 = vpop.f32.mrb[0].mxu0
        %v3274 = vpop.f32.mrb[0].mxu0
        %3275 = vdwg.mxu0
        %3276 = vmatprep.subr.bf16.mxu0 %v2823
        %3277 = vmatpush1.bf16.xpose.msra.mxu0 %v2822
        %3278 = vmatprep.subr.bf16.mxu0 0
        %3279 = vmatpush1.bf16.xpose.msra.mxu0 0
        %3280 = vmatprep.subr.bf16.mxu0 0
        %3281 = vmatpush1.bf16.xpose.msra.mxu0 0
        %3282 = vmatprep.subr.bf16.mxu0 0
        %3283 = vmatpush1.bf16.xpose.msra.mxu0 0
        %3284 = vmatprep.subr.bf16.mxu0 0
        %3285 = vmatpush1.bf16.xpose.msra.mxu0 0
        %3286 = vmatprep.subr.bf16.mxu0 0
        %3287 = vmatpush1.bf16.xpose.msra.mxu0 0
        %3288 = vmatprep.subr.bf16.mxu0 0
        %3289 = vmatpush1.bf16.xpose.msra.mxu0 0
        %3290 = vmatprep.subr.bf16.mxu0 0
        %3291 = vmatpush1.bf16.xpose.msra.mxu0 0
        %3292 = vmatprep.subr.bf16.mxu0 0
        %3293 = vmatpush1.bf16.xpose.msra.mxu0 0
        %3294 = vmatprep.subr.bf16.mxu0 0
        %3295 = vmatpush1.bf16.xpose.msra.mxu0 0
        %3296 = vmatprep.subr.bf16.mxu0 0
        %3297 = vmatpush1.bf16.xpose.msra.mxu0 0
        %3298 = vmatprep.subr.bf16.mxu0 0
        %3299 = vmatpush1.bf16.xpose.msra.mxu0 0
        %3300 = vmatprep.subr.bf16.mxu0 0
        %3301 = vmatpush1.bf16.xpose.msra.mxu0 0
        %3302 = vmatprep.subr.bf16.mxu0 0
        %3303 = vmatpush1.bf16.xpose.msra.mxu0 0
        %3304 = vmatprep.subr.bf16.mxu0 0
        %3305 = vmatpush1.bf16.xpose.msra.mxu0 0
        %3306 = vmatprep.subr.bf16.mxu0 0
        %3307 = vmatpush1.bf16.xpose.msra.mxu0 0
        %3308 = vmatprep.mubr.bf16.mxu0 %v2759
        %3309 = vmatmul.mubr.bf16.gmra.mrb[0].mxu0 %v2758
        %v3310 = vpop.f32.mrb[0].mxu0
        %v3311 = vadd.f32 %v3055, %v3310
        %v3312 = vpop.f32.mrb[0].mxu0
        %v3313 = vpop.f32.mrb[0].mxu0
        %v3314 = vpop.f32.mrb[0].mxu0
        %3315 = vdwg.mxu0
        %3316 = vmatprep.subr.bf16.mxu0 %v2827
        %3317 = vmatpush1.bf16.xpose.msra.mxu0 %v2826
        %3318 = vmatprep.subr.bf16.mxu0 0
        %3319 = vmatpush1.bf16.xpose.msra.mxu0 0
        %3320 = vmatprep.subr.bf16.mxu0 0
        %3321 = vmatpush1.bf16.xpose.msra.mxu0 0
        %3322 = vmatprep.subr.bf16.mxu0 0
        %3323 = vmatpush1.bf16.xpose.msra.mxu0 0
        %3324 = vmatprep.subr.bf16.mxu0 0
        %3325 = vmatpush1.bf16.xpose.msra.mxu0 0
        %3326 = vmatprep.subr.bf16.mxu0 0
        %3327 = vmatpush1.bf16.xpose.msra.mxu0 0
        %3328 = vmatprep.subr.bf16.mxu0 0
        %3329 = vmatpush1.bf16.xpose.msra.mxu0 0
        %3330 = vmatprep.subr.bf16.mxu0 0
        %3331 = vmatpush1.bf16.xpose.msra.mxu0 0
        %3332 = vmatprep.subr.bf16.mxu0 0
        %3333 = vmatpush1.bf16.xpose.msra.mxu0 0
        %3334 = vmatprep.subr.bf16.mxu0 0
        %3335 = vmatpush1.bf16.xpose.msra.mxu0 0
        %3336 = vmatprep.subr.bf16.mxu0 0
        %3337 = vmatpush1.bf16.xpose.msra.mxu0 0
        %3338 = vmatprep.subr.bf16.mxu0 0
        %3339 = vmatpush1.bf16.xpose.msra.mxu0 0
        %3340 = vmatprep.subr.bf16.mxu0 0
        %3341 = vmatpush1.bf16.xpose.msra.mxu0 0
        %3342 = vmatprep.subr.bf16.mxu0 0
        %3343 = vmatpush1.bf16.xpose.msra.mxu0 0
        %3344 = vmatprep.subr.bf16.mxu0 0
        %3345 = vmatpush1.bf16.xpose.msra.mxu0 0
        %3346 = vmatprep.subr.bf16.mxu0 0
        %3347 = vmatpush1.bf16.xpose.msra.mxu0 0
        %3348 = vmatprep.mubr.bf16.mxu0 %v2763
        %3349 = vmatmul.mubr.bf16.gmra.mrb[0].mxu0 %v2762
        %v3350 = vpop.f32.mrb[0].mxu0
        %v3351 = vadd.f32 %v3059, %v3350
        %v3352 = vpop.f32.mrb[0].mxu0
        %v3353 = vpop.f32.mrb[0].mxu0
        %v3354 = vpop.f32.mrb[0].mxu0
        %3355 = vdwg.mxu0
        %3356 = vmatprep.subr.bf16.mxu0 %v2831
        %3357 = vmatpush1.bf16.xpose.msra.mxu0 %v2830
        %3358 = vmatprep.subr.bf16.mxu0 0
        %3359 = vmatpush1.bf16.xpose.msra.mxu0 0
        %3360 = vmatprep.subr.bf16.mxu0 0
        %3361 = vmatpush1.bf16.xpose.msra.mxu0 0
        %3362 = vmatprep.subr.bf16.mxu0 0
        %3363 = vmatpush1.bf16.xpose.msra.mxu0 0
        %3364 = vmatprep.subr.bf16.mxu0 0
        %3365 = vmatpush1.bf16.xpose.msra.mxu0 0
        %3366 = vmatprep.subr.bf16.mxu0 0
        %3367 = vmatpush1.bf16.xpose.msra.mxu0 0
        %3368 = vmatprep.subr.bf16.mxu0 0
        %3369 = vmatpush1.bf16.xpose.msra.mxu0 0
        %3370 = vmatprep.subr.bf16.mxu0 0
        %3371 = vmatpush1.bf16.xpose.msra.mxu0 0
        %3372 = vmatprep.subr.bf16.mxu0 0
        %3373 = vmatpush1.bf16.xpose.msra.mxu0 0
        %3374 = vmatprep.subr.bf16.mxu0 0
        %3375 = vmatpush1.bf16.xpose.msra.mxu0 0
        %3376 = vmatprep.subr.bf16.mxu0 0
        %3377 = vmatpush1.bf16.xpose.msra.mxu0 0
        %3378 = vmatprep.subr.bf16.mxu0 0
        %3379 = vmatpush1.bf16.xpose.msra.mxu0 0
        %3380 = vmatprep.subr.bf16.mxu0 0
        %3381 = vmatpush1.bf16.xpose.msra.mxu0 0
        %3382 = vmatprep.subr.bf16.mxu0 0
        %3383 = vmatpush1.bf16.xpose.msra.mxu0 0
        %3384 = vmatprep.subr.bf16.mxu0 0
        %3385 = vmatpush1.bf16.xpose.msra.mxu0 0
        %3386 = vmatprep.subr.bf16.mxu0 0
        %3387 = vmatpush1.bf16.xpose.msra.mxu0 0
        %3388 = vmatprep.mubr.bf16.mxu0 %v2767
        %3389 = vmatmul.mubr.bf16.gmra.mrb[0].mxu0 %v2766
        %v3390 = vpop.f32.mrb[0].mxu0
        %v3391 = vadd.f32 %v3063, %v3390
        %v3392 = vpop.f32.mrb[0].mxu0
        %v3393 = vpop.f32.mrb[0].mxu0
        %v3394 = vpop.f32.mrb[0].mxu0
        %3395 = vdwg.mxu0
        %3396 = vmatprep.subr.bf16.mxu0 %v2835
        %3397 = vmatpush1.bf16.xpose.msra.mxu0 %v2834
        %3398 = vmatprep.subr.bf16.mxu0 0
        %3399 = vmatpush1.bf16.xpose.msra.mxu0 0
        %3400 = vmatprep.subr.bf16.mxu0 0
        %3401 = vmatpush1.bf16.xpose.msra.mxu0 0
        %3402 = vmatprep.subr.bf16.mxu0 0
        %3403 = vmatpush1.bf16.xpose.msra.mxu0 0
        %3404 = vmatprep.subr.bf16.mxu0 0
        %3405 = vmatpush1.bf16.xpose.msra.mxu0 0
        %3406 = vmatprep.subr.bf16.mxu0 0
        %3407 = vmatpush1.bf16.xpose.msra.mxu0 0
        %3408 = vmatprep.subr.bf16.mxu0 0
        %3409 = vmatpush1.bf16.xpose.msra.mxu0 0
        %3410 = vmatprep.subr.bf16.mxu0 0
        %3411 = vmatpush1.bf16.xpose.msra.mxu0 0
        %3412 = vmatprep.subr.bf16.mxu0 0
        %3413 = vmatpush1.bf16.xpose.msra.mxu0 0
        %3414 = vmatprep.subr.bf16.mxu0 0
        %3415 = vmatpush1.bf16.xpose.msra.mxu0 0
        %3416 = vmatprep.subr.bf16.mxu0 0
        %3417 = vmatpush1.bf16.xpose.msra.mxu0 0
        %3418 = vmatprep.subr.bf16.mxu0 0
        %3419 = vmatpush1.bf16.xpose.msra.mxu0 0
        %3420 = vmatprep.subr.bf16.mxu0 0
        %3421 = vmatpush1.bf16.xpose.msra.mxu0 0
        %3422 = vmatprep.subr.bf16.mxu0 0
        %3423 = vmatpush1.bf16.xpose.msra.mxu0 0
        %3424 = vmatprep.subr.bf16.mxu0 0
        %3425 = vmatpush1.bf16.xpose.msra.mxu0 0
        %3426 = vmatprep.subr.bf16.mxu0 0
        %3427 = vmatpush1.bf16.xpose.msra.mxu0 0
        %3428 = vmatprep.mubr.bf16.mxu0 %v2771
        %3429 = vmatmul.mubr.bf16.gmra.mrb[0].mxu0 %v2770
        %v3430 = vpop.f32.mrb[0].mxu0
        %v3431 = vadd.f32 %v3067, %v3430
        %v3432 = vpop.f32.mrb[0].mxu0
        %v3433 = vpop.f32.mrb[0].mxu0
        %v3434 = vpop.f32.mrb[0].mxu0
        %3435 = vdwg.mxu0
        %3436 = vmatprep.subr.bf16.mxu0 %v2839
        %3437 = vmatpush1.bf16.xpose.msra.mxu0 %v2838
        %3438 = vmatprep.subr.bf16.mxu0 0
        %3439 = vmatpush1.bf16.xpose.msra.mxu0 0
        %3440 = vmatprep.subr.bf16.mxu0 0
        %3441 = vmatpush1.bf16.xpose.msra.mxu0 0
        %3442 = vmatprep.subr.bf16.mxu0 0
        %3443 = vmatpush1.bf16.xpose.msra.mxu0 0
        %3444 = vmatprep.subr.bf16.mxu0 0
        %3445 = vmatpush1.bf16.xpose.msra.mxu0 0
        %3446 = vmatprep.subr.bf16.mxu0 0
        %3447 = vmatpush1.bf16.xpose.msra.mxu0 0
        %3448 = vmatprep.subr.bf16.mxu0 0
        %3449 = vmatpush1.bf16.xpose.msra.mxu0 0
        %3450 = vmatprep.subr.bf16.mxu0 0
        %3451 = vmatpush1.bf16.xpose.msra.mxu0 0
        %3452 = vmatprep.subr.bf16.mxu0 0
        %3453 = vmatpush1.bf16.xpose.msra.mxu0 0
        %3454 = vmatprep.subr.bf16.mxu0 0
        %3455 = vmatpush1.bf16.xpose.msra.mxu0 0
        %3456 = vmatprep.subr.bf16.mxu0 0
        %3457 = vmatpush1.bf16.xpose.msra.mxu0 0
        %3458 = vmatprep.subr.bf16.mxu0 0
        %3459 = vmatpush1.bf16.xpose.msra.mxu0 0
        %3460 = vmatprep.subr.bf16.mxu0 0
        %3461 = vmatpush1.bf16.xpose.msra.mxu0 0
        %3462 = vmatprep.subr.bf16.mxu0 0
        %3463 = vmatpush1.bf16.xpose.msra.mxu0 0
        %3464 = vmatprep.subr.bf16.mxu0 0
        %3465 = vmatpush1.bf16.xpose.msra.mxu0 0
        %3466 = vmatprep.subr.bf16.mxu0 0
        %3467 = vmatpush1.bf16.xpose.msra.mxu0 0
        %3468 = vmatprep.mubr.bf16.mxu0 %v2775
        %3469 = vmatmul.mubr.bf16.gmra.mrb[0].mxu0 %v2774
        %v3470 = vpop.f32.mrb[0].mxu0
        %v3471 = vadd.f32 %v3071, %v3470
        %v3472 = vpop.f32.mrb[0].mxu0
        %v3473 = vpop.f32.mrb[0].mxu0
        %v3474 = vpop.f32.mrb[0].mxu0
        %3475 = vdwg.mxu0
        %3476 = vmatprep.subr.bf16.mxu0 %v2843
        %3477 = vmatpush1.bf16.xpose.msra.mxu0 %v2842
        %3478 = vmatprep.subr.bf16.mxu0 0
        %3479 = vmatpush1.bf16.xpose.msra.mxu0 0
        %3480 = vmatprep.subr.bf16.mxu0 0
        %3481 = vmatpush1.bf16.xpose.msra.mxu0 0
        %3482 = vmatprep.subr.bf16.mxu0 0
        %3483 = vmatpush1.bf16.xpose.msra.mxu0 0
        %3484 = vmatprep.subr.bf16.mxu0 0
        %3485 = vmatpush1.bf16.xpose.msra.mxu0 0
        %3486 = vmatprep.subr.bf16.mxu0 0
        %3487 = vmatpush1.bf16.xpose.msra.mxu0 0
        %3488 = vmatprep.subr.bf16.mxu0 0
        %3489 = vmatpush1.bf16.xpose.msra.mxu0 0
        %3490 = vmatprep.subr.bf16.mxu0 0
        %3491 = vmatpush1.bf16.xpose.msra.mxu0 0
        %3492 = vmatprep.subr.bf16.mxu0 0
        %3493 = vmatpush1.bf16.xpose.msra.mxu0 0
        %3494 = vmatprep.subr.bf16.mxu0 0
        %3495 = vmatpush1.bf16.xpose.msra.mxu0 0
        %3496 = vmatprep.subr.bf16.mxu0 0
        %3497 = vmatpush1.bf16.xpose.msra.mxu0 0
        %3498 = vmatprep.subr.bf16.mxu0 0
        %3499 = vmatpush1.bf16.xpose.msra.mxu0 0
        %3500 = vmatprep.subr.bf16.mxu0 0
        %3501 = vmatpush1.bf16.xpose.msra.mxu0 0
        %3502 = vmatprep.subr.bf16.mxu0 0
        %3503 = vmatpush1.bf16.xpose.msra.mxu0 0
        %3504 = vmatprep.subr.bf16.mxu0 0
        %3505 = vmatpush1.bf16.xpose.msra.mxu0 0
        %3506 = vmatprep.subr.bf16.mxu0 0
        %3507 = vmatpush1.bf16.xpose.msra.mxu0 0
        %3508 = vmatprep.mubr.bf16.mxu0 %v2779
        %3509 = vmatmul.mubr.bf16.gmra.mrb[0].mxu0 %v2778
        %v3510 = vpop.f32.mrb[0].mxu0
        %v3511 = vadd.f32 %v3075, %v3510
        %v3512 = vpop.f32.mrb[0].mxu0
        %v3513 = vpop.f32.mrb[0].mxu0
        %v3514 = vpop.f32.mrb[0].mxu0
        %3515 = vdwg.mxu0
        %3516 = vmatprep.subr.bf16.mxu0 %v2847
        %3517 = vmatpush1.bf16.xpose.msra.mxu0 %v2846
        %3518 = vmatprep.subr.bf16.mxu0 0
        %3519 = vmatpush1.bf16.xpose.msra.mxu0 0
        %3520 = vmatprep.subr.bf16.mxu0 0
        %3521 = vmatpush1.bf16.xpose.msra.mxu0 0
        %3522 = vmatprep.subr.bf16.mxu0 0
        %3523 = vmatpush1.bf16.xpose.msra.mxu0 0
        %3524 = vmatprep.subr.bf16.mxu0 0
        %3525 = vmatpush1.bf16.xpose.msra.mxu0 0
        %3526 = vmatprep.subr.bf16.mxu0 0
        %3527 = vmatpush1.bf16.xpose.msra.mxu0 0
        %3528 = vmatprep.subr.bf16.mxu0 0
        %3529 = vmatpush1.bf16.xpose.msra.mxu0 0
        %3530 = vmatprep.subr.bf16.mxu0 0
        %3531 = vmatpush1.bf16.xpose.msra.mxu0 0
        %3532 = vmatprep.subr.bf16.mxu0 0
        %3533 = vmatpush1.bf16.xpose.msra.mxu0 0
        %3534 = vmatprep.subr.bf16.mxu0 0
        %3535 = vmatpush1.bf16.xpose.msra.mxu0 0
        %3536 = vmatprep.subr.bf16.mxu0 0
        %3537 = vmatpush1.bf16.xpose.msra.mxu0 0
        %3538 = vmatprep.subr.bf16.mxu0 0
        %3539 = vmatpush1.bf16.xpose.msra.mxu0 0
        %3540 = vmatprep.subr.bf16.mxu0 0
        %3541 = vmatpush1.bf16.xpose.msra.mxu0 0
        %3542 = vmatprep.subr.bf16.mxu0 0
        %3543 = vmatpush1.bf16.xpose.msra.mxu0 0
        %3544 = vmatprep.subr.bf16.mxu0 0
        %3545 = vmatpush1.bf16.xpose.msra.mxu0 0
        %3546 = vmatprep.subr.bf16.mxu0 0
        %3547 = vmatpush1.bf16.xpose.msra.mxu0 0
        %3548 = vmatprep.mubr.bf16.mxu0 %v2783
        %3549 = vmatmul.mubr.bf16.gmra.mrb[0].mxu0 %v2782
        %v3550 = vpop.f32.mrb[0].mxu0
        %v3551 = vadd.f32 %v3079, %v3550
        %v3552 = vpop.f32.mrb[0].mxu0
        %v3553 = vpop.f32.mrb[0].mxu0
        %v3554 = vpop.f32.mrb[0].mxu0
        %3555 = vdwg.mxu0
        %3556 = vmatprep.subr.bf16.mxu0 %v2851
        %3557 = vmatpush1.bf16.xpose.msra.mxu0 %v2850
        %3558 = vmatprep.subr.bf16.mxu0 0
        %3559 = vmatpush1.bf16.xpose.msra.mxu0 0
        %3560 = vmatprep.subr.bf16.mxu0 0
        %3561 = vmatpush1.bf16.xpose.msra.mxu0 0
        %3562 = vmatprep.subr.bf16.mxu0 0
        %3563 = vmatpush1.bf16.xpose.msra.mxu0 0
        %3564 = vmatprep.subr.bf16.mxu0 0
        %3565 = vmatpush1.bf16.xpose.msra.mxu0 0
        %3566 = vmatprep.subr.bf16.mxu0 0
        %3567 = vmatpush1.bf16.xpose.msra.mxu0 0
        %3568 = vmatprep.subr.bf16.mxu0 0
        %3569 = vmatpush1.bf16.xpose.msra.mxu0 0
        %3570 = vmatprep.subr.bf16.mxu0 0
        %3571 = vmatpush1.bf16.xpose.msra.mxu0 0
        %3572 = vmatprep.subr.bf16.mxu0 0
        %3573 = vmatpush1.bf16.xpose.msra.mxu0 0
        %3574 = vmatprep.subr.bf16.mxu0 0
        %3575 = vmatpush1.bf16.xpose.msra.mxu0 0
        %3576 = vmatprep.subr.bf16.mxu0 0
        %3577 = vmatpush1.bf16.xpose.msra.mxu0 0
        %3578 = vmatprep.subr.bf16.mxu0 0
        %3579 = vmatpush1.bf16.xpose.msra.mxu0 0
        %3580 = vmatprep.subr.bf16.mxu0 0
        %3581 = vmatpush1.bf16.xpose.msra.mxu0 0
        %3582 = vmatprep.subr.bf16.mxu0 0
        %3583 = vmatpush1.bf16.xpose.msra.mxu0 0
        %3584 = vmatprep.subr.bf16.mxu0 0
        %3585 = vmatpush1.bf16.xpose.msra.mxu0 0
        %3586 = vmatprep.subr.bf16.mxu0 0
        %3587 = vmatpush1.bf16.xpose.msra.mxu0 0
        %3588 = vmatprep.mubr.bf16.mxu0 %v2787
        %3589 = vmatmul.mubr.bf16.gmra.mrb[0].mxu0 %v2786
        %v3590 = vpop.f32.mrb[0].mxu0
        %v3591 = vadd.f32 %v3083, %v3590
        %v3592 = vpop.f32.mrb[0].mxu0
        %v3593 = vpop.f32.mrb[0].mxu0
        %v3594 = vpop.f32.mrb[0].mxu0
        %3595 = vdwg.mxu0
        %3596 = vmatprep.subr.bf16.mxu0 %v2855
        %3597 = vmatpush1.bf16.xpose.msra.mxu0 %v2854
        %3598 = vmatprep.subr.bf16.mxu0 0
        %3599 = vmatpush1.bf16.xpose.msra.mxu0 0
        %3600 = vmatprep.subr.bf16.mxu0 0
        %3601 = vmatpush1.bf16.xpose.msra.mxu0 0
        %3602 = vmatprep.subr.bf16.mxu0 0
        %3603 = vmatpush1.bf16.xpose.msra.mxu0 0
        %3604 = vmatprep.subr.bf16.mxu0 0
        %3605 = vmatpush1.bf16.xpose.msra.mxu0 0
        %3606 = vmatprep.subr.bf16.mxu0 0
        %3607 = vmatpush1.bf16.xpose.msra.mxu0 0
        %3608 = vmatprep.subr.bf16.mxu0 0
        %3609 = vmatpush1.bf16.xpose.msra.mxu0 0
        %3610 = vmatprep.subr.bf16.mxu0 0
        %3611 = vmatpush1.bf16.xpose.msra.mxu0 0
        %3612 = vmatprep.subr.bf16.mxu0 0
        %3613 = vmatpush1.bf16.xpose.msra.mxu0 0
        %3614 = vmatprep.subr.bf16.mxu0 0
        %3615 = vmatpush1.bf16.xpose.msra.mxu0 0
        %3616 = vmatprep.subr.bf16.mxu0 0
        %3617 = vmatpush1.bf16.xpose.msra.mxu0 0
        %3618 = vmatprep.subr.bf16.mxu0 0
        %3619 = vmatpush1.bf16.xpose.msra.mxu0 0
        %3620 = vmatprep.subr.bf16.mxu0 0
        %3621 = vmatpush1.bf16.xpose.msra.mxu0 0
        %3622 = vmatprep.subr.bf16.mxu0 0
        %3623 = vmatpush1.bf16.xpose.msra.mxu0 0
        %3624 = vmatprep.subr.bf16.mxu0 0
        %3625 = vmatpush1.bf16.xpose.msra.mxu0 0
        %3626 = vmatprep.subr.bf16.mxu0 0
        %3627 = vmatpush1.bf16.xpose.msra.mxu0 0
        %3628 = vmatprep.mubr.bf16.mxu0 %v2791
        %3629 = vmatmul.mubr.bf16.gmra.mrb[0].mxu0 %v2790
        %v3630 = vpop.f32.mrb[0].mxu0
        %v3631 = vadd.f32 %v3087, %v3630
        %v3632 = vpop.f32.mrb[0].mxu0
        %v3633 = vpop.f32.mrb[0].mxu0
        %v3634 = vpop.f32.mrb[0].mxu0
        %3635 = vdwg.mxu0
        %3636 = vmatprep.subr.bf16.mxu0 %v2859
        %3637 = vmatpush1.bf16.xpose.msra.mxu0 %v2858
        %3638 = vmatprep.subr.bf16.mxu0 0
        %3639 = vmatpush1.bf16.xpose.msra.mxu0 0
        %3640 = vmatprep.subr.bf16.mxu0 0
        %3641 = vmatpush1.bf16.xpose.msra.mxu0 0
        %3642 = vmatprep.subr.bf16.mxu0 0
        %3643 = vmatpush1.bf16.xpose.msra.mxu0 0
        %3644 = vmatprep.subr.bf16.mxu0 0
        %3645 = vmatpush1.bf16.xpose.msra.mxu0 0
        %3646 = vmatprep.subr.bf16.mxu0 0
        %3647 = vmatpush1.bf16.xpose.msra.mxu0 0
        %3648 = vmatprep.subr.bf16.mxu0 0
        %3649 = vmatpush1.bf16.xpose.msra.mxu0 0
        %3650 = vmatprep.subr.bf16.mxu0 0
        %3651 = vmatpush1.bf16.xpose.msra.mxu0 0
        %3652 = vmatprep.subr.bf16.mxu0 0
        %3653 = vmatpush1.bf16.xpose.msra.mxu0 0
        %3654 = vmatprep.subr.bf16.mxu0 0
        %3655 = vmatpush1.bf16.xpose.msra.mxu0 0
        %3656 = vmatprep.subr.bf16.mxu0 0
        %3657 = vmatpush1.bf16.xpose.msra.mxu0 0
        %3658 = vmatprep.subr.bf16.mxu0 0
        %3659 = vmatpush1.bf16.xpose.msra.mxu0 0
        %3660 = vmatprep.subr.bf16.mxu0 0
        %3661 = vmatpush1.bf16.xpose.msra.mxu0 0
        %3662 = vmatprep.subr.bf16.mxu0 0
        %3663 = vmatpush1.bf16.xpose.msra.mxu0 0
        %3664 = vmatprep.subr.bf16.mxu0 0
        %3665 = vmatpush1.bf16.xpose.msra.mxu0 0
        %3666 = vmatprep.subr.bf16.mxu0 0
        %3667 = vmatpush1.bf16.xpose.msra.mxu0 0
        %3668 = vmatprep.mubr.bf16.mxu0 %v2795
        %3669 = vmatmul.mubr.bf16.gmra.mrb[0].mxu0 %v2794
        %v3670 = vpop.f32.mrb[0].mxu0
        %v3671 = vadd.f32 %v3091, %v3670
        %v3672 = vpop.f32.mrb[0].mxu0
        %v3673 = vpop.f32.mrb[0].mxu0
        %v3674 = vpop.f32.mrb[0].mxu0
        %3675 = vdwg.mxu0
        %3676 = vmatprep.subr.bf16.mxu0 %v2863
        %3677 = vmatpush1.bf16.xpose.msra.mxu0 %v2862
        %3678 = vmatprep.subr.bf16.mxu0 0
        %3679 = vmatpush1.bf16.xpose.msra.mxu0 0
        %3680 = vmatprep.subr.bf16.mxu0 0
        %3681 = vmatpush1.bf16.xpose.msra.mxu0 0
        %3682 = vmatprep.subr.bf16.mxu0 0
        %3683 = vmatpush1.bf16.xpose.msra.mxu0 0
        %3684 = vmatprep.subr.bf16.mxu0 0
        %3685 = vmatpush1.bf16.xpose.msra.mxu0 0
        %3686 = vmatprep.subr.bf16.mxu0 0
        %3687 = vmatpush1.bf16.xpose.msra.mxu0 0
        %3688 = vmatprep.subr.bf16.mxu0 0
        %3689 = vmatpush1.bf16.xpose.msra.mxu0 0
        %3690 = vmatprep.subr.bf16.mxu0 0
        %3691 = vmatpush1.bf16.xpose.msra.mxu0 0
        %3692 = vmatprep.subr.bf16.mxu0 0
        %3693 = vmatpush1.bf16.xpose.msra.mxu0 0
        %3694 = vmatprep.subr.bf16.mxu0 0
        %3695 = vmatpush1.bf16.xpose.msra.mxu0 0
        %3696 = vmatprep.subr.bf16.mxu0 0
        %3697 = vmatpush1.bf16.xpose.msra.mxu0 0
        %3698 = vmatprep.subr.bf16.mxu0 0
        %3699 = vmatpush1.bf16.xpose.msra.mxu0 0
        %3700 = vmatprep.subr.bf16.mxu0 0
        %3701 = vmatpush1.bf16.xpose.msra.mxu0 0
        %3702 = vmatprep.subr.bf16.mxu0 0
        %3703 = vmatpush1.bf16.xpose.msra.mxu0 0
        %3704 = vmatprep.subr.bf16.mxu0 0
        %3705 = vmatpush1.bf16.xpose.msra.mxu0 0
        %3706 = vmatprep.subr.bf16.mxu0 0
        %3707 = vmatpush1.bf16.xpose.msra.mxu0 0
        %3708 = vmatprep.mubr.bf16.mxu0 %v2799
        %3709 = vmatmul.mubr.bf16.gmra.mrb[0].mxu0 %v2798
        %v3710 = vpop.f32.mrb[0].mxu0
        %v3711 = vadd.f32 %v3095, %v3710
        %v3712 = vpop.f32.mrb[0].mxu0
        %v3713 = vpop.f32.mrb[0].mxu0
        %v3714 = vpop.f32.mrb[0].mxu0
        %3715 = vdwg.mxu0
        %3716 = vmatprep.subr.bf16.mxu0 %v2867
        %3717 = vmatpush1.bf16.xpose.msra.mxu0 %v2866
        %3718 = vmatprep.subr.bf16.mxu0 0
        %3719 = vmatpush1.bf16.xpose.msra.mxu0 0
        %3720 = vmatprep.subr.bf16.mxu0 0
        %3721 = vmatpush1.bf16.xpose.msra.mxu0 0
        %3722 = vmatprep.subr.bf16.mxu0 0
        %3723 = vmatpush1.bf16.xpose.msra.mxu0 0
        %3724 = vmatprep.subr.bf16.mxu0 0
        %3725 = vmatpush1.bf16.xpose.msra.mxu0 0
        %3726 = vmatprep.subr.bf16.mxu0 0
        %3727 = vmatpush1.bf16.xpose.msra.mxu0 0
        %3728 = vmatprep.subr.bf16.mxu0 0
        %3729 = vmatpush1.bf16.xpose.msra.mxu0 0
        %3730 = vmatprep.subr.bf16.mxu0 0
        %3731 = vmatpush1.bf16.xpose.msra.mxu0 0
        %3732 = vmatprep.subr.bf16.mxu0 0
        %3733 = vmatpush1.bf16.xpose.msra.mxu0 0
        %3734 = vmatprep.subr.bf16.mxu0 0
        %3735 = vmatpush1.bf16.xpose.msra.mxu0 0
        %3736 = vmatprep.subr.bf16.mxu0 0
        %3737 = vmatpush1.bf16.xpose.msra.mxu0 0
        %3738 = vmatprep.subr.bf16.mxu0 0
        %3739 = vmatpush1.bf16.xpose.msra.mxu0 0
        %3740 = vmatprep.subr.bf16.mxu0 0
        %3741 = vmatpush1.bf16.xpose.msra.mxu0 0
        %3742 = vmatprep.subr.bf16.mxu0 0
        %3743 = vmatpush1.bf16.xpose.msra.mxu0 0
        %3744 = vmatprep.subr.bf16.mxu0 0
        %3745 = vmatpush1.bf16.xpose.msra.mxu0 0
        %3746 = vmatprep.subr.bf16.mxu0 0
        %3747 = vmatpush1.bf16.xpose.msra.mxu0 0
        %3748 = vmatprep.mubr.bf16.mxu0 %v2803
        %3749 = vmatmul.mubr.bf16.gmra.mrb[0].mxu0 %v2802
        %v3750 = vpop.f32.mrb[0].mxu0
        %v3751 = vadd.f32 %v3099, %v3750
        %v3752 = vpop.f32.mrb[0].mxu0
        %v3753 = vpop.f32.mrb[0].mxu0
        %v3754 = vpop.f32.mrb[0].mxu0
        %3755 = vdwg.mxu0
        %vm3756 = vcmask 64512
        %v3757 = vsel %vm3756, %v3151, -inf
        %3758 = vmax.xlane.f32.xlu0 %v3757
        %v3759 = vpop.xlane.xlu0 %3758
        %v3760 = vsel %vm3756, %v3191, -inf
        %3761 = vmax.xlane.f32.xlu0 %v3760
        %v3762 = vpop.xlane.xlu0 %3761
        %v3763 = vsel %vm3756, %v3231, -inf
        %3764 = vmax.xlane.f32.xlu0 %v3763
        %v3765 = vpop.xlane.xlu0 %3764
        %v3766 = vsel %vm3756, %v3271, -inf
        %3767 = vmax.xlane.f32.xlu0 %v3766
        %v3768 = vpop.xlane.xlu0 %3767
        %v3769 = vsel %vm3756, %v3311, -inf
        %3770 = vmax.xlane.f32.xlu0 %v3769
        %v3771 = vpop.xlane.xlu0 %3770
        %v3772 = vsel %vm3756, %v3351, -inf
        %3773 = vmax.xlane.f32.xlu0 %v3772
        %v3774 = vpop.xlane.xlu0 %3773
        %v3775 = vsel %vm3756, %v3391, -inf
        %3776 = vmax.xlane.f32.xlu0 %v3775
        %v3777 = vpop.xlane.xlu0 %3776
        %v3778 = vsel %vm3756, %v3431, -inf
        %3779 = vmax.xlane.f32.xlu0 %v3778
        %v3780 = vpop.xlane.xlu0 %3779
        %v3781 = vsel %vm3756, %v3471, -inf
        %3782 = vmax.xlane.f32.xlu0 %v3781
        %v3783 = vpop.xlane.xlu0 %3782
        %v3784 = vsel %vm3756, %v3511, -inf
        %3785 = vmax.xlane.f32.xlu0 %v3784
        %v3786 = vpop.xlane.xlu0 %3785
        %v3787 = vsel %vm3756, %v3551, -inf
        %3788 = vmax.xlane.f32.xlu0 %v3787
        %v3789 = vpop.xlane.xlu0 %3788
        %v3790 = vsel %vm3756, %v3591, -inf
        %3791 = vmax.xlane.f32.xlu0 %v3790
        %v3792 = vpop.xlane.xlu0 %3791
        %v3793 = vsel %vm3756, %v3631, -inf
        %3794 = vmax.xlane.f32.xlu0 %v3793
        %v3795 = vpop.xlane.xlu0 %3794
        %v3796 = vsel %vm3756, %v3671, -inf
        %3797 = vmax.xlane.f32.xlu0 %v3796
        %v3798 = vpop.xlane.xlu0 %3797
        %v3799 = vsel %vm3756, %v3711, -inf
        %3800 = vmax.xlane.f32.xlu0 %v3799
        %v3801 = vpop.xlane.xlu0 %3800
        %v3802 = vsel %vm3756, %v3751, -inf
        %3803 = vmax.xlane.f32.xlu0 %v3802
        %v3804 = vpop.xlane.xlu0 %3803
        %v3805 = vsub.f32 %v3151, %v3759
        %v3806 = vsub.f32 %v3191, %v3762
        %v3807 = vsub.f32 %v3231, %v3765
        %v3808 = vsub.f32 %v3271, %v3768
        %v3809 = vsub.f32 %v3311, %v3771
        %v3810 = vsub.f32 %v3351, %v3774
        %v3811 = vsub.f32 %v3391, %v3777
        %v3812 = vsub.f32 %v3431, %v3780
        %v3813 = vsub.f32 %v3471, %v3783
        %v3814 = vsub.f32 %v3511, %v3786
        %v3815 = vsub.f32 %v3551, %v3789
        %v3816 = vsub.f32 %v3591, %v3792
        %v3817 = vsub.f32 %v3631, %v3795
        %v3818 = vsub.f32 %v3671, %v3798
        %v3819 = vsub.f32 %v3711, %v3801
        %v3820 = vsub.f32 %v3751, %v3804
        %v3821 = vmul.f32 %v3805, 1.442695
        %v3822 = vpow.pop %v3821
        %v3823 = vmul.f32 %v3806, 1.442695
        %v3824 = vpow.pop %v3823
        %v3825 = vmul.f32 %v3807, 1.442695
        %v3826 = vpow.pop %v3825
        %v3827 = vmul.f32 %v3808, 1.442695
        %v3828 = vpow.pop %v3827
        %v3829 = vmul.f32 %v3809, 1.442695
        %v3830 = vpow.pop %v3829
        %v3831 = vmul.f32 %v3810, 1.442695
        %v3832 = vpow.pop %v3831
        %v3833 = vmul.f32 %v3811, 1.442695
        %v3834 = vpow.pop %v3833
        %v3835 = vmul.f32 %v3812, 1.442695
        %v3836 = vpow.pop %v3835
        %v3837 = vmul.f32 %v3813, 1.442695
        %v3838 = vpow.pop %v3837
        %v3839 = vmul.f32 %v3814, 1.442695
        %v3840 = vpow.pop %v3839
        %v3841 = vmul.f32 %v3815, 1.442695
        %v3842 = vpow.pop %v3841
        %v3843 = vmul.f32 %v3816, 1.442695
        %v3844 = vpow.pop %v3843
        %v3845 = vmul.f32 %v3817, 1.442695
        %v3846 = vpow.pop %v3845
        %v3847 = vmul.f32 %v3818, 1.442695
        %v3848 = vpow.pop %v3847
        %v3849 = vmul.f32 %v3819, 1.442695
        %v3850 = vpow.pop %v3849
        %v3851 = vmul.f32 %v3820, 1.442695
        %v3852 = vpow.pop %v3851
        %v3853 = vsel %vm3756, %v3822, 0.0
        %3854 = vadd.xlane.f32.xlu0 %v3853
        %v3855 = vpop.xlane.xlu0 %3854
        %v3856 = vsel %vm3756, %v3824, 0.0
        %3857 = vadd.xlane.f32.xlu0 %v3856
        %v3858 = vpop.xlane.xlu0 %3857
        %v3859 = vsel %vm3756, %v3826, 0.0
        %3860 = vadd.xlane.f32.xlu0 %v3859
        %v3861 = vpop.xlane.xlu0 %3860
        %v3862 = vsel %vm3756, %v3828, 0.0
        %3863 = vadd.xlane.f32.xlu0 %v3862
        %v3864 = vpop.xlane.xlu0 %3863
        %v3865 = vsel %vm3756, %v3830, 0.0
        %3866 = vadd.xlane.f32.xlu0 %v3865
        %v3867 = vpop.xlane.xlu0 %3866
        %v3868 = vsel %vm3756, %v3832, 0.0
        %3869 = vadd.xlane.f32.xlu0 %v3868
        %v3870 = vpop.xlane.xlu0 %3869
        %v3871 = vsel %vm3756, %v3834, 0.0
        %3872 = vadd.xlane.f32.xlu0 %v3871
        %v3873 = vpop.xlane.xlu0 %3872
        %v3874 = vsel %vm3756, %v3836, 0.0
        %3875 = vadd.xlane.f32.xlu0 %v3874
        %v3876 = vpop.xlane.xlu0 %3875
        %v3877 = vsel %vm3756, %v3838, 0.0
        %3878 = vadd.xlane.f32.xlu0 %v3877
        %v3879 = vpop.xlane.xlu0 %3878
        %v3880 = vsel %vm3756, %v3840, 0.0
        %3881 = vadd.xlane.f32.xlu0 %v3880
        %v3882 = vpop.xlane.xlu0 %3881
        %v3883 = vsel %vm3756, %v3842, 0.0
        %3884 = vadd.xlane.f32.xlu0 %v3883
        %v3885 = vpop.xlane.xlu0 %3884
        %v3886 = vsel %vm3756, %v3844, 0.0
        %3887 = vadd.xlane.f32.xlu0 %v3886
        %v3888 = vpop.xlane.xlu0 %3887
        %v3889 = vsel %vm3756, %v3846, 0.0
        %3890 = vadd.xlane.f32.xlu0 %v3889
        %v3891 = vpop.xlane.xlu0 %3890
        %v3892 = vsel %vm3756, %v3848, 0.0
        %3893 = vadd.xlane.f32.xlu0 %v3892
        %v3894 = vpop.xlane.xlu0 %3893
        %v3895 = vsel %vm3756, %v3850, 0.0
        %3896 = vadd.xlane.f32.xlu0 %v3895
        %v3897 = vpop.xlane.xlu0 %3896
        %v3898 = vsel %vm3756, %v3852, 0.0
        %3899 = vadd.xlane.f32.xlu0 %v3898
        %v3900 = vpop.xlane.xlu0 %3899
        %v3901 = vrcp.pop %v3855
        %v3902 = vrcp.pop %v3858
        %v3903 = vrcp.pop %v3861
        %v3904 = vrcp.pop %v3864
        %v3905 = vrcp.pop %v3867
        %v3906 = vrcp.pop %v3870
        %v3907 = vrcp.pop %v3873
        %v3908 = vrcp.pop %v3876
        %v3909 = vrcp.pop %v3879
        %v3910 = vrcp.pop %v3882
        %v3911 = vrcp.pop %v3885
        %v3912 = vrcp.pop %v3888
        %v3913 = vrcp.pop %v3891
        %v3914 = vrcp.pop %v3894
        %v3915 = vrcp.pop %v3897
        %v3916 = vrcp.pop %v3900
        %v3917 = vmul.f32 %v3822, %v3901
        %v3918 = vmul.f32 %v3824, %v3902
        %v3919 = vmul.f32 %v3826, %v3903
        %v3920 = vmul.f32 %v3828, %v3904
        %v3921 = vmul.f32 %v3830, %v3905
        %v3922 = vmul.f32 %v3832, %v3906
        %v3923 = vmul.f32 %v3834, %v3907
        %v3924 = vmul.f32 %v3836, %v3908
        %v3925 = vmul.f32 %v3838, %v3909
        %v3926 = vmul.f32 %v3840, %v3910
        %v3927 = vmul.f32 %v3842, %v3911
        %v3928 = vmul.f32 %v3844, %v3912
        %v3929 = vmul.f32 %v3846, %v3913
        %v3930 = vmul.f32 %v3848, %v3914
        %v3931 = vmul.f32 %v3850, %v3915
        %v3932 = vmul.f32 %v3852, %v3916
        %v3933 = vpack.c.bf16 %v3917, %v3917
        %v3934 = vpack.c.bf16 %v3918, %v3918
        %v3935 = vpack.c.bf16 %v3919, %v3919
        %v3936 = vpack.c.bf16 %v3920, %v3920
        %v3937 = vpack.c.bf16 %v3921, %v3921
        %v3938 = vpack.c.bf16 %v3922, %v3922
        %v3939 = vpack.c.bf16 %v3923, %v3923
        %v3940 = vpack.c.bf16 %v3924, %v3924
        %v3941 = vpack.c.bf16 %v3925, %v3925
        %v3942 = vpack.c.bf16 %v3926, %v3926
        %v3943 = vpack.c.bf16 %v3927, %v3927
        %v3944 = vpack.c.bf16 %v3928, %v3928
        %v3945 = vpack.c.bf16 %v3929, %v3929
        %v3946 = vpack.c.bf16 %v3930, %v3930
        %v3947 = vpack.c.bf16 %v3931, %v3931
        %v3948 = vpack.c.bf16 %v3932, %v3932
        %v3950 = vsel %vm3756, %v3933, 0
        %vm3952 = vcmask 1043456
        %v3954 = vsel %vm3952, %v2870, 0
        %v3957 = vsel %vm3952, %v2871, 0
        %3959 = vmatprep.subr.bf16.mxu0 %v3957
        %3960 = vmatpush1.bf16.msra.mxu0 %v3954
        %3961 = vmatprep.subr.bf16.mxu0 0
        %3962 = vmatpush1.bf16.msra.mxu0 0
        %3963 = vmatprep.subr.bf16.mxu0 0
        %3964 = vmatpush1.bf16.msra.mxu0 0
        %3965 = vmatprep.subr.bf16.mxu0 0
        %3966 = vmatpush1.bf16.msra.mxu0 0
        %3967 = vmatprep.subr.bf16.mxu0 0
        %3968 = vmatpush1.bf16.msra.mxu0 0
        %3969 = vmatprep.subr.bf16.mxu0 0
        %3970 = vmatpush1.bf16.msra.mxu0 0
        %3971 = vmatprep.subr.bf16.mxu0 0
        %3972 = vmatpush1.bf16.msra.mxu0 0
        %3973 = vmatprep.subr.bf16.mxu0 0
        %3974 = vmatpush1.bf16.msra.mxu0 0
        %3975 = vmatprep.subr.bf16.mxu0 0
        %3976 = vmatpush1.bf16.msra.mxu0 0
        %3977 = vmatprep.subr.bf16.mxu0 0
        %3978 = vmatpush1.bf16.msra.mxu0 0
        %3979 = vmatprep.subr.bf16.mxu0 0
        %3980 = vmatpush1.bf16.msra.mxu0 0
        %3981 = vmatprep.subr.bf16.mxu0 0
        %3982 = vmatpush1.bf16.msra.mxu0 0
        %3983 = vmatprep.subr.bf16.mxu0 0
        %3984 = vmatpush1.bf16.msra.mxu0 0
        %3985 = vmatprep.subr.bf16.mxu0 0
        %3986 = vmatpush1.bf16.msra.mxu0 0
        %3987 = vmatprep.subr.bf16.mxu0 0
        %3988 = vmatpush1.bf16.msra.mxu0 0
        %3989 = vmatprep.subr.bf16.mxu0 0
        %3990 = vmatpush1.bf16.msra.mxu0 0
        %3991 = vmatprep.mubr.bf16.mxu0 0
        %3992 = vmatmul.mubr.bf16.gmra.mrb[0].mxu0 %v3950
        %v3993 = vpop.f32.mrb[0].mxu0
        %v3994 = vadd.f32 0.0, %v3993
        %v3995 = vpop.f32.mrb[0].mxu0
        %v3996 = vadd.f32 0.0, %v3995
        %v3997 = vpop.f32.mrb[0].mxu0
        %v3998 = vpop.f32.mrb[0].mxu0
        %3999 = vdwg.mxu0
        %v4001 = vsel %vm3756, %v3934, 0
        %v4004 = vsel %vm3952, %v2874, 0
        %v4007 = vsel %vm3952, %v2875, 0
        %4009 = vmatprep.subr.bf16.mxu0 %v4007
        %4010 = vmatpush1.bf16.msra.mxu0 %v4004
        %4011 = vmatprep.subr.bf16.mxu0 0
        %4012 = vmatpush1.bf16.msra.mxu0 0
        %4013 = vmatprep.subr.bf16.mxu0 0
        %4014 = vmatpush1.bf16.msra.mxu0 0
        %4015 = vmatprep.subr.bf16.mxu0 0
        %4016 = vmatpush1.bf16.msra.mxu0 0
        %4017 = vmatprep.subr.bf16.mxu0 0
        %4018 = vmatpush1.bf16.msra.mxu0 0
        %4019 = vmatprep.subr.bf16.mxu0 0
        %4020 = vmatpush1.bf16.msra.mxu0 0
        %4021 = vmatprep.subr.bf16.mxu0 0
        %4022 = vmatpush1.bf16.msra.mxu0 0
        %4023 = vmatprep.subr.bf16.mxu0 0
        %4024 = vmatpush1.bf16.msra.mxu0 0
        %4025 = vmatprep.subr.bf16.mxu0 0
        %4026 = vmatpush1.bf16.msra.mxu0 0
        %4027 = vmatprep.subr.bf16.mxu0 0
        %4028 = vmatpush1.bf16.msra.mxu0 0
        %4029 = vmatprep.subr.bf16.mxu0 0
        %4030 = vmatpush1.bf16.msra.mxu0 0
        %4031 = vmatprep.subr.bf16.mxu0 0
        %4032 = vmatpush1.bf16.msra.mxu0 0
        %4033 = vmatprep.subr.bf16.mxu0 0
        %4034 = vmatpush1.bf16.msra.mxu0 0
        %4035 = vmatprep.subr.bf16.mxu0 0
        %4036 = vmatpush1.bf16.msra.mxu0 0
        %4037 = vmatprep.subr.bf16.mxu0 0
        %4038 = vmatpush1.bf16.msra.mxu0 0
        %4039 = vmatprep.subr.bf16.mxu0 0
        %4040 = vmatpush1.bf16.msra.mxu0 0
        %4041 = vmatprep.mubr.bf16.mxu0 0
        %4042 = vmatmul.mubr.bf16.gmra.mrb[0].mxu0 %v4001
        %v4043 = vpop.f32.mrb[0].mxu0
        %v4044 = vadd.f32 0.0, %v4043
        %v4045 = vpop.f32.mrb[0].mxu0
        %v4046 = vadd.f32 0.0, %v4045
        %v4047 = vpop.f32.mrb[0].mxu0
        %v4048 = vpop.f32.mrb[0].mxu0
        %4049 = vdwg.mxu0
        %v4051 = vsel %vm3756, %v3935, 0
        %v4054 = vsel %vm3952, %v2878, 0
        %v4057 = vsel %vm3952, %v2879, 0
        %4059 = vmatprep.subr.bf16.mxu0 %v4057
        %4060 = vmatpush1.bf16.msra.mxu0 %v4054
        %4061 = vmatprep.subr.bf16.mxu0 0
        %4062 = vmatpush1.bf16.msra.mxu0 0
        %4063 = vmatprep.subr.bf16.mxu0 0
        %4064 = vmatpush1.bf16.msra.mxu0 0
        %4065 = vmatprep.subr.bf16.mxu0 0
        %4066 = vmatpush1.bf16.msra.mxu0 0
        %4067 = vmatprep.subr.bf16.mxu0 0
        %4068 = vmatpush1.bf16.msra.mxu0 0
        %4069 = vmatprep.subr.bf16.mxu0 0
        %4070 = vmatpush1.bf16.msra.mxu0 0
        %4071 = vmatprep.subr.bf16.mxu0 0
        %4072 = vmatpush1.bf16.msra.mxu0 0
        %4073 = vmatprep.subr.bf16.mxu0 0
        %4074 = vmatpush1.bf16.msra.mxu0 0
        %4075 = vmatprep.subr.bf16.mxu0 0
        %4076 = vmatpush1.bf16.msra.mxu0 0
        %4077 = vmatprep.subr.bf16.mxu0 0
        %4078 = vmatpush1.bf16.msra.mxu0 0
        %4079 = vmatprep.subr.bf16.mxu0 0
        %4080 = vmatpush1.bf16.msra.mxu0 0
        %4081 = vmatprep.subr.bf16.mxu0 0
        %4082 = vmatpush1.bf16.msra.mxu0 0
        %4083 = vmatprep.subr.bf16.mxu0 0
        %4084 = vmatpush1.bf16.msra.mxu0 0
        %4085 = vmatprep.subr.bf16.mxu0 0
        %4086 = vmatpush1.bf16.msra.mxu0 0
        %4087 = vmatprep.subr.bf16.mxu0 0
        %4088 = vmatpush1.bf16.msra.mxu0 0
        %4089 = vmatprep.subr.bf16.mxu0 0
        %4090 = vmatpush1.bf16.msra.mxu0 0
        %4091 = vmatprep.mubr.bf16.mxu0 0
        %4092 = vmatmul.mubr.bf16.gmra.mrb[0].mxu0 %v4051
        %v4093 = vpop.f32.mrb[0].mxu0
        %v4094 = vadd.f32 0.0, %v4093
        %v4095 = vpop.f32.mrb[0].mxu0
        %v4096 = vadd.f32 0.0, %v4095
        %v4097 = vpop.f32.mrb[0].mxu0
        %v4098 = vpop.f32.mrb[0].mxu0
        %4099 = vdwg.mxu0
        %v4101 = vsel %vm3756, %v3936, 0
        %v4104 = vsel %vm3952, %v2882, 0
        %v4107 = vsel %vm3952, %v2883, 0
        %4109 = vmatprep.subr.bf16.mxu0 %v4107
        %4110 = vmatpush1.bf16.msra.mxu0 %v4104
        %4111 = vmatprep.subr.bf16.mxu0 0
        %4112 = vmatpush1.bf16.msra.mxu0 0
        %4113 = vmatprep.subr.bf16.mxu0 0
        %4114 = vmatpush1.bf16.msra.mxu0 0
        %4115 = vmatprep.subr.bf16.mxu0 0
        %4116 = vmatpush1.bf16.msra.mxu0 0
        %4117 = vmatprep.subr.bf16.mxu0 0
        %4118 = vmatpush1.bf16.msra.mxu0 0
        %4119 = vmatprep.subr.bf16.mxu0 0
        %4120 = vmatpush1.bf16.msra.mxu0 0
        %4121 = vmatprep.subr.bf16.mxu0 0
        %4122 = vmatpush1.bf16.msra.mxu0 0
        %4123 = vmatprep.subr.bf16.mxu0 0
        %4124 = vmatpush1.bf16.msra.mxu0 0
        %4125 = vmatprep.subr.bf16.mxu0 0
        %4126 = vmatpush1.bf16.msra.mxu0 0
        %4127 = vmatprep.subr.bf16.mxu0 0
        %4128 = vmatpush1.bf16.msra.mxu0 0
        %4129 = vmatprep.subr.bf16.mxu0 0
        %4130 = vmatpush1.bf16.msra.mxu0 0
        %4131 = vmatprep.subr.bf16.mxu0 0
        %4132 = vmatpush1.bf16.msra.mxu0 0
        %4133 = vmatprep.subr.bf16.mxu0 0
        %4134 = vmatpush1.bf16.msra.mxu0 0
        %4135 = vmatprep.subr.bf16.mxu0 0
        %4136 = vmatpush1.bf16.msra.mxu0 0
        %4137 = vmatprep.subr.bf16.mxu0 0
        %4138 = vmatpush1.bf16.msra.mxu0 0
        %4139 = vmatprep.subr.bf16.mxu0 0
        %4140 = vmatpush1.bf16.msra.mxu0 0
        %4141 = vmatprep.mubr.bf16.mxu0 0
        %4142 = vmatmul.mubr.bf16.gmra.mrb[0].mxu0 %v4101
        %v4143 = vpop.f32.mrb[0].mxu0
        %v4144 = vadd.f32 0.0, %v4143
        %v4145 = vpop.f32.mrb[0].mxu0
        %v4146 = vadd.f32 0.0, %v4145
        %v4147 = vpop.f32.mrb[0].mxu0
        %v4148 = vpop.f32.mrb[0].mxu0
        %4149 = vdwg.mxu0
        %v4151 = vsel %vm3756, %v3937, 0
        %v4154 = vsel %vm3952, %v2886, 0
        %v4157 = vsel %vm3952, %v2887, 0
        %4159 = vmatprep.subr.bf16.mxu0 %v4157
        %4160 = vmatpush1.bf16.msra.mxu0 %v4154
        %4161 = vmatprep.subr.bf16.mxu0 0
        %4162 = vmatpush1.bf16.msra.mxu0 0
        %4163 = vmatprep.subr.bf16.mxu0 0
        %4164 = vmatpush1.bf16.msra.mxu0 0
        %4165 = vmatprep.subr.bf16.mxu0 0
        %4166 = vmatpush1.bf16.msra.mxu0 0
        %4167 = vmatprep.subr.bf16.mxu0 0
        %4168 = vmatpush1.bf16.msra.mxu0 0
        %4169 = vmatprep.subr.bf16.mxu0 0
        %4170 = vmatpush1.bf16.msra.mxu0 0
        %4171 = vmatprep.subr.bf16.mxu0 0
        %4172 = vmatpush1.bf16.msra.mxu0 0
        %4173 = vmatprep.subr.bf16.mxu0 0
        %4174 = vmatpush1.bf16.msra.mxu0 0
        %4175 = vmatprep.subr.bf16.mxu0 0
        %4176 = vmatpush1.bf16.msra.mxu0 0
        %4177 = vmatprep.subr.bf16.mxu0 0
        %4178 = vmatpush1.bf16.msra.mxu0 0
        %4179 = vmatprep.subr.bf16.mxu0 0
        %4180 = vmatpush1.bf16.msra.mxu0 0
        %4181 = vmatprep.subr.bf16.mxu0 0
        %4182 = vmatpush1.bf16.msra.mxu0 0
        %4183 = vmatprep.subr.bf16.mxu0 0
        %4184 = vmatpush1.bf16.msra.mxu0 0
        %4185 = vmatprep.subr.bf16.mxu0 0
        %4186 = vmatpush1.bf16.msra.mxu0 0
        %4187 = vmatprep.subr.bf16.mxu0 0
        %4188 = vmatpush1.bf16.msra.mxu0 0
        %4189 = vmatprep.subr.bf16.mxu0 0
        %4190 = vmatpush1.bf16.msra.mxu0 0
        %4191 = vmatprep.mubr.bf16.mxu0 0
        %4192 = vmatmul.mubr.bf16.gmra.mrb[0].mxu0 %v4151
        %v4193 = vpop.f32.mrb[0].mxu0
        %v4194 = vadd.f32 0.0, %v4193
        %v4195 = vpop.f32.mrb[0].mxu0
        %v4196 = vadd.f32 0.0, %v4195
        %v4197 = vpop.f32.mrb[0].mxu0
        %v4198 = vpop.f32.mrb[0].mxu0
        %4199 = vdwg.mxu0
        %v4201 = vsel %vm3756, %v3938, 0
        %v4204 = vsel %vm3952, %v2890, 0
        %v4207 = vsel %vm3952, %v2891, 0
        %4209 = vmatprep.subr.bf16.mxu0 %v4207
        %4210 = vmatpush1.bf16.msra.mxu0 %v4204
        %4211 = vmatprep.subr.bf16.mxu0 0
        %4212 = vmatpush1.bf16.msra.mxu0 0
        %4213 = vmatprep.subr.bf16.mxu0 0
        %4214 = vmatpush1.bf16.msra.mxu0 0
        %4215 = vmatprep.subr.bf16.mxu0 0
        %4216 = vmatpush1.bf16.msra.mxu0 0
        %4217 = vmatprep.subr.bf16.mxu0 0
        %4218 = vmatpush1.bf16.msra.mxu0 0
        %4219 = vmatprep.subr.bf16.mxu0 0
        %4220 = vmatpush1.bf16.msra.mxu0 0
        %4221 = vmatprep.subr.bf16.mxu0 0
        %4222 = vmatpush1.bf16.msra.mxu0 0
        %4223 = vmatprep.subr.bf16.mxu0 0
        %4224 = vmatpush1.bf16.msra.mxu0 0
        %4225 = vmatprep.subr.bf16.mxu0 0
        %4226 = vmatpush1.bf16.msra.mxu0 0
        %4227 = vmatprep.subr.bf16.mxu0 0
        %4228 = vmatpush1.bf16.msra.mxu0 0
        %4229 = vmatprep.subr.bf16.mxu0 0
        %4230 = vmatpush1.bf16.msra.mxu0 0
        %4231 = vmatprep.subr.bf16.mxu0 0
        %4232 = vmatpush1.bf16.msra.mxu0 0
        %4233 = vmatprep.subr.bf16.mxu0 0
        %4234 = vmatpush1.bf16.msra.mxu0 0
        %4235 = vmatprep.subr.bf16.mxu0 0
        %4236 = vmatpush1.bf16.msra.mxu0 0
        %4237 = vmatprep.subr.bf16.mxu0 0
        %4238 = vmatpush1.bf16.msra.mxu0 0
        %4239 = vmatprep.subr.bf16.mxu0 0
        %4240 = vmatpush1.bf16.msra.mxu0 0
        %4241 = vmatprep.mubr.bf16.mxu0 0
        %4242 = vmatmul.mubr.bf16.gmra.mrb[0].mxu0 %v4201
        %v4243 = vpop.f32.mrb[0].mxu0
        %v4244 = vadd.f32 0.0, %v4243
        %v4245 = vpop.f32.mrb[0].mxu0
        %v4246 = vadd.f32 0.0, %v4245
        %v4247 = vpop.f32.mrb[0].mxu0
        %v4248 = vpop.f32.mrb[0].mxu0
        %4249 = vdwg.mxu0
        %v4251 = vsel %vm3756, %v3939, 0
        %v4254 = vsel %vm3952, %v2894, 0
        %v4257 = vsel %vm3952, %v2895, 0
        %4259 = vmatprep.subr.bf16.mxu0 %v4257
        %4260 = vmatpush1.bf16.msra.mxu0 %v4254
        %4261 = vmatprep.subr.bf16.mxu0 0
        %4262 = vmatpush1.bf16.msra.mxu0 0
        %4263 = vmatprep.subr.bf16.mxu0 0
        %4264 = vmatpush1.bf16.msra.mxu0 0
        %4265 = vmatprep.subr.bf16.mxu0 0
        %4266 = vmatpush1.bf16.msra.mxu0 0
        %4267 = vmatprep.subr.bf16.mxu0 0
        %4268 = vmatpush1.bf16.msra.mxu0 0
        %4269 = vmatprep.subr.bf16.mxu0 0
        %4270 = vmatpush1.bf16.msra.mxu0 0
        %4271 = vmatprep.subr.bf16.mxu0 0
        %4272 = vmatpush1.bf16.msra.mxu0 0
        %4273 = vmatprep.subr.bf16.mxu0 0
        %4274 = vmatpush1.bf16.msra.mxu0 0
        %4275 = vmatprep.subr.bf16.mxu0 0
        %4276 = vmatpush1.bf16.msra.mxu0 0
        %4277 = vmatprep.subr.bf16.mxu0 0
        %4278 = vmatpush1.bf16.msra.mxu0 0
        %4279 = vmatprep.subr.bf16.mxu0 0
        %4280 = vmatpush1.bf16.msra.mxu0 0
        %4281 = vmatprep.subr.bf16.mxu0 0
        %4282 = vmatpush1.bf16.msra.mxu0 0
        %4283 = vmatprep.subr.bf16.mxu0 0
        %4284 = vmatpush1.bf16.msra.mxu0 0
        %4285 = vmatprep.subr.bf16.mxu0 0
        %4286 = vmatpush1.bf16.msra.mxu0 0
        %4287 = vmatprep.subr.bf16.mxu0 0
        %4288 = vmatpush1.bf16.msra.mxu0 0
        %4289 = vmatprep.subr.bf16.mxu0 0
        %4290 = vmatpush1.bf16.msra.mxu0 0
        %4291 = vmatprep.mubr.bf16.mxu0 0
        %4292 = vmatmul.mubr.bf16.gmra.mrb[0].mxu0 %v4251
        %v4293 = vpop.f32.mrb[0].mxu0
        %v4294 = vadd.f32 0.0, %v4293
        %v4295 = vpop.f32.mrb[0].mxu0
        %v4296 = vadd.f32 0.0, %v4295
        %v4297 = vpop.f32.mrb[0].mxu0
        %v4298 = vpop.f32.mrb[0].mxu0
        %4299 = vdwg.mxu0
        %v4301 = vsel %vm3756, %v3940, 0
        %v4304 = vsel %vm3952, %v2898, 0
        %v4307 = vsel %vm3952, %v2899, 0
        %4309 = vmatprep.subr.bf16.mxu0 %v4307
        %4310 = vmatpush1.bf16.msra.mxu0 %v4304
        %4311 = vmatprep.subr.bf16.mxu0 0
        %4312 = vmatpush1.bf16.msra.mxu0 0
        %4313 = vmatprep.subr.bf16.mxu0 0
        %4314 = vmatpush1.bf16.msra.mxu0 0
        %4315 = vmatprep.subr.bf16.mxu0 0
        %4316 = vmatpush1.bf16.msra.mxu0 0
        %4317 = vmatprep.subr.bf16.mxu0 0
        %4318 = vmatpush1.bf16.msra.mxu0 0
        %4319 = vmatprep.subr.bf16.mxu0 0
        %4320 = vmatpush1.bf16.msra.mxu0 0
        %4321 = vmatprep.subr.bf16.mxu0 0
        %4322 = vmatpush1.bf16.msra.mxu0 0
        %4323 = vmatprep.subr.bf16.mxu0 0
        %4324 = vmatpush1.bf16.msra.mxu0 0
        %4325 = vmatprep.subr.bf16.mxu0 0
        %4326 = vmatpush1.bf16.msra.mxu0 0
        %4327 = vmatprep.subr.bf16.mxu0 0
        %4328 = vmatpush1.bf16.msra.mxu0 0
        %4329 = vmatprep.subr.bf16.mxu0 0
        %4330 = vmatpush1.bf16.msra.mxu0 0
        %4331 = vmatprep.subr.bf16.mxu0 0
        %4332 = vmatpush1.bf16.msra.mxu0 0
        %4333 = vmatprep.subr.bf16.mxu0 0
        %4334 = vmatpush1.bf16.msra.mxu0 0
        %4335 = vmatprep.subr.bf16.mxu0 0
        %4336 = vmatpush1.bf16.msra.mxu0 0
        %4337 = vmatprep.subr.bf16.mxu0 0
        %4338 = vmatpush1.bf16.msra.mxu0 0
        %4339 = vmatprep.subr.bf16.mxu0 0
        %4340 = vmatpush1.bf16.msra.mxu0 0
        %4341 = vmatprep.mubr.bf16.mxu0 0
        %4342 = vmatmul.mubr.bf16.gmra.mrb[0].mxu0 %v4301
        %v4343 = vpop.f32.mrb[0].mxu0
        %v4344 = vadd.f32 0.0, %v4343
        %v4345 = vpop.f32.mrb[0].mxu0
        %v4346 = vadd.f32 0.0, %v4345
        %v4347 = vpop.f32.mrb[0].mxu0
        %v4348 = vpop.f32.mrb[0].mxu0
        %4349 = vdwg.mxu0
        %v4351 = vsel %vm3756, %v3941, 0
        %v4354 = vsel %vm3952, %v2902, 0
        %v4357 = vsel %vm3952, %v2903, 0
        %4359 = vmatprep.subr.bf16.mxu0 %v4357
        %4360 = vmatpush1.bf16.msra.mxu0 %v4354
        %4361 = vmatprep.subr.bf16.mxu0 0
        %4362 = vmatpush1.bf16.msra.mxu0 0
        %4363 = vmatprep.subr.bf16.mxu0 0
        %4364 = vmatpush1.bf16.msra.mxu0 0
        %4365 = vmatprep.subr.bf16.mxu0 0
        %4366 = vmatpush1.bf16.msra.mxu0 0
        %4367 = vmatprep.subr.bf16.mxu0 0
        %4368 = vmatpush1.bf16.msra.mxu0 0
        %4369 = vmatprep.subr.bf16.mxu0 0
        %4370 = vmatpush1.bf16.msra.mxu0 0
        %4371 = vmatprep.subr.bf16.mxu0 0
        %4372 = vmatpush1.bf16.msra.mxu0 0
        %4373 = vmatprep.subr.bf16.mxu0 0
        %4374 = vmatpush1.bf16.msra.mxu0 0
        %4375 = vmatprep.subr.bf16.mxu0 0
        %4376 = vmatpush1.bf16.msra.mxu0 0
        %4377 = vmatprep.subr.bf16.mxu0 0
        %4378 = vmatpush1.bf16.msra.mxu0 0
        %4379 = vmatprep.subr.bf16.mxu0 0
        %4380 = vmatpush1.bf16.msra.mxu0 0
        %4381 = vmatprep.subr.bf16.mxu0 0
        %4382 = vmatpush1.bf16.msra.mxu0 0
        %4383 = vmatprep.subr.bf16.mxu0 0
        %4384 = vmatpush1.bf16.msra.mxu0 0
        %4385 = vmatprep.subr.bf16.mxu0 0
        %4386 = vmatpush1.bf16.msra.mxu0 0
        %4387 = vmatprep.subr.bf16.mxu0 0
        %4388 = vmatpush1.bf16.msra.mxu0 0
        %4389 = vmatprep.subr.bf16.mxu0 0
        %4390 = vmatpush1.bf16.msra.mxu0 0
        %4391 = vmatprep.mubr.bf16.mxu0 0
        %4392 = vmatmul.mubr.bf16.gmra.mrb[0].mxu0 %v4351
        %v4393 = vpop.f32.mrb[0].mxu0
        %v4394 = vadd.f32 0.0, %v4393
        %v4395 = vpop.f32.mrb[0].mxu0
        %v4396 = vadd.f32 0.0, %v4395
        %v4397 = vpop.f32.mrb[0].mxu0
        %v4398 = vpop.f32.mrb[0].mxu0
        %4399 = vdwg.mxu0
        %v4401 = vsel %vm3756, %v3942, 0
        %v4404 = vsel %vm3952, %v2906, 0
        %v4407 = vsel %vm3952, %v2907, 0
        %4409 = vmatprep.subr.bf16.mxu0 %v4407
        %4410 = vmatpush1.bf16.msra.mxu0 %v4404
        %4411 = vmatprep.subr.bf16.mxu0 0
        %4412 = vmatpush1.bf16.msra.mxu0 0
        %4413 = vmatprep.subr.bf16.mxu0 0
        %4414 = vmatpush1.bf16.msra.mxu0 0
        %4415 = vmatprep.subr.bf16.mxu0 0
        %4416 = vmatpush1.bf16.msra.mxu0 0
        %4417 = vmatprep.subr.bf16.mxu0 0
        %4418 = vmatpush1.bf16.msra.mxu0 0
        %4419 = vmatprep.subr.bf16.mxu0 0
        %4420 = vmatpush1.bf16.msra.mxu0 0
        %4421 = vmatprep.subr.bf16.mxu0 0
        %4422 = vmatpush1.bf16.msra.mxu0 0
        %4423 = vmatprep.subr.bf16.mxu0 0
        %4424 = vmatpush1.bf16.msra.mxu0 0
        %4425 = vmatprep.subr.bf16.mxu0 0
        %4426 = vmatpush1.bf16.msra.mxu0 0
        %4427 = vmatprep.subr.bf16.mxu0 0
        %4428 = vmatpush1.bf16.msra.mxu0 0
        %4429 = vmatprep.subr.bf16.mxu0 0
        %4430 = vmatpush1.bf16.msra.mxu0 0
        %4431 = vmatprep.subr.bf16.mxu0 0
        %4432 = vmatpush1.bf16.msra.mxu0 0
        %4433 = vmatprep.subr.bf16.mxu0 0
        %4434 = vmatpush1.bf16.msra.mxu0 0
        %4435 = vmatprep.subr.bf16.mxu0 0
        %4436 = vmatpush1.bf16.msra.mxu0 0
        %4437 = vmatprep.subr.bf16.mxu0 0
        %4438 = vmatpush1.bf16.msra.mxu0 0
        %4439 = vmatprep.subr.bf16.mxu0 0
        %4440 = vmatpush1.bf16.msra.mxu0 0
        %4441 = vmatprep.mubr.bf16.mxu0 0
        %4442 = vmatmul.mubr.bf16.gmra.mrb[0].mxu0 %v4401
        %v4443 = vpop.f32.mrb[0].mxu0
        %v4444 = vadd.f32 0.0, %v4443
        %v4445 = vpop.f32.mrb[0].mxu0
        %v4446 = vadd.f32 0.0, %v4445
        %v4447 = vpop.f32.mrb[0].mxu0
        %v4448 = vpop.f32.mrb[0].mxu0
        %4449 = vdwg.mxu0
        %v4451 = vsel %vm3756, %v3943, 0
        %v4454 = vsel %vm3952, %v2910, 0
        %v4457 = vsel %vm3952, %v2911, 0
        %4459 = vmatprep.subr.bf16.mxu0 %v4457
        %4460 = vmatpush1.bf16.msra.mxu0 %v4454
        %4461 = vmatprep.subr.bf16.mxu0 0
        %4462 = vmatpush1.bf16.msra.mxu0 0
        %4463 = vmatprep.subr.bf16.mxu0 0
        %4464 = vmatpush1.bf16.msra.mxu0 0
        %4465 = vmatprep.subr.bf16.mxu0 0
        %4466 = vmatpush1.bf16.msra.mxu0 0
        %4467 = vmatprep.subr.bf16.mxu0 0
        %4468 = vmatpush1.bf16.msra.mxu0 0
        %4469 = vmatprep.subr.bf16.mxu0 0
        %4470 = vmatpush1.bf16.msra.mxu0 0
        %4471 = vmatprep.subr.bf16.mxu0 0
        %4472 = vmatpush1.bf16.msra.mxu0 0
        %4473 = vmatprep.subr.bf16.mxu0 0
        %4474 = vmatpush1.bf16.msra.mxu0 0
        %4475 = vmatprep.subr.bf16.mxu0 0
        %4476 = vmatpush1.bf16.msra.mxu0 0
        %4477 = vmatprep.subr.bf16.mxu0 0
        %4478 = vmatpush1.bf16.msra.mxu0 0
        %4479 = vmatprep.subr.bf16.mxu0 0
        %4480 = vmatpush1.bf16.msra.mxu0 0
        %4481 = vmatprep.subr.bf16.mxu0 0
        %4482 = vmatpush1.bf16.msra.mxu0 0
        %4483 = vmatprep.subr.bf16.mxu0 0
        %4484 = vmatpush1.bf16.msra.mxu0 0
        %4485 = vmatprep.subr.bf16.mxu0 0
        %4486 = vmatpush1.bf16.msra.mxu0 0
        %4487 = vmatprep.subr.bf16.mxu0 0
        %4488 = vmatpush1.bf16.msra.mxu0 0
        %4489 = vmatprep.subr.bf16.mxu0 0
        %4490 = vmatpush1.bf16.msra.mxu0 0
        %4491 = vmatprep.mubr.bf16.mxu0 0
        %4492 = vmatmul.mubr.bf16.gmra.mrb[0].mxu0 %v4451
        %v4493 = vpop.f32.mrb[0].mxu0
        %v4494 = vadd.f32 0.0, %v4493
        %v4495 = vpop.f32.mrb[0].mxu0
        %v4496 = vadd.f32 0.0, %v4495
        %v4497 = vpop.f32.mrb[0].mxu0
        %v4498 = vpop.f32.mrb[0].mxu0
        %4499 = vdwg.mxu0
        %v4501 = vsel %vm3756, %v3944, 0
        %v4504 = vsel %vm3952, %v2914, 0
        %v4507 = vsel %vm3952, %v2915, 0
        %4509 = vmatprep.subr.bf16.mxu0 %v4507
        %4510 = vmatpush1.bf16.msra.mxu0 %v4504
        %4511 = vmatprep.subr.bf16.mxu0 0
        %4512 = vmatpush1.bf16.msra.mxu0 0
        %4513 = vmatprep.subr.bf16.mxu0 0
        %4514 = vmatpush1.bf16.msra.mxu0 0
        %4515 = vmatprep.subr.bf16.mxu0 0
        %4516 = vmatpush1.bf16.msra.mxu0 0
        %4517 = vmatprep.subr.bf16.mxu0 0
        %4518 = vmatpush1.bf16.msra.mxu0 0
        %4519 = vmatprep.subr.bf16.mxu0 0
        %4520 = vmatpush1.bf16.msra.mxu0 0
        %4521 = vmatprep.subr.bf16.mxu0 0
        %4522 = vmatpush1.bf16.msra.mxu0 0
        %4523 = vmatprep.subr.bf16.mxu0 0
        %4524 = vmatpush1.bf16.msra.mxu0 0
        %4525 = vmatprep.subr.bf16.mxu0 0
        %4526 = vmatpush1.bf16.msra.mxu0 0
        %4527 = vmatprep.subr.bf16.mxu0 0
        %4528 = vmatpush1.bf16.msra.mxu0 0
        %4529 = vmatprep.subr.bf16.mxu0 0
        %4530 = vmatpush1.bf16.msra.mxu0 0
        %4531 = vmatprep.subr.bf16.mxu0 0
        %4532 = vmatpush1.bf16.msra.mxu0 0
        %4533 = vmatprep.subr.bf16.mxu0 0
        %4534 = vmatpush1.bf16.msra.mxu0 0
        %4535 = vmatprep.subr.bf16.mxu0 0
        %4536 = vmatpush1.bf16.msra.mxu0 0
        %4537 = vmatprep.subr.bf16.mxu0 0
        %4538 = vmatpush1.bf16.msra.mxu0 0
        %4539 = vmatprep.subr.bf16.mxu0 0
        %4540 = vmatpush1.bf16.msra.mxu0 0
        %4541 = vmatprep.mubr.bf16.mxu0 0
        %4542 = vmatmul.mubr.bf16.gmra.mrb[0].mxu0 %v4501
        %v4543 = vpop.f32.mrb[0].mxu0
        %v4544 = vadd.f32 0.0, %v4543
        %v4545 = vpop.f32.mrb[0].mxu0
        %v4546 = vadd.f32 0.0, %v4545
        %v4547 = vpop.f32.mrb[0].mxu0
        %v4548 = vpop.f32.mrb[0].mxu0
        %4549 = vdwg.mxu0
        %v4551 = vsel %vm3756, %v3945, 0
        %v4554 = vsel %vm3952, %v2918, 0
        %v4557 = vsel %vm3952, %v2919, 0
        %4559 = vmatprep.subr.bf16.mxu0 %v4557
        %4560 = vmatpush1.bf16.msra.mxu0 %v4554
        %4561 = vmatprep.subr.bf16.mxu0 0
        %4562 = vmatpush1.bf16.msra.mxu0 0
        %4563 = vmatprep.subr.bf16.mxu0 0
        %4564 = vmatpush1.bf16.msra.mxu0 0
        %4565 = vmatprep.subr.bf16.mxu0 0
        %4566 = vmatpush1.bf16.msra.mxu0 0
        %4567 = vmatprep.subr.bf16.mxu0 0
        %4568 = vmatpush1.bf16.msra.mxu0 0
        %4569 = vmatprep.subr.bf16.mxu0 0
        %4570 = vmatpush1.bf16.msra.mxu0 0
        %4571 = vmatprep.subr.bf16.mxu0 0
        %4572 = vmatpush1.bf16.msra.mxu0 0
        %4573 = vmatprep.subr.bf16.mxu0 0
        %4574 = vmatpush1.bf16.msra.mxu0 0
        %4575 = vmatprep.subr.bf16.mxu0 0
        %4576 = vmatpush1.bf16.msra.mxu0 0
        %4577 = vmatprep.subr.bf16.mxu0 0
        %4578 = vmatpush1.bf16.msra.mxu0 0
        %4579 = vmatprep.subr.bf16.mxu0 0
        %4580 = vmatpush1.bf16.msra.mxu0 0
        %4581 = vmatprep.subr.bf16.mxu0 0
        %4582 = vmatpush1.bf16.msra.mxu0 0
        %4583 = vmatprep.subr.bf16.mxu0 0
        %4584 = vmatpush1.bf16.msra.mxu0 0
        %4585 = vmatprep.subr.bf16.mxu0 0
        %4586 = vmatpush1.bf16.msra.mxu0 0
        %4587 = vmatprep.subr.bf16.mxu0 0
        %4588 = vmatpush1.bf16.msra.mxu0 0
        %4589 = vmatprep.subr.bf16.mxu0 0
        %4590 = vmatpush1.bf16.msra.mxu0 0
        %4591 = vmatprep.mubr.bf16.mxu0 0
        %4592 = vmatmul.mubr.bf16.gmra.mrb[0].mxu0 %v4551
        %v4593 = vpop.f32.mrb[0].mxu0
        %v4594 = vadd.f32 0.0, %v4593
        %v4595 = vpop.f32.mrb[0].mxu0
        %v4596 = vadd.f32 0.0, %v4595
        %v4597 = vpop.f32.mrb[0].mxu0
        %v4598 = vpop.f32.mrb[0].mxu0
        %4599 = vdwg.mxu0
        %v4601 = vsel %vm3756, %v3946, 0
        %v4604 = vsel %vm3952, %v2922, 0
        %v4607 = vsel %vm3952, %v2923, 0
        %4609 = vmatprep.subr.bf16.mxu0 %v4607
        %4610 = vmatpush1.bf16.msra.mxu0 %v4604
        %4611 = vmatprep.subr.bf16.mxu0 0
        %4612 = vmatpush1.bf16.msra.mxu0 0
        %4613 = vmatprep.subr.bf16.mxu0 0
        %4614 = vmatpush1.bf16.msra.mxu0 0
        %4615 = vmatprep.subr.bf16.mxu0 0
        %4616 = vmatpush1.bf16.msra.mxu0 0
        %4617 = vmatprep.subr.bf16.mxu0 0
        %4618 = vmatpush1.bf16.msra.mxu0 0
        %4619 = vmatprep.subr.bf16.mxu0 0
        %4620 = vmatpush1.bf16.msra.mxu0 0
        %4621 = vmatprep.subr.bf16.mxu0 0
        %4622 = vmatpush1.bf16.msra.mxu0 0
        %4623 = vmatprep.subr.bf16.mxu0 0
        %4624 = vmatpush1.bf16.msra.mxu0 0
        %4625 = vmatprep.subr.bf16.mxu0 0
        %4626 = vmatpush1.bf16.msra.mxu0 0
        %4627 = vmatprep.subr.bf16.mxu0 0
        %4628 = vmatpush1.bf16.msra.mxu0 0
        %4629 = vmatprep.subr.bf16.mxu0 0
        %4630 = vmatpush1.bf16.msra.mxu0 0
        %4631 = vmatprep.subr.bf16.mxu0 0
        %4632 = vmatpush1.bf16.msra.mxu0 0
        %4633 = vmatprep.subr.bf16.mxu0 0
        %4634 = vmatpush1.bf16.msra.mxu0 0
        %4635 = vmatprep.subr.bf16.mxu0 0
        %4636 = vmatpush1.bf16.msra.mxu0 0
        %4637 = vmatprep.subr.bf16.mxu0 0
        %4638 = vmatpush1.bf16.msra.mxu0 0
        %4639 = vmatprep.subr.bf16.mxu0 0
        %4640 = vmatpush1.bf16.msra.mxu0 0
        %4641 = vmatprep.mubr.bf16.mxu0 0
        %4642 = vmatmul.mubr.bf16.gmra.mrb[0].mxu0 %v4601
        %v4643 = vpop.f32.mrb[0].mxu0
        %v4644 = vadd.f32 0.0, %v4643
        %v4645 = vpop.f32.mrb[0].mxu0
        %v4646 = vadd.f32 0.0, %v4645
        %v4647 = vpop.f32.mrb[0].mxu0
        %v4648 = vpop.f32.mrb[0].mxu0
        %4649 = vdwg.mxu0
        %v4651 = vsel %vm3756, %v3947, 0
        %v4654 = vsel %vm3952, %v2926, 0
        %v4657 = vsel %vm3952, %v2927, 0
        %4659 = vmatprep.subr.bf16.mxu0 %v4657
        %4660 = vmatpush1.bf16.msra.mxu0 %v4654
        %4661 = vmatprep.subr.bf16.mxu0 0
        %4662 = vmatpush1.bf16.msra.mxu0 0
        %4663 = vmatprep.subr.bf16.mxu0 0
        %4664 = vmatpush1.bf16.msra.mxu0 0
        %4665 = vmatprep.subr.bf16.mxu0 0
        %4666 = vmatpush1.bf16.msra.mxu0 0
        %4667 = vmatprep.subr.bf16.mxu0 0
        %4668 = vmatpush1.bf16.msra.mxu0 0
        %4669 = vmatprep.subr.bf16.mxu0 0
        %4670 = vmatpush1.bf16.msra.mxu0 0
        %4671 = vmatprep.subr.bf16.mxu0 0
        %4672 = vmatpush1.bf16.msra.mxu0 0
        %4673 = vmatprep.subr.bf16.mxu0 0
        %4674 = vmatpush1.bf16.msra.mxu0 0
        %4675 = vmatprep.subr.bf16.mxu0 0
        %4676 = vmatpush1.bf16.msra.mxu0 0
        %4677 = vmatprep.subr.bf16.mxu0 0
        %4678 = vmatpush1.bf16.msra.mxu0 0
        %4679 = vmatprep.subr.bf16.mxu0 0
        %4680 = vmatpush1.bf16.msra.mxu0 0
        %4681 = vmatprep.subr.bf16.mxu0 0
        %4682 = vmatpush1.bf16.msra.mxu0 0
        %4683 = vmatprep.subr.bf16.mxu0 0
        %4684 = vmatpush1.bf16.msra.mxu0 0
        %4685 = vmatprep.subr.bf16.mxu0 0
        %4686 = vmatpush1.bf16.msra.mxu0 0
        %4687 = vmatprep.subr.bf16.mxu0 0
        %4688 = vmatpush1.bf16.msra.mxu0 0
        %4689 = vmatprep.subr.bf16.mxu0 0
        %4690 = vmatpush1.bf16.msra.mxu0 0
        %4691 = vmatprep.mubr.bf16.mxu0 0
        %4692 = vmatmul.mubr.bf16.gmra.mrb[0].mxu0 %v4651
        %v4693 = vpop.f32.mrb[0].mxu0
        %v4694 = vadd.f32 0.0, %v4693
        %v4695 = vpop.f32.mrb[0].mxu0
        %v4696 = vadd.f32 0.0, %v4695
        %v4697 = vpop.f32.mrb[0].mxu0
        %v4698 = vpop.f32.mrb[0].mxu0
        %4699 = vdwg.mxu0
        %v4701 = vsel %vm3756, %v3948, 0
        %v4704 = vsel %vm3952, %v2930, 0
        %v4707 = vsel %vm3952, %v2931, 0
        %4709 = vmatprep.subr.bf16.mxu0 %v4707
        %4710 = vmatpush1.bf16.msra.mxu0 %v4704
        %4711 = vmatprep.subr.bf16.mxu0 0
        %4712 = vmatpush1.bf16.msra.mxu0 0
        %4713 = vmatprep.subr.bf16.mxu0 0
        %4714 = vmatpush1.bf16.msra.mxu0 0
        %4715 = vmatprep.subr.bf16.mxu0 0
        %4716 = vmatpush1.bf16.msra.mxu0 0
        %4717 = vmatprep.subr.bf16.mxu0 0
        %4718 = vmatpush1.bf16.msra.mxu0 0
        %4719 = vmatprep.subr.bf16.mxu0 0
        %4720 = vmatpush1.bf16.msra.mxu0 0
        %4721 = vmatprep.subr.bf16.mxu0 0
        %4722 = vmatpush1.bf16.msra.mxu0 0
        %4723 = vmatprep.subr.bf16.mxu0 0
        %4724 = vmatpush1.bf16.msra.mxu0 0
        %4725 = vmatprep.subr.bf16.mxu0 0
        %4726 = vmatpush1.bf16.msra.mxu0 0
        %4727 = vmatprep.subr.bf16.mxu0 0
        %4728 = vmatpush1.bf16.msra.mxu0 0
        %4729 = vmatprep.subr.bf16.mxu0 0
        %4730 = vmatpush1.bf16.msra.mxu0 0
        %4731 = vmatprep.subr.bf16.mxu0 0
        %4732 = vmatpush1.bf16.msra.mxu0 0
        %4733 = vmatprep.subr.bf16.mxu0 0
        %4734 = vmatpush1.bf16.msra.mxu0 0
        %4735 = vmatprep.subr.bf16.mxu0 0
        %4736 = vmatpush1.bf16.msra.mxu0 0
        %4737 = vmatprep.subr.bf16.mxu0 0
        %4738 = vmatpush1.bf16.msra.mxu0 0
        %4739 = vmatprep.subr.bf16.mxu0 0
        %4740 = vmatpush1.bf16.msra.mxu0 0
        %4741 = vmatprep.mubr.bf16.mxu0 0
        %4742 = vmatmul.mubr.bf16.gmra.mrb[0].mxu0 %v4701
        %v4743 = vpop.f32.mrb[0].mxu0
        %v4744 = vadd.f32 0.0, %v4743
        %v4745 = vpop.f32.mrb[0].mxu0
        %v4746 = vadd.f32 0.0, %v4745
        %v4747 = vpop.f32.mrb[0].mxu0
        %v4748 = vpop.f32.mrb[0].mxu0
        %4749 = vdwg.mxu0
        %v4750 = vpack.c.bf16 %v4044, %v3994
        %v4751 = vpack.c.bf16 %v4046, %v3996
        %v4752 = vpack.c.bf16 %v4144, %v4094
        %v4753 = vpack.c.bf16 %v4146, %v4096
        %v4754 = vpack.c.bf16 %v4244, %v4194
        %v4755 = vpack.c.bf16 %v4246, %v4196
        %v4756 = vpack.c.bf16 %v4344, %v4294
        %v4757 = vpack.c.bf16 %v4346, %v4296
        %v4758 = vpack.c.bf16 %v4444, %v4394
        %v4759 = vpack.c.bf16 %v4446, %v4396
        %v4760 = vpack.c.bf16 %v4544, %v4494
        %v4761 = vpack.c.bf16 %v4546, %v4496
        %v4762 = vpack.c.bf16 %v4644, %v4594
        %v4763 = vpack.c.bf16 %v4646, %v4596
        %v4764 = vpack.c.bf16 %v4744, %v4694
        %v4765 = vpack.c.bf16 %v4746, %v4696
        %s4766 = smul.addr %s835, 4
        %s4767 = scalar_lea.vmem [#allocation10], %s4766
        %v4768 = vld [vmem:[%s4767] sm:$0xff]
        %v4769 = vld [vmem:[%s4767 + $0x8] sm:$0xff]
        %v4770 = vld [vmem:[%s4767 + $0x10] sm:$0xff]
        %v4771 = vld [vmem:[%s4767 + $0x18] sm:$0xff]
        %v4772 = vld [vmem:[%s4767 + $0x20] sm:$0xff]
        %v4773 = vld [vmem:[%s4767 + $0x28] sm:$0xff]
        %v4774 = vld [vmem:[%s4767 + $0x30] sm:$0xff]
        %v4775 = vld [vmem:[%s4767 + $0x38] sm:$0xff]
        %v4776 = vld [vmem:[%s4767 + $0x40] sm:$0xff]
        %v4777 = vld [vmem:[%s4767 + $0x48] sm:$0xff]
        %v4778 = vld [vmem:[%s4767 + $0x50] sm:$0xff]
        %v4779 = vld [vmem:[%s4767 + $0x58] sm:$0xff]
        %v4780 = vld [vmem:[%s4767 + $0x60] sm:$0xff]
        %v4781 = vld [vmem:[%s4767 + $0x68] sm:$0xff]
        %v4782 = vld [vmem:[%s4767 + $0x70] sm:$0xff]
        %v4783 = vld [vmem:[%s4767 + $0x78] sm:$0xff]
        %v4784 = vld [vmem:[%s4767 + $0x80] sm:$0xff]
        %v4785 = vld [vmem:[%s4767 + $0x88] sm:$0xff]
        %v4786 = vld [vmem:[%s4767 + $0x90] sm:$0xff]
        %v4787 = vld [vmem:[%s4767 + $0x98] sm:$0xff]
        %v4788 = vld [vmem:[%s4767 + $0xa0] sm:$0xff]
        %v4789 = vld [vmem:[%s4767 + $0xa8] sm:$0xff]
        %v4790 = vld [vmem:[%s4767 + $0xb0] sm:$0xff]
        %v4791 = vld [vmem:[%s4767 + $0xb8] sm:$0xff]
        %v4792 = vld [vmem:[%s4767 + $0xc0] sm:$0xff]
        %v4793 = vld [vmem:[%s4767 + $0xc8] sm:$0xff]
        %v4794 = vld [vmem:[%s4767 + $0xd0] sm:$0xff]
        %v4795 = vld [vmem:[%s4767 + $0xd8] sm:$0xff]
        %v4796 = vld [vmem:[%s4767 + $0xe0] sm:$0xff]
        %v4797 = vld [vmem:[%s4767 + $0xe8] sm:$0xff]
        %v4798 = vld [vmem:[%s4767 + $0xf0] sm:$0xff]
        %v4799 = vld [vmem:[%s4767 + $0xf8] sm:$0xff]
        %4800 = vmatprep.subr.bf16.mxu0 %v2809
        %4801 = vmatpush1.bf16.xpose.msra.mxu0 %v2808
        %4802 = vmatprep.subr.bf16.mxu0 0
        %4803 = vmatpush1.bf16.xpose.msra.mxu0 0
        %4804 = vmatprep.subr.bf16.mxu0 0
        %4805 = vmatpush1.bf16.xpose.msra.mxu0 0
        %4806 = vmatprep.subr.bf16.mxu0 0
        %4807 = vmatpush1.bf16.xpose.msra.mxu0 0
        %4808 = vmatprep.subr.bf16.mxu0 0
        %4809 = vmatpush1.bf16.xpose.msra.mxu0 0
        %4810 = vmatprep.subr.bf16.mxu0 0
        %4811 = vmatpush1.bf16.xpose.msra.mxu0 0
        %4812 = vmatprep.subr.bf16.mxu0 0
        %4813 = vmatpush1.bf16.xpose.msra.mxu0 0
        %4814 = vmatprep.subr.bf16.mxu0 0
        %4815 = vmatpush1.bf16.xpose.msra.mxu0 0
        %4816 = vmatprep.subr.bf16.mxu0 0
        %4817 = vmatpush1.bf16.xpose.msra.mxu0 0
        %4818 = vmatprep.subr.bf16.mxu0 0
        %4819 = vmatpush1.bf16.xpose.msra.mxu0 0
        %4820 = vmatprep.subr.bf16.mxu0 0
        %4821 = vmatpush1.bf16.xpose.msra.mxu0 0
        %4822 = vmatprep.subr.bf16.mxu0 0
        %4823 = vmatpush1.bf16.xpose.msra.mxu0 0
        %4824 = vmatprep.subr.bf16.mxu0 0
        %4825 = vmatpush1.bf16.xpose.msra.mxu0 0
        %4826 = vmatprep.subr.bf16.mxu0 0
        %4827 = vmatpush1.bf16.xpose.msra.mxu0 0
        %4828 = vmatprep.subr.bf16.mxu0 0
        %4829 = vmatpush1.bf16.xpose.msra.mxu0 0
        %4830 = vmatprep.subr.bf16.mxu0 0
        %4831 = vmatpush1.bf16.xpose.msra.mxu0 0
        %4832 = vmatprep.mubr.bf16.mxu0 %v2745
        %4833 = vmatmul.mubr.bf16.gmra.mrb[0].mxu0 %v2744
        %v4834 = vpop.f32.mrb[0].mxu0
        %v4835 = vadd.f32 %v3039, %v4834
        %v4836 = vpop.f32.mrb[0].mxu0
        %v4837 = vpop.f32.mrb[0].mxu0
        %v4838 = vpop.f32.mrb[0].mxu0
        %4839 = vdwg.mxu0
        %4840 = vmatprep.subr.bf16.mxu0 %v2813
        %4841 = vmatpush1.bf16.xpose.msra.mxu0 %v2812
        %4842 = vmatprep.subr.bf16.mxu0 0
        %4843 = vmatpush1.bf16.xpose.msra.mxu0 0
        %4844 = vmatprep.subr.bf16.mxu0 0
        %4845 = vmatpush1.bf16.xpose.msra.mxu0 0
        %4846 = vmatprep.subr.bf16.mxu0 0
        %4847 = vmatpush1.bf16.xpose.msra.mxu0 0
        %4848 = vmatprep.subr.bf16.mxu0 0
        %4849 = vmatpush1.bf16.xpose.msra.mxu0 0
        %4850 = vmatprep.subr.bf16.mxu0 0
        %4851 = vmatpush1.bf16.xpose.msra.mxu0 0
        %4852 = vmatprep.subr.bf16.mxu0 0
        %4853 = vmatpush1.bf16.xpose.msra.mxu0 0
        %4854 = vmatprep.subr.bf16.mxu0 0
        %4855 = vmatpush1.bf16.xpose.msra.mxu0 0
        %4856 = vmatprep.subr.bf16.mxu0 0
        %4857 = vmatpush1.bf16.xpose.msra.mxu0 0
        %4858 = vmatprep.subr.bf16.mxu0 0
        %4859 = vmatpush1.bf16.xpose.msra.mxu0 0
        %4860 = vmatprep.subr.bf16.mxu0 0
        %4861 = vmatpush1.bf16.xpose.msra.mxu0 0
        %4862 = vmatprep.subr.bf16.mxu0 0
        %4863 = vmatpush1.bf16.xpose.msra.mxu0 0
        %4864 = vmatprep.subr.bf16.mxu0 0
        %4865 = vmatpush1.bf16.xpose.msra.mxu0 0
        %4866 = vmatprep.subr.bf16.mxu0 0
        %4867 = vmatpush1.bf16.xpose.msra.mxu0 0
        %4868 = vmatprep.subr.bf16.mxu0 0
        %4869 = vmatpush1.bf16.xpose.msra.mxu0 0
        %4870 = vmatprep.subr.bf16.mxu0 0
        %4871 = vmatpush1.bf16.xpose.msra.mxu0 0
        %4872 = vmatprep.mubr.bf16.mxu0 %v2749
        %4873 = vmatmul.mubr.bf16.gmra.mrb[0].mxu0 %v2748
        %v4874 = vpop.f32.mrb[0].mxu0
        %v4875 = vadd.f32 %v3043, %v4874
        %v4876 = vpop.f32.mrb[0].mxu0
        %v4877 = vpop.f32.mrb[0].mxu0
        %v4878 = vpop.f32.mrb[0].mxu0
        %4879 = vdwg.mxu0
        %4880 = vmatprep.subr.bf16.mxu0 %v2817
        %4881 = vmatpush1.bf16.xpose.msra.mxu0 %v2816
        %4882 = vmatprep.subr.bf16.mxu0 0
        %4883 = vmatpush1.bf16.xpose.msra.mxu0 0
        %4884 = vmatprep.subr.bf16.mxu0 0
        %4885 = vmatpush1.bf16.xpose.msra.mxu0 0
        %4886 = vmatprep.subr.bf16.mxu0 0
        %4887 = vmatpush1.bf16.xpose.msra.mxu0 0
        %4888 = vmatprep.subr.bf16.mxu0 0
        %4889 = vmatpush1.bf16.xpose.msra.mxu0 0
        %4890 = vmatprep.subr.bf16.mxu0 0
        %4891 = vmatpush1.bf16.xpose.msra.mxu0 0
        %4892 = vmatprep.subr.bf16.mxu0 0
        %4893 = vmatpush1.bf16.xpose.msra.mxu0 0
        %4894 = vmatprep.subr.bf16.mxu0 0
        %4895 = vmatpush1.bf16.xpose.msra.mxu0 0
        %4896 = vmatprep.subr.bf16.mxu0 0
        %4897 = vmatpush1.bf16.xpose.msra.mxu0 0
        %4898 = vmatprep.subr.bf16.mxu0 0
        %4899 = vmatpush1.bf16.xpose.msra.mxu0 0
        %4900 = vmatprep.subr.bf16.mxu0 0
        %4901 = vmatpush1.bf16.xpose.msra.mxu0 0
        %4902 = vmatprep.subr.bf16.mxu0 0
        %4903 = vmatpush1.bf16.xpose.msra.mxu0 0
        %4904 = vmatprep.subr.bf16.mxu0 0
        %4905 = vmatpush1.bf16.xpose.msra.mxu0 0
        %4906 = vmatprep.subr.bf16.mxu0 0
        %4907 = vmatpush1.bf16.xpose.msra.mxu0 0
        %4908 = vmatprep.subr.bf16.mxu0 0
        %4909 = vmatpush1.bf16.xpose.msra.mxu0 0
        %4910 = vmatprep.subr.bf16.mxu0 0
        %4911 = vmatpush1.bf16.xpose.msra.mxu0 0
        %4912 = vmatprep.mubr.bf16.mxu0 %v2753
        %4913 = vmatmul.mubr.bf16.gmra.mrb[0].mxu0 %v2752
        %v4914 = vpop.f32.mrb[0].mxu0
        %v4915 = vadd.f32 %v3047, %v4914
        %v4916 = vpop.f32.mrb[0].mxu0
        %v4917 = vpop.f32.mrb[0].mxu0
        %v4918 = vpop.f32.mrb[0].mxu0
        %4919 = vdwg.mxu0
        %4920 = vmatprep.subr.bf16.mxu0 %v2821
        %4921 = vmatpush1.bf16.xpose.msra.mxu0 %v2820
        %4922 = vmatprep.subr.bf16.mxu0 0
        %4923 = vmatpush1.bf16.xpose.msra.mxu0 0
        %4924 = vmatprep.subr.bf16.mxu0 0
        %4925 = vmatpush1.bf16.xpose.msra.mxu0 0
        %4926 = vmatprep.subr.bf16.mxu0 0
        %4927 = vmatpush1.bf16.xpose.msra.mxu0 0
        %4928 = vmatprep.subr.bf16.mxu0 0
        %4929 = vmatpush1.bf16.xpose.msra.mxu0 0
        %4930 = vmatprep.subr.bf16.mxu0 0
        %4931 = vmatpush1.bf16.xpose.msra.mxu0 0
        %4932 = vmatprep.subr.bf16.mxu0 0
        %4933 = vmatpush1.bf16.xpose.msra.mxu0 0
        %4934 = vmatprep.subr.bf16.mxu0 0
        %4935 = vmatpush1.bf16.xpose.msra.mxu0 0
        %4936 = vmatprep.subr.bf16.mxu0 0
        %4937 = vmatpush1.bf16.xpose.msra.mxu0 0
        %4938 = vmatprep.subr.bf16.mxu0 0
        %4939 = vmatpush1.bf16.xpose.msra.mxu0 0
        %4940 = vmatprep.subr.bf16.mxu0 0
        %4941 = vmatpush1.bf16.xpose.msra.mxu0 0
        %4942 = vmatprep.subr.bf16.mxu0 0
        %4943 = vmatpush1.bf16.xpose.msra.mxu0 0
        %4944 = vmatprep.subr.bf16.mxu0 0
        %4945 = vmatpush1.bf16.xpose.msra.mxu0 0
        %4946 = vmatprep.subr.bf16.mxu0 0
        %4947 = vmatpush1.bf16.xpose.msra.mxu0 0
        %4948 = vmatprep.subr.bf16.mxu0 0
        %4949 = vmatpush1.bf16.xpose.msra.mxu0 0
        %4950 = vmatprep.subr.bf16.mxu0 0
        %4951 = vmatpush1.bf16.xpose.msra.mxu0 0
        %4952 = vmatprep.mubr.bf16.mxu0 %v2757
        %4953 = vmatmul.mubr.bf16.gmra.mrb[0].mxu0 %v2756
        %v4954 = vpop.f32.mrb[0].mxu0
        %v4955 = vadd.f32 %v3051, %v4954
        %v4956 = vpop.f32.mrb[0].mxu0
        %v4957 = vpop.f32.mrb[0].mxu0
        %v4958 = vpop.f32.mrb[0].mxu0
        %4959 = vdwg.mxu0
        %4960 = vmatprep.subr.bf16.mxu0 %v2825
        %4961 = vmatpush1.bf16.xpose.msra.mxu0 %v2824
        %4962 = vmatprep.subr.bf16.mxu0 0
        %4963 = vmatpush1.bf16.xpose.msra.mxu0 0
        %4964 = vmatprep.subr.bf16.mxu0 0
        %4965 = vmatpush1.bf16.xpose.msra.mxu0 0
        %4966 = vmatprep.subr.bf16.mxu0 0
        %4967 = vmatpush1.bf16.xpose.msra.mxu0 0
        %4968 = vmatprep.subr.bf16.mxu0 0
        %4969 = vmatpush1.bf16.xpose.msra.mxu0 0
        %4970 = vmatprep.subr.bf16.mxu0 0
        %4971 = vmatpush1.bf16.xpose.msra.mxu0 0
        %4972 = vmatprep.subr.bf16.mxu0 0
        %4973 = vmatpush1.bf16.xpose.msra.mxu0 0
        %4974 = vmatprep.subr.bf16.mxu0 0
        %4975 = vmatpush1.bf16.xpose.msra.mxu0 0
        %4976 = vmatprep.subr.bf16.mxu0 0
        %4977 = vmatpush1.bf16.xpose.msra.mxu0 0
        %4978 = vmatprep.subr.bf16.mxu0 0
        %4979 = vmatpush1.bf16.xpose.msra.mxu0 0
        %4980 = vmatprep.subr.bf16.mxu0 0
        %4981 = vmatpush1.bf16.xpose.msra.mxu0 0
        %4982 = vmatprep.subr.bf16.mxu0 0
        %4983 = vmatpush1.bf16.xpose.msra.mxu0 0
        %4984 = vmatprep.subr.bf16.mxu0 0
        %4985 = vmatpush1.bf16.xpose.msra.mxu0 0
        %4986 = vmatprep.subr.bf16.mxu0 0
        %4987 = vmatpush1.bf16.xpose.msra.mxu0 0
        %4988 = vmatprep.subr.bf16.mxu0 0
        %4989 = vmatpush1.bf16.xpose.msra.mxu0 0
        %4990 = vmatprep.subr.bf16.mxu0 0
        %4991 = vmatpush1.bf16.xpose.msra.mxu0 0
        %4992 = vmatprep.mubr.bf16.mxu0 %v2761
        %4993 = vmatmul.mubr.bf16.gmra.mrb[0].mxu0 %v2760
        %v4994 = vpop.f32.mrb[0].mxu0
        %v4995 = vadd.f32 %v3055, %v4994
        %v4996 = vpop.f32.mrb[0].mxu0
        %v4997 = vpop.f32.mrb[0].mxu0
        %v4998 = vpop.f32.mrb[0].mxu0
        %4999 = vdwg.mxu0
        %5000 = vmatprep.subr.bf16.mxu0 %v2829
        %5001 = vmatpush1.bf16.xpose.msra.mxu0 %v2828
        %5002 = vmatprep.subr.bf16.mxu0 0
        %5003 = vmatpush1.bf16.xpose.msra.mxu0 0
        %5004 = vmatprep.subr.bf16.mxu0 0
        %5005 = vmatpush1.bf16.xpose.msra.mxu0 0
        %5006 = vmatprep.subr.bf16.mxu0 0
        %5007 = vmatpush1.bf16.xpose.msra.mxu0 0
        %5008 = vmatprep.subr.bf16.mxu0 0
        %5009 = vmatpush1.bf16.xpose.msra.mxu0 0
        %5010 = vmatprep.subr.bf16.mxu0 0
        %5011 = vmatpush1.bf16.xpose.msra.mxu0 0
        %5012 = vmatprep.subr.bf16.mxu0 0
        %5013 = vmatpush1.bf16.xpose.msra.mxu0 0
        %5014 = vmatprep.subr.bf16.mxu0 0
        %5015 = vmatpush1.bf16.xpose.msra.mxu0 0
        %5016 = vmatprep.subr.bf16.mxu0 0
        %5017 = vmatpush1.bf16.xpose.msra.mxu0 0
        %5018 = vmatprep.subr.bf16.mxu0 0
        %5019 = vmatpush1.bf16.xpose.msra.mxu0 0
        %5020 = vmatprep.subr.bf16.mxu0 0
        %5021 = vmatpush1.bf16.xpose.msra.mxu0 0
        %5022 = vmatprep.subr.bf16.mxu0 0
        %5023 = vmatpush1.bf16.xpose.msra.mxu0 0
        %5024 = vmatprep.subr.bf16.mxu0 0
        %5025 = vmatpush1.bf16.xpose.msra.mxu0 0
        %5026 = vmatprep.subr.bf16.mxu0 0
        %5027 = vmatpush1.bf16.xpose.msra.mxu0 0
        %5028 = vmatprep.subr.bf16.mxu0 0
        %5029 = vmatpush1.bf16.xpose.msra.mxu0 0
        %5030 = vmatprep.subr.bf16.mxu0 0
        %5031 = vmatpush1.bf16.xpose.msra.mxu0 0
        %5032 = vmatprep.mubr.bf16.mxu0 %v2765
        %5033 = vmatmul.mubr.bf16.gmra.mrb[0].mxu0 %v2764
        %v5034 = vpop.f32.mrb[0].mxu0
        %v5035 = vadd.f32 %v3059, %v5034
        %v5036 = vpop.f32.mrb[0].mxu0
        %v5037 = vpop.f32.mrb[0].mxu0
        %v5038 = vpop.f32.mrb[0].mxu0
        %5039 = vdwg.mxu0
        %5040 = vmatprep.subr.bf16.mxu0 %v2833
        %5041 = vmatpush1.bf16.xpose.msra.mxu0 %v2832
        %5042 = vmatprep.subr.bf16.mxu0 0
        %5043 = vmatpush1.bf16.xpose.msra.mxu0 0
        %5044 = vmatprep.subr.bf16.mxu0 0
        %5045 = vmatpush1.bf16.xpose.msra.mxu0 0
        %5046 = vmatprep.subr.bf16.mxu0 0
        %5047 = vmatpush1.bf16.xpose.msra.mxu0 0
        %5048 = vmatprep.subr.bf16.mxu0 0
        %5049 = vmatpush1.bf16.xpose.msra.mxu0 0
        %5050 = vmatprep.subr.bf16.mxu0 0
        %5051 = vmatpush1.bf16.xpose.msra.mxu0 0
        %5052 = vmatprep.subr.bf16.mxu0 0
        %5053 = vmatpush1.bf16.xpose.msra.mxu0 0
        %5054 = vmatprep.subr.bf16.mxu0 0
        %5055 = vmatpush1.bf16.xpose.msra.mxu0 0
        %5056 = vmatprep.subr.bf16.mxu0 0
        %5057 = vmatpush1.bf16.xpose.msra.mxu0 0
        %5058 = vmatprep.subr.bf16.mxu0 0
        %5059 = vmatpush1.bf16.xpose.msra.mxu0 0
        %5060 = vmatprep.subr.bf16.mxu0 0
        %5061 = vmatpush1.bf16.xpose.msra.mxu0 0
        %5062 = vmatprep.subr.bf16.mxu0 0
        %5063 = vmatpush1.bf16.xpose.msra.mxu0 0
        %5064 = vmatprep.subr.bf16.mxu0 0
        %5065 = vmatpush1.bf16.xpose.msra.mxu0 0
        %5066 = vmatprep.subr.bf16.mxu0 0
        %5067 = vmatpush1.bf16.xpose.msra.mxu0 0
        %5068 = vmatprep.subr.bf16.mxu0 0
        %5069 = vmatpush1.bf16.xpose.msra.mxu0 0
        %5070 = vmatprep.subr.bf16.mxu0 0
        %5071 = vmatpush1.bf16.xpose.msra.mxu0 0
        %5072 = vmatprep.mubr.bf16.mxu0 %v2769
        %5073 = vmatmul.mubr.bf16.gmra.mrb[0].mxu0 %v2768
        %v5074 = vpop.f32.mrb[0].mxu0
        %v5075 = vadd.f32 %v3063, %v5074
        %v5076 = vpop.f32.mrb[0].mxu0
        %v5077 = vpop.f32.mrb[0].mxu0
        %v5078 = vpop.f32.mrb[0].mxu0
        %5079 = vdwg.mxu0
        %5080 = vmatprep.subr.bf16.mxu0 %v2837
        %5081 = vmatpush1.bf16.xpose.msra.mxu0 %v2836
        %5082 = vmatprep.subr.bf16.mxu0 0
        %5083 = vmatpush1.bf16.xpose.msra.mxu0 0
        %5084 = vmatprep.subr.bf16.mxu0 0
        %5085 = vmatpush1.bf16.xpose.msra.mxu0 0
        %5086 = vmatprep.subr.bf16.mxu0 0
        %5087 = vmatpush1.bf16.xpose.msra.mxu0 0
        %5088 = vmatprep.subr.bf16.mxu0 0
        %5089 = vmatpush1.bf16.xpose.msra.mxu0 0
        %5090 = vmatprep.subr.bf16.mxu0 0
        %5091 = vmatpush1.bf16.xpose.msra.mxu0 0
        %5092 = vmatprep.subr.bf16.mxu0 0
        %5093 = vmatpush1.bf16.xpose.msra.mxu0 0
        %5094 = vmatprep.subr.bf16.mxu0 0
        %5095 = vmatpush1.bf16.xpose.msra.mxu0 0
        %5096 = vmatprep.subr.bf16.mxu0 0
        %5097 = vmatpush1.bf16.xpose.msra.mxu0 0
        %5098 = vmatprep.subr.bf16.mxu0 0
        %5099 = vmatpush1.bf16.xpose.msra.mxu0 0
        %5100 = vmatprep.subr.bf16.mxu0 0
        %5101 = vmatpush1.bf16.xpose.msra.mxu0 0
        %5102 = vmatprep.subr.bf16.mxu0 0
        %5103 = vmatpush1.bf16.xpose.msra.mxu0 0
        %5104 = vmatprep.subr.bf16.mxu0 0
        %5105 = vmatpush1.bf16.xpose.msra.mxu0 0
        %5106 = vmatprep.subr.bf16.mxu0 0
        %5107 = vmatpush1.bf16.xpose.msra.mxu0 0
        %5108 = vmatprep.subr.bf16.mxu0 0
        %5109 = vmatpush1.bf16.xpose.msra.mxu0 0
        %5110 = vmatprep.subr.bf16.mxu0 0
        %5111 = vmatpush1.bf16.xpose.msra.mxu0 0
        %5112 = vmatprep.mubr.bf16.mxu0 %v2773
        %5113 = vmatmul.mubr.bf16.gmra.mrb[0].mxu0 %v2772
        %v5114 = vpop.f32.mrb[0].mxu0
        %v5115 = vadd.f32 %v3067, %v5114
        %v5116 = vpop.f32.mrb[0].mxu0
        %v5117 = vpop.f32.mrb[0].mxu0
        %v5118 = vpop.f32.mrb[0].mxu0
        %5119 = vdwg.mxu0
        %5120 = vmatprep.subr.bf16.mxu0 %v2841
        %5121 = vmatpush1.bf16.xpose.msra.mxu0 %v2840
        %5122 = vmatprep.subr.bf16.mxu0 0
        %5123 = vmatpush1.bf16.xpose.msra.mxu0 0
        %5124 = vmatprep.subr.bf16.mxu0 0
        %5125 = vmatpush1.bf16.xpose.msra.mxu0 0
        %5126 = vmatprep.subr.bf16.mxu0 0
        %5127 = vmatpush1.bf16.xpose.msra.mxu0 0
        %5128 = vmatprep.subr.bf16.mxu0 0
        %5129 = vmatpush1.bf16.xpose.msra.mxu0 0
        %5130 = vmatprep.subr.bf16.mxu0 0
        %5131 = vmatpush1.bf16.xpose.msra.mxu0 0
        %5132 = vmatprep.subr.bf16.mxu0 0
        %5133 = vmatpush1.bf16.xpose.msra.mxu0 0
        %5134 = vmatprep.subr.bf16.mxu0 0
        %5135 = vmatpush1.bf16.xpose.msra.mxu0 0
        %5136 = vmatprep.subr.bf16.mxu0 0
        %5137 = vmatpush1.bf16.xpose.msra.mxu0 0
        %5138 = vmatprep.subr.bf16.mxu0 0
        %5139 = vmatpush1.bf16.xpose.msra.mxu0 0
        %5140 = vmatprep.subr.bf16.mxu0 0
        %5141 = vmatpush1.bf16.xpose.msra.mxu0 0
        %5142 = vmatprep.subr.bf16.mxu0 0
        %5143 = vmatpush1.bf16.xpose.msra.mxu0 0
        %5144 = vmatprep.subr.bf16.mxu0 0
        %5145 = vmatpush1.bf16.xpose.msra.mxu0 0
        %5146 = vmatprep.subr.bf16.mxu0 0
        %5147 = vmatpush1.bf16.xpose.msra.mxu0 0
        %5148 = vmatprep.subr.bf16.mxu0 0
        %5149 = vmatpush1.bf16.xpose.msra.mxu0 0
        %5150 = vmatprep.subr.bf16.mxu0 0
        %5151 = vmatpush1.bf16.xpose.msra.mxu0 0
        %5152 = vmatprep.mubr.bf16.mxu0 %v2777
        %5153 = vmatmul.mubr.bf16.gmra.mrb[0].mxu0 %v2776
        %v5154 = vpop.f32.mrb[0].mxu0
        %v5155 = vadd.f32 %v3071, %v5154
        %v5156 = vpop.f32.mrb[0].mxu0
        %v5157 = vpop.f32.mrb[0].mxu0
        %v5158 = vpop.f32.mrb[0].mxu0
        %5159 = vdwg.mxu0
        %5160 = vmatprep.subr.bf16.mxu0 %v2845
        %5161 = vmatpush1.bf16.xpose.msra.mxu0 %v2844
        %5162 = vmatprep.subr.bf16.mxu0 0
        %5163 = vmatpush1.bf16.xpose.msra.mxu0 0
        %5164 = vmatprep.subr.bf16.mxu0 0
        %5165 = vmatpush1.bf16.xpose.msra.mxu0 0
        %5166 = vmatprep.subr.bf16.mxu0 0
        %5167 = vmatpush1.bf16.xpose.msra.mxu0 0
        %5168 = vmatprep.subr.bf16.mxu0 0
        %5169 = vmatpush1.bf16.xpose.msra.mxu0 0
        %5170 = vmatprep.subr.bf16.mxu0 0
        %5171 = vmatpush1.bf16.xpose.msra.mxu0 0
        %5172 = vmatprep.subr.bf16.mxu0 0
        %5173 = vmatpush1.bf16.xpose.msra.mxu0 0
        %5174 = vmatprep.subr.bf16.mxu0 0
        %5175 = vmatpush1.bf16.xpose.msra.mxu0 0
        %5176 = vmatprep.subr.bf16.mxu0 0
        %5177 = vmatpush1.bf16.xpose.msra.mxu0 0
        %5178 = vmatprep.subr.bf16.mxu0 0
        %5179 = vmatpush1.bf16.xpose.msra.mxu0 0
        %5180 = vmatprep.subr.bf16.mxu0 0
        %5181 = vmatpush1.bf16.xpose.msra.mxu0 0
        %5182 = vmatprep.subr.bf16.mxu0 0
        %5183 = vmatpush1.bf16.xpose.msra.mxu0 0
        %5184 = vmatprep.subr.bf16.mxu0 0
        %5185 = vmatpush1.bf16.xpose.msra.mxu0 0
        %5186 = vmatprep.subr.bf16.mxu0 0
        %5187 = vmatpush1.bf16.xpose.msra.mxu0 0
        %5188 = vmatprep.subr.bf16.mxu0 0
        %5189 = vmatpush1.bf16.xpose.msra.mxu0 0
        %5190 = vmatprep.subr.bf16.mxu0 0
        %5191 = vmatpush1.bf16.xpose.msra.mxu0 0
        %5192 = vmatprep.mubr.bf16.mxu0 %v2781
        %5193 = vmatmul.mubr.bf16.gmra.mrb[0].mxu0 %v2780
        %v5194 = vpop.f32.mrb[0].mxu0
        %v5195 = vadd.f32 %v3075, %v5194
        %v5196 = vpop.f32.mrb[0].mxu0
        %v5197 = vpop.f32.mrb[0].mxu0
        %v5198 = vpop.f32.mrb[0].mxu0
        %5199 = vdwg.mxu0
        %5200 = vmatprep.subr.bf16.mxu0 %v2849
        %5201 = vmatpush1.bf16.xpose.msra.mxu0 %v2848
        %5202 = vmatprep.subr.bf16.mxu0 0
        %5203 = vmatpush1.bf16.xpose.msra.mxu0 0
        %5204 = vmatprep.subr.bf16.mxu0 0
        %5205 = vmatpush1.bf16.xpose.msra.mxu0 0
        %5206 = vmatprep.subr.bf16.mxu0 0
        %5207 = vmatpush1.bf16.xpose.msra.mxu0 0
        %5208 = vmatprep.subr.bf16.mxu0 0
        %5209 = vmatpush1.bf16.xpose.msra.mxu0 0
        %5210 = vmatprep.subr.bf16.mxu0 0
        %5211 = vmatpush1.bf16.xpose.msra.mxu0 0
        %5212 = vmatprep.subr.bf16.mxu0 0
        %5213 = vmatpush1.bf16.xpose.msra.mxu0 0
        %5214 = vmatprep.subr.bf16.mxu0 0
        %5215 = vmatpush1.bf16.xpose.msra.mxu0 0
        %5216 = vmatprep.subr.bf16.mxu0 0
        %5217 = vmatpush1.bf16.xpose.msra.mxu0 0
        %5218 = vmatprep.subr.bf16.mxu0 0
        %5219 = vmatpush1.bf16.xpose.msra.mxu0 0
        %5220 = vmatprep.subr.bf16.mxu0 0
        %5221 = vmatpush1.bf16.xpose.msra.mxu0 0
        %5222 = vmatprep.subr.bf16.mxu0 0
        %5223 = vmatpush1.bf16.xpose.msra.mxu0 0
        %5224 = vmatprep.subr.bf16.mxu0 0
        %5225 = vmatpush1.bf16.xpose.msra.mxu0 0
        %5226 = vmatprep.subr.bf16.mxu0 0
        %5227 = vmatpush1.bf16.xpose.msra.mxu0 0
        %5228 = vmatprep.subr.bf16.mxu0 0
        %5229 = vmatpush1.bf16.xpose.msra.mxu0 0
        %5230 = vmatprep.subr.bf16.mxu0 0
        %5231 = vmatpush1.bf16.xpose.msra.mxu0 0
        %5232 = vmatprep.mubr.bf16.mxu0 %v2785
        %5233 = vmatmul.mubr.bf16.gmra.mrb[0].mxu0 %v2784
        %v5234 = vpop.f32.mrb[0].mxu0
        %v5235 = vadd.f32 %v3079, %v5234
        %v5236 = vpop.f32.mrb[0].mxu0
        %v5237 = vpop.f32.mrb[0].mxu0
        %v5238 = vpop.f32.mrb[0].mxu0
        %5239 = vdwg.mxu0
        %5240 = vmatprep.subr.bf16.mxu0 %v2853
        %5241 = vmatpush1.bf16.xpose.msra.mxu0 %v2852
        %5242 = vmatprep.subr.bf16.mxu0 0
        %5243 = vmatpush1.bf16.xpose.msra.mxu0 0
        %5244 = vmatprep.subr.bf16.mxu0 0
        %5245 = vmatpush1.bf16.xpose.msra.mxu0 0
        %5246 = vmatprep.subr.bf16.mxu0 0
        %5247 = vmatpush1.bf16.xpose.msra.mxu0 0
        %5248 = vmatprep.subr.bf16.mxu0 0
        %5249 = vmatpush1.bf16.xpose.msra.mxu0 0
        %5250 = vmatprep.subr.bf16.mxu0 0
        %5251 = vmatpush1.bf16.xpose.msra.mxu0 0
        %5252 = vmatprep.subr.bf16.mxu0 0
        %5253 = vmatpush1.bf16.xpose.msra.mxu0 0
        %5254 = vmatprep.subr.bf16.mxu0 0
        %5255 = vmatpush1.bf16.xpose.msra.mxu0 0
        %5256 = vmatprep.subr.bf16.mxu0 0
        %5257 = vmatpush1.bf16.xpose.msra.mxu0 0
        %5258 = vmatprep.subr.bf16.mxu0 0
        %5259 = vmatpush1.bf16.xpose.msra.mxu0 0
        %5260 = vmatprep.subr.bf16.mxu0 0
        %5261 = vmatpush1.bf16.xpose.msra.mxu0 0
        %5262 = vmatprep.subr.bf16.mxu0 0
        %5263 = vmatpush1.bf16.xpose.msra.mxu0 0
        %5264 = vmatprep.subr.bf16.mxu0 0
        %5265 = vmatpush1.bf16.xpose.msra.mxu0 0
        %5266 = vmatprep.subr.bf16.mxu0 0
        %5267 = vmatpush1.bf16.xpose.msra.mxu0 0
        %5268 = vmatprep.subr.bf16.mxu0 0
        %5269 = vmatpush1.bf16.xpose.msra.mxu0 0
        %5270 = vmatprep.subr.bf16.mxu0 0
        %5271 = vmatpush1.bf16.xpose.msra.mxu0 0
        %5272 = vmatprep.mubr.bf16.mxu0 %v2789
        %5273 = vmatmul.mubr.bf16.gmra.mrb[0].mxu0 %v2788
        %v5274 = vpop.f32.mrb[0].mxu0
        %v5275 = vadd.f32 %v3083, %v5274
        %v5276 = vpop.f32.mrb[0].mxu0
        %v5277 = vpop.f32.mrb[0].mxu0
        %v5278 = vpop.f32.mrb[0].mxu0
        %5279 = vdwg.mxu0
        %5280 = vmatprep.subr.bf16.mxu0 %v2857
        %5281 = vmatpush1.bf16.xpose.msra.mxu0 %v2856
        %5282 = vmatprep.subr.bf16.mxu0 0
        %5283 = vmatpush1.bf16.xpose.msra.mxu0 0
        %5284 = vmatprep.subr.bf16.mxu0 0
        %5285 = vmatpush1.bf16.xpose.msra.mxu0 0
        %5286 = vmatprep.subr.bf16.mxu0 0
        %5287 = vmatpush1.bf16.xpose.msra.mxu0 0
        %5288 = vmatprep.subr.bf16.mxu0 0
        %5289 = vmatpush1.bf16.xpose.msra.mxu0 0
        %5290 = vmatprep.subr.bf16.mxu0 0
        %5291 = vmatpush1.bf16.xpose.msra.mxu0 0
        %5292 = vmatprep.subr.bf16.mxu0 0
        %5293 = vmatpush1.bf16.xpose.msra.mxu0 0
        %5294 = vmatprep.subr.bf16.mxu0 0
        %5295 = vmatpush1.bf16.xpose.msra.mxu0 0
        %5296 = vmatprep.subr.bf16.mxu0 0
        %5297 = vmatpush1.bf16.xpose.msra.mxu0 0
        %5298 = vmatprep.subr.bf16.mxu0 0
        %5299 = vmatpush1.bf16.xpose.msra.mxu0 0
        %5300 = vmatprep.subr.bf16.mxu0 0
        %5301 = vmatpush1.bf16.xpose.msra.mxu0 0
        %5302 = vmatprep.subr.bf16.mxu0 0
        %5303 = vmatpush1.bf16.xpose.msra.mxu0 0
        %5304 = vmatprep.subr.bf16.mxu0 0
        %5305 = vmatpush1.bf16.xpose.msra.mxu0 0
        %5306 = vmatprep.subr.bf16.mxu0 0
        %5307 = vmatpush1.bf16.xpose.msra.mxu0 0
        %5308 = vmatprep.subr.bf16.mxu0 0
        %5309 = vmatpush1.bf16.xpose.msra.mxu0 0
        %5310 = vmatprep.subr.bf16.mxu0 0
        %5311 = vmatpush1.bf16.xpose.msra.mxu0 0
        %5312 = vmatprep.mubr.bf16.mxu0 %v2793
        %5313 = vmatmul.mubr.bf16.gmra.mrb[0].mxu0 %v2792
        %v5314 = vpop.f32.mrb[0].mxu0
        %v5315 = vadd.f32 %v3087, %v5314
        %v5316 = vpop.f32.mrb[0].mxu0
        %v5317 = vpop.f32.mrb[0].mxu0
        %v5318 = vpop.f32.mrb[0].mxu0
        %5319 = vdwg.mxu0
        %5320 = vmatprep.subr.bf16.mxu0 %v2861
        %5321 = vmatpush1.bf16.xpose.msra.mxu0 %v2860
        %5322 = vmatprep.subr.bf16.mxu0 0
        %5323 = vmatpush1.bf16.xpose.msra.mxu0 0
        %5324 = vmatprep.subr.bf16.mxu0 0
        %5325 = vmatpush1.bf16.xpose.msra.mxu0 0
        %5326 = vmatprep.subr.bf16.mxu0 0
        %5327 = vmatpush1.bf16.xpose.msra.mxu0 0
        %5328 = vmatprep.subr.bf16.mxu0 0
        %5329 = vmatpush1.bf16.xpose.msra.mxu0 0
        %5330 = vmatprep.subr.bf16.mxu0 0
        %5331 = vmatpush1.bf16.xpose.msra.mxu0 0
        %5332 = vmatprep.subr.bf16.mxu0 0
        %5333 = vmatpush1.bf16.xpose.msra.mxu0 0
        %5334 = vmatprep.subr.bf16.mxu0 0
        %5335 = vmatpush1.bf16.xpose.msra.mxu0 0
        %5336 = vmatprep.subr.bf16.mxu0 0
        %5337 = vmatpush1.bf16.xpose.msra.mxu0 0
        %5338 = vmatprep.subr.bf16.mxu0 0
        %5339 = vmatpush1.bf16.xpose.msra.mxu0 0
        %5340 = vmatprep.subr.bf16.mxu0 0
        %5341 = vmatpush1.bf16.xpose.msra.mxu0 0
        %5342 = vmatprep.subr.bf16.mxu0 0
        %5343 = vmatpush1.bf16.xpose.msra.mxu0 0
        %5344 = vmatprep.subr.bf16.mxu0 0
        %5345 = vmatpush1.bf16.xpose.msra.mxu0 0
        %5346 = vmatprep.subr.bf16.mxu0 0
        %5347 = vmatpush1.bf16.xpose.msra.mxu0 0
        %5348 = vmatprep.subr.bf16.mxu0 0
        %5349 = vmatpush1.bf16.xpose.msra.mxu0 0
        %5350 = vmatprep.subr.bf16.mxu0 0
        %5351 = vmatpush1.bf16.xpose.msra.mxu0 0
        %5352 = vmatprep.mubr.bf16.mxu0 %v2797
        %5353 = vmatmul.mubr.bf16.gmra.mrb[0].mxu0 %v2796
        %v5354 = vpop.f32.mrb[0].mxu0
        %v5355 = vadd.f32 %v3091, %v5354
        %v5356 = vpop.f32.mrb[0].mxu0
        %v5357 = vpop.f32.mrb[0].mxu0
        %v5358 = vpop.f32.mrb[0].mxu0
        %5359 = vdwg.mxu0
        %5360 = vmatprep.subr.bf16.mxu0 %v2865
        %5361 = vmatpush1.bf16.xpose.msra.mxu0 %v2864
        %5362 = vmatprep.subr.bf16.mxu0 0
        %5363 = vmatpush1.bf16.xpose.msra.mxu0 0
        %5364 = vmatprep.subr.bf16.mxu0 0
        %5365 = vmatpush1.bf16.xpose.msra.mxu0 0
        %5366 = vmatprep.subr.bf16.mxu0 0
        %5367 = vmatpush1.bf16.xpose.msra.mxu0 0
        %5368 = vmatprep.subr.bf16.mxu0 0
        %5369 = vmatpush1.bf16.xpose.msra.mxu0 0
        %5370 = vmatprep.subr.bf16.mxu0 0
        %5371 = vmatpush1.bf16.xpose.msra.mxu0 0
        %5372 = vmatprep.subr.bf16.mxu0 0
        %5373 = vmatpush1.bf16.xpose.msra.mxu0 0
        %5374 = vmatprep.subr.bf16.mxu0 0
        %5375 = vmatpush1.bf16.xpose.msra.mxu0 0
        %5376 = vmatprep.subr.bf16.mxu0 0
        %5377 = vmatpush1.bf16.xpose.msra.mxu0 0
        %5378 = vmatprep.subr.bf16.mxu0 0
        %5379 = vmatpush1.bf16.xpose.msra.mxu0 0
        %5380 = vmatprep.subr.bf16.mxu0 0
        %5381 = vmatpush1.bf16.xpose.msra.mxu0 0
        %5382 = vmatprep.subr.bf16.mxu0 0
        %5383 = vmatpush1.bf16.xpose.msra.mxu0 0
        %5384 = vmatprep.subr.bf16.mxu0 0
        %5385 = vmatpush1.bf16.xpose.msra.mxu0 0
        %5386 = vmatprep.subr.bf16.mxu0 0
        %5387 = vmatpush1.bf16.xpose.msra.mxu0 0
        %5388 = vmatprep.subr.bf16.mxu0 0
        %5389 = vmatpush1.bf16.xpose.msra.mxu0 0
        %5390 = vmatprep.subr.bf16.mxu0 0
        %5391 = vmatpush1.bf16.xpose.msra.mxu0 0
        %5392 = vmatprep.mubr.bf16.mxu0 %v2801
        %5393 = vmatmul.mubr.bf16.gmra.mrb[0].mxu0 %v2800
        %v5394 = vpop.f32.mrb[0].mxu0
        %v5395 = vadd.f32 %v3095, %v5394
        %v5396 = vpop.f32.mrb[0].mxu0
        %v5397 = vpop.f32.mrb[0].mxu0
        %v5398 = vpop.f32.mrb[0].mxu0
        %5399 = vdwg.mxu0
        %5400 = vmatprep.subr.bf16.mxu0 %v2869
        %5401 = vmatpush1.bf16.xpose.msra.mxu0 %v2868
        %5402 = vmatprep.subr.bf16.mxu0 0
        %5403 = vmatpush1.bf16.xpose.msra.mxu0 0
        %5404 = vmatprep.subr.bf16.mxu0 0
        %5405 = vmatpush1.bf16.xpose.msra.mxu0 0
        %5406 = vmatprep.subr.bf16.mxu0 0
        %5407 = vmatpush1.bf16.xpose.msra.mxu0 0
        %5408 = vmatprep.subr.bf16.mxu0 0
        %5409 = vmatpush1.bf16.xpose.msra.mxu0 0
        %5410 = vmatprep.subr.bf16.mxu0 0
        %5411 = vmatpush1.bf16.xpose.msra.mxu0 0
        %5412 = vmatprep.subr.bf16.mxu0 0
        %5413 = vmatpush1.bf16.xpose.msra.mxu0 0
        %5414 = vmatprep.subr.bf16.mxu0 0
        %5415 = vmatpush1.bf16.xpose.msra.mxu0 0
        %5416 = vmatprep.subr.bf16.mxu0 0
        %5417 = vmatpush1.bf16.xpose.msra.mxu0 0
        %5418 = vmatprep.subr.bf16.mxu0 0
        %5419 = vmatpush1.bf16.xpose.msra.mxu0 0
        %5420 = vmatprep.subr.bf16.mxu0 0
        %5421 = vmatpush1.bf16.xpose.msra.mxu0 0
        %5422 = vmatprep.subr.bf16.mxu0 0
        %5423 = vmatpush1.bf16.xpose.msra.mxu0 0
        %5424 = vmatprep.subr.bf16.mxu0 0
        %5425 = vmatpush1.bf16.xpose.msra.mxu0 0
        %5426 = vmatprep.subr.bf16.mxu0 0
        %5427 = vmatpush1.bf16.xpose.msra.mxu0 0
        %5428 = vmatprep.subr.bf16.mxu0 0
        %5429 = vmatpush1.bf16.xpose.msra.mxu0 0
        %5430 = vmatprep.subr.bf16.mxu0 0
        %5431 = vmatpush1.bf16.xpose.msra.mxu0 0
        %5432 = vmatprep.mubr.bf16.mxu0 %v2805
        %5433 = vmatmul.mubr.bf16.gmra.mrb[0].mxu0 %v2804
        %v5434 = vpop.f32.mrb[0].mxu0
        %v5435 = vadd.f32 %v3099, %v5434
        %v5436 = vpop.f32.mrb[0].mxu0
        %v5437 = vpop.f32.mrb[0].mxu0
        %v5438 = vpop.f32.mrb[0].mxu0
        %5439 = vdwg.mxu0
        %v5440 = vsel %vm3756, %v4835, -inf
        %5441 = vmax.xlane.f32.xlu0 %v5440
        %v5442 = vpop.xlane.xlu0 %5441
        %v5443 = vsel %vm3756, %v4875, -inf
        %5444 = vmax.xlane.f32.xlu0 %v5443
        %v5445 = vpop.xlane.xlu0 %5444
        %v5446 = vsel %vm3756, %v4915, -inf
        %5447 = vmax.xlane.f32.xlu0 %v5446
        %v5448 = vpop.xlane.xlu0 %5447
        %v5449 = vsel %vm3756, %v4955, -inf
        %5450 = vmax.xlane.f32.xlu0 %v5449
        %v5451 = vpop.xlane.xlu0 %5450
        %v5452 = vsel %vm3756, %v4995, -inf
        %5453 = vmax.xlane.f32.xlu0 %v5452
        %v5454 = vpop.xlane.xlu0 %5453
        %v5455 = vsel %vm3756, %v5035, -inf
        %5456 = vmax.xlane.f32.xlu0 %v5455
        %v5457 = vpop.xlane.xlu0 %5456
        %v5458 = vsel %vm3756, %v5075, -inf
        %5459 = vmax.xlane.f32.xlu0 %v5458
        %v5460 = vpop.xlane.xlu0 %5459
        %v5461 = vsel %vm3756, %v5115, -inf
        %5462 = vmax.xlane.f32.xlu0 %v5461
        %v5463 = vpop.xlane.xlu0 %5462
        %v5464 = vsel %vm3756, %v5155, -inf
        %5465 = vmax.xlane.f32.xlu0 %v5464
        %v5466 = vpop.xlane.xlu0 %5465
        %v5467 = vsel %vm3756, %v5195, -inf
        %5468 = vmax.xlane.f32.xlu0 %v5467
        %v5469 = vpop.xlane.xlu0 %5468
        %v5470 = vsel %vm3756, %v5235, -inf
        %5471 = vmax.xlane.f32.xlu0 %v5470
        %v5472 = vpop.xlane.xlu0 %5471
        %v5473 = vsel %vm3756, %v5275, -inf
        %5474 = vmax.xlane.f32.xlu0 %v5473
        %v5475 = vpop.xlane.xlu0 %5474
        %v5476 = vsel %vm3756, %v5315, -inf
        %5477 = vmax.xlane.f32.xlu0 %v5476
        %v5478 = vpop.xlane.xlu0 %5477
        %v5479 = vsel %vm3756, %v5355, -inf
        %5480 = vmax.xlane.f32.xlu0 %v5479
        %v5481 = vpop.xlane.xlu0 %5480
        %v5482 = vsel %vm3756, %v5395, -inf
        %5483 = vmax.xlane.f32.xlu0 %v5482
        %v5484 = vpop.xlane.xlu0 %5483
        %v5485 = vsel %vm3756, %v5435, -inf
        %5486 = vmax.xlane.f32.xlu0 %v5485
        %v5487 = vpop.xlane.xlu0 %5486
        %v5488 = vsub.f32 %v4835, %v5442
        %v5489 = vsub.f32 %v4875, %v5445
        %v5490 = vsub.f32 %v4915, %v5448
        %v5491 = vsub.f32 %v4955, %v5451
        %v5492 = vsub.f32 %v4995, %v5454
        %v5493 = vsub.f32 %v5035, %v5457
        %v5494 = vsub.f32 %v5075, %v5460
        %v5495 = vsub.f32 %v5115, %v5463
        %v5496 = vsub.f32 %v5155, %v5466
        %v5497 = vsub.f32 %v5195, %v5469
        %v5498 = vsub.f32 %v5235, %v5472
        %v5499 = vsub.f32 %v5275, %v5475
        %v5500 = vsub.f32 %v5315, %v5478
        %v5501 = vsub.f32 %v5355, %v5481
        %v5502 = vsub.f32 %v5395, %v5484
        %v5503 = vsub.f32 %v5435, %v5487
        %v5504 = vmul.f32 %v5488, 1.442695
        %v5505 = vpow.pop %v5504
        %v5506 = vmul.f32 %v5489, 1.442695
        %v5507 = vpow.pop %v5506
        %v5508 = vmul.f32 %v5490, 1.442695
        %v5509 = vpow.pop %v5508
        %v5510 = vmul.f32 %v5491, 1.442695
        %v5511 = vpow.pop %v5510
        %v5512 = vmul.f32 %v5492, 1.442695
        %v5513 = vpow.pop %v5512
        %v5514 = vmul.f32 %v5493, 1.442695
        %v5515 = vpow.pop %v5514
        %v5516 = vmul.f32 %v5494, 1.442695
        %v5517 = vpow.pop %v5516
        %v5518 = vmul.f32 %v5495, 1.442695
        %v5519 = vpow.pop %v5518
        %v5520 = vmul.f32 %v5496, 1.442695
        %v5521 = vpow.pop %v5520
        %v5522 = vmul.f32 %v5497, 1.442695
        %v5523 = vpow.pop %v5522
        %v5524 = vmul.f32 %v5498, 1.442695
        %v5525 = vpow.pop %v5524
        %v5526 = vmul.f32 %v5499, 1.442695
        %v5527 = vpow.pop %v5526
        %v5528 = vmul.f32 %v5500, 1.442695
        %v5529 = vpow.pop %v5528
        %v5530 = vmul.f32 %v5501, 1.442695
        %v5531 = vpow.pop %v5530
        %v5532 = vmul.f32 %v5502, 1.442695
        %v5533 = vpow.pop %v5532
        %v5534 = vmul.f32 %v5503, 1.442695
        %v5535 = vpow.pop %v5534
        %v5536 = vsel %vm3756, %v5505, 0.0
        %5537 = vadd.xlane.f32.xlu0 %v5536
        %v5538 = vpop.xlane.xlu0 %5537
        %v5539 = vsel %vm3756, %v5507, 0.0
        %5540 = vadd.xlane.f32.xlu0 %v5539
        %v5541 = vpop.xlane.xlu0 %5540
        %v5542 = vsel %vm3756, %v5509, 0.0
        %5543 = vadd.xlane.f32.xlu0 %v5542
        %v5544 = vpop.xlane.xlu0 %5543
        %v5545 = vsel %vm3756, %v5511, 0.0
        %5546 = vadd.xlane.f32.xlu0 %v5545
        %v5547 = vpop.xlane.xlu0 %5546
        %v5548 = vsel %vm3756, %v5513, 0.0
        %5549 = vadd.xlane.f32.xlu0 %v5548
        %v5550 = vpop.xlane.xlu0 %5549
        %v5551 = vsel %vm3756, %v5515, 0.0
        %5552 = vadd.xlane.f32.xlu0 %v5551
        %v5553 = vpop.xlane.xlu0 %5552
        %v5554 = vsel %vm3756, %v5517, 0.0
        %5555 = vadd.xlane.f32.xlu0 %v5554
        %v5556 = vpop.xlane.xlu0 %5555
        %v5557 = vsel %vm3756, %v5519, 0.0
        %5558 = vadd.xlane.f32.xlu0 %v5557
        %v5559 = vpop.xlane.xlu0 %5558
        %v5560 = vsel %vm3756, %v5521, 0.0
        %5561 = vadd.xlane.f32.xlu0 %v5560
        %v5562 = vpop.xlane.xlu0 %5561
        %v5563 = vsel %vm3756, %v5523, 0.0
        %5564 = vadd.xlane.f32.xlu0 %v5563
        %v5565 = vpop.xlane.xlu0 %5564
        %v5566 = vsel %vm3756, %v5525, 0.0
        %5567 = vadd.xlane.f32.xlu0 %v5566
        %v5568 = vpop.xlane.xlu0 %5567
        %v5569 = vsel %vm3756, %v5527, 0.0
        %5570 = vadd.xlane.f32.xlu0 %v5569
        %v5571 = vpop.xlane.xlu0 %5570
        %v5572 = vsel %vm3756, %v5529, 0.0
        %5573 = vadd.xlane.f32.xlu0 %v5572
        %v5574 = vpop.xlane.xlu0 %5573
        %v5575 = vsel %vm3756, %v5531, 0.0
        %5576 = vadd.xlane.f32.xlu0 %v5575
        %v5577 = vpop.xlane.xlu0 %5576
        %v5578 = vsel %vm3756, %v5533, 0.0
        %5579 = vadd.xlane.f32.xlu0 %v5578
        %v5580 = vpop.xlane.xlu0 %5579
        %v5581 = vsel %vm3756, %v5535, 0.0
        %5582 = vadd.xlane.f32.xlu0 %v5581
        %v5583 = vpop.xlane.xlu0 %5582
        %v5584 = vrcp.pop %v5538
        %v5585 = vrcp.pop %v5541
        %v5586 = vrcp.pop %v5544
        %v5587 = vrcp.pop %v5547
        %v5588 = vrcp.pop %v5550
        %v5589 = vrcp.pop %v5553
        %v5590 = vrcp.pop %v5556
        %v5591 = vrcp.pop %v5559
        %v5592 = vrcp.pop %v5562
        %v5593 = vrcp.pop %v5565
        %v5594 = vrcp.pop %v5568
        %v5595 = vrcp.pop %v5571
        %v5596 = vrcp.pop %v5574
        %v5597 = vrcp.pop %v5577
        %v5598 = vrcp.pop %v5580
        %v5599 = vrcp.pop %v5583
        %v5600 = vmul.f32 %v5505, %v5584
        %v5601 = vmul.f32 %v5507, %v5585
        %v5602 = vmul.f32 %v5509, %v5586
        %v5603 = vmul.f32 %v5511, %v5587
        %v5604 = vmul.f32 %v5513, %v5588
        %v5605 = vmul.f32 %v5515, %v5589
        %v5606 = vmul.f32 %v5517, %v5590
        %v5607 = vmul.f32 %v5519, %v5591
        %v5608 = vmul.f32 %v5521, %v5592
        %v5609 = vmul.f32 %v5523, %v5593
        %v5610 = vmul.f32 %v5525, %v5594
        %v5611 = vmul.f32 %v5527, %v5595
        %v5612 = vmul.f32 %v5529, %v5596
        %v5613 = vmul.f32 %v5531, %v5597
        %v5614 = vmul.f32 %v5533, %v5598
        %v5615 = vmul.f32 %v5535, %v5599
        %v5616 = vpack.c.bf16 %v5600, %v5600
        %v5617 = vpack.c.bf16 %v5601, %v5601
        %v5618 = vpack.c.bf16 %v5602, %v5602
        %v5619 = vpack.c.bf16 %v5603, %v5603
        %v5620 = vpack.c.bf16 %v5604, %v5604
        %v5621 = vpack.c.bf16 %v5605, %v5605
        %v5622 = vpack.c.bf16 %v5606, %v5606
        %v5623 = vpack.c.bf16 %v5607, %v5607
        %v5624 = vpack.c.bf16 %v5608, %v5608
        %v5625 = vpack.c.bf16 %v5609, %v5609
        %v5626 = vpack.c.bf16 %v5610, %v5610
        %v5627 = vpack.c.bf16 %v5611, %v5611
        %v5628 = vpack.c.bf16 %v5612, %v5612
        %v5629 = vpack.c.bf16 %v5613, %v5613
        %v5630 = vpack.c.bf16 %v5614, %v5614
        %v5631 = vpack.c.bf16 %v5615, %v5615
        %v5633 = vsel %vm3756, %v5616, 0
        %v5636 = vsel %vm3952, %v2872, 0
        %v5639 = vsel %vm3952, %v2873, 0
        %5641 = vmatprep.subr.bf16.mxu0 %v5639
        %5642 = vmatpush1.bf16.msra.mxu0 %v5636
        %5643 = vmatprep.subr.bf16.mxu0 0
        %5644 = vmatpush1.bf16.msra.mxu0 0
        %5645 = vmatprep.subr.bf16.mxu0 0
        %5646 = vmatpush1.bf16.msra.mxu0 0
        %5647 = vmatprep.subr.bf16.mxu0 0
        %5648 = vmatpush1.bf16.msra.mxu0 0
        %5649 = vmatprep.subr.bf16.mxu0 0
        %5650 = vmatpush1.bf16.msra.mxu0 0
        %5651 = vmatprep.subr.bf16.mxu0 0
        %5652 = vmatpush1.bf16.msra.mxu0 0
        %5653 = vmatprep.subr.bf16.mxu0 0
        %5654 = vmatpush1.bf16.msra.mxu0 0
        %5655 = vmatprep.subr.bf16.mxu0 0
        %5656 = vmatpush1.bf16.msra.mxu0 0
        %5657 = vmatprep.subr.bf16.mxu0 0
        %5658 = vmatpush1.bf16.msra.mxu0 0
        %5659 = vmatprep.subr.bf16.mxu0 0
        %5660 = vmatpush1.bf16.msra.mxu0 0
        %5661 = vmatprep.subr.bf16.mxu0 0
        %5662 = vmatpush1.bf16.msra.mxu0 0
        %5663 = vmatprep.subr.bf16.mxu0 0
        %5664 = vmatpush1.bf16.msra.mxu0 0
        %5665 = vmatprep.subr.bf16.mxu0 0
        %5666 = vmatpush1.bf16.msra.mxu0 0
        %5667 = vmatprep.subr.bf16.mxu0 0
        %5668 = vmatpush1.bf16.msra.mxu0 0
        %5669 = vmatprep.subr.bf16.mxu0 0
        %5670 = vmatpush1.bf16.msra.mxu0 0
        %5671 = vmatprep.subr.bf16.mxu0 0
        %5672 = vmatpush1.bf16.msra.mxu0 0
        %5673 = vmatprep.mubr.bf16.mxu0 0
        %5674 = vmatmul.mubr.bf16.gmra.mrb[0].mxu0 %v5633
        %v5675 = vpop.f32.mrb[0].mxu0
        %v5676 = vadd.f32 0.0, %v5675
        %v5677 = vpop.f32.mrb[0].mxu0
        %v5678 = vadd.f32 0.0, %v5677
        %v5679 = vpop.f32.mrb[0].mxu0
        %v5680 = vpop.f32.mrb[0].mxu0
        %5681 = vdwg.mxu0
        %v5683 = vsel %vm3756, %v5617, 0
        %v5686 = vsel %vm3952, %v2876, 0
        %v5689 = vsel %vm3952, %v2877, 0
        %5691 = vmatprep.subr.bf16.mxu0 %v5689
        %5692 = vmatpush1.bf16.msra.mxu0 %v5686
        %5693 = vmatprep.subr.bf16.mxu0 0
        %5694 = vmatpush1.bf16.msra.mxu0 0
        %5695 = vmatprep.subr.bf16.mxu0 0
        %5696 = vmatpush1.bf16.msra.mxu0 0
        %5697 = vmatprep.subr.bf16.mxu0 0
        %5698 = vmatpush1.bf16.msra.mxu0 0
        %5699 = vmatprep.subr.bf16.mxu0 0
        %5700 = vmatpush1.bf16.msra.mxu0 0
        %5701 = vmatprep.subr.bf16.mxu0 0
        %5702 = vmatpush1.bf16.msra.mxu0 0
        %5703 = vmatprep.subr.bf16.mxu0 0
        %5704 = vmatpush1.bf16.msra.mxu0 0
        %5705 = vmatprep.subr.bf16.mxu0 0
        %5706 = vmatpush1.bf16.msra.mxu0 0
        %5707 = vmatprep.subr.bf16.mxu0 0
        %5708 = vmatpush1.bf16.msra.mxu0 0
        %5709 = vmatprep.subr.bf16.mxu0 0
        %5710 = vmatpush1.bf16.msra.mxu0 0
        %5711 = vmatprep.subr.bf16.mxu0 0
        %5712 = vmatpush1.bf16.msra.mxu0 0
        %5713 = vmatprep.subr.bf16.mxu0 0
        %5714 = vmatpush1.bf16.msra.mxu0 0
        %5715 = vmatprep.subr.bf16.mxu0 0
        %5716 = vmatpush1.bf16.msra.mxu0 0
        %5717 = vmatprep.subr.bf16.mxu0 0
        %5718 = vmatpush1.bf16.msra.mxu0 0
        %5719 = vmatprep.subr.bf16.mxu0 0
        %5720 = vmatpush1.bf16.msra.mxu0 0
        %5721 = vmatprep.subr.bf16.mxu0 0
        %5722 = vmatpush1.bf16.msra.mxu0 0
        %5723 = vmatprep.mubr.bf16.mxu0 0
        %5724 = vmatmul.mubr.bf16.gmra.mrb[0].mxu0 %v5683
        %v5725 = vpop.f32.mrb[0].mxu0
        %v5726 = vadd.f32 0.0, %v5725
        %v5727 = vpop.f32.mrb[0].mxu0
        %v5728 = vadd.f32 0.0, %v5727
        %v5729 = vpop.f32.mrb[0].mxu0
        %v5730 = vpop.f32.mrb[0].mxu0
        %5731 = vdwg.mxu0
        %v5733 = vsel %vm3756, %v5618, 0
        %v5736 = vsel %vm3952, %v2880, 0
        %v5739 = vsel %vm3952, %v2881, 0
        %5741 = vmatprep.subr.bf16.mxu0 %v5739
        %5742 = vmatpush1.bf16.msra.mxu0 %v5736
        %5743 = vmatprep.subr.bf16.mxu0 0
        %5744 = vmatpush1.bf16.msra.mxu0 0
        %5745 = vmatprep.subr.bf16.mxu0 0
        %5746 = vmatpush1.bf16.msra.mxu0 0
        %5747 = vmatprep.subr.bf16.mxu0 0
        %5748 = vmatpush1.bf16.msra.mxu0 0
        %5749 = vmatprep.subr.bf16.mxu0 0
        %5750 = vmatpush1.bf16.msra.mxu0 0
        %5751 = vmatprep.subr.bf16.mxu0 0
        %5752 = vmatpush1.bf16.msra.mxu0 0
        %5753 = vmatprep.subr.bf16.mxu0 0
        %5754 = vmatpush1.bf16.msra.mxu0 0
        %5755 = vmatprep.subr.bf16.mxu0 0
        %5756 = vmatpush1.bf16.msra.mxu0 0
        %5757 = vmatprep.subr.bf16.mxu0 0
        %5758 = vmatpush1.bf16.msra.mxu0 0
        %5759 = vmatprep.subr.bf16.mxu0 0
        %5760 = vmatpush1.bf16.msra.mxu0 0
        %5761 = vmatprep.subr.bf16.mxu0 0
        %5762 = vmatpush1.bf16.msra.mxu0 0
        %5763 = vmatprep.subr.bf16.mxu0 0
        %5764 = vmatpush1.bf16.msra.mxu0 0
        %5765 = vmatprep.subr.bf16.mxu0 0
        %5766 = vmatpush1.bf16.msra.mxu0 0
        %5767 = vmatprep.subr.bf16.mxu0 0
        %5768 = vmatpush1.bf16.msra.mxu0 0
        %5769 = vmatprep.subr.bf16.mxu0 0
        %5770 = vmatpush1.bf16.msra.mxu0 0
        %5771 = vmatprep.subr.bf16.mxu0 0
        %5772 = vmatpush1.bf16.msra.mxu0 0
        %5773 = vmatprep.mubr.bf16.mxu0 0
        %5774 = vmatmul.mubr.bf16.gmra.mrb[0].mxu0 %v5733
        %v5775 = vpop.f32.mrb[0].mxu0
        %v5776 = vadd.f32 0.0, %v5775
        %v5777 = vpop.f32.mrb[0].mxu0
        %v5778 = vadd.f32 0.0, %v5777
        %v5779 = vpop.f32.mrb[0].mxu0
        %v5780 = vpop.f32.mrb[0].mxu0
        %5781 = vdwg.mxu0
        %v5783 = vsel %vm3756, %v5619, 0
        %v5786 = vsel %vm3952, %v2884, 0
        %v5789 = vsel %vm3952, %v2885, 0
        %5791 = vmatprep.subr.bf16.mxu0 %v5789
        %5792 = vmatpush1.bf16.msra.mxu0 %v5786
        %5793 = vmatprep.subr.bf16.mxu0 0
        %5794 = vmatpush1.bf16.msra.mxu0 0
        %5795 = vmatprep.subr.bf16.mxu0 0
        %5796 = vmatpush1.bf16.msra.mxu0 0
        %5797 = vmatprep.subr.bf16.mxu0 0
        %5798 = vmatpush1.bf16.msra.mxu0 0
        %5799 = vmatprep.subr.bf16.mxu0 0
        %5800 = vmatpush1.bf16.msra.mxu0 0
        %5801 = vmatprep.subr.bf16.mxu0 0
        %5802 = vmatpush1.bf16.msra.mxu0 0
        %5803 = vmatprep.subr.bf16.mxu0 0
        %5804 = vmatpush1.bf16.msra.mxu0 0
        %5805 = vmatprep.subr.bf16.mxu0 0
        %5806 = vmatpush1.bf16.msra.mxu0 0
        %5807 = vmatprep.subr.bf16.mxu0 0
        %5808 = vmatpush1.bf16.msra.mxu0 0
        %5809 = vmatprep.subr.bf16.mxu0 0
        %5810 = vmatpush1.bf16.msra.mxu0 0
        %5811 = vmatprep.subr.bf16.mxu0 0
        %5812 = vmatpush1.bf16.msra.mxu0 0
        %5813 = vmatprep.subr.bf16.mxu0 0
        %5814 = vmatpush1.bf16.msra.mxu0 0
        %5815 = vmatprep.subr.bf16.mxu0 0
        %5816 = vmatpush1.bf16.msra.mxu0 0
        %5817 = vmatprep.subr.bf16.mxu0 0
        %5818 = vmatpush1.bf16.msra.mxu0 0
        %5819 = vmatprep.subr.bf16.mxu0 0
        %5820 = vmatpush1.bf16.msra.mxu0 0
        %5821 = vmatprep.subr.bf16.mxu0 0
        %5822 = vmatpush1.bf16.msra.mxu0 0
        %5823 = vmatprep.mubr.bf16.mxu0 0
        %5824 = vmatmul.mubr.bf16.gmra.mrb[0].mxu0 %v5783
        %v5825 = vpop.f32.mrb[0].mxu0
        %v5826 = vadd.f32 0.0, %v5825
        %v5827 = vpop.f32.mrb[0].mxu0
        %v5828 = vadd.f32 0.0, %v5827
        %v5829 = vpop.f32.mrb[0].mxu0
        %v5830 = vpop.f32.mrb[0].mxu0
        %5831 = vdwg.mxu0
        %v5833 = vsel %vm3756, %v5620, 0
        %v5836 = vsel %vm3952, %v2888, 0
        %v5839 = vsel %vm3952, %v2889, 0
        %5841 = vmatprep.subr.bf16.mxu0 %v5839
        %5842 = vmatpush1.bf16.msra.mxu0 %v5836
        %5843 = vmatprep.subr.bf16.mxu0 0
        %5844 = vmatpush1.bf16.msra.mxu0 0
        %5845 = vmatprep.subr.bf16.mxu0 0
        %5846 = vmatpush1.bf16.msra.mxu0 0
        %5847 = vmatprep.subr.bf16.mxu0 0
        %5848 = vmatpush1.bf16.msra.mxu0 0
        %5849 = vmatprep.subr.bf16.mxu0 0
        %5850 = vmatpush1.bf16.msra.mxu0 0
        %5851 = vmatprep.subr.bf16.mxu0 0
        %5852 = vmatpush1.bf16.msra.mxu0 0
        %5853 = vmatprep.subr.bf16.mxu0 0
        %5854 = vmatpush1.bf16.msra.mxu0 0
        %5855 = vmatprep.subr.bf16.mxu0 0
        %5856 = vmatpush1.bf16.msra.mxu0 0
        %5857 = vmatprep.subr.bf16.mxu0 0
        %5858 = vmatpush1.bf16.msra.mxu0 0
        %5859 = vmatprep.subr.bf16.mxu0 0
        %5860 = vmatpush1.bf16.msra.mxu0 0
        %5861 = vmatprep.subr.bf16.mxu0 0
        %5862 = vmatpush1.bf16.msra.mxu0 0
        %5863 = vmatprep.subr.bf16.mxu0 0
        %5864 = vmatpush1.bf16.msra.mxu0 0
        %5865 = vmatprep.subr.bf16.mxu0 0
        %5866 = vmatpush1.bf16.msra.mxu0 0
        %5867 = vmatprep.subr.bf16.mxu0 0
        %5868 = vmatpush1.bf16.msra.mxu0 0
        %5869 = vmatprep.subr.bf16.mxu0 0
        %5870 = vmatpush1.bf16.msra.mxu0 0
        %5871 = vmatprep.subr.bf16.mxu0 0
        %5872 = vmatpush1.bf16.msra.mxu0 0
        %5873 = vmatprep.mubr.bf16.mxu0 0
        %5874 = vmatmul.mubr.bf16.gmra.mrb[0].mxu0 %v5833
        %v5875 = vpop.f32.mrb[0].mxu0
        %v5876 = vadd.f32 0.0, %v5875
        %v5877 = vpop.f32.mrb[0].mxu0
        %v5878 = vadd.f32 0.0, %v5877
        %v5879 = vpop.f32.mrb[0].mxu0
        %v5880 = vpop.f32.mrb[0].mxu0
        %5881 = vdwg.mxu0
        %v5883 = vsel %vm3756, %v5621, 0
        %v5886 = vsel %vm3952, %v2892, 0
        %v5889 = vsel %vm3952, %v2893, 0
        %5891 = vmatprep.subr.bf16.mxu0 %v5889
        %5892 = vmatpush1.bf16.msra.mxu0 %v5886
        %5893 = vmatprep.subr.bf16.mxu0 0
        %5894 = vmatpush1.bf16.msra.mxu0 0
        %5895 = vmatprep.subr.bf16.mxu0 0
        %5896 = vmatpush1.bf16.msra.mxu0 0
        %5897 = vmatprep.subr.bf16.mxu0 0
        %5898 = vmatpush1.bf16.msra.mxu0 0
        %5899 = vmatprep.subr.bf16.mxu0 0
        %5900 = vmatpush1.bf16.msra.mxu0 0
        %5901 = vmatprep.subr.bf16.mxu0 0
        %5902 = vmatpush1.bf16.msra.mxu0 0
        %5903 = vmatprep.subr.bf16.mxu0 0
        %5904 = vmatpush1.bf16.msra.mxu0 0
        %5905 = vmatprep.subr.bf16.mxu0 0
        %5906 = vmatpush1.bf16.msra.mxu0 0
        %5907 = vmatprep.subr.bf16.mxu0 0
        %5908 = vmatpush1.bf16.msra.mxu0 0
        %5909 = vmatprep.subr.bf16.mxu0 0
        %5910 = vmatpush1.bf16.msra.mxu0 0
        %5911 = vmatprep.subr.bf16.mxu0 0
        %5912 = vmatpush1.bf16.msra.mxu0 0
        %5913 = vmatprep.subr.bf16.mxu0 0
        %5914 = vmatpush1.bf16.msra.mxu0 0
        %5915 = vmatprep.subr.bf16.mxu0 0
        %5916 = vmatpush1.bf16.msra.mxu0 0
        %5917 = vmatprep.subr.bf16.mxu0 0
        %5918 = vmatpush1.bf16.msra.mxu0 0
        %5919 = vmatprep.subr.bf16.mxu0 0
        %5920 = vmatpush1.bf16.msra.mxu0 0
        %5921 = vmatprep.subr.bf16.mxu0 0
        %5922 = vmatpush1.bf16.msra.mxu0 0
        %5923 = vmatprep.mubr.bf16.mxu0 0
        %5924 = vmatmul.mubr.bf16.gmra.mrb[0].mxu0 %v5883
        %v5925 = vpop.f32.mrb[0].mxu0
        %v5926 = vadd.f32 0.0, %v5925
        %v5927 = vpop.f32.mrb[0].mxu0
        %v5928 = vadd.f32 0.0, %v5927
        %v5929 = vpop.f32.mrb[0].mxu0
        %v5930 = vpop.f32.mrb[0].mxu0
        %5931 = vdwg.mxu0
        %v5933 = vsel %vm3756, %v5622, 0
        %v5936 = vsel %vm3952, %v2896, 0
        %v5939 = vsel %vm3952, %v2897, 0
        %5941 = vmatprep.subr.bf16.mxu0 %v5939
        %5942 = vmatpush1.bf16.msra.mxu0 %v5936
        %5943 = vmatprep.subr.bf16.mxu0 0
        %5944 = vmatpush1.bf16.msra.mxu0 0
        %5945 = vmatprep.subr.bf16.mxu0 0
        %5946 = vmatpush1.bf16.msra.mxu0 0
        %5947 = vmatprep.subr.bf16.mxu0 0
        %5948 = vmatpush1.bf16.msra.mxu0 0
        %5949 = vmatprep.subr.bf16.mxu0 0
        %5950 = vmatpush1.bf16.msra.mxu0 0
        %5951 = vmatprep.subr.bf16.mxu0 0
        %5952 = vmatpush1.bf16.msra.mxu0 0
        %5953 = vmatprep.subr.bf16.mxu0 0
        %5954 = vmatpush1.bf16.msra.mxu0 0
        %5955 = vmatprep.subr.bf16.mxu0 0
        %5956 = vmatpush1.bf16.msra.mxu0 0
        %5957 = vmatprep.subr.bf16.mxu0 0
        %5958 = vmatpush1.bf16.msra.mxu0 0
        %5959 = vmatprep.subr.bf16.mxu0 0
        %5960 = vmatpush1.bf16.msra.mxu0 0
        %5961 = vmatprep.subr.bf16.mxu0 0
        %5962 = vmatpush1.bf16.msra.mxu0 0
        %5963 = vmatprep.subr.bf16.mxu0 0
        %5964 = vmatpush1.bf16.msra.mxu0 0
        %5965 = vmatprep.subr.bf16.mxu0 0
        %5966 = vmatpush1.bf16.msra.mxu0 0
        %5967 = vmatprep.subr.bf16.mxu0 0
        %5968 = vmatpush1.bf16.msra.mxu0 0
        %5969 = vmatprep.subr.bf16.mxu0 0
        %5970 = vmatpush1.bf16.msra.mxu0 0
        %5971 = vmatprep.subr.bf16.mxu0 0
        %5972 = vmatpush1.bf16.msra.mxu0 0
        %5973 = vmatprep.mubr.bf16.mxu0 0
        %5974 = vmatmul.mubr.bf16.gmra.mrb[0].mxu0 %v5933
        %v5975 = vpop.f32.mrb[0].mxu0
        %v5976 = vadd.f32 0.0, %v5975
        %v5977 = vpop.f32.mrb[0].mxu0
        %v5978 = vadd.f32 0.0, %v5977
        %v5979 = vpop.f32.mrb[0].mxu0
        %v5980 = vpop.f32.mrb[0].mxu0
        %5981 = vdwg.mxu0
        %v5983 = vsel %vm3756, %v5623, 0
        %v5986 = vsel %vm3952, %v2900, 0
        %v5989 = vsel %vm3952, %v2901, 0
        %5991 = vmatprep.subr.bf16.mxu0 %v5989
        %5992 = vmatpush1.bf16.msra.mxu0 %v5986
        %5993 = vmatprep.subr.bf16.mxu0 0
        %5994 = vmatpush1.bf16.msra.mxu0 0
        %5995 = vmatprep.subr.bf16.mxu0 0
        %5996 = vmatpush1.bf16.msra.mxu0 0
        %5997 = vmatprep.subr.bf16.mxu0 0
        %5998 = vmatpush1.bf16.msra.mxu0 0
        %5999 = vmatprep.subr.bf16.mxu0 0
        %6000 = vmatpush1.bf16.msra.mxu0 0
        %6001 = vmatprep.subr.bf16.mxu0 0
        %6002 = vmatpush1.bf16.msra.mxu0 0
        %6003 = vmatprep.subr.bf16.mxu0 0
        %6004 = vmatpush1.bf16.msra.mxu0 0
        %6005 = vmatprep.subr.bf16.mxu0 0
        %6006 = vmatpush1.bf16.msra.mxu0 0
        %6007 = vmatprep.subr.bf16.mxu0 0
        %6008 = vmatpush1.bf16.msra.mxu0 0
        %6009 = vmatprep.subr.bf16.mxu0 0
        %6010 = vmatpush1.bf16.msra.mxu0 0
        %6011 = vmatprep.subr.bf16.mxu0 0
        %6012 = vmatpush1.bf16.msra.mxu0 0
        %6013 = vmatprep.subr.bf16.mxu0 0
        %6014 = vmatpush1.bf16.msra.mxu0 0
        %6015 = vmatprep.subr.bf16.mxu0 0
        %6016 = vmatpush1.bf16.msra.mxu0 0
        %6017 = vmatprep.subr.bf16.mxu0 0
        %6018 = vmatpush1.bf16.msra.mxu0 0
        %6019 = vmatprep.subr.bf16.mxu0 0
        %6020 = vmatpush1.bf16.msra.mxu0 0
        %6021 = vmatprep.subr.bf16.mxu0 0
        %6022 = vmatpush1.bf16.msra.mxu0 0
        %6023 = vmatprep.mubr.bf16.mxu0 0
        %6024 = vmatmul.mubr.bf16.gmra.mrb[0].mxu0 %v5983
        %v6025 = vpop.f32.mrb[0].mxu0
        %v6026 = vadd.f32 0.0, %v6025
        %v6027 = vpop.f32.mrb[0].mxu0
        %v6028 = vadd.f32 0.0, %v6027
        %v6029 = vpop.f32.mrb[0].mxu0
        %v6030 = vpop.f32.mrb[0].mxu0
        %6031 = vdwg.mxu0
        %v6033 = vsel %vm3756, %v5624, 0
        %v6036 = vsel %vm3952, %v2904, 0
        %v6039 = vsel %vm3952, %v2905, 0
        %6041 = vmatprep.subr.bf16.mxu0 %v6039
        %6042 = vmatpush1.bf16.msra.mxu0 %v6036
        %6043 = vmatprep.subr.bf16.mxu0 0
        %6044 = vmatpush1.bf16.msra.mxu0 0
        %6045 = vmatprep.subr.bf16.mxu0 0
        %6046 = vmatpush1.bf16.msra.mxu0 0
        %6047 = vmatprep.subr.bf16.mxu0 0
        %6048 = vmatpush1.bf16.msra.mxu0 0
        %6049 = vmatprep.subr.bf16.mxu0 0
        %6050 = vmatpush1.bf16.msra.mxu0 0
        %6051 = vmatprep.subr.bf16.mxu0 0
        %6052 = vmatpush1.bf16.msra.mxu0 0
        %6053 = vmatprep.subr.bf16.mxu0 0
        %6054 = vmatpush1.bf16.msra.mxu0 0
        %6055 = vmatprep.subr.bf16.mxu0 0
        %6056 = vmatpush1.bf16.msra.mxu0 0
        %6057 = vmatprep.subr.bf16.mxu0 0
        %6058 = vmatpush1.bf16.msra.mxu0 0
        %6059 = vmatprep.subr.bf16.mxu0 0
        %6060 = vmatpush1.bf16.msra.mxu0 0
        %6061 = vmatprep.subr.bf16.mxu0 0
        %6062 = vmatpush1.bf16.msra.mxu0 0
        %6063 = vmatprep.subr.bf16.mxu0 0
        %6064 = vmatpush1.bf16.msra.mxu0 0
        %6065 = vmatprep.subr.bf16.mxu0 0
        %6066 = vmatpush1.bf16.msra.mxu0 0
        %6067 = vmatprep.subr.bf16.mxu0 0
        %6068 = vmatpush1.bf16.msra.mxu0 0
        %6069 = vmatprep.subr.bf16.mxu0 0
        %6070 = vmatpush1.bf16.msra.mxu0 0
        %6071 = vmatprep.subr.bf16.mxu0 0
        %6072 = vmatpush1.bf16.msra.mxu0 0
        %6073 = vmatprep.mubr.bf16.mxu0 0
        %6074 = vmatmul.mubr.bf16.gmra.mrb[0].mxu0 %v6033
        %v6075 = vpop.f32.mrb[0].mxu0
        %v6076 = vadd.f32 0.0, %v6075
        %v6077 = vpop.f32.mrb[0].mxu0
        %v6078 = vadd.f32 0.0, %v6077
        %v6079 = vpop.f32.mrb[0].mxu0
        %v6080 = vpop.f32.mrb[0].mxu0
        %6081 = vdwg.mxu0
        %v6083 = vsel %vm3756, %v5625, 0
        %v6086 = vsel %vm3952, %v2908, 0
        %v6089 = vsel %vm3952, %v2909, 0
        %6091 = vmatprep.subr.bf16.mxu0 %v6089
        %6092 = vmatpush1.bf16.msra.mxu0 %v6086
        %6093 = vmatprep.subr.bf16.mxu0 0
        %6094 = vmatpush1.bf16.msra.mxu0 0
        %6095 = vmatprep.subr.bf16.mxu0 0
        %6096 = vmatpush1.bf16.msra.mxu0 0
        %6097 = vmatprep.subr.bf16.mxu0 0
        %6098 = vmatpush1.bf16.msra.mxu0 0
        %6099 = vmatprep.subr.bf16.mxu0 0
        %6100 = vmatpush1.bf16.msra.mxu0 0
        %6101 = vmatprep.subr.bf16.mxu0 0
        %6102 = vmatpush1.bf16.msra.mxu0 0
        %6103 = vmatprep.subr.bf16.mxu0 0
        %6104 = vmatpush1.bf16.msra.mxu0 0
        %6105 = vmatprep.subr.bf16.mxu0 0
        %6106 = vmatpush1.bf16.msra.mxu0 0
        %6107 = vmatprep.subr.bf16.mxu0 0
        %6108 = vmatpush1.bf16.msra.mxu0 0
        %6109 = vmatprep.subr.bf16.mxu0 0
        %6110 = vmatpush1.bf16.msra.mxu0 0
        %6111 = vmatprep.subr.bf16.mxu0 0
        %6112 = vmatpush1.bf16.msra.mxu0 0
        %6113 = vmatprep.subr.bf16.mxu0 0
        %6114 = vmatpush1.bf16.msra.mxu0 0
        %6115 = vmatprep.subr.bf16.mxu0 0
        %6116 = vmatpush1.bf16.msra.mxu0 0
        %6117 = vmatprep.subr.bf16.mxu0 0
        %6118 = vmatpush1.bf16.msra.mxu0 0
        %6119 = vmatprep.subr.bf16.mxu0 0
        %6120 = vmatpush1.bf16.msra.mxu0 0
        %6121 = vmatprep.subr.bf16.mxu0 0
        %6122 = vmatpush1.bf16.msra.mxu0 0
        %6123 = vmatprep.mubr.bf16.mxu0 0
        %6124 = vmatmul.mubr.bf16.gmra.mrb[0].mxu0 %v6083
        %v6125 = vpop.f32.mrb[0].mxu0
        %v6126 = vadd.f32 0.0, %v6125
        %v6127 = vpop.f32.mrb[0].mxu0
        %v6128 = vadd.f32 0.0, %v6127
        %v6129 = vpop.f32.mrb[0].mxu0
        %v6130 = vpop.f32.mrb[0].mxu0
        %6131 = vdwg.mxu0
        %v6133 = vsel %vm3756, %v5626, 0
        %v6136 = vsel %vm3952, %v2912, 0
        %v6139 = vsel %vm3952, %v2913, 0
        %6141 = vmatprep.subr.bf16.mxu0 %v6139
        %6142 = vmatpush1.bf16.msra.mxu0 %v6136
        %6143 = vmatprep.subr.bf16.mxu0 0
        %6144 = vmatpush1.bf16.msra.mxu0 0
        %6145 = vmatprep.subr.bf16.mxu0 0
        %6146 = vmatpush1.bf16.msra.mxu0 0
        %6147 = vmatprep.subr.bf16.mxu0 0
        %6148 = vmatpush1.bf16.msra.mxu0 0
        %6149 = vmatprep.subr.bf16.mxu0 0
        %6150 = vmatpush1.bf16.msra.mxu0 0
        %6151 = vmatprep.subr.bf16.mxu0 0
        %6152 = vmatpush1.bf16.msra.mxu0 0
        %6153 = vmatprep.subr.bf16.mxu0 0
        %6154 = vmatpush1.bf16.msra.mxu0 0
        %6155 = vmatprep.subr.bf16.mxu0 0
        %6156 = vmatpush1.bf16.msra.mxu0 0
        %6157 = vmatprep.subr.bf16.mxu0 0
        %6158 = vmatpush1.bf16.msra.mxu0 0
        %6159 = vmatprep.subr.bf16.mxu0 0
        %6160 = vmatpush1.bf16.msra.mxu0 0
        %6161 = vmatprep.subr.bf16.mxu0 0
        %6162 = vmatpush1.bf16.msra.mxu0 0
        %6163 = vmatprep.subr.bf16.mxu0 0
        %6164 = vmatpush1.bf16.msra.mxu0 0
        %6165 = vmatprep.subr.bf16.mxu0 0
        %6166 = vmatpush1.bf16.msra.mxu0 0
        %6167 = vmatprep.subr.bf16.mxu0 0
        %6168 = vmatpush1.bf16.msra.mxu0 0
        %6169 = vmatprep.subr.bf16.mxu0 0
        %6170 = vmatpush1.bf16.msra.mxu0 0
        %6171 = vmatprep.subr.bf16.mxu0 0
        %6172 = vmatpush1.bf16.msra.mxu0 0
        %6173 = vmatprep.mubr.bf16.mxu0 0
        %6174 = vmatmul.mubr.bf16.gmra.mrb[0].mxu0 %v6133
        %v6175 = vpop.f32.mrb[0].mxu0
        %v6176 = vadd.f32 0.0, %v6175
        %v6177 = vpop.f32.mrb[0].mxu0
        %v6178 = vadd.f32 0.0, %v6177
        %v6179 = vpop.f32.mrb[0].mxu0
        %v6180 = vpop.f32.mrb[0].mxu0
        %6181 = vdwg.mxu0
        %v6183 = vsel %vm3756, %v5627, 0
        %v6186 = vsel %vm3952, %v2916, 0
        %v6189 = vsel %vm3952, %v2917, 0
        %6191 = vmatprep.subr.bf16.mxu0 %v6189
        %6192 = vmatpush1.bf16.msra.mxu0 %v6186
        %6193 = vmatprep.subr.bf16.mxu0 0
        %6194 = vmatpush1.bf16.msra.mxu0 0
        %6195 = vmatprep.subr.bf16.mxu0 0
        %6196 = vmatpush1.bf16.msra.mxu0 0
        %6197 = vmatprep.subr.bf16.mxu0 0
        %6198 = vmatpush1.bf16.msra.mxu0 0
        %6199 = vmatprep.subr.bf16.mxu0 0
        %6200 = vmatpush1.bf16.msra.mxu0 0
        %6201 = vmatprep.subr.bf16.mxu0 0
        %6202 = vmatpush1.bf16.msra.mxu0 0
        %6203 = vmatprep.subr.bf16.mxu0 0
        %6204 = vmatpush1.bf16.msra.mxu0 0
        %6205 = vmatprep.subr.bf16.mxu0 0
        %6206 = vmatpush1.bf16.msra.mxu0 0
        %6207 = vmatprep.subr.bf16.mxu0 0
        %6208 = vmatpush1.bf16.msra.mxu0 0
        %6209 = vmatprep.subr.bf16.mxu0 0
        %6210 = vmatpush1.bf16.msra.mxu0 0
        %6211 = vmatprep.subr.bf16.mxu0 0
        %6212 = vmatpush1.bf16.msra.mxu0 0
        %6213 = vmatprep.subr.bf16.mxu0 0
        %6214 = vmatpush1.bf16.msra.mxu0 0
        %6215 = vmatprep.subr.bf16.mxu0 0
        %6216 = vmatpush1.bf16.msra.mxu0 0
        %6217 = vmatprep.subr.bf16.mxu0 0
        %6218 = vmatpush1.bf16.msra.mxu0 0
        %6219 = vmatprep.subr.bf16.mxu0 0
        %6220 = vmatpush1.bf16.msra.mxu0 0
        %6221 = vmatprep.subr.bf16.mxu0 0
        %6222 = vmatpush1.bf16.msra.mxu0 0
        %6223 = vmatprep.mubr.bf16.mxu0 0
        %6224 = vmatmul.mubr.bf16.gmra.mrb[0].mxu0 %v6183
        %v6225 = vpop.f32.mrb[0].mxu0
        %v6226 = vadd.f32 0.0, %v6225
        %v6227 = vpop.f32.mrb[0].mxu0
        %v6228 = vadd.f32 0.0, %v6227
        %v6229 = vpop.f32.mrb[0].mxu0
        %v6230 = vpop.f32.mrb[0].mxu0
        %6231 = vdwg.mxu0
        %v6233 = vsel %vm3756, %v5628, 0
        %v6236 = vsel %vm3952, %v2920, 0
        %v6239 = vsel %vm3952, %v2921, 0
        %6241 = vmatprep.subr.bf16.mxu0 %v6239
        %6242 = vmatpush1.bf16.msra.mxu0 %v6236
        %6243 = vmatprep.subr.bf16.mxu0 0
        %6244 = vmatpush1.bf16.msra.mxu0 0
        %6245 = vmatprep.subr.bf16.mxu0 0
        %6246 = vmatpush1.bf16.msra.mxu0 0
        %6247 = vmatprep.subr.bf16.mxu0 0
        %6248 = vmatpush1.bf16.msra.mxu0 0
        %6249 = vmatprep.subr.bf16.mxu0 0
        %6250 = vmatpush1.bf16.msra.mxu0 0
        %6251 = vmatprep.subr.bf16.mxu0 0
        %6252 = vmatpush1.bf16.msra.mxu0 0
        %6253 = vmatprep.subr.bf16.mxu0 0
        %6254 = vmatpush1.bf16.msra.mxu0 0
        %6255 = vmatprep.subr.bf16.mxu0 0
        %6256 = vmatpush1.bf16.msra.mxu0 0
        %6257 = vmatprep.subr.bf16.mxu0 0
        %6258 = vmatpush1.bf16.msra.mxu0 0
        %6259 = vmatprep.subr.bf16.mxu0 0
        %6260 = vmatpush1.bf16.msra.mxu0 0
        %6261 = vmatprep.subr.bf16.mxu0 0
        %6262 = vmatpush1.bf16.msra.mxu0 0
        %6263 = vmatprep.subr.bf16.mxu0 0
        %6264 = vmatpush1.bf16.msra.mxu0 0
        %6265 = vmatprep.subr.bf16.mxu0 0
        %6266 = vmatpush1.bf16.msra.mxu0 0
        %6267 = vmatprep.subr.bf16.mxu0 0
        %6268 = vmatpush1.bf16.msra.mxu0 0
        %6269 = vmatprep.subr.bf16.mxu0 0
        %6270 = vmatpush1.bf16.msra.mxu0 0
        %6271 = vmatprep.subr.bf16.mxu0 0
        %6272 = vmatpush1.bf16.msra.mxu0 0
        %6273 = vmatprep.mubr.bf16.mxu0 0
        %6274 = vmatmul.mubr.bf16.gmra.mrb[0].mxu0 %v6233
        %v6275 = vpop.f32.mrb[0].mxu0
        %v6276 = vadd.f32 0.0, %v6275
        %v6277 = vpop.f32.mrb[0].mxu0
        %v6278 = vadd.f32 0.0, %v6277
        %v6279 = vpop.f32.mrb[0].mxu0
        %v6280 = vpop.f32.mrb[0].mxu0
        %6281 = vdwg.mxu0
        %v6283 = vsel %vm3756, %v5629, 0
        %v6286 = vsel %vm3952, %v2924, 0
        %v6289 = vsel %vm3952, %v2925, 0
        %6291 = vmatprep.subr.bf16.mxu0 %v6289
        %6292 = vmatpush1.bf16.msra.mxu0 %v6286
        %6293 = vmatprep.subr.bf16.mxu0 0
        %6294 = vmatpush1.bf16.msra.mxu0 0
        %6295 = vmatprep.subr.bf16.mxu0 0
        %6296 = vmatpush1.bf16.msra.mxu0 0
        %6297 = vmatprep.subr.bf16.mxu0 0
        %6298 = vmatpush1.bf16.msra.mxu0 0
        %6299 = vmatprep.subr.bf16.mxu0 0
        %6300 = vmatpush1.bf16.msra.mxu0 0
        %6301 = vmatprep.subr.bf16.mxu0 0
        %6302 = vmatpush1.bf16.msra.mxu0 0
        %6303 = vmatprep.subr.bf16.mxu0 0
        %6304 = vmatpush1.bf16.msra.mxu0 0
        %6305 = vmatprep.subr.bf16.mxu0 0
        %6306 = vmatpush1.bf16.msra.mxu0 0
        %6307 = vmatprep.subr.bf16.mxu0 0
        %6308 = vmatpush1.bf16.msra.mxu0 0
        %6309 = vmatprep.subr.bf16.mxu0 0
        %6310 = vmatpush1.bf16.msra.mxu0 0
        %6311 = vmatprep.subr.bf16.mxu0 0
        %6312 = vmatpush1.bf16.msra.mxu0 0
        %6313 = vmatprep.subr.bf16.mxu0 0
        %6314 = vmatpush1.bf16.msra.mxu0 0
        %6315 = vmatprep.subr.bf16.mxu0 0
        %6316 = vmatpush1.bf16.msra.mxu0 0
        %6317 = vmatprep.subr.bf16.mxu0 0
        %6318 = vmatpush1.bf16.msra.mxu0 0
        %6319 = vmatprep.subr.bf16.mxu0 0
        %6320 = vmatpush1.bf16.msra.mxu0 0
        %6321 = vmatprep.subr.bf16.mxu0 0
        %6322 = vmatpush1.bf16.msra.mxu0 0
        %6323 = vmatprep.mubr.bf16.mxu0 0
        %6324 = vmatmul.mubr.bf16.gmra.mrb[0].mxu0 %v6283
        %v6325 = vpop.f32.mrb[0].mxu0
        %v6326 = vadd.f32 0.0, %v6325
        %v6327 = vpop.f32.mrb[0].mxu0
        %v6328 = vadd.f32 0.0, %v6327
        %v6329 = vpop.f32.mrb[0].mxu0
        %v6330 = vpop.f32.mrb[0].mxu0
        %6331 = vdwg.mxu0
        %v6333 = vsel %vm3756, %v5630, 0
        %v6336 = vsel %vm3952, %v2928, 0
        %v6339 = vsel %vm3952, %v2929, 0
        %6341 = vmatprep.subr.bf16.mxu0 %v6339
        %6342 = vmatpush1.bf16.msra.mxu0 %v6336
        %6343 = vmatprep.subr.bf16.mxu0 0
        %6344 = vmatpush1.bf16.msra.mxu0 0
        %6345 = vmatprep.subr.bf16.mxu0 0
        %6346 = vmatpush1.bf16.msra.mxu0 0
        %6347 = vmatprep.subr.bf16.mxu0 0
        %6348 = vmatpush1.bf16.msra.mxu0 0
        %6349 = vmatprep.subr.bf16.mxu0 0
        %6350 = vmatpush1.bf16.msra.mxu0 0
        %6351 = vmatprep.subr.bf16.mxu0 0
        %6352 = vmatpush1.bf16.msra.mxu0 0
        %6353 = vmatprep.subr.bf16.mxu0 0
        %6354 = vmatpush1.bf16.msra.mxu0 0
        %6355 = vmatprep.subr.bf16.mxu0 0
        %6356 = vmatpush1.bf16.msra.mxu0 0
        %6357 = vmatprep.subr.bf16.mxu0 0
        %6358 = vmatpush1.bf16.msra.mxu0 0
        %6359 = vmatprep.subr.bf16.mxu0 0
        %6360 = vmatpush1.bf16.msra.mxu0 0
        %6361 = vmatprep.subr.bf16.mxu0 0
        %6362 = vmatpush1.bf16.msra.mxu0 0
        %6363 = vmatprep.subr.bf16.mxu0 0
        %6364 = vmatpush1.bf16.msra.mxu0 0
        %6365 = vmatprep.subr.bf16.mxu0 0
        %6366 = vmatpush1.bf16.msra.mxu0 0
        %6367 = vmatprep.subr.bf16.mxu0 0
        %6368 = vmatpush1.bf16.msra.mxu0 0
        %6369 = vmatprep.subr.bf16.mxu0 0
        %6370 = vmatpush1.bf16.msra.mxu0 0
        %6371 = vmatprep.subr.bf16.mxu0 0
        %6372 = vmatpush1.bf16.msra.mxu0 0
        %6373 = vmatprep.mubr.bf16.mxu0 0
        %6374 = vmatmul.mubr.bf16.gmra.mrb[0].mxu0 %v6333
        %v6375 = vpop.f32.mrb[0].mxu0
        %v6376 = vadd.f32 0.0, %v6375
        %v6377 = vpop.f32.mrb[0].mxu0
        %v6378 = vadd.f32 0.0, %v6377
        %v6379 = vpop.f32.mrb[0].mxu0
        %v6380 = vpop.f32.mrb[0].mxu0
        %6381 = vdwg.mxu0
        %v6383 = vsel %vm3756, %v5631, 0
        %v6386 = vsel %vm3952, %v2932, 0
        %v6389 = vsel %vm3952, %v2933, 0
        %6391 = vmatprep.subr.bf16.mxu0 %v6389
        %6392 = vmatpush1.bf16.msra.mxu0 %v6386
        %6393 = vmatprep.subr.bf16.mxu0 0
        %6394 = vmatpush1.bf16.msra.mxu0 0
        %6395 = vmatprep.subr.bf16.mxu0 0
        %6396 = vmatpush1.bf16.msra.mxu0 0
        %6397 = vmatprep.subr.bf16.mxu0 0
        %6398 = vmatpush1.bf16.msra.mxu0 0
        %6399 = vmatprep.subr.bf16.mxu0 0
        %6400 = vmatpush1.bf16.msra.mxu0 0
        %6401 = vmatprep.subr.bf16.mxu0 0
        %6402 = vmatpush1.bf16.msra.mxu0 0
        %6403 = vmatprep.subr.bf16.mxu0 0
        %6404 = vmatpush1.bf16.msra.mxu0 0
        %6405 = vmatprep.subr.bf16.mxu0 0
        %6406 = vmatpush1.bf16.msra.mxu0 0
        %6407 = vmatprep.subr.bf16.mxu0 0
        %6408 = vmatpush1.bf16.msra.mxu0 0
        %6409 = vmatprep.subr.bf16.mxu0 0
        %6410 = vmatpush1.bf16.msra.mxu0 0
        %6411 = vmatprep.subr.bf16.mxu0 0
        %6412 = vmatpush1.bf16.msra.mxu0 0
        %6413 = vmatprep.subr.bf16.mxu0 0
        %6414 = vmatpush1.bf16.msra.mxu0 0
        %6415 = vmatprep.subr.bf16.mxu0 0
        %6416 = vmatpush1.bf16.msra.mxu0 0
        %6417 = vmatprep.subr.bf16.mxu0 0
        %6418 = vmatpush1.bf16.msra.mxu0 0
        %6419 = vmatprep.subr.bf16.mxu0 0
        %6420 = vmatpush1.bf16.msra.mxu0 0
        %6421 = vmatprep.subr.bf16.mxu0 0
        %6422 = vmatpush1.bf16.msra.mxu0 0
        %6423 = vmatprep.mubr.bf16.mxu0 0
        %6424 = vmatmul.mubr.bf16.gmra.mrb[0].mxu0 %v6383
        %v6425 = vpop.f32.mrb[0].mxu0
        %v6426 = vadd.f32 0.0, %v6425
        %v6427 = vpop.f32.mrb[0].mxu0
        %v6428 = vadd.f32 0.0, %v6427
        %v6429 = vpop.f32.mrb[0].mxu0
        %v6430 = vpop.f32.mrb[0].mxu0
        %6431 = vdwg.mxu0
        %v6432 = vpack.c.bf16 %v5726, %v5676
        %v6433 = vpack.c.bf16 %v5728, %v5678
        %v6434 = vpack.c.bf16 %v5826, %v5776
        %v6435 = vpack.c.bf16 %v5828, %v5778
        %v6436 = vpack.c.bf16 %v5926, %v5876
        %v6437 = vpack.c.bf16 %v5928, %v5878
        %v6438 = vpack.c.bf16 %v6026, %v5976
        %v6439 = vpack.c.bf16 %v6028, %v5978
        %v6440 = vpack.c.bf16 %v6126, %v6076
        %v6441 = vpack.c.bf16 %v6128, %v6078
        %v6442 = vpack.c.bf16 %v6226, %v6176
        %v6443 = vpack.c.bf16 %v6228, %v6178
        %v6444 = vpack.c.bf16 %v6326, %v6276
        %v6445 = vpack.c.bf16 %v6328, %v6278
        %v6446 = vpack.c.bf16 %v6426, %v6376
        %v6447 = vpack.c.bf16 %v6428, %v6378
        %v6448 = vld [vmem:[%s4767 + $0x100] sm:$0xff]
        %v6449 = vld [vmem:[%s4767 + $0x108] sm:$0xff]
        %v6450 = vld [vmem:[%s4767 + $0x110] sm:$0xff]
        %v6451 = vld [vmem:[%s4767 + $0x118] sm:$0xff]
        %v6452 = vld [vmem:[%s4767 + $0x120] sm:$0xff]
        %v6453 = vld [vmem:[%s4767 + $0x128] sm:$0xff]
        %v6454 = vld [vmem:[%s4767 + $0x130] sm:$0xff]
        %v6455 = vld [vmem:[%s4767 + $0x138] sm:$0xff]
        %v6456 = vld [vmem:[%s4767 + $0x140] sm:$0xff]
        %v6457 = vld [vmem:[%s4767 + $0x148] sm:$0xff]
        %v6458 = vld [vmem:[%s4767 + $0x150] sm:$0xff]
        %v6459 = vld [vmem:[%s4767 + $0x158] sm:$0xff]
        %v6460 = vld [vmem:[%s4767 + $0x160] sm:$0xff]
        %v6461 = vld [vmem:[%s4767 + $0x168] sm:$0xff]
        %v6462 = vld [vmem:[%s4767 + $0x170] sm:$0xff]
        %v6463 = vld [vmem:[%s4767 + $0x178] sm:$0xff]
        %v6464 = vld [vmem:[%s4767 + $0x180] sm:$0xff]
        %v6465 = vld [vmem:[%s4767 + $0x188] sm:$0xff]
        %v6466 = vld [vmem:[%s4767 + $0x190] sm:$0xff]
        %v6467 = vld [vmem:[%s4767 + $0x198] sm:$0xff]
        %v6468 = vld [vmem:[%s4767 + $0x1a0] sm:$0xff]
        %v6469 = vld [vmem:[%s4767 + $0x1a8] sm:$0xff]
        %v6470 = vld [vmem:[%s4767 + $0x1b0] sm:$0xff]
        %v6471 = vld [vmem:[%s4767 + $0x1b8] sm:$0xff]
        %v6472 = vld [vmem:[%s4767 + $0x1c0] sm:$0xff]
        %v6473 = vld [vmem:[%s4767 + $0x1c8] sm:$0xff]
        %v6474 = vld [vmem:[%s4767 + $0x1d0] sm:$0xff]
        %v6475 = vld [vmem:[%s4767 + $0x1d8] sm:$0xff]
        %v6476 = vld [vmem:[%s4767 + $0x1e0] sm:$0xff]
        %v6477 = vld [vmem:[%s4767 + $0x1e8] sm:$0xff]
        %v6478 = vld [vmem:[%s4767 + $0x1f0] sm:$0xff]
        %v6479 = vld [vmem:[%s4767 + $0x1f8] sm:$0xff]
        %v6512 = vunpack.c.l.b16 %v6448
        %v6513 = vunpack.c.h.b16 %v6448
        %v6514 = vunpack.c.l.b16 %v6449
        %v6515 = vunpack.c.h.b16 %v6449
        %v6516 = vunpack.c.l.b16 %v6450
        %v6517 = vunpack.c.h.b16 %v6450
        %v6518 = vunpack.c.l.b16 %v6451
        %v6519 = vunpack.c.h.b16 %v6451
        %v6520 = vunpack.c.l.b16 %v6452
        %v6521 = vunpack.c.h.b16 %v6452
        %v6522 = vunpack.c.l.b16 %v6453
        %v6523 = vunpack.c.h.b16 %v6453
        %v6524 = vunpack.c.l.b16 %v6454
        %v6525 = vunpack.c.h.b16 %v6454
        %v6526 = vunpack.c.l.b16 %v6455
        %v6527 = vunpack.c.h.b16 %v6455
        %v6528 = vunpack.c.l.b16 %v6456
        %v6529 = vunpack.c.h.b16 %v6456
        %v6530 = vunpack.c.l.b16 %v6457
        %v6531 = vunpack.c.h.b16 %v6457
        %v6532 = vunpack.c.l.b16 %v6458
        %v6533 = vunpack.c.h.b16 %v6458
        %v6534 = vunpack.c.l.b16 %v6459
        %v6535 = vunpack.c.h.b16 %v6459
        %v6536 = vunpack.c.l.b16 %v6460
        %v6537 = vunpack.c.h.b16 %v6460
        %v6538 = vunpack.c.l.b16 %v6461
        %v6539 = vunpack.c.h.b16 %v6461
        %v6540 = vunpack.c.l.b16 %v6462
        %v6541 = vunpack.c.h.b16 %v6462
        %v6542 = vunpack.c.l.b16 %v6463
        %v6543 = vunpack.c.h.b16 %v6463
        %v6544 = vunpack.c.l.b16 %v6464
        %v6545 = vunpack.c.h.b16 %v6464
        %v6546 = vunpack.c.l.b16 %v6465
        %v6547 = vunpack.c.h.b16 %v6465
        %v6548 = vunpack.c.l.b16 %v6466
        %v6549 = vunpack.c.h.b16 %v6466
        %v6550 = vunpack.c.l.b16 %v6467
        %v6551 = vunpack.c.h.b16 %v6467
        %v6552 = vunpack.c.l.b16 %v6468
        %v6553 = vunpack.c.h.b16 %v6468
        %v6554 = vunpack.c.l.b16 %v6469
        %v6555 = vunpack.c.h.b16 %v6469
        %v6556 = vunpack.c.l.b16 %v6470
        %v6557 = vunpack.c.h.b16 %v6470
        %v6558 = vunpack.c.l.b16 %v6471
        %v6559 = vunpack.c.h.b16 %v6471
        %v6560 = vunpack.c.l.b16 %v6472
        %v6561 = vunpack.c.h.b16 %v6472
        %v6562 = vunpack.c.l.b16 %v6473
        %v6563 = vunpack.c.h.b16 %v6473
        %v6564 = vunpack.c.l.b16 %v6474
        %v6565 = vunpack.c.h.b16 %v6474
        %v6566 = vunpack.c.l.b16 %v6475
        %v6567 = vunpack.c.h.b16 %v6475
        %v6568 = vunpack.c.l.b16 %v6476
        %v6569 = vunpack.c.h.b16 %v6476
        %v6570 = vunpack.c.l.b16 %v6477
        %v6571 = vunpack.c.h.b16 %v6477
        %v6572 = vunpack.c.l.b16 %v6478
        %v6573 = vunpack.c.h.b16 %v6478
        %v6574 = vunpack.c.l.b16 %v6479
        %v6575 = vunpack.c.h.b16 %v6479
        %v6576 = vpack.c.b16 %v6514, %v6512
        %v6577 = vpack.c.b16 %v6515, %v6513
        %v6578 = vpack.c.b16 %v6518, %v6516
        %v6579 = vpack.c.b16 %v6519, %v6517
        %v6580 = vpack.c.b16 %v6522, %v6520
        %v6581 = vpack.c.b16 %v6523, %v6521
        %v6582 = vpack.c.b16 %v6526, %v6524
        %v6583 = vpack.c.b16 %v6527, %v6525
        %v6584 = vpack.c.b16 %v6530, %v6528
        %v6585 = vpack.c.b16 %v6531, %v6529
        %v6586 = vpack.c.b16 %v6534, %v6532
        %v6587 = vpack.c.b16 %v6535, %v6533
        %v6588 = vpack.c.b16 %v6538, %v6536
        %v6589 = vpack.c.b16 %v6539, %v6537
        %v6590 = vpack.c.b16 %v6542, %v6540
        %v6591 = vpack.c.b16 %v6543, %v6541
        %v6592 = vpack.c.b16 %v6546, %v6544
        %v6593 = vpack.c.b16 %v6547, %v6545
        %v6594 = vpack.c.b16 %v6550, %v6548
        %v6595 = vpack.c.b16 %v6551, %v6549
        %v6596 = vpack.c.b16 %v6554, %v6552
        %v6597 = vpack.c.b16 %v6555, %v6553
        %v6598 = vpack.c.b16 %v6558, %v6556
        %v6599 = vpack.c.b16 %v6559, %v6557
        %v6600 = vpack.c.b16 %v6562, %v6560
        %v6601 = vpack.c.b16 %v6563, %v6561
        %v6602 = vpack.c.b16 %v6566, %v6564
        %v6603 = vpack.c.b16 %v6567, %v6565
        %v6604 = vpack.c.b16 %v6570, %v6568
        %v6605 = vpack.c.b16 %v6571, %v6569
        %v6606 = vpack.c.b16 %v6574, %v6572
        %v6607 = vpack.c.b16 %v6575, %v6573
        %6640 = vmatprep.subr.bf16.mxu0 %v6577
        %6641 = vmatpush1.bf16.msra.mxu0 %v6576
        %6642 = vmatprep.subr.bf16.mxu0 %v6579
        %6643 = vmatpush1.bf16.msra.mxu0 %v6578
        %6644 = vmatprep.subr.bf16.mxu0 %v6581
        %6645 = vmatpush1.bf16.msra.mxu0 %v6580
        %6646 = vmatprep.subr.bf16.mxu0 %v6583
        %6647 = vmatpush1.bf16.msra.mxu0 %v6582
        %6648 = vmatprep.subr.bf16.mxu0 %v6585
        %6649 = vmatpush1.bf16.msra.mxu0 %v6584
        %6650 = vmatprep.subr.bf16.mxu0 %v6587
        %6651 = vmatpush1.bf16.msra.mxu0 %v6586
        %6652 = vmatprep.subr.bf16.mxu0 %v6589
        %6653 = vmatpush1.bf16.msra.mxu0 %v6588
        %6654 = vmatprep.subr.bf16.mxu0 %v6591
        %6655 = vmatpush1.bf16.msra.mxu0 %v6590
        %6656 = vmatprep.subr.bf16.mxu0 %v6593
        %6657 = vmatpush1.bf16.msra.mxu0 %v6592
        %6658 = vmatprep.subr.bf16.mxu0 %v6595
        %6659 = vmatpush1.bf16.msra.mxu0 %v6594
        %6660 = vmatprep.subr.bf16.mxu0 %v6597
        %6661 = vmatpush1.bf16.msra.mxu0 %v6596
        %6662 = vmatprep.subr.bf16.mxu0 %v6599
        %6663 = vmatpush1.bf16.msra.mxu0 %v6598
        %6664 = vmatprep.subr.bf16.mxu0 %v6601
        %6665 = vmatpush1.bf16.msra.mxu0 %v6600
        %6666 = vmatprep.subr.bf16.mxu0 %v6603
        %6667 = vmatpush1.bf16.msra.mxu0 %v6602
        %6668 = vmatprep.subr.bf16.mxu0 %v6605
        %6669 = vmatpush1.bf16.msra.mxu0 %v6604
        %6670 = vmatprep.subr.bf16.mxu0 %v6607
        %6671 = vmatpush1.bf16.msra.mxu0 %v6606
        %6672 = vmatprep.mubr.bf16.mxu0 %v6433
        %6673 = vmatmul.mubr.bf16.gmra.mrb[0].mxu0 %v6432
        %v6674 = vpop.f32.mrb[0].mxu0
        %v6675 = vadd.f32 0.0, %v6674
        %v6676 = vpop.f32.mrb[0].mxu0
        %v6677 = vadd.f32 0.0, %v6676
        %v6678 = vpop.f32.mrb[0].mxu0
        %v6679 = vadd.f32 0.0, %v6678
        %v6680 = vpop.f32.mrb[0].mxu0
        %v6681 = vadd.f32 0.0, %v6680
        %6682 = vmatprep.mubr.bf16.mxu0 %v6435
        %6683 = vmatmul.mubr.bf16.gmra.mrb[0].mxu0 %v6434
        %v6684 = vpop.f32.mrb[0].mxu0
        %v6685 = vadd.f32 0.0, %v6684
        %v6686 = vpop.f32.mrb[0].mxu0
        %v6687 = vadd.f32 0.0, %v6686
        %v6688 = vpop.f32.mrb[0].mxu0
        %v6689 = vadd.f32 0.0, %v6688
        %v6690 = vpop.f32.mrb[0].mxu0
        %v6691 = vadd.f32 0.0, %v6690
        %6692 = vmatprep.mubr.bf16.mxu0 %v6437
        %6693 = vmatmul.mubr.bf16.gmra.mrb[0].mxu0 %v6436
        %v6694 = vpop.f32.mrb[0].mxu0
        %v6695 = vadd.f32 0.0, %v6694
        %v6696 = vpop.f32.mrb[0].mxu0
        %v6697 = vadd.f32 0.0, %v6696
        %v6698 = vpop.f32.mrb[0].mxu0
        %v6699 = vadd.f32 0.0, %v6698
        %v6700 = vpop.f32.mrb[0].mxu0
        %v6701 = vadd.f32 0.0, %v6700
        %6702 = vmatprep.mubr.bf16.mxu0 %v6439
        %6703 = vmatmul.mubr.bf16.gmra.mrb[0].mxu0 %v6438
        %v6704 = vpop.f32.mrb[0].mxu0
        %v6705 = vadd.f32 0.0, %v6704
        %v6706 = vpop.f32.mrb[0].mxu0
        %v6707 = vadd.f32 0.0, %v6706
        %v6708 = vpop.f32.mrb[0].mxu0
        %v6709 = vadd.f32 0.0, %v6708
        %v6710 = vpop.f32.mrb[0].mxu0
        %v6711 = vadd.f32 0.0, %v6710
        %6712 = vmatprep.mubr.bf16.mxu0 %v6441
        %6713 = vmatmul.mubr.bf16.gmra.mrb[0].mxu0 %v6440
        %v6714 = vpop.f32.mrb[0].mxu0
        %v6715 = vadd.f32 0.0, %v6714
        %v6716 = vpop.f32.mrb[0].mxu0
        %v6717 = vadd.f32 0.0, %v6716
        %v6718 = vpop.f32.mrb[0].mxu0
        %v6719 = vadd.f32 0.0, %v6718
        %v6720 = vpop.f32.mrb[0].mxu0
        %v6721 = vadd.f32 0.0, %v6720
        %6722 = vmatprep.mubr.bf16.mxu0 %v6443
        %6723 = vmatmul.mubr.bf16.gmra.mrb[0].mxu0 %v6442
        %v6724 = vpop.f32.mrb[0].mxu0
        %v6725 = vadd.f32 0.0, %v6724
        %v6726 = vpop.f32.mrb[0].mxu0
        %v6727 = vadd.f32 0.0, %v6726
        %v6728 = vpop.f32.mrb[0].mxu0
        %v6729 = vadd.f32 0.0, %v6728
        %v6730 = vpop.f32.mrb[0].mxu0
        %v6731 = vadd.f32 0.0, %v6730
        %6732 = vmatprep.mubr.bf16.mxu0 %v6445
        %6733 = vmatmul.mubr.bf16.gmra.mrb[0].mxu0 %v6444
        %v6734 = vpop.f32.mrb[0].mxu0
        %v6735 = vadd.f32 0.0, %v6734
        %v6736 = vpop.f32.mrb[0].mxu0
        %v6737 = vadd.f32 0.0, %v6736
        %v6738 = vpop.f32.mrb[0].mxu0
        %v6739 = vadd.f32 0.0, %v6738
        %v6740 = vpop.f32.mrb[0].mxu0
        %v6741 = vadd.f32 0.0, %v6740
        %6742 = vmatprep.mubr.bf16.mxu0 %v6447
        %6743 = vmatmul.mubr.bf16.gmra.mrb[0].mxu0 %v6446
        %v6744 = vpop.f32.mrb[0].mxu0
        %v6745 = vadd.f32 0.0, %v6744
        %v6746 = vpop.f32.mrb[0].mxu0
        %v6747 = vadd.f32 0.0, %v6746
        %v6748 = vpop.f32.mrb[0].mxu0
        %v6749 = vadd.f32 0.0, %v6748
        %v6750 = vpop.f32.mrb[0].mxu0
        %v6751 = vadd.f32 0.0, %v6750
        %6752 = vdwg.mxu0
        %v6785 = vunpack.c.l.b16 %v4768
        %v6786 = vunpack.c.h.b16 %v4768
        %v6787 = vunpack.c.l.b16 %v4769
        %v6788 = vunpack.c.h.b16 %v4769
        %v6789 = vunpack.c.l.b16 %v4770
        %v6790 = vunpack.c.h.b16 %v4770
        %v6791 = vunpack.c.l.b16 %v4771
        %v6792 = vunpack.c.h.b16 %v4771
        %v6793 = vunpack.c.l.b16 %v4772
        %v6794 = vunpack.c.h.b16 %v4772
        %v6795 = vunpack.c.l.b16 %v4773
        %v6796 = vunpack.c.h.b16 %v4773
        %v6797 = vunpack.c.l.b16 %v4774
        %v6798 = vunpack.c.h.b16 %v4774
        %v6799 = vunpack.c.l.b16 %v4775
        %v6800 = vunpack.c.h.b16 %v4775
        %v6801 = vunpack.c.l.b16 %v4776
        %v6802 = vunpack.c.h.b16 %v4776
        %v6803 = vunpack.c.l.b16 %v4777
        %v6804 = vunpack.c.h.b16 %v4777
        %v6805 = vunpack.c.l.b16 %v4778
        %v6806 = vunpack.c.h.b16 %v4778
        %v6807 = vunpack.c.l.b16 %v4779
        %v6808 = vunpack.c.h.b16 %v4779
        %v6809 = vunpack.c.l.b16 %v4780
        %v6810 = vunpack.c.h.b16 %v4780
        %v6811 = vunpack.c.l.b16 %v4781
        %v6812 = vunpack.c.h.b16 %v4781
        %v6813 = vunpack.c.l.b16 %v4782
        %v6814 = vunpack.c.h.b16 %v4782
        %v6815 = vunpack.c.l.b16 %v4783
        %v6816 = vunpack.c.h.b16 %v4783
        %v6817 = vunpack.c.l.b16 %v4784
        %v6818 = vunpack.c.h.b16 %v4784
        %v6819 = vunpack.c.l.b16 %v4785
        %v6820 = vunpack.c.h.b16 %v4785
        %v6821 = vunpack.c.l.b16 %v4786
        %v6822 = vunpack.c.h.b16 %v4786
        %v6823 = vunpack.c.l.b16 %v4787
        %v6824 = vunpack.c.h.b16 %v4787
        %v6825 = vunpack.c.l.b16 %v4788
        %v6826 = vunpack.c.h.b16 %v4788
        %v6827 = vunpack.c.l.b16 %v4789
        %v6828 = vunpack.c.h.b16 %v4789
        %v6829 = vunpack.c.l.b16 %v4790
        %v6830 = vunpack.c.h.b16 %v4790
        %v6831 = vunpack.c.l.b16 %v4791
        %v6832 = vunpack.c.h.b16 %v4791
        %v6833 = vunpack.c.l.b16 %v4792
        %v6834 = vunpack.c.h.b16 %v4792
        %v6835 = vunpack.c.l.b16 %v4793
        %v6836 = vunpack.c.h.b16 %v4793
        %v6837 = vunpack.c.l.b16 %v4794
        %v6838 = vunpack.c.h.b16 %v4794
        %v6839 = vunpack.c.l.b16 %v4795
        %v6840 = vunpack.c.h.b16 %v4795
        %v6841 = vunpack.c.l.b16 %v4796
        %v6842 = vunpack.c.h.b16 %v4796
        %v6843 = vunpack.c.l.b16 %v4797
        %v6844 = vunpack.c.h.b16 %v4797
        %v6845 = vunpack.c.l.b16 %v4798
        %v6846 = vunpack.c.h.b16 %v4798
        %v6847 = vunpack.c.l.b16 %v4799
        %v6848 = vunpack.c.h.b16 %v4799
        %v6849 = vpack.c.b16 %v6787, %v6785
        %v6850 = vpack.c.b16 %v6788, %v6786
        %v6851 = vpack.c.b16 %v6791, %v6789
        %v6852 = vpack.c.b16 %v6792, %v6790
        %v6853 = vpack.c.b16 %v6795, %v6793
        %v6854 = vpack.c.b16 %v6796, %v6794
        %v6855 = vpack.c.b16 %v6799, %v6797
        %v6856 = vpack.c.b16 %v6800, %v6798
        %v6857 = vpack.c.b16 %v6803, %v6801
        %v6858 = vpack.c.b16 %v6804, %v6802
        %v6859 = vpack.c.b16 %v6807, %v6805
        %v6860 = vpack.c.b16 %v6808, %v6806
        %v6861 = vpack.c.b16 %v6811, %v6809
        %v6862 = vpack.c.b16 %v6812, %v6810
        %v6863 = vpack.c.b16 %v6815, %v6813
        %v6864 = vpack.c.b16 %v6816, %v6814
        %v6865 = vpack.c.b16 %v6819, %v6817
        %v6866 = vpack.c.b16 %v6820, %v6818
        %v6867 = vpack.c.b16 %v6823, %v6821
        %v6868 = vpack.c.b16 %v6824, %v6822
        %v6869 = vpack.c.b16 %v6827, %v6825
        %v6870 = vpack.c.b16 %v6828, %v6826
        %v6871 = vpack.c.b16 %v6831, %v6829
        %v6872 = vpack.c.b16 %v6832, %v6830
        %v6873 = vpack.c.b16 %v6835, %v6833
        %v6874 = vpack.c.b16 %v6836, %v6834
        %v6875 = vpack.c.b16 %v6839, %v6837
        %v6876 = vpack.c.b16 %v6840, %v6838
        %v6877 = vpack.c.b16 %v6843, %v6841
        %v6878 = vpack.c.b16 %v6844, %v6842
        %v6879 = vpack.c.b16 %v6847, %v6845
        %v6880 = vpack.c.b16 %v6848, %v6846
        %6913 = vmatprep.subr.bf16.mxu0 %v6850
        %6914 = vmatpush1.bf16.msra.mxu0 %v6849
        %6915 = vmatprep.subr.bf16.mxu0 %v6852
        %6916 = vmatpush1.bf16.msra.mxu0 %v6851
        %6917 = vmatprep.subr.bf16.mxu0 %v6854
        %6918 = vmatpush1.bf16.msra.mxu0 %v6853
        %6919 = vmatprep.subr.bf16.mxu0 %v6856
        %6920 = vmatpush1.bf16.msra.mxu0 %v6855
        %6921 = vmatprep.subr.bf16.mxu0 %v6858
        %6922 = vmatpush1.bf16.msra.mxu0 %v6857
        %6923 = vmatprep.subr.bf16.mxu0 %v6860
        %6924 = vmatpush1.bf16.msra.mxu0 %v6859
        %6925 = vmatprep.subr.bf16.mxu0 %v6862
        %6926 = vmatpush1.bf16.msra.mxu0 %v6861
        %6927 = vmatprep.subr.bf16.mxu0 %v6864
        %6928 = vmatpush1.bf16.msra.mxu0 %v6863
        %6929 = vmatprep.subr.bf16.mxu0 %v6866
        %6930 = vmatpush1.bf16.msra.mxu0 %v6865
        %6931 = vmatprep.subr.bf16.mxu0 %v6868
        %6932 = vmatpush1.bf16.msra.mxu0 %v6867
        %6933 = vmatprep.subr.bf16.mxu0 %v6870
        %6934 = vmatpush1.bf16.msra.mxu0 %v6869
        %6935 = vmatprep.subr.bf16.mxu0 %v6872
        %6936 = vmatpush1.bf16.msra.mxu0 %v6871
        %6937 = vmatprep.subr.bf16.mxu0 %v6874
        %6938 = vmatpush1.bf16.msra.mxu0 %v6873
        %6939 = vmatprep.subr.bf16.mxu0 %v6876
        %6940 = vmatpush1.bf16.msra.mxu0 %v6875
        %6941 = vmatprep.subr.bf16.mxu0 %v6878
        %6942 = vmatpush1.bf16.msra.mxu0 %v6877
        %6943 = vmatprep.subr.bf16.mxu0 %v6880
        %6944 = vmatpush1.bf16.msra.mxu0 %v6879
        %6945 = vmatprep.mubr.bf16.mxu0 %v4751
        %6946 = vmatmul.mubr.bf16.gmra.mrb[0].mxu0 %v4750
        %v6947 = vpop.f32.mrb[0].mxu0
        %v6948 = vadd.f32 %v6675, %v6947
        %v6949 = vpop.f32.mrb[0].mxu0
        %v6950 = vadd.f32 %v6677, %v6949
        %v6951 = vpop.f32.mrb[0].mxu0
        %v6952 = vadd.f32 %v6679, %v6951
        %v6953 = vpop.f32.mrb[0].mxu0
        %v6954 = vadd.f32 %v6681, %v6953
        %6955 = vmatprep.mubr.bf16.mxu0 %v4753
        %6956 = vmatmul.mubr.bf16.gmra.mrb[0].mxu0 %v4752
        %v6957 = vpop.f32.mrb[0].mxu0
        %v6958 = vadd.f32 %v6685, %v6957
        %v6959 = vpop.f32.mrb[0].mxu0
        %v6960 = vadd.f32 %v6687, %v6959
        %v6961 = vpop.f32.mrb[0].mxu0
        %v6962 = vadd.f32 %v6689, %v6961
        %v6963 = vpop.f32.mrb[0].mxu0
        %v6964 = vadd.f32 %v6691, %v6963
        %6965 = vmatprep.mubr.bf16.mxu0 %v4755
        %6966 = vmatmul.mubr.bf16.gmra.mrb[0].mxu0 %v4754
        %v6967 = vpop.f32.mrb[0].mxu0
        %v6968 = vadd.f32 %v6695, %v6967
        %v6969 = vpop.f32.mrb[0].mxu0
        %v6970 = vadd.f32 %v6697, %v6969
        %v6971 = vpop.f32.mrb[0].mxu0
        %v6972 = vadd.f32 %v6699, %v6971
        %v6973 = vpop.f32.mrb[0].mxu0
        %v6974 = vadd.f32 %v6701, %v6973
        %6975 = vmatprep.mubr.bf16.mxu0 %v4757
        %6976 = vmatmul.mubr.bf16.gmra.mrb[0].mxu0 %v4756
        %v6977 = vpop.f32.mrb[0].mxu0
        %v6978 = vadd.f32 %v6705, %v6977
        %v6979 = vpop.f32.mrb[0].mxu0
        %v6980 = vadd.f32 %v6707, %v6979
        %v6981 = vpop.f32.mrb[0].mxu0
        %v6982 = vadd.f32 %v6709, %v6981
        %v6983 = vpop.f32.mrb[0].mxu0
        %v6984 = vadd.f32 %v6711, %v6983
        %6985 = vmatprep.mubr.bf16.mxu0 %v4759
        %6986 = vmatmul.mubr.bf16.gmra.mrb[0].mxu0 %v4758
        %v6987 = vpop.f32.mrb[0].mxu0
        %v6988 = vadd.f32 %v6715, %v6987
        %v6989 = vpop.f32.mrb[0].mxu0
        %v6990 = vadd.f32 %v6717, %v6989
        %v6991 = vpop.f32.mrb[0].mxu0
        %v6992 = vadd.f32 %v6719, %v6991
        %v6993 = vpop.f32.mrb[0].mxu0
        %v6994 = vadd.f32 %v6721, %v6993
        %6995 = vmatprep.mubr.bf16.mxu0 %v4761
        %6996 = vmatmul.mubr.bf16.gmra.mrb[0].mxu0 %v4760
        %v6997 = vpop.f32.mrb[0].mxu0
        %v6998 = vadd.f32 %v6725, %v6997
        %v6999 = vpop.f32.mrb[0].mxu0
        %v7000 = vadd.f32 %v6727, %v6999
        %v7001 = vpop.f32.mrb[0].mxu0
        %v7002 = vadd.f32 %v6729, %v7001
        %v7003 = vpop.f32.mrb[0].mxu0
        %v7004 = vadd.f32 %v6731, %v7003
        %7005 = vmatprep.mubr.bf16.mxu0 %v4763
        %7006 = vmatmul.mubr.bf16.gmra.mrb[0].mxu0 %v4762
        %v7007 = vpop.f32.mrb[0].mxu0
        %v7008 = vadd.f32 %v6735, %v7007
        %v7009 = vpop.f32.mrb[0].mxu0
        %v7010 = vadd.f32 %v6737, %v7009
        %v7011 = vpop.f32.mrb[0].mxu0
        %v7012 = vadd.f32 %v6739, %v7011
        %v7013 = vpop.f32.mrb[0].mxu0
        %v7014 = vadd.f32 %v6741, %v7013
        %7015 = vmatprep.mubr.bf16.mxu0 %v4765
        %7016 = vmatmul.mubr.bf16.gmra.mrb[0].mxu0 %v4764
        %v7017 = vpop.f32.mrb[0].mxu0
        %v7018 = vadd.f32 %v6745, %v7017
        %v7019 = vpop.f32.mrb[0].mxu0
        %v7020 = vadd.f32 %v6747, %v7019
        %v7021 = vpop.f32.mrb[0].mxu0
        %v7022 = vadd.f32 %v6749, %v7021
        %v7023 = vpop.f32.mrb[0].mxu0
        %v7024 = vadd.f32 %v6751, %v7023
        %7025 = vdwg.mxu0
        %s7026 = smul.u32 %s43, 2
        %s7027 = scalar_lea.vmem %s9, %s7026
        %v7028 = vld [vmem:[%s7027] sm:$0x3]
        %v7030 = vlaneseq
        %v7031 = vshrl.u32 %v7030, 7
        %v7032 = vsub.s32 0, %v7031
        %v7033 = vrot.slane %v7028, %v7032
        %v7034 = vlaneseq
        %v7035 = vshrl.u32 %v7034, 7
        %v7036 = vsub.s32 1, %v7035
        %v7037 = vrot.slane %v7028, %v7036
        %v7040 = vadd.f32 %v6948, %v7033
        %v7041 = vadd.f32 %v6950, %v7037
        %v7042 = vadd.f32 %v6952, %v7033
        %v7043 = vadd.f32 %v6954, %v7037
        %v7044 = vadd.f32 %v6958, %v7033
        %v7045 = vadd.f32 %v6960, %v7037
        %v7046 = vadd.f32 %v6962, %v7033
        %v7047 = vadd.f32 %v6964, %v7037
        %v7048 = vadd.f32 %v6968, %v7033
        %v7049 = vadd.f32 %v6970, %v7037
        %v7050 = vadd.f32 %v6972, %v7033
        %v7051 = vadd.f32 %v6974, %v7037
        %v7052 = vadd.f32 %v6978, %v7033
        %v7053 = vadd.f32 %v6980, %v7037
        %v7054 = vadd.f32 %v6982, %v7033
        %v7055 = vadd.f32 %v6984, %v7037
        %v7056 = vadd.f32 %v6988, %v7033
        %v7057 = vadd.f32 %v6990, %v7037
        %v7058 = vadd.f32 %v6992, %v7033
        %v7059 = vadd.f32 %v6994, %v7037
        %v7060 = vadd.f32 %v6998, %v7033
        %v7061 = vadd.f32 %v7000, %v7037
        %v7062 = vadd.f32 %v7002, %v7033
        %v7063 = vadd.f32 %v7004, %v7037
        %v7064 = vadd.f32 %v7008, %v7033
        %v7065 = vadd.f32 %v7010, %v7037
        %v7066 = vadd.f32 %v7012, %v7033
        %v7067 = vadd.f32 %v7014, %v7037
        %v7068 = vadd.f32 %v7018, %v7033
        %v7069 = vadd.f32 %v7020, %v7037
        %v7070 = vadd.f32 %v7022, %v7033
        %v7071 = vadd.f32 %v7024, %v7037
        %v7072 = vlaneseq
        %v7073 = vand.u32 %v7072, 127
        %v7074 = vadd.s32 %v7073, 128
        %vm7075 = vcmp.lt.s32.totalorder %v7073, 200
        %vm7076 = vcmp.lt.s32.totalorder %v7074, 200
        %v7077 = vadd.f32 %v7040, %v787
        %v7078 = vadd.f32 %v7041, %v788
        %v7079 = vadd.f32 %v7042, %v789
        %v7080 = vadd.f32 %v7043, %v790
        %v7081 = vadd.f32 %v7044, %v791
        %v7082 = vadd.f32 %v7045, %v792
        %v7083 = vadd.f32 %v7046, %v793
        %v7084 = vadd.f32 %v7047, %v794
        %v7085 = vadd.f32 %v7048, %v795
        %v7086 = vadd.f32 %v7049, %v796
        %v7087 = vadd.f32 %v7050, %v797
        %v7088 = vadd.f32 %v7051, %v798
        %v7089 = vadd.f32 %v7052, %v799
        %v7090 = vadd.f32 %v7053, %v800
        %v7091 = vadd.f32 %v7054, %v801
        %v7092 = vadd.f32 %v7055, %v802
        %v7093 = vadd.f32 %v7056, %v803
        %v7094 = vadd.f32 %v7057, %v804
        %v7095 = vadd.f32 %v7058, %v805
        %v7096 = vadd.f32 %v7059, %v806
        %v7097 = vadd.f32 %v7060, %v807
        %v7098 = vadd.f32 %v7061, %v808
        %v7099 = vadd.f32 %v7062, %v809
        %v7100 = vadd.f32 %v7063, %v810
        %v7101 = vadd.f32 %v7064, %v811
        %v7102 = vadd.f32 %v7065, %v812
        %v7103 = vadd.f32 %v7066, %v813
        %v7104 = vadd.f32 %v7067, %v814
        %v7105 = vadd.f32 %v7068, %v815
        %v7106 = vadd.f32 %v7069, %v816
        %v7107 = vadd.f32 %v7070, %v817
        %v7108 = vadd.f32 %v7071, %v818
        %s7109 = scalar_lea.vmem %s14, %s7026
        %v7110 = vld [vmem:[%s7109] sm:$0x3]
        %s7111 = scalar_lea.vmem %s15, %s7026
        %v7112 = vld [vmem:[%s7111] sm:$0x3]
        %v7113 = vadd.f32 %v7077, %v7078
        %7114 = vadd.xlane.f32.xlu0 %v7113
        %v7115 = vpop.xlane.xlu0 %7114
        %v7116 = vadd.f32 %v7079, %v7080
        %7117 = vadd.xlane.f32.xlu0 %v7116
        %v7118 = vpop.xlane.xlu0 %7117
        %v7119 = vadd.f32 %v7081, %v7082
        %7120 = vadd.xlane.f32.xlu0 %v7119
        %v7121 = vpop.xlane.xlu0 %7120
        %v7122 = vadd.f32 %v7083, %v7084
        %7123 = vadd.xlane.f32.xlu0 %v7122
        %v7124 = vpop.xlane.xlu0 %7123
        %v7125 = vadd.f32 %v7085, %v7086
        %7126 = vadd.xlane.f32.xlu0 %v7125
        %v7127 = vpop.xlane.xlu0 %7126
        %v7128 = vadd.f32 %v7087, %v7088
        %7129 = vadd.xlane.f32.xlu0 %v7128
        %v7130 = vpop.xlane.xlu0 %7129
        %v7131 = vadd.f32 %v7089, %v7090
        %7132 = vadd.xlane.f32.xlu0 %v7131
        %v7133 = vpop.xlane.xlu0 %7132
        %v7134 = vadd.f32 %v7091, %v7092
        %7135 = vadd.xlane.f32.xlu0 %v7134
        %v7136 = vpop.xlane.xlu0 %7135
        %v7137 = vadd.f32 %v7093, %v7094
        %7138 = vadd.xlane.f32.xlu0 %v7137
        %v7139 = vpop.xlane.xlu0 %7138
        %v7140 = vadd.f32 %v7095, %v7096
        %7141 = vadd.xlane.f32.xlu0 %v7140
        %v7142 = vpop.xlane.xlu0 %7141
        %v7143 = vadd.f32 %v7097, %v7098
        %7144 = vadd.xlane.f32.xlu0 %v7143
        %v7145 = vpop.xlane.xlu0 %7144
        %v7146 = vadd.f32 %v7099, %v7100
        %7147 = vadd.xlane.f32.xlu0 %v7146
        %v7148 = vpop.xlane.xlu0 %7147
        %v7149 = vadd.f32 %v7101, %v7102
        %7150 = vadd.xlane.f32.xlu0 %v7149
        %v7151 = vpop.xlane.xlu0 %7150
        %v7152 = vadd.f32 %v7103, %v7104
        %7153 = vadd.xlane.f32.xlu0 %v7152
        %v7154 = vpop.xlane.xlu0 %7153
        %v7155 = vadd.f32 %v7105, %v7106
        %7156 = vadd.xlane.f32.xlu0 %v7155
        %v7157 = vpop.xlane.xlu0 %7156
        %v7158 = vadd.f32 %v7107, %v7108
        %7159 = vadd.xlane.f32.xlu0 %v7158
        %v7160 = vpop.xlane.xlu0 %7159
        %v7161 = vmul.f32 %v7115, 0.005
        %v7162 = vmul.f32 %v7118, 0.005
        %v7163 = vmul.f32 %v7121, 0.005
        %v7164 = vmul.f32 %v7124, 0.005
        %v7165 = vmul.f32 %v7127, 0.005
        %v7166 = vmul.f32 %v7130, 0.005
        %v7167 = vmul.f32 %v7133, 0.005
        %v7168 = vmul.f32 %v7136, 0.005
        %v7169 = vmul.f32 %v7139, 0.005
        %v7170 = vmul.f32 %v7142, 0.005
        %v7171 = vmul.f32 %v7145, 0.005
        %v7172 = vmul.f32 %v7148, 0.005
        %v7173 = vmul.f32 %v7151, 0.005
        %v7174 = vmul.f32 %v7154, 0.005
        %v7175 = vmul.f32 %v7157, 0.005
        %v7176 = vmul.f32 %v7160, 0.005
        %v7177 = vsub.f32 %v7077, %v7161
        %v7178 = vsub.f32 %v7078, %v7161
        %v7179 = vsub.f32 %v7079, %v7162
        %v7180 = vsub.f32 %v7080, %v7162
        %v7181 = vsub.f32 %v7081, %v7163
        %v7182 = vsub.f32 %v7082, %v7163
        %v7183 = vsub.f32 %v7083, %v7164
        %v7184 = vsub.f32 %v7084, %v7164
        %v7185 = vsub.f32 %v7085, %v7165
        %v7186 = vsub.f32 %v7086, %v7165
        %v7187 = vsub.f32 %v7087, %v7166
        %v7188 = vsub.f32 %v7088, %v7166
        %v7189 = vsub.f32 %v7089, %v7167
        %v7190 = vsub.f32 %v7090, %v7167
        %v7191 = vsub.f32 %v7091, %v7168
        %v7192 = vsub.f32 %v7092, %v7168
        %v7193 = vsub.f32 %v7093, %v7169
        %v7194 = vsub.f32 %v7094, %v7169
        %v7195 = vsub.f32 %v7095, %v7170
        %v7196 = vsub.f32 %v7096, %v7170
        %v7197 = vsub.f32 %v7097, %v7171
        %v7198 = vsub.f32 %v7098, %v7171
        %v7199 = vsub.f32 %v7099, %v7172
        %v7200 = vsub.f32 %v7100, %v7172
        %v7201 = vsub.f32 %v7101, %v7173
        %v7202 = vsub.f32 %v7102, %v7173
        %v7203 = vsub.f32 %v7103, %v7174
        %v7204 = vsub.f32 %v7104, %v7174
        %v7205 = vsub.f32 %v7105, %v7175
        %v7206 = vsub.f32 %v7106, %v7175
        %v7207 = vsub.f32 %v7107, %v7176
        %v7208 = vsub.f32 %v7108, %v7176
        %v7209 = vsel %vm7075, 1, 0
        %v7210 = vsel %vm7076, 1, 0
        %vm7211 = vcmp.eq.s32.totalorder %v7209, 1
        %vm7212 = vcmp.eq.s32.totalorder %v7210, 1
        %v7213 = vsel %vm7211, %v7177, 0.0
        %v7214 = vsel %vm7212, %v7178, 0.0
        %v7215 = vsel %vm7211, %v7179, 0.0
        %v7216 = vsel %vm7212, %v7180, 0.0
        %v7217 = vsel %vm7211, %v7181, 0.0
        %v7218 = vsel %vm7212, %v7182, 0.0
        %v7219 = vsel %vm7211, %v7183, 0.0
        %v7220 = vsel %vm7212, %v7184, 0.0
        %v7221 = vsel %vm7211, %v7185, 0.0
        %v7222 = vsel %vm7212, %v7186, 0.0
        %v7223 = vsel %vm7211, %v7187, 0.0
        %v7224 = vsel %vm7212, %v7188, 0.0
        %v7225 = vsel %vm7211, %v7189, 0.0
        %v7226 = vsel %vm7212, %v7190, 0.0
        %v7227 = vsel %vm7211, %v7191, 0.0
        %v7228 = vsel %vm7212, %v7192, 0.0
        %v7229 = vsel %vm7211, %v7193, 0.0
        %v7230 = vsel %vm7212, %v7194, 0.0
        %v7231 = vsel %vm7211, %v7195, 0.0
        %v7232 = vsel %vm7212, %v7196, 0.0
        %v7233 = vsel %vm7211, %v7197, 0.0
        %v7234 = vsel %vm7212, %v7198, 0.0
        %v7235 = vsel %vm7211, %v7199, 0.0
        %v7236 = vsel %vm7212, %v7200, 0.0
        %v7237 = vsel %vm7211, %v7201, 0.0
        %v7238 = vsel %vm7212, %v7202, 0.0
        %v7239 = vsel %vm7211, %v7203, 0.0
        %v7240 = vsel %vm7212, %v7204, 0.0
        %v7241 = vsel %vm7211, %v7205, 0.0
        %v7242 = vsel %vm7212, %v7206, 0.0
        %v7243 = vsel %vm7211, %v7207, 0.0
        %v7244 = vsel %vm7212, %v7208, 0.0
        %v7245 = vmul.f32 %v7213, %v7213
        %v7246 = vmul.f32 %v7214, %v7214
        %v7247 = vmul.f32 %v7215, %v7215
        %v7248 = vmul.f32 %v7216, %v7216
        %v7249 = vmul.f32 %v7217, %v7217
        %v7250 = vmul.f32 %v7218, %v7218
        %v7251 = vmul.f32 %v7219, %v7219
        %v7252 = vmul.f32 %v7220, %v7220
        %v7253 = vmul.f32 %v7221, %v7221
        %v7254 = vmul.f32 %v7222, %v7222
        %v7255 = vmul.f32 %v7223, %v7223
        %v7256 = vmul.f32 %v7224, %v7224
        %v7257 = vmul.f32 %v7225, %v7225
        %v7258 = vmul.f32 %v7226, %v7226
        %v7259 = vmul.f32 %v7227, %v7227
        %v7260 = vmul.f32 %v7228, %v7228
        %v7261 = vmul.f32 %v7229, %v7229
        %v7262 = vmul.f32 %v7230, %v7230
        %v7263 = vmul.f32 %v7231, %v7231
        %v7264 = vmul.f32 %v7232, %v7232
        %v7265 = vmul.f32 %v7233, %v7233
        %v7266 = vmul.f32 %v7234, %v7234
        %v7267 = vmul.f32 %v7235, %v7235
        %v7268 = vmul.f32 %v7236, %v7236
        %v7269 = vmul.f32 %v7237, %v7237
        %v7270 = vmul.f32 %v7238, %v7238
        %v7271 = vmul.f32 %v7239, %v7239
        %v7272 = vmul.f32 %v7240, %v7240
        %v7273 = vmul.f32 %v7241, %v7241
        %v7274 = vmul.f32 %v7242, %v7242
        %v7275 = vmul.f32 %v7243, %v7243
        %v7276 = vmul.f32 %v7244, %v7244
        %v7277 = vadd.f32 %v7245, %v7246
        %7278 = vadd.xlane.f32.xlu0 %v7277
        %v7279 = vpop.xlane.xlu0 %7278
        %v7280 = vadd.f32 %v7247, %v7248
        %7281 = vadd.xlane.f32.xlu0 %v7280
        %v7282 = vpop.xlane.xlu0 %7281
        %v7283 = vadd.f32 %v7249, %v7250
        %7284 = vadd.xlane.f32.xlu0 %v7283
        %v7285 = vpop.xlane.xlu0 %7284
        %v7286 = vadd.f32 %v7251, %v7252
        %7287 = vadd.xlane.f32.xlu0 %v7286
        %v7288 = vpop.xlane.xlu0 %7287
        %v7289 = vadd.f32 %v7253, %v7254
        %7290 = vadd.xlane.f32.xlu0 %v7289
        %v7291 = vpop.xlane.xlu0 %7290
        %v7292 = vadd.f32 %v7255, %v7256
        %7293 = vadd.xlane.f32.xlu0 %v7292
        %v7294 = vpop.xlane.xlu0 %7293
        %v7295 = vadd.f32 %v7257, %v7258
        %7296 = vadd.xlane.f32.xlu0 %v7295
        %v7297 = vpop.xlane.xlu0 %7296
        %v7298 = vadd.f32 %v7259, %v7260
        %7299 = vadd.xlane.f32.xlu0 %v7298
        %v7300 = vpop.xlane.xlu0 %7299
        %v7301 = vadd.f32 %v7261, %v7262
        %7302 = vadd.xlane.f32.xlu0 %v7301
        %v7303 = vpop.xlane.xlu0 %7302
        %v7304 = vadd.f32 %v7263, %v7264
        %7305 = vadd.xlane.f32.xlu0 %v7304
        %v7306 = vpop.xlane.xlu0 %7305
        %v7307 = vadd.f32 %v7265, %v7266
        %7308 = vadd.xlane.f32.xlu0 %v7307
        %v7309 = vpop.xlane.xlu0 %7308
        %v7310 = vadd.f32 %v7267, %v7268
        %7311 = vadd.xlane.f32.xlu0 %v7310
        %v7312 = vpop.xlane.xlu0 %7311
        %v7313 = vadd.f32 %v7269, %v7270
        %7314 = vadd.xlane.f32.xlu0 %v7313
        %v7315 = vpop.xlane.xlu0 %7314
        %v7316 = vadd.f32 %v7271, %v7272
        %7317 = vadd.xlane.f32.xlu0 %v7316
        %v7318 = vpop.xlane.xlu0 %7317
        %v7319 = vadd.f32 %v7273, %v7274
        %7320 = vadd.xlane.f32.xlu0 %v7319
        %v7321 = vpop.xlane.xlu0 %7320
        %v7322 = vadd.f32 %v7275, %v7276
        %7323 = vadd.xlane.f32.xlu0 %v7322
        %v7324 = vpop.xlane.xlu0 %7323
        %v7325 = vmul.f32 %v7279, 0.005
        %v7326 = vmul.f32 %v7282, 0.005
        %v7327 = vmul.f32 %v7285, 0.005
        %v7328 = vmul.f32 %v7288, 0.005
        %v7329 = vmul.f32 %v7291, 0.005
        %v7330 = vmul.f32 %v7294, 0.005
        %v7331 = vmul.f32 %v7297, 0.005
        %v7332 = vmul.f32 %v7300, 0.005
        %v7333 = vmul.f32 %v7303, 0.005
        %v7334 = vmul.f32 %v7306, 0.005
        %v7335 = vmul.f32 %v7309, 0.005
        %v7336 = vmul.f32 %v7312, 0.005
        %v7337 = vmul.f32 %v7315, 0.005
        %v7338 = vmul.f32 %v7318, 0.005
        %v7339 = vmul.f32 %v7321, 0.005
        %v7340 = vmul.f32 %v7324, 0.005
        %v7341 = vadd.f32 %v7325, 1e-05
        %v7342 = vadd.f32 %v7326, 1e-05
        %v7343 = vadd.f32 %v7327, 1e-05
        %v7344 = vadd.f32 %v7328, 1e-05
        %v7345 = vadd.f32 %v7329, 1e-05
        %v7346 = vadd.f32 %v7330, 1e-05
        %v7347 = vadd.f32 %v7331, 1e-05
        %v7348 = vadd.f32 %v7332, 1e-05
        %v7349 = vadd.f32 %v7333, 1e-05
        %v7350 = vadd.f32 %v7334, 1e-05
        %v7351 = vadd.f32 %v7335, 1e-05
        %v7352 = vadd.f32 %v7336, 1e-05
        %v7353 = vadd.f32 %v7337, 1e-05
        %v7354 = vadd.f32 %v7338, 1e-05
        %v7355 = vadd.f32 %v7339, 1e-05
        %v7356 = vadd.f32 %v7340, 1e-05
        %v7357 = vrsqrt.pop %v7341
        %v7358 = vrsqrt.pop %v7342
        %v7359 = vrsqrt.pop %v7343
        %v7360 = vrsqrt.pop %v7344
        %v7361 = vrsqrt.pop %v7345
        %v7362 = vrsqrt.pop %v7346
        %v7363 = vrsqrt.pop %v7347
        %v7364 = vrsqrt.pop %v7348
        %v7365 = vrsqrt.pop %v7349
        %v7366 = vrsqrt.pop %v7350
        %v7367 = vrsqrt.pop %v7351
        %v7368 = vrsqrt.pop %v7352
        %v7369 = vrsqrt.pop %v7353
        %v7370 = vrsqrt.pop %v7354
        %v7371 = vrsqrt.pop %v7355
        %v7372 = vrsqrt.pop %v7356
        %v7373 = vmul.f32 %v7213, %v7357
        %v7374 = vmul.f32 %v7214, %v7357
        %v7375 = vmul.f32 %v7215, %v7358
        %v7376 = vmul.f32 %v7216, %v7358
        %v7377 = vmul.f32 %v7217, %v7359
        %v7378 = vmul.f32 %v7218, %v7359
        %v7379 = vmul.f32 %v7219, %v7360
        %v7380 = vmul.f32 %v7220, %v7360
        %v7381 = vmul.f32 %v7221, %v7361
        %v7382 = vmul.f32 %v7222, %v7361
        %v7383 = vmul.f32 %v7223, %v7362
        %v7384 = vmul.f32 %v7224, %v7362
        %v7385 = vmul.f32 %v7225, %v7363
        %v7386 = vmul.f32 %v7226, %v7363
        %v7387 = vmul.f32 %v7227, %v7364
        %v7388 = vmul.f32 %v7228, %v7364
        %v7389 = vmul.f32 %v7229, %v7365
        %v7390 = vmul.f32 %v7230, %v7365
        %v7391 = vmul.f32 %v7231, %v7366
        %v7392 = vmul.f32 %v7232, %v7366
        %v7393 = vmul.f32 %v7233, %v7367
        %v7394 = vmul.f32 %v7234, %v7367
        %v7395 = vmul.f32 %v7235, %v7368
        %v7396 = vmul.f32 %v7236, %v7368
        %v7397 = vmul.f32 %v7237, %v7369
        %v7398 = vmul.f32 %v7238, %v7369
        %v7399 = vmul.f32 %v7239, %v7370
        %v7400 = vmul.f32 %v7240, %v7370
        %v7401 = vmul.f32 %v7241, %v7371
        %v7402 = vmul.f32 %v7242, %v7371
        %v7403 = vmul.f32 %v7243, %v7372
        %v7404 = vmul.f32 %v7244, %v7372
        %v7406 = vlaneseq
        %v7407 = vshrl.u32 %v7406, 7
        %v7408 = vsub.s32 0, %v7407
        %v7409 = vrot.slane %v7110, %v7408
        %v7410 = vlaneseq
        %v7411 = vshrl.u32 %v7410, 7
        %v7412 = vsub.s32 1, %v7411
        %v7413 = vrot.slane %v7110, %v7412
        %v7416 = vmul.f32 %v7373, %v7409
        %v7417 = vmul.f32 %v7374, %v7413
        %v7418 = vmul.f32 %v7375, %v7409
        %v7419 = vmul.f32 %v7376, %v7413
        %v7420 = vmul.f32 %v7377, %v7409
        %v7421 = vmul.f32 %v7378, %v7413
        %v7422 = vmul.f32 %v7379, %v7409
        %v7423 = vmul.f32 %v7380, %v7413
        %v7424 = vmul.f32 %v7381, %v7409
        %v7425 = vmul.f32 %v7382, %v7413
        %v7426 = vmul.f32 %v7383, %v7409
        %v7427 = vmul.f32 %v7384, %v7413
        %v7428 = vmul.f32 %v7385, %v7409
        %v7429 = vmul.f32 %v7386, %v7413
        %v7430 = vmul.f32 %v7387, %v7409
        %v7431 = vmul.f32 %v7388, %v7413
        %v7432 = vmul.f32 %v7389, %v7409
        %v7433 = vmul.f32 %v7390, %v7413
        %v7434 = vmul.f32 %v7391, %v7409
        %v7435 = vmul.f32 %v7392, %v7413
        %v7436 = vmul.f32 %v7393, %v7409
        %v7437 = vmul.f32 %v7394, %v7413
        %v7438 = vmul.f32 %v7395, %v7409
        %v7439 = vmul.f32 %v7396, %v7413
        %v7440 = vmul.f32 %v7397, %v7409
        %v7441 = vmul.f32 %v7398, %v7413
        %v7442 = vmul.f32 %v7399, %v7409
        %v7443 = vmul.f32 %v7400, %v7413
        %v7444 = vmul.f32 %v7401, %v7409
        %v7445 = vmul.f32 %v7402, %v7413
        %v7446 = vmul.f32 %v7403, %v7409
        %v7447 = vmul.f32 %v7404, %v7413
        %v7449 = vlaneseq
        %v7450 = vshrl.u32 %v7449, 7
        %v7451 = vsub.s32 0, %v7450
        %v7452 = vrot.slane %v7112, %v7451
        %v7453 = vlaneseq
        %v7454 = vshrl.u32 %v7453, 7
        %v7455 = vsub.s32 1, %v7454
        %v7456 = vrot.slane %v7112, %v7455
        %v7459 = vadd.f32 %v7416, %v7452
        %v7460 = vadd.f32 %v7417, %v7456
        %v7461 = vadd.f32 %v7418, %v7452
        %v7462 = vadd.f32 %v7419, %v7456
        %v7463 = vadd.f32 %v7420, %v7452
        %v7464 = vadd.f32 %v7421, %v7456
        %v7465 = vadd.f32 %v7422, %v7452
        %v7466 = vadd.f32 %v7423, %v7456
        %v7467 = vadd.f32 %v7424, %v7452
        %v7468 = vadd.f32 %v7425, %v7456
        %v7469 = vadd.f32 %v7426, %v7452
        %v7470 = vadd.f32 %v7427, %v7456
        %v7471 = vadd.f32 %v7428, %v7452
        %v7472 = vadd.f32 %v7429, %v7456
        %v7473 = vadd.f32 %v7430, %v7452
        %v7474 = vadd.f32 %v7431, %v7456
        %v7475 = vadd.f32 %v7432, %v7452
        %v7476 = vadd.f32 %v7433, %v7456
        %v7477 = vadd.f32 %v7434, %v7452
        %v7478 = vadd.f32 %v7435, %v7456
        %v7479 = vadd.f32 %v7436, %v7452
        %v7480 = vadd.f32 %v7437, %v7456
        %v7481 = vadd.f32 %v7438, %v7452
        %v7482 = vadd.f32 %v7439, %v7456
        %v7483 = vadd.f32 %v7440, %v7452
        %v7484 = vadd.f32 %v7441, %v7456
        %v7485 = vadd.f32 %v7442, %v7452
        %v7486 = vadd.f32 %v7443, %v7456
        %v7487 = vadd.f32 %v7444, %v7452
        %v7488 = vadd.f32 %v7445, %v7456
        %v7489 = vadd.f32 %v7446, %v7452
        %v7490 = vadd.f32 %v7447, %v7456
        %v7491 = vpack.c.bf16 %v7461, %v7459
        %v7492 = vpack.c.bf16 %v7462, %v7460
        %v7493 = vpack.c.bf16 %v7465, %v7463
        %v7494 = vpack.c.bf16 %v7466, %v7464
        %v7495 = vpack.c.bf16 %v7469, %v7467
        %v7496 = vpack.c.bf16 %v7470, %v7468
        %v7497 = vpack.c.bf16 %v7473, %v7471
        %v7498 = vpack.c.bf16 %v7474, %v7472
        %v7499 = vpack.c.bf16 %v7477, %v7475
        %v7500 = vpack.c.bf16 %v7478, %v7476
        %v7501 = vpack.c.bf16 %v7481, %v7479
        %v7502 = vpack.c.bf16 %v7482, %v7480
        %v7503 = vpack.c.bf16 %v7485, %v7483
        %v7504 = vpack.c.bf16 %v7486, %v7484
        %v7505 = vpack.c.bf16 %v7489, %v7487
        %v7506 = vpack.c.bf16 %v7490, %v7488
        %s7507 = smul.u32 %s43, 64
        %s7508 = smul.addr %s7507, 4
        %s7509 = scalar_lea.vmem [#allocation11], %s7508
        %v7510 = vld [vmem:[%s7509] sm:$0xff]
        %v7511 = vld [vmem:[%s7509 + $0x8] sm:$0xff]
        %v7512 = vld [vmem:[%s7509 + $0x10] sm:$0xff]
        %v7513 = vld [vmem:[%s7509 + $0x18] sm:$0xff]
        %v7514 = vld [vmem:[%s7509 + $0x20] sm:$0xff]
        %v7515 = vld [vmem:[%s7509 + $0x28] sm:$0xff]
        %v7516 = vld [vmem:[%s7509 + $0x30] sm:$0xff]
        %v7517 = vld [vmem:[%s7509 + $0x38] sm:$0xff]
        %v7518 = vld [vmem:[%s7509 + $0x40] sm:$0xff]
        %v7519 = vld [vmem:[%s7509 + $0x48] sm:$0xff]
        %v7520 = vld [vmem:[%s7509 + $0x50] sm:$0xff]
        %v7521 = vld [vmem:[%s7509 + $0x58] sm:$0xff]
        %v7522 = vld [vmem:[%s7509 + $0x60] sm:$0xff]
        %v7523 = vld [vmem:[%s7509 + $0x68] sm:$0xff]
        %v7524 = vld [vmem:[%s7509 + $0x70] sm:$0xff]
        %v7525 = vld [vmem:[%s7509 + $0x78] sm:$0xff]
        %v7526 = vld [vmem:[%s7509 + $0x80] sm:$0xff]
        %v7527 = vld [vmem:[%s7509 + $0x88] sm:$0xff]
        %v7528 = vld [vmem:[%s7509 + $0x90] sm:$0xff]
        %v7529 = vld [vmem:[%s7509 + $0x98] sm:$0xff]
        %v7530 = vld [vmem:[%s7509 + $0xa0] sm:$0xff]
        %v7531 = vld [vmem:[%s7509 + $0xa8] sm:$0xff]
        %v7532 = vld [vmem:[%s7509 + $0xb0] sm:$0xff]
        %v7533 = vld [vmem:[%s7509 + $0xb8] sm:$0xff]
        %v7534 = vld [vmem:[%s7509 + $0xc0] sm:$0xff]
        %v7535 = vld [vmem:[%s7509 + $0xc8] sm:$0xff]
        %v7536 = vld [vmem:[%s7509 + $0xd0] sm:$0xff]
        %v7537 = vld [vmem:[%s7509 + $0xd8] sm:$0xff]
        %v7538 = vld [vmem:[%s7509 + $0xe0] sm:$0xff]
        %v7539 = vld [vmem:[%s7509 + $0xe8] sm:$0xff]
        %v7540 = vld [vmem:[%s7509 + $0xf0] sm:$0xff]
        %v7541 = vld [vmem:[%s7509 + $0xf8] sm:$0xff]
        %s7542 = scalar_lea.vmem %s11, %s7026
        %v7543 = vld [vmem:[%s7542] sm:$0x3]
        %v7545 = vlaneseq
        %v7546 = vshrl.u32 %v7545, 7
        %v7547 = vsub.s32 0, %v7546
        %v7548 = vrot.slane %v7543, %v7547
        %v7549 = vlaneseq
        %v7550 = vshrl.u32 %v7549, 7
        %v7551 = vsub.s32 1, %v7550
        %v7552 = vrot.slane %v7543, %v7551
        %v7587 = vunpack.c.l.b16 %v7510
        %v7588 = vunpack.c.h.b16 %v7510
        %v7589 = vunpack.c.l.b16 %v7511
        %v7590 = vunpack.c.h.b16 %v7511
        %v7591 = vunpack.c.l.b16 %v7512
        %v7592 = vunpack.c.h.b16 %v7512
        %v7593 = vunpack.c.l.b16 %v7513
        %v7594 = vunpack.c.h.b16 %v7513
        %v7595 = vunpack.c.l.b16 %v7514
        %v7596 = vunpack.c.h.b16 %v7514
        %v7597 = vunpack.c.l.b16 %v7515
        %v7598 = vunpack.c.h.b16 %v7515
        %v7599 = vunpack.c.l.b16 %v7516
        %v7600 = vunpack.c.h.b16 %v7516
        %v7601 = vunpack.c.l.b16 %v7517
        %v7602 = vunpack.c.h.b16 %v7517
        %v7603 = vunpack.c.l.b16 %v7518
        %v7604 = vunpack.c.h.b16 %v7518
        %v7605 = vunpack.c.l.b16 %v7519
        %v7606 = vunpack.c.h.b16 %v7519
        %v7607 = vunpack.c.l.b16 %v7520
        %v7608 = vunpack.c.h.b16 %v7520
        %v7609 = vunpack.c.l.b16 %v7521
        %v7610 = vunpack.c.h.b16 %v7521
        %v7611 = vunpack.c.l.b16 %v7522
        %v7612 = vunpack.c.h.b16 %v7522
        %v7613 = vunpack.c.l.b16 %v7523
        %v7614 = vunpack.c.h.b16 %v7523
        %v7615 = vunpack.c.l.b16 %v7524
        %v7616 = vunpack.c.h.b16 %v7524
        %v7617 = vunpack.c.l.b16 %v7525
        %v7618 = vunpack.c.h.b16 %v7525
        %v7619 = vunpack.c.l.b16 %v7526
        %v7620 = vunpack.c.h.b16 %v7526
        %v7621 = vunpack.c.l.b16 %v7527
        %v7622 = vunpack.c.h.b16 %v7527
        %v7623 = vunpack.c.l.b16 %v7528
        %v7624 = vunpack.c.h.b16 %v7528
        %v7625 = vunpack.c.l.b16 %v7529
        %v7626 = vunpack.c.h.b16 %v7529
        %v7627 = vunpack.c.l.b16 %v7530
        %v7628 = vunpack.c.h.b16 %v7530
        %v7629 = vunpack.c.l.b16 %v7531
        %v7630 = vunpack.c.h.b16 %v7531
        %v7631 = vunpack.c.l.b16 %v7532
        %v7632 = vunpack.c.h.b16 %v7532
        %v7633 = vunpack.c.l.b16 %v7533
        %v7634 = vunpack.c.h.b16 %v7533
        %v7635 = vunpack.c.l.b16 %v7534
        %v7636 = vunpack.c.h.b16 %v7534
        %v7637 = vunpack.c.l.b16 %v7535
        %v7638 = vunpack.c.h.b16 %v7535
        %v7639 = vunpack.c.l.b16 %v7536
        %v7640 = vunpack.c.h.b16 %v7536
        %v7641 = vunpack.c.l.b16 %v7537
        %v7642 = vunpack.c.h.b16 %v7537
        %v7643 = vunpack.c.l.b16 %v7538
        %v7644 = vunpack.c.h.b16 %v7538
        %v7645 = vunpack.c.l.b16 %v7539
        %v7646 = vunpack.c.h.b16 %v7539
        %v7647 = vunpack.c.l.b16 %v7540
        %v7648 = vunpack.c.h.b16 %v7540
        %v7649 = vunpack.c.l.b16 %v7541
        %v7650 = vunpack.c.h.b16 %v7541
        %v7651 = vpack.c.b16 %v7589, %v7587
        %v7652 = vpack.c.b16 %v7590, %v7588
        %v7653 = vpack.c.b16 %v7593, %v7591
        %v7654 = vpack.c.b16 %v7594, %v7592
        %v7655 = vpack.c.b16 %v7597, %v7595
        %v7656 = vpack.c.b16 %v7598, %v7596
        %v7657 = vpack.c.b16 %v7601, %v7599
        %v7658 = vpack.c.b16 %v7602, %v7600
        %v7659 = vpack.c.b16 %v7605, %v7603
        %v7660 = vpack.c.b16 %v7606, %v7604
        %v7661 = vpack.c.b16 %v7609, %v7607
        %v7662 = vpack.c.b16 %v7610, %v7608
        %v7663 = vpack.c.b16 %v7613, %v7611
        %v7664 = vpack.c.b16 %v7614, %v7612
        %v7665 = vpack.c.b16 %v7617, %v7615
        %v7666 = vpack.c.b16 %v7618, %v7616
        %v7667 = vpack.c.b16 %v7621, %v7619
        %v7668 = vpack.c.b16 %v7622, %v7620
        %v7669 = vpack.c.b16 %v7625, %v7623
        %v7670 = vpack.c.b16 %v7626, %v7624
        %v7671 = vpack.c.b16 %v7629, %v7627
        %v7672 = vpack.c.b16 %v7630, %v7628
        %v7673 = vpack.c.b16 %v7633, %v7631
        %v7674 = vpack.c.b16 %v7634, %v7632
        %v7675 = vpack.c.b16 %v7637, %v7635
        %v7676 = vpack.c.b16 %v7638, %v7636
        %v7677 = vpack.c.b16 %v7641, %v7639
        %v7678 = vpack.c.b16 %v7642, %v7640
        %v7679 = vpack.c.b16 %v7645, %v7643
        %v7680 = vpack.c.b16 %v7646, %v7644
        %v7681 = vpack.c.b16 %v7649, %v7647
        %v7682 = vpack.c.b16 %v7650, %v7648
        %7715 = vmatprep.subr.bf16.mxu0 %v7652
        %7716 = vmatpush1.bf16.msra.mxu0 %v7651
        %7717 = vmatprep.subr.bf16.mxu0 %v7654
        %7718 = vmatpush1.bf16.msra.mxu0 %v7653
        %7719 = vmatprep.subr.bf16.mxu0 %v7656
        %7720 = vmatpush1.bf16.msra.mxu0 %v7655
        %7721 = vmatprep.subr.bf16.mxu0 %v7658
        %7722 = vmatpush1.bf16.msra.mxu0 %v7657
        %7723 = vmatprep.subr.bf16.mxu0 %v7660
        %7724 = vmatpush1.bf16.msra.mxu0 %v7659
        %7725 = vmatprep.subr.bf16.mxu0 %v7662
        %7726 = vmatpush1.bf16.msra.mxu0 %v7661
        %7727 = vmatprep.subr.bf16.mxu0 %v7664
        %7728 = vmatpush1.bf16.msra.mxu0 %v7663
        %7729 = vmatprep.subr.bf16.mxu0 %v7666
        %7730 = vmatpush1.bf16.msra.mxu0 %v7665
        %7731 = vmatprep.subr.bf16.mxu0 %v7668
        %7732 = vmatpush1.bf16.msra.mxu0 %v7667
        %7733 = vmatprep.subr.bf16.mxu0 %v7670
        %7734 = vmatpush1.bf16.msra.mxu0 %v7669
        %7735 = vmatprep.subr.bf16.mxu0 %v7672
        %7736 = vmatpush1.bf16.msra.mxu0 %v7671
        %7737 = vmatprep.subr.bf16.mxu0 %v7674
        %7738 = vmatpush1.bf16.msra.mxu0 %v7673
        %7739 = vmatprep.subr.bf16.mxu0 %v7676
        %7740 = vmatpush1.bf16.msra.mxu0 %v7675
        %7741 = vmatprep.subr.bf16.mxu0 %v7678
        %7742 = vmatpush1.bf16.msra.mxu0 %v7677
        %7743 = vmatprep.subr.bf16.mxu0 %v7680
        %7744 = vmatpush1.bf16.msra.mxu0 %v7679
        %7745 = vmatprep.subr.bf16.mxu0 %v7682
        %7746 = vmatpush1.bf16.msra.mxu0 %v7681
        %7747 = vmatprep.mubr.bf16.mxu0 %v7492
        %7748 = vmatmul.mubr.bf16.gmra.mrb[0].mxu0 %v7491
        %v7749 = vpop.f32.mrb[0].mxu0
        %v7750 = vadd.f32 %v7548, %v7749
        %v7751 = vpop.f32.mrb[0].mxu0
        %v7752 = vadd.f32 %v7552, %v7751
        %v7753 = vpop.f32.mrb[0].mxu0
        %v7754 = vadd.f32 %v7548, %v7753
        %v7755 = vpop.f32.mrb[0].mxu0
        %v7756 = vadd.f32 %v7552, %v7755
        %7757 = vmatprep.mubr.bf16.mxu0 %v7494
        %7758 = vmatmul.mubr.bf16.gmra.mrb[0].mxu0 %v7493
        %v7759 = vpop.f32.mrb[0].mxu0
        %v7760 = vadd.f32 %v7548, %v7759
        %v7761 = vpop.f32.mrb[0].mxu0
        %v7762 = vadd.f32 %v7552, %v7761
        %v7763 = vpop.f32.mrb[0].mxu0
        %v7764 = vadd.f32 %v7548, %v7763
        %v7765 = vpop.f32.mrb[0].mxu0
        %v7766 = vadd.f32 %v7552, %v7765
        %7767 = vmatprep.mubr.bf16.mxu0 %v7496
        %7768 = vmatmul.mubr.bf16.gmra.mrb[0].mxu0 %v7495
        %v7769 = vpop.f32.mrb[0].mxu0
        %v7770 = vadd.f32 %v7548, %v7769
        %v7771 = vpop.f32.mrb[0].mxu0
        %v7772 = vadd.f32 %v7552, %v7771
        %v7773 = vpop.f32.mrb[0].mxu0
        %v7774 = vadd.f32 %v7548, %v7773
        %v7775 = vpop.f32.mrb[0].mxu0
        %v7776 = vadd.f32 %v7552, %v7775
        %7777 = vmatprep.mubr.bf16.mxu0 %v7498
        %7778 = vmatmul.mubr.bf16.gmra.mrb[0].mxu0 %v7497
        %v7779 = vpop.f32.mrb[0].mxu0
        %v7780 = vadd.f32 %v7548, %v7779
        %v7781 = vpop.f32.mrb[0].mxu0
        %v7782 = vadd.f32 %v7552, %v7781
        %v7783 = vpop.f32.mrb[0].mxu0
        %v7784 = vadd.f32 %v7548, %v7783
        %v7785 = vpop.f32.mrb[0].mxu0
        %v7786 = vadd.f32 %v7552, %v7785
        %7787 = vmatprep.mubr.bf16.mxu0 %v7500
        %7788 = vmatmul.mubr.bf16.gmra.mrb[0].mxu0 %v7499
        %v7789 = vpop.f32.mrb[0].mxu0
        %v7790 = vadd.f32 %v7548, %v7789
        %v7791 = vpop.f32.mrb[0].mxu0
        %v7792 = vadd.f32 %v7552, %v7791
        %v7793 = vpop.f32.mrb[0].mxu0
        %v7794 = vadd.f32 %v7548, %v7793
        %v7795 = vpop.f32.mrb[0].mxu0
        %v7796 = vadd.f32 %v7552, %v7795
        %7797 = vmatprep.mubr.bf16.mxu0 %v7502
        %7798 = vmatmul.mubr.bf16.gmra.mrb[0].mxu0 %v7501
        %v7799 = vpop.f32.mrb[0].mxu0
        %v7800 = vadd.f32 %v7548, %v7799
        %v7801 = vpop.f32.mrb[0].mxu0
        %v7802 = vadd.f32 %v7552, %v7801
        %v7803 = vpop.f32.mrb[0].mxu0
        %v7804 = vadd.f32 %v7548, %v7803
        %v7805 = vpop.f32.mrb[0].mxu0
        %v7806 = vadd.f32 %v7552, %v7805
        %7807 = vmatprep.mubr.bf16.mxu0 %v7504
        %7808 = vmatmul.mubr.bf16.gmra.mrb[0].mxu0 %v7503
        %v7809 = vpop.f32.mrb[0].mxu0
        %v7810 = vadd.f32 %v7548, %v7809
        %v7811 = vpop.f32.mrb[0].mxu0
        %v7812 = vadd.f32 %v7552, %v7811
        %v7813 = vpop.f32.mrb[0].mxu0
        %v7814 = vadd.f32 %v7548, %v7813
        %v7815 = vpop.f32.mrb[0].mxu0
        %v7816 = vadd.f32 %v7552, %v7815
        %7817 = vmatprep.mubr.bf16.mxu0 %v7506
        %7818 = vmatmul.mubr.bf16.gmra.mrb[0].mxu0 %v7505
        %v7819 = vpop.f32.mrb[0].mxu0
        %v7820 = vadd.f32 %v7548, %v7819
        %v7821 = vpop.f32.mrb[0].mxu0
        %v7822 = vadd.f32 %v7552, %v7821
        %v7823 = vpop.f32.mrb[0].mxu0
        %v7824 = vadd.f32 %v7548, %v7823
        %v7825 = vpop.f32.mrb[0].mxu0
        %v7826 = vadd.f32 %v7552, %v7825
        %7827 = vdwg.mxu0
        %v7828 = vmax.f32 %v7750, 0.0
        %v7829 = vmax.f32 %v7752, 0.0
        %v7830 = vmax.f32 %v7754, 0.0
        %v7831 = vmax.f32 %v7756, 0.0
        %v7832 = vmax.f32 %v7760, 0.0
        %v7833 = vmax.f32 %v7762, 0.0
        %v7834 = vmax.f32 %v7764, 0.0
        %v7835 = vmax.f32 %v7766, 0.0
        %v7836 = vmax.f32 %v7770, 0.0
        %v7837 = vmax.f32 %v7772, 0.0
        %v7838 = vmax.f32 %v7774, 0.0
        %v7839 = vmax.f32 %v7776, 0.0
        %v7840 = vmax.f32 %v7780, 0.0
        %v7841 = vmax.f32 %v7782, 0.0
        %v7842 = vmax.f32 %v7784, 0.0
        %v7843 = vmax.f32 %v7786, 0.0
        %v7844 = vmax.f32 %v7790, 0.0
        %v7845 = vmax.f32 %v7792, 0.0
        %v7846 = vmax.f32 %v7794, 0.0
        %v7847 = vmax.f32 %v7796, 0.0
        %v7848 = vmax.f32 %v7800, 0.0
        %v7849 = vmax.f32 %v7802, 0.0
        %v7850 = vmax.f32 %v7804, 0.0
        %v7851 = vmax.f32 %v7806, 0.0
        %v7852 = vmax.f32 %v7810, 0.0
        %v7853 = vmax.f32 %v7812, 0.0
        %v7854 = vmax.f32 %v7814, 0.0
        %v7855 = vmax.f32 %v7816, 0.0
        %v7856 = vmax.f32 %v7820, 0.0
        %v7857 = vmax.f32 %v7822, 0.0
        %v7858 = vmax.f32 %v7824, 0.0
        %v7859 = vmax.f32 %v7826, 0.0
        %v7860 = vpack.c.bf16 %v7830, %v7828
        %v7861 = vpack.c.bf16 %v7831, %v7829
        %v7862 = vpack.c.bf16 %v7834, %v7832
        %v7863 = vpack.c.bf16 %v7835, %v7833
        %v7864 = vpack.c.bf16 %v7838, %v7836
        %v7865 = vpack.c.bf16 %v7839, %v7837
        %v7866 = vpack.c.bf16 %v7842, %v7840
        %v7867 = vpack.c.bf16 %v7843, %v7841
        %v7868 = vpack.c.bf16 %v7846, %v7844
        %v7869 = vpack.c.bf16 %v7847, %v7845
        %v7870 = vpack.c.bf16 %v7850, %v7848
        %v7871 = vpack.c.bf16 %v7851, %v7849
        %v7872 = vpack.c.bf16 %v7854, %v7852
        %v7873 = vpack.c.bf16 %v7855, %v7853
        %v7874 = vpack.c.bf16 %v7858, %v7856
        %v7875 = vpack.c.bf16 %v7859, %v7857
        %s7876 = smul.addr %s7507, 4
        %s7877 = scalar_lea.vmem [#allocation13], %s7876
        %v7878 = vld [vmem:[%s7877] sm:$0xff]
        %v7879 = vld [vmem:[%s7877 + $0x8] sm:$0xff]
        %v7880 = vld [vmem:[%s7877 + $0x10] sm:$0xff]
        %v7881 = vld [vmem:[%s7877 + $0x18] sm:$0xff]
        %v7882 = vld [vmem:[%s7877 + $0x20] sm:$0xff]
        %v7883 = vld [vmem:[%s7877 + $0x28] sm:$0xff]
        %v7884 = vld [vmem:[%s7877 + $0x30] sm:$0xff]
        %v7885 = vld [vmem:[%s7877 + $0x38] sm:$0xff]
        %v7886 = vld [vmem:[%s7877 + $0x40] sm:$0xff]
        %v7887 = vld [vmem:[%s7877 + $0x48] sm:$0xff]
        %v7888 = vld [vmem:[%s7877 + $0x50] sm:$0xff]
        %v7889 = vld [vmem:[%s7877 + $0x58] sm:$0xff]
        %v7890 = vld [vmem:[%s7877 + $0x60] sm:$0xff]
        %v7891 = vld [vmem:[%s7877 + $0x68] sm:$0xff]
        %v7892 = vld [vmem:[%s7877 + $0x70] sm:$0xff]
        %v7893 = vld [vmem:[%s7877 + $0x78] sm:$0xff]
        %v7894 = vld [vmem:[%s7877 + $0x80] sm:$0xff]
        %v7895 = vld [vmem:[%s7877 + $0x88] sm:$0xff]
        %v7896 = vld [vmem:[%s7877 + $0x90] sm:$0xff]
        %v7897 = vld [vmem:[%s7877 + $0x98] sm:$0xff]
        %v7898 = vld [vmem:[%s7877 + $0xa0] sm:$0xff]
        %v7899 = vld [vmem:[%s7877 + $0xa8] sm:$0xff]
        %v7900 = vld [vmem:[%s7877 + $0xb0] sm:$0xff]
        %v7901 = vld [vmem:[%s7877 + $0xb8] sm:$0xff]
        %v7902 = vld [vmem:[%s7877 + $0xc0] sm:$0xff]
        %v7903 = vld [vmem:[%s7877 + $0xc8] sm:$0xff]
        %v7904 = vld [vmem:[%s7877 + $0xd0] sm:$0xff]
        %v7905 = vld [vmem:[%s7877 + $0xd8] sm:$0xff]
        %v7906 = vld [vmem:[%s7877 + $0xe0] sm:$0xff]
        %v7907 = vld [vmem:[%s7877 + $0xe8] sm:$0xff]
        %v7908 = vld [vmem:[%s7877 + $0xf0] sm:$0xff]
        %v7909 = vld [vmem:[%s7877 + $0xf8] sm:$0xff]
        %s7910 = scalar_lea.vmem %s13, %s7026
        %v7911 = vld [vmem:[%s7910] sm:$0x3]
        %v7913 = vlaneseq
        %v7914 = vshrl.u32 %v7913, 7
        %v7915 = vsub.s32 0, %v7914
        %v7916 = vrot.slane %v7911, %v7915
        %v7917 = vlaneseq
        %v7918 = vshrl.u32 %v7917, 7
        %v7919 = vsub.s32 1, %v7918
        %v7920 = vrot.slane %v7911, %v7919
        %v7955 = vunpack.c.l.b16 %v7878
        %v7956 = vunpack.c.h.b16 %v7878
        %v7957 = vunpack.c.l.b16 %v7879
        %v7958 = vunpack.c.h.b16 %v7879
        %v7959 = vunpack.c.l.b16 %v7880
        %v7960 = vunpack.c.h.b16 %v7880
        %v7961 = vunpack.c.l.b16 %v7881
        %v7962 = vunpack.c.h.b16 %v7881
        %v7963 = vunpack.c.l.b16 %v7882
        %v7964 = vunpack.c.h.b16 %v7882
        %v7965 = vunpack.c.l.b16 %v7883
        %v7966 = vunpack.c.h.b16 %v7883
        %v7967 = vunpack.c.l.b16 %v7884
        %v7968 = vunpack.c.h.b16 %v7884
        %v7969 = vunpack.c.l.b16 %v7885
        %v7970 = vunpack.c.h.b16 %v7885
        %v7971 = vunpack.c.l.b16 %v7886
        %v7972 = vunpack.c.h.b16 %v7886
        %v7973 = vunpack.c.l.b16 %v7887
        %v7974 = vunpack.c.h.b16 %v7887
        %v7975 = vunpack.c.l.b16 %v7888
        %v7976 = vunpack.c.h.b16 %v7888
        %v7977 = vunpack.c.l.b16 %v7889
        %v7978 = vunpack.c.h.b16 %v7889
        %v7979 = vunpack.c.l.b16 %v7890
        %v7980 = vunpack.c.h.b16 %v7890
        %v7981 = vunpack.c.l.b16 %v7891
        %v7982 = vunpack.c.h.b16 %v7891
        %v7983 = vunpack.c.l.b16 %v7892
        %v7984 = vunpack.c.h.b16 %v7892
        %v7985 = vunpack.c.l.b16 %v7893
        %v7986 = vunpack.c.h.b16 %v7893
        %v7987 = vunpack.c.l.b16 %v7894
        %v7988 = vunpack.c.h.b16 %v7894
        %v7989 = vunpack.c.l.b16 %v7895
        %v7990 = vunpack.c.h.b16 %v7895
        %v7991 = vunpack.c.l.b16 %v7896
        %v7992 = vunpack.c.h.b16 %v7896
        %v7993 = vunpack.c.l.b16 %v7897
        %v7994 = vunpack.c.h.b16 %v7897
        %v7995 = vunpack.c.l.b16 %v7898
        %v7996 = vunpack.c.h.b16 %v7898
        %v7997 = vunpack.c.l.b16 %v7899
        %v7998 = vunpack.c.h.b16 %v7899
        %v7999 = vunpack.c.l.b16 %v7900
        %v8000 = vunpack.c.h.b16 %v7900
        %v8001 = vunpack.c.l.b16 %v7901
        %v8002 = vunpack.c.h.b16 %v7901
        %v8003 = vunpack.c.l.b16 %v7902
        %v8004 = vunpack.c.h.b16 %v7902
        %v8005 = vunpack.c.l.b16 %v7903
        %v8006 = vunpack.c.h.b16 %v7903
        %v8007 = vunpack.c.l.b16 %v7904
        %v8008 = vunpack.c.h.b16 %v7904
        %v8009 = vunpack.c.l.b16 %v7905
        %v8010 = vunpack.c.h.b16 %v7905
        %v8011 = vunpack.c.l.b16 %v7906
        %v8012 = vunpack.c.h.b16 %v7906
        %v8013 = vunpack.c.l.b16 %v7907
        %v8014 = vunpack.c.h.b16 %v7907
        %v8015 = vunpack.c.l.b16 %v7908
        %v8016 = vunpack.c.h.b16 %v7908
        %v8017 = vunpack.c.l.b16 %v7909
        %v8018 = vunpack.c.h.b16 %v7909
        %v8019 = vpack.c.b16 %v7957, %v7955
        %v8020 = vpack.c.b16 %v7958, %v7956
        %v8021 = vpack.c.b16 %v7961, %v7959
        %v8022 = vpack.c.b16 %v7962, %v7960
        %v8023 = vpack.c.b16 %v7965, %v7963
        %v8024 = vpack.c.b16 %v7966, %v7964
        %v8025 = vpack.c.b16 %v7969, %v7967
        %v8026 = vpack.c.b16 %v7970, %v7968
        %v8027 = vpack.c.b16 %v7973, %v7971
        %v8028 = vpack.c.b16 %v7974, %v7972
        %v8029 = vpack.c.b16 %v7977, %v7975
        %v8030 = vpack.c.b16 %v7978, %v7976
        %v8031 = vpack.c.b16 %v7981, %v7979
        %v8032 = vpack.c.b16 %v7982, %v7980
        %v8033 = vpack.c.b16 %v7985, %v7983
        %v8034 = vpack.c.b16 %v7986, %v7984
        %v8035 = vpack.c.b16 %v7989, %v7987
        %v8036 = vpack.c.b16 %v7990, %v7988
        %v8037 = vpack.c.b16 %v7993, %v7991
        %v8038 = vpack.c.b16 %v7994, %v7992
        %v8039 = vpack.c.b16 %v7997, %v7995
        %v8040 = vpack.c.b16 %v7998, %v7996
        %v8041 = vpack.c.b16 %v8001, %v7999
        %v8042 = vpack.c.b16 %v8002, %v8000
        %v8043 = vpack.c.b16 %v8005, %v8003
        %v8044 = vpack.c.b16 %v8006, %v8004
        %v8045 = vpack.c.b16 %v8009, %v8007
        %v8046 = vpack.c.b16 %v8010, %v8008
        %v8047 = vpack.c.b16 %v8013, %v8011
        %v8048 = vpack.c.b16 %v8014, %v8012
        %v8049 = vpack.c.b16 %v8017, %v8015
        %v8050 = vpack.c.b16 %v8018, %v8016
        %8083 = vmatprep.subr.bf16.mxu0 %v8020
        %8084 = vmatpush1.bf16.msra.mxu0 %v8019
        %8085 = vmatprep.subr.bf16.mxu0 %v8022
        %8086 = vmatpush1.bf16.msra.mxu0 %v8021
        %8087 = vmatprep.subr.bf16.mxu0 %v8024
        %8088 = vmatpush1.bf16.msra.mxu0 %v8023
        %8089 = vmatprep.subr.bf16.mxu0 %v8026
        %8090 = vmatpush1.bf16.msra.mxu0 %v8025
        %8091 = vmatprep.subr.bf16.mxu0 %v8028
        %8092 = vmatpush1.bf16.msra.mxu0 %v8027
        %8093 = vmatprep.subr.bf16.mxu0 %v8030
        %8094 = vmatpush1.bf16.msra.mxu0 %v8029
        %8095 = vmatprep.subr.bf16.mxu0 %v8032
        %8096 = vmatpush1.bf16.msra.mxu0 %v8031
        %8097 = vmatprep.subr.bf16.mxu0 %v8034
        %8098 = vmatpush1.bf16.msra.mxu0 %v8033
        %8099 = vmatprep.subr.bf16.mxu0 %v8036
        %8100 = vmatpush1.bf16.msra.mxu0 %v8035
        %8101 = vmatprep.subr.bf16.mxu0 %v8038
        %8102 = vmatpush1.bf16.msra.mxu0 %v8037
        %8103 = vmatprep.subr.bf16.mxu0 %v8040
        %8104 = vmatpush1.bf16.msra.mxu0 %v8039
        %8105 = vmatprep.subr.bf16.mxu0 %v8042
        %8106 = vmatpush1.bf16.msra.mxu0 %v8041
        %8107 = vmatprep.subr.bf16.mxu0 %v8044
        %8108 = vmatpush1.bf16.msra.mxu0 %v8043
        %8109 = vmatprep.subr.bf16.mxu0 %v8046
        %8110 = vmatpush1.bf16.msra.mxu0 %v8045
        %8111 = vmatprep.subr.bf16.mxu0 %v8048
        %8112 = vmatpush1.bf16.msra.mxu0 %v8047
        %8113 = vmatprep.subr.bf16.mxu0 %v8050
        %8114 = vmatpush1.bf16.msra.mxu0 %v8049
        %8115 = vmatprep.mubr.bf16.mxu0 %v7861
        %8116 = vmatmul.mubr.bf16.gmra.mrb[0].mxu0 %v7860
        %v8117 = vpop.f32.mrb[0].mxu0
        %v8118 = vadd.f32 %v7916, %v8117
        %v8119 = vpop.f32.mrb[0].mxu0
        %v8120 = vadd.f32 %v7920, %v8119
        %v8121 = vpop.f32.mrb[0].mxu0
        %v8122 = vadd.f32 %v7916, %v8121
        %v8123 = vpop.f32.mrb[0].mxu0
        %v8124 = vadd.f32 %v7920, %v8123
        %8125 = vmatprep.mubr.bf16.mxu0 %v7863
        %8126 = vmatmul.mubr.bf16.gmra.mrb[0].mxu0 %v7862
        %v8127 = vpop.f32.mrb[0].mxu0
        %v8128 = vadd.f32 %v7916, %v8127
        %v8129 = vpop.f32.mrb[0].mxu0
        %v8130 = vadd.f32 %v7920, %v8129
        %v8131 = vpop.f32.mrb[0].mxu0
        %v8132 = vadd.f32 %v7916, %v8131
        %v8133 = vpop.f32.mrb[0].mxu0
        %v8134 = vadd.f32 %v7920, %v8133
        %8135 = vmatprep.mubr.bf16.mxu0 %v7865
        %8136 = vmatmul.mubr.bf16.gmra.mrb[0].mxu0 %v7864
        %v8137 = vpop.f32.mrb[0].mxu0
        %v8138 = vadd.f32 %v7916, %v8137
        %v8139 = vpop.f32.mrb[0].mxu0
        %v8140 = vadd.f32 %v7920, %v8139
        %v8141 = vpop.f32.mrb[0].mxu0
        %v8142 = vadd.f32 %v7916, %v8141
        %v8143 = vpop.f32.mrb[0].mxu0
        %v8144 = vadd.f32 %v7920, %v8143
        %8145 = vmatprep.mubr.bf16.mxu0 %v7867
        %8146 = vmatmul.mubr.bf16.gmra.mrb[0].mxu0 %v7866
        %v8147 = vpop.f32.mrb[0].mxu0
        %v8148 = vadd.f32 %v7916, %v8147
        %v8149 = vpop.f32.mrb[0].mxu0
        %v8150 = vadd.f32 %v7920, %v8149
        %v8151 = vpop.f32.mrb[0].mxu0
        %v8152 = vadd.f32 %v7916, %v8151
        %v8153 = vpop.f32.mrb[0].mxu0
        %v8154 = vadd.f32 %v7920, %v8153
        %8155 = vmatprep.mubr.bf16.mxu0 %v7869
        %8156 = vmatmul.mubr.bf16.gmra.mrb[0].mxu0 %v7868
        %v8157 = vpop.f32.mrb[0].mxu0
        %v8158 = vadd.f32 %v7916, %v8157
        %v8159 = vpop.f32.mrb[0].mxu0
        %v8160 = vadd.f32 %v7920, %v8159
        %v8161 = vpop.f32.mrb[0].mxu0
        %v8162 = vadd.f32 %v7916, %v8161
        %v8163 = vpop.f32.mrb[0].mxu0
        %v8164 = vadd.f32 %v7920, %v8163
        %8165 = vmatprep.mubr.bf16.mxu0 %v7871
        %8166 = vmatmul.mubr.bf16.gmra.mrb[0].mxu0 %v7870
        %v8167 = vpop.f32.mrb[0].mxu0
        %v8168 = vadd.f32 %v7916, %v8167
        %v8169 = vpop.f32.mrb[0].mxu0
        %v8170 = vadd.f32 %v7920, %v8169
        %v8171 = vpop.f32.mrb[0].mxu0
        %v8172 = vadd.f32 %v7916, %v8171
        %v8173 = vpop.f32.mrb[0].mxu0
        %v8174 = vadd.f32 %v7920, %v8173
        %8175 = vmatprep.mubr.bf16.mxu0 %v7873
        %8176 = vmatmul.mubr.bf16.gmra.mrb[0].mxu0 %v7872
        %v8177 = vpop.f32.mrb[0].mxu0
        %v8178 = vadd.f32 %v7916, %v8177
        %v8179 = vpop.f32.mrb[0].mxu0
        %v8180 = vadd.f32 %v7920, %v8179
        %v8181 = vpop.f32.mrb[0].mxu0
        %v8182 = vadd.f32 %v7916, %v8181
        %v8183 = vpop.f32.mrb[0].mxu0
        %v8184 = vadd.f32 %v7920, %v8183
        %8185 = vmatprep.mubr.bf16.mxu0 %v7875
        %8186 = vmatmul.mubr.bf16.gmra.mrb[0].mxu0 %v7874
        %v8187 = vpop.f32.mrb[0].mxu0
        %v8188 = vadd.f32 %v7916, %v8187
        %v8189 = vpop.f32.mrb[0].mxu0
        %v8190 = vadd.f32 %v7920, %v8189
        %v8191 = vpop.f32.mrb[0].mxu0
        %v8192 = vadd.f32 %v7916, %v8191
        %v8193 = vpop.f32.mrb[0].mxu0
        %v8194 = vadd.f32 %v7920, %v8193
        %8195 = vdwg.mxu0
        %v8196 = vadd.f32 %v8118, %v7459
        %v8197 = vadd.f32 %v8120, %v7460
        %v8198 = vadd.f32 %v8122, %v7461
        %v8199 = vadd.f32 %v8124, %v7462
        %v8200 = vadd.f32 %v8128, %v7463
        %v8201 = vadd.f32 %v8130, %v7464
        %v8202 = vadd.f32 %v8132, %v7465
        %v8203 = vadd.f32 %v8134, %v7466
        %v8204 = vadd.f32 %v8138, %v7467
        %v8205 = vadd.f32 %v8140, %v7468
        %v8206 = vadd.f32 %v8142, %v7469
        %v8207 = vadd.f32 %v8144, %v7470
        %v8208 = vadd.f32 %v8148, %v7471
        %v8209 = vadd.f32 %v8150, %v7472
        %v8210 = vadd.f32 %v8152, %v7473
        %v8211 = vadd.f32 %v8154, %v7474
        %v8212 = vadd.f32 %v8158, %v7475
        %v8213 = vadd.f32 %v8160, %v7476
        %v8214 = vadd.f32 %v8162, %v7477
        %v8215 = vadd.f32 %v8164, %v7478
        %v8216 = vadd.f32 %v8168, %v7479
        %v8217 = vadd.f32 %v8170, %v7480
        %v8218 = vadd.f32 %v8172, %v7481
        %v8219 = vadd.f32 %v8174, %v7482
        %v8220 = vadd.f32 %v8178, %v7483
        %v8221 = vadd.f32 %v8180, %v7484
        %v8222 = vadd.f32 %v8182, %v7485
        %v8223 = vadd.f32 %v8184, %v7486
        %v8224 = vadd.f32 %v8188, %v7487
        %v8225 = vadd.f32 %v8190, %v7488
        %v8226 = vadd.f32 %v8192, %v7489
        %v8227 = vadd.f32 %v8194, %v7490
        %s8228 = scalar_lea.vmem %s16, %s7026
        %v8229 = vld [vmem:[%s8228] sm:$0x3]
        %s8230 = scalar_lea.vmem %s17, %s7026
        %v8231 = vld [vmem:[%s8230] sm:$0x3]
        %v8232 = vadd.f32 %v8196, %v8197
        %8233 = vadd.xlane.f32.xlu0 %v8232
        %v8234 = vpop.xlane.xlu0 %8233
        %v8235 = vadd.f32 %v8198, %v8199
        %8236 = vadd.xlane.f32.xlu0 %v8235
        %v8237 = vpop.xlane.xlu0 %8236
        %v8238 = vadd.f32 %v8200, %v8201
        %8239 = vadd.xlane.f32.xlu0 %v8238
        %v8240 = vpop.xlane.xlu0 %8239
        %v8241 = vadd.f32 %v8202, %v8203
        %8242 = vadd.xlane.f32.xlu0 %v8241
        %v8243 = vpop.xlane.xlu0 %8242
        %v8244 = vadd.f32 %v8204, %v8205
        %8245 = vadd.xlane.f32.xlu0 %v8244
        %v8246 = vpop.xlane.xlu0 %8245
        %v8247 = vadd.f32 %v8206, %v8207
        %8248 = vadd.xlane.f32.xlu0 %v8247
        %v8249 = vpop.xlane.xlu0 %8248
        %v8250 = vadd.f32 %v8208, %v8209
        %8251 = vadd.xlane.f32.xlu0 %v8250
        %v8252 = vpop.xlane.xlu0 %8251
        %v8253 = vadd.f32 %v8210, %v8211
        %8254 = vadd.xlane.f32.xlu0 %v8253
        %v8255 = vpop.xlane.xlu0 %8254
        %v8256 = vadd.f32 %v8212, %v8213
        %8257 = vadd.xlane.f32.xlu0 %v8256
        %v8258 = vpop.xlane.xlu0 %8257
        %v8259 = vadd.f32 %v8214, %v8215
        %8260 = vadd.xlane.f32.xlu0 %v8259
        %v8261 = vpop.xlane.xlu0 %8260
        %v8262 = vadd.f32 %v8216, %v8217
        %8263 = vadd.xlane.f32.xlu0 %v8262
        %v8264 = vpop.xlane.xlu0 %8263
        %v8265 = vadd.f32 %v8218, %v8219
        %8266 = vadd.xlane.f32.xlu0 %v8265
        %v8267 = vpop.xlane.xlu0 %8266
        %v8268 = vadd.f32 %v8220, %v8221
        %8269 = vadd.xlane.f32.xlu0 %v8268
        %v8270 = vpop.xlane.xlu0 %8269
        %v8271 = vadd.f32 %v8222, %v8223
        %8272 = vadd.xlane.f32.xlu0 %v8271
        %v8273 = vpop.xlane.xlu0 %8272
        %v8274 = vadd.f32 %v8224, %v8225
        %8275 = vadd.xlane.f32.xlu0 %v8274
        %v8276 = vpop.xlane.xlu0 %8275
        %v8277 = vadd.f32 %v8226, %v8227
        %8278 = vadd.xlane.f32.xlu0 %v8277
        %v8279 = vpop.xlane.xlu0 %8278
        %v8280 = vmul.f32 %v8234, 0.005
        %v8281 = vmul.f32 %v8237, 0.005
        %v8282 = vmul.f32 %v8240, 0.005
        %v8283 = vmul.f32 %v8243, 0.005
        %v8284 = vmul.f32 %v8246, 0.005
        %v8285 = vmul.f32 %v8249, 0.005
        %v8286 = vmul.f32 %v8252, 0.005
        %v8287 = vmul.f32 %v8255, 0.005
        %v8288 = vmul.f32 %v8258, 0.005
        %v8289 = vmul.f32 %v8261, 0.005
        %v8290 = vmul.f32 %v8264, 0.005
        %v8291 = vmul.f32 %v8267, 0.005
        %v8292 = vmul.f32 %v8270, 0.005
        %v8293 = vmul.f32 %v8273, 0.005
        %v8294 = vmul.f32 %v8276, 0.005
        %v8295 = vmul.f32 %v8279, 0.005
        %v8296 = vsub.f32 %v8196, %v8280
        %v8297 = vsub.f32 %v8197, %v8280
        %v8298 = vsub.f32 %v8198, %v8281
        %v8299 = vsub.f32 %v8199, %v8281
        %v8300 = vsub.f32 %v8200, %v8282
        %v8301 = vsub.f32 %v8201, %v8282
        %v8302 = vsub.f32 %v8202, %v8283
        %v8303 = vsub.f32 %v8203, %v8283
        %v8304 = vsub.f32 %v8204, %v8284
        %v8305 = vsub.f32 %v8205, %v8284
        %v8306 = vsub.f32 %v8206, %v8285
        %v8307 = vsub.f32 %v8207, %v8285
        %v8308 = vsub.f32 %v8208, %v8286
        %v8309 = vsub.f32 %v8209, %v8286
        %v8310 = vsub.f32 %v8210, %v8287
        %v8311 = vsub.f32 %v8211, %v8287
        %v8312 = vsub.f32 %v8212, %v8288
        %v8313 = vsub.f32 %v8213, %v8288
        %v8314 = vsub.f32 %v8214, %v8289
        %v8315 = vsub.f32 %v8215, %v8289
        %v8316 = vsub.f32 %v8216, %v8290
        %v8317 = vsub.f32 %v8217, %v8290
        %v8318 = vsub.f32 %v8218, %v8291
        %v8319 = vsub.f32 %v8219, %v8291
        %v8320 = vsub.f32 %v8220, %v8292
        %v8321 = vsub.f32 %v8221, %v8292
        %v8322 = vsub.f32 %v8222, %v8293
        %v8323 = vsub.f32 %v8223, %v8293
        %v8324 = vsub.f32 %v8224, %v8294
        %v8325 = vsub.f32 %v8225, %v8294
        %v8326 = vsub.f32 %v8226, %v8295
        %v8327 = vsub.f32 %v8227, %v8295
        %v8328 = vsel %vm7211, %v8296, 0.0
        %v8329 = vsel %vm7212, %v8297, 0.0
        %v8330 = vsel %vm7211, %v8298, 0.0
        %v8331 = vsel %vm7212, %v8299, 0.0
        %v8332 = vsel %vm7211, %v8300, 0.0
        %v8333 = vsel %vm7212, %v8301, 0.0
        %v8334 = vsel %vm7211, %v8302, 0.0
        %v8335 = vsel %vm7212, %v8303, 0.0
        %v8336 = vsel %vm7211, %v8304, 0.0
        %v8337 = vsel %vm7212, %v8305, 0.0
        %v8338 = vsel %vm7211, %v8306, 0.0
        %v8339 = vsel %vm7212, %v8307, 0.0
        %v8340 = vsel %vm7211, %v8308, 0.0
        %v8341 = vsel %vm7212, %v8309, 0.0
        %v8342 = vsel %vm7211, %v8310, 0.0
        %v8343 = vsel %vm7212, %v8311, 0.0
        %v8344 = vsel %vm7211, %v8312, 0.0
        %v8345 = vsel %vm7212, %v8313, 0.0
        %v8346 = vsel %vm7211, %v8314, 0.0
        %v8347 = vsel %vm7212, %v8315, 0.0
        %v8348 = vsel %vm7211, %v8316, 0.0
        %v8349 = vsel %vm7212, %v8317, 0.0
        %v8350 = vsel %vm7211, %v8318, 0.0
        %v8351 = vsel %vm7212, %v8319, 0.0
        %v8352 = vsel %vm7211, %v8320, 0.0
        %v8353 = vsel %vm7212, %v8321, 0.0
        %v8354 = vsel %vm7211, %v8322, 0.0
        %v8355 = vsel %vm7212, %v8323, 0.0
        %v8356 = vsel %vm7211, %v8324, 0.0
        %v8357 = vsel %vm7212, %v8325, 0.0
        %v8358 = vsel %vm7211, %v8326, 0.0
        %v8359 = vsel %vm7212, %v8327, 0.0
        %v8360 = vmul.f32 %v8328, %v8328
        %v8361 = vmul.f32 %v8329, %v8329
        %v8362 = vmul.f32 %v8330, %v8330
        %v8363 = vmul.f32 %v8331, %v8331
        %v8364 = vmul.f32 %v8332, %v8332
        %v8365 = vmul.f32 %v8333, %v8333
        %v8366 = vmul.f32 %v8334, %v8334
        %v8367 = vmul.f32 %v8335, %v8335
        %v8368 = vmul.f32 %v8336, %v8336
        %v8369 = vmul.f32 %v8337, %v8337
        %v8370 = vmul.f32 %v8338, %v8338
        %v8371 = vmul.f32 %v8339, %v8339
        %v8372 = vmul.f32 %v8340, %v8340
        %v8373 = vmul.f32 %v8341, %v8341
        %v8374 = vmul.f32 %v8342, %v8342
        %v8375 = vmul.f32 %v8343, %v8343
        %v8376 = vmul.f32 %v8344, %v8344
        %v8377 = vmul.f32 %v8345, %v8345
        %v8378 = vmul.f32 %v8346, %v8346
        %v8379 = vmul.f32 %v8347, %v8347
        %v8380 = vmul.f32 %v8348, %v8348
        %v8381 = vmul.f32 %v8349, %v8349
        %v8382 = vmul.f32 %v8350, %v8350
        %v8383 = vmul.f32 %v8351, %v8351
        %v8384 = vmul.f32 %v8352, %v8352
        %v8385 = vmul.f32 %v8353, %v8353
        %v8386 = vmul.f32 %v8354, %v8354
        %v8387 = vmul.f32 %v8355, %v8355
        %v8388 = vmul.f32 %v8356, %v8356
        %v8389 = vmul.f32 %v8357, %v8357
        %v8390 = vmul.f32 %v8358, %v8358
        %v8391 = vmul.f32 %v8359, %v8359
        %v8392 = vadd.f32 %v8360, %v8361
        %8393 = vadd.xlane.f32.xlu0 %v8392
        %v8394 = vpop.xlane.xlu0 %8393
        %v8395 = vadd.f32 %v8362, %v8363
        %8396 = vadd.xlane.f32.xlu0 %v8395
        %v8397 = vpop.xlane.xlu0 %8396
        %v8398 = vadd.f32 %v8364, %v8365
        %8399 = vadd.xlane.f32.xlu0 %v8398
        %v8400 = vpop.xlane.xlu0 %8399
        %v8401 = vadd.f32 %v8366, %v8367
        %8402 = vadd.xlane.f32.xlu0 %v8401
        %v8403 = vpop.xlane.xlu0 %8402
        %v8404 = vadd.f32 %v8368, %v8369
        %8405 = vadd.xlane.f32.xlu0 %v8404
        %v8406 = vpop.xlane.xlu0 %8405
        %v8407 = vadd.f32 %v8370, %v8371
        %8408 = vadd.xlane.f32.xlu0 %v8407
        %v8409 = vpop.xlane.xlu0 %8408
        %v8410 = vadd.f32 %v8372, %v8373
        %8411 = vadd.xlane.f32.xlu0 %v8410
        %v8412 = vpop.xlane.xlu0 %8411
        %v8413 = vadd.f32 %v8374, %v8375
        %8414 = vadd.xlane.f32.xlu0 %v8413
        %v8415 = vpop.xlane.xlu0 %8414
        %v8416 = vadd.f32 %v8376, %v8377
        %8417 = vadd.xlane.f32.xlu0 %v8416
        %v8418 = vpop.xlane.xlu0 %8417
        %v8419 = vadd.f32 %v8378, %v8379
        %8420 = vadd.xlane.f32.xlu0 %v8419
        %v8421 = vpop.xlane.xlu0 %8420
        %v8422 = vadd.f32 %v8380, %v8381
        %8423 = vadd.xlane.f32.xlu0 %v8422
        %v8424 = vpop.xlane.xlu0 %8423
        %v8425 = vadd.f32 %v8382, %v8383
        %8426 = vadd.xlane.f32.xlu0 %v8425
        %v8427 = vpop.xlane.xlu0 %8426
        %v8428 = vadd.f32 %v8384, %v8385
        %8429 = vadd.xlane.f32.xlu0 %v8428
        %v8430 = vpop.xlane.xlu0 %8429
        %v8431 = vadd.f32 %v8386, %v8387
        %8432 = vadd.xlane.f32.xlu0 %v8431
        %v8433 = vpop.xlane.xlu0 %8432
        %v8434 = vadd.f32 %v8388, %v8389
        %8435 = vadd.xlane.f32.xlu0 %v8434
        %v8436 = vpop.xlane.xlu0 %8435
        %v8437 = vadd.f32 %v8390, %v8391
        %8438 = vadd.xlane.f32.xlu0 %v8437
        %v8439 = vpop.xlane.xlu0 %8438
        %v8440 = vmul.f32 %v8394, 0.005
        %v8441 = vmul.f32 %v8397, 0.005
        %v8442 = vmul.f32 %v8400, 0.005
        %v8443 = vmul.f32 %v8403, 0.005
        %v8444 = vmul.f32 %v8406, 0.005
        %v8445 = vmul.f32 %v8409, 0.005
        %v8446 = vmul.f32 %v8412, 0.005
        %v8447 = vmul.f32 %v8415, 0.005
        %v8448 = vmul.f32 %v8418, 0.005
        %v8449 = vmul.f32 %v8421, 0.005
        %v8450 = vmul.f32 %v8424, 0.005
        %v8451 = vmul.f32 %v8427, 0.005
        %v8452 = vmul.f32 %v8430, 0.005
        %v8453 = vmul.f32 %v8433, 0.005
        %v8454 = vmul.f32 %v8436, 0.005
        %v8455 = vmul.f32 %v8439, 0.005
        %v8456 = vadd.f32 %v8440, 1e-05
        %v8457 = vadd.f32 %v8441, 1e-05
        %v8458 = vadd.f32 %v8442, 1e-05
        %v8459 = vadd.f32 %v8443, 1e-05
        %v8460 = vadd.f32 %v8444, 1e-05
        %v8461 = vadd.f32 %v8445, 1e-05
        %v8462 = vadd.f32 %v8446, 1e-05
        %v8463 = vadd.f32 %v8447, 1e-05
        %v8464 = vadd.f32 %v8448, 1e-05
        %v8465 = vadd.f32 %v8449, 1e-05
        %v8466 = vadd.f32 %v8450, 1e-05
        %v8467 = vadd.f32 %v8451, 1e-05
        %v8468 = vadd.f32 %v8452, 1e-05
        %v8469 = vadd.f32 %v8453, 1e-05
        %v8470 = vadd.f32 %v8454, 1e-05
        %v8471 = vadd.f32 %v8455, 1e-05
        %v8472 = vrsqrt.pop %v8456
        %v8473 = vrsqrt.pop %v8457
        %v8474 = vrsqrt.pop %v8458
        %v8475 = vrsqrt.pop %v8459
        %v8476 = vrsqrt.pop %v8460
        %v8477 = vrsqrt.pop %v8461
        %v8478 = vrsqrt.pop %v8462
        %v8479 = vrsqrt.pop %v8463
        %v8480 = vrsqrt.pop %v8464
        %v8481 = vrsqrt.pop %v8465
        %v8482 = vrsqrt.pop %v8466
        %v8483 = vrsqrt.pop %v8467
        %v8484 = vrsqrt.pop %v8468
        %v8485 = vrsqrt.pop %v8469
        %v8486 = vrsqrt.pop %v8470
        %v8487 = vrsqrt.pop %v8471
        %v8488 = vmul.f32 %v8328, %v8472
        %v8489 = vmul.f32 %v8329, %v8472
        %v8490 = vmul.f32 %v8330, %v8473
        %v8491 = vmul.f32 %v8331, %v8473
        %v8492 = vmul.f32 %v8332, %v8474
        %v8493 = vmul.f32 %v8333, %v8474
        %v8494 = vmul.f32 %v8334, %v8475
        %v8495 = vmul.f32 %v8335, %v8475
        %v8496 = vmul.f32 %v8336, %v8476
        %v8497 = vmul.f32 %v8337, %v8476
        %v8498 = vmul.f32 %v8338, %v8477
        %v8499 = vmul.f32 %v8339, %v8477
        %v8500 = vmul.f32 %v8340, %v8478
        %v8501 = vmul.f32 %v8341, %v8478
        %v8502 = vmul.f32 %v8342, %v8479
        %v8503 = vmul.f32 %v8343, %v8479
        %v8504 = vmul.f32 %v8344, %v8480
        %v8505 = vmul.f32 %v8345, %v8480
        %v8506 = vmul.f32 %v8346, %v8481
        %v8507 = vmul.f32 %v8347, %v8481
        %v8508 = vmul.f32 %v8348, %v8482
        %v8509 = vmul.f32 %v8349, %v8482
        %v8510 = vmul.f32 %v8350, %v8483
        %v8511 = vmul.f32 %v8351, %v8483
        %v8512 = vmul.f32 %v8352, %v8484
        %v8513 = vmul.f32 %v8353, %v8484
        %v8514 = vmul.f32 %v8354, %v8485
        %v8515 = vmul.f32 %v8355, %v8485
        %v8516 = vmul.f32 %v8356, %v8486
        %v8517 = vmul.f32 %v8357, %v8486
        %v8518 = vmul.f32 %v8358, %v8487
        %v8519 = vmul.f32 %v8359, %v8487
        %v8521 = vlaneseq
        %v8522 = vshrl.u32 %v8521, 7
        %v8523 = vsub.s32 0, %v8522
        %v8524 = vrot.slane %v8229, %v8523
        %v8525 = vlaneseq
        %v8526 = vshrl.u32 %v8525, 7
        %v8527 = vsub.s32 1, %v8526
        %v8528 = vrot.slane %v8229, %v8527
        %v8531 = vmul.f32 %v8488, %v8524
        %v8532 = vmul.f32 %v8489, %v8528
        %v8533 = vmul.f32 %v8490, %v8524
        %v8534 = vmul.f32 %v8491, %v8528
        %v8535 = vmul.f32 %v8492, %v8524
        %v8536 = vmul.f32 %v8493, %v8528
        %v8537 = vmul.f32 %v8494, %v8524
        %v8538 = vmul.f32 %v8495, %v8528
        %v8539 = vmul.f32 %v8496, %v8524
        %v8540 = vmul.f32 %v8497, %v8528
        %v8541 = vmul.f32 %v8498, %v8524
        %v8542 = vmul.f32 %v8499, %v8528
        %v8543 = vmul.f32 %v8500, %v8524
        %v8544 = vmul.f32 %v8501, %v8528
        %v8545 = vmul.f32 %v8502, %v8524
        %v8546 = vmul.f32 %v8503, %v8528
        %v8547 = vmul.f32 %v8504, %v8524
        %v8548 = vmul.f32 %v8505, %v8528
        %v8549 = vmul.f32 %v8506, %v8524
        %v8550 = vmul.f32 %v8507, %v8528
        %v8551 = vmul.f32 %v8508, %v8524
        %v8552 = vmul.f32 %v8509, %v8528
        %v8553 = vmul.f32 %v8510, %v8524
        %v8554 = vmul.f32 %v8511, %v8528
        %v8555 = vmul.f32 %v8512, %v8524
        %v8556 = vmul.f32 %v8513, %v8528
        %v8557 = vmul.f32 %v8514, %v8524
        %v8558 = vmul.f32 %v8515, %v8528
        %v8559 = vmul.f32 %v8516, %v8524
        %v8560 = vmul.f32 %v8517, %v8528
        %v8561 = vmul.f32 %v8518, %v8524
        %v8562 = vmul.f32 %v8519, %v8528
        %v8564 = vlaneseq
        %v8565 = vshrl.u32 %v8564, 7
        %v8566 = vsub.s32 0, %v8565
        %v8567 = vrot.slane %v8231, %v8566
        %v8568 = vlaneseq
        %v8569 = vshrl.u32 %v8568, 7
        %v8570 = vsub.s32 1, %v8569
        %v8571 = vrot.slane %v8231, %v8570
        %v8574 = vadd.f32 %v8531, %v8567
        %v8575 = vadd.f32 %v8532, %v8571
        %v8576 = vadd.f32 %v8533, %v8567
        %v8577 = vadd.f32 %v8534, %v8571
        %v8578 = vadd.f32 %v8535, %v8567
        %v8579 = vadd.f32 %v8536, %v8571
        %v8580 = vadd.f32 %v8537, %v8567
        %v8581 = vadd.f32 %v8538, %v8571
        %v8582 = vadd.f32 %v8539, %v8567
        %v8583 = vadd.f32 %v8540, %v8571
        %v8584 = vadd.f32 %v8541, %v8567
        %v8585 = vadd.f32 %v8542, %v8571
        %v8586 = vadd.f32 %v8543, %v8567
        %v8587 = vadd.f32 %v8544, %v8571
        %v8588 = vadd.f32 %v8545, %v8567
        %v8589 = vadd.f32 %v8546, %v8571
        %v8590 = vadd.f32 %v8547, %v8567
        %v8591 = vadd.f32 %v8548, %v8571
        %v8592 = vadd.f32 %v8549, %v8567
        %v8593 = vadd.f32 %v8550, %v8571
        %v8594 = vadd.f32 %v8551, %v8567
        %v8595 = vadd.f32 %v8552, %v8571
        %v8596 = vadd.f32 %v8553, %v8567
        %v8597 = vadd.f32 %v8554, %v8571
        %v8598 = vadd.f32 %v8555, %v8567
        %v8599 = vadd.f32 %v8556, %v8571
        %v8600 = vadd.f32 %v8557, %v8567
        %v8601 = vadd.f32 %v8558, %v8571
        %v8602 = vadd.f32 %v8559, %v8567
        %v8603 = vadd.f32 %v8560, %v8571
        %v8604 = vadd.f32 %v8561, %v8567
        %v8605 = vadd.f32 %v8562, %v8571
        %8606 = vst [vmem:[%s709] sm:$0xff] %v8574
        %8607 = vst [vmem:[%s709 + $0x8] sm:$0xff] %v8575
        %8608 = vst [vmem:[%s709 + $0x10] sm:$0xff] %v8576
        %8609 = vst [vmem:[%s709 + $0x18] sm:$0xff] %v8577
        %8610 = vst [vmem:[%s709 + $0x20] sm:$0xff] %v8578
        %8611 = vst [vmem:[%s709 + $0x28] sm:$0xff] %v8579
        %8612 = vst [vmem:[%s709 + $0x30] sm:$0xff] %v8580
        %8613 = vst [vmem:[%s709 + $0x38] sm:$0xff] %v8581
        %8614 = vst [vmem:[%s709 + $0x40] sm:$0xff] %v8582
        %8615 = vst [vmem:[%s709 + $0x48] sm:$0xff] %v8583
        %8616 = vst [vmem:[%s709 + $0x50] sm:$0xff] %v8584
        %8617 = vst [vmem:[%s709 + $0x58] sm:$0xff] %v8585
        %8618 = vst [vmem:[%s709 + $0x60] sm:$0xff] %v8586
        %8619 = vst [vmem:[%s709 + $0x68] sm:$0xff] %v8587
        %8620 = vst [vmem:[%s709 + $0x70] sm:$0xff] %v8588
        %8621 = vst [vmem:[%s709 + $0x78] sm:$0xff] %v8589
        %8622 = vst [vmem:[%s709 + $0x80] sm:$0xff] %v8590
        %8623 = vst [vmem:[%s709 + $0x88] sm:$0xff] %v8591
        %8624 = vst [vmem:[%s709 + $0x90] sm:$0xff] %v8592
        %8625 = vst [vmem:[%s709 + $0x98] sm:$0xff] %v8593
        %8626 = vst [vmem:[%s709 + $0xa0] sm:$0xff] %v8594
        %8627 = vst [vmem:[%s709 + $0xa8] sm:$0xff] %v8595
        %8628 = vst [vmem:[%s709 + $0xb0] sm:$0xff] %v8596
        %8629 = vst [vmem:[%s709 + $0xb8] sm:$0xff] %v8597
        %8630 = vst [vmem:[%s709 + $0xc0] sm:$0xff] %v8598
        %8631 = vst [vmem:[%s709 + $0xc8] sm:$0xff] %v8599
        %8632 = vst [vmem:[%s709 + $0xd0] sm:$0xff] %v8600
        %8633 = vst [vmem:[%s709 + $0xd8] sm:$0xff] %v8601
        %8634 = vst [vmem:[%s709 + $0xe0] sm:$0xff] %v8602
        %8635 = vst [vmem:[%s709 + $0xe8] sm:$0xff] %v8603
        %8636 = vst [vmem:[%s709 + $0xf0] sm:$0xff] %v8604
        %8637 = vst [vmem:[%s709 + $0xf8] sm:$0xff] %v8605
        %s8638 = sand.u32 %s446, 1
        %s8639 = scalar_lea.sflag [#allocation4], %s8638
        %s8640 = sand.u32 %s446, 1
        %s8641 = smul.addr %s8640, 256
        %s8642 = scalar_lea.vmem [#allocation14], %s8641
        // Predicated region
        $region125: #{tpu_custom_call.1} parent=91 // pred_check
          %p8643 = pneg %p456
        $region126: #{tpu_custom_call.1} parent=91 // pred_check_branch
          %8645 = sbr.rel (%p8643) target = $region128
        $region127: #{tpu_custom_call.1} parent=91 // pred_region
          %s8646 = smul.u32 16, %s42
          %s8648 = ssub.s32 4096, 4096
          %8649 = vsyncadd %s8639, %s8648
          %s8650 = smul.addr %s8646, 2
          %s8651 = smul.addr %s8650, 128
          %s8652 = scalar_lea.hbm %s18, %s8651
          %s8653 = sshll.u32 %s8642, 4
          %s8654 = int_to_ptr.vmem [resolvable:$true] %s8653
          %8659 = dma.vmem_to_hbm [thread:$0]  %s8654, 4096, %s8652, %s8639, 256, 256, 16
        $region128: #{tpu_custom_call.1} parent=91 // pred_fallthru
          _
      $region92: #{tpu_custom_call.1} parent=5 // pred_fallthru
        _
      %p8660 = scmp.le.s32.totalorder 2, %s33
      // Predicated region
      $region129: #{tpu_custom_call.1} parent=5 // pred_check
        %p8661 = pneg %p8660
      $region130: #{tpu_custom_call.1} parent=5 // pred_check_branch
        %8663 = sbr.rel (%p8661) target = $region132
      $region131: #{tpu_custom_call.1} parent=5 // pred_region
        %s8664 = ssub.s32 %s33, 2
        // Predicated region
        $region133: #{tpu_custom_call.1} parent=131 // pred_check
          %p8665 = pneg %p462
        $region134: #{tpu_custom_call.1} parent=131 // pred_check_branch
          %8667 = sbr.rel (%p8665) target = $region136
        $region135: #{tpu_custom_call.1} parent=131 // pred_region
          %s8668 = sand.u32 %s447, 1
          %s8669 = scalar_lea.sflag [#allocation4], %s8668
          %s8670 = sand.u32 %s447, 1
          %s8671 = smul.addr %s8670, 256
          %s8672 = scalar_lea.vmem [#allocation14], %s8671
          %8673 = dma.done %s8669, 4096
        $region136: #{tpu_custom_call.1} parent=131 // pred_fallthru
          _
      $region132: #{tpu_custom_call.1} parent=5 // pred_fallthru
        _
    $region6: #{tpu_custom_call.1} parent=1 // loop_footer
      %s37 = sadd.s32 1, %s33
    $region7: #{tpu_custom_call.1} parent=1 // loop_footer_branch
      %32 = sbr.rel target = $region3
    $region8: #{tpu_custom_call.1} parent=1 // loop_exit
      _
    %8674 = vsyncpa [#allocation3], 1
    %s8675 = scalar_lea.sflag [#allocation3], 1
    %8676 = vsyncpa %s8675, 1
    %8677 = vsyncpa [#allocation6], 1
    %8678 = vsyncpa [#allocation9], 1
    %8679 = vsyncpa [#allocation12], 1
    %8680 = vsyncpa [#allocation4], 1
    %s8681 = scalar_lea.sflag [#allocation4], 1
    %8682 = vsyncpa %s8681, 1

</llo_original>
